<compile_context>
chip_gen: v7x
topology: tpu7x:2x2x1
jax: 0.10.0
libtpu: 0.0.40
codegen_flags: <defaults>
</compile_context>

<pallas_src>
import functools

import jax
import jax.numpy as jnp
from jax.experimental import pallas as pl
from jax.experimental.pallas import tpu as pltpu


# ------------------------------ tiling helper --------------------------------

def _pick_tile(dim, tile):
    """Largest friendly tile <= `tile` that divides `dim`."""
    tile = min(tile, dim)
    if dim % tile == 0:
        return tile
    # Prefer the largest multiple-of-128 divisor (lane aligned).
    t = (tile // 128) * 128
    while t >= 128:
        if dim % t == 0:
            return t
        t -= 128
    # Then the largest multiple-of-8 divisor (sublane aligned).
    t = (tile // 8) * 8
    while t >= 8:
        if dim % t == 0:
            return t
        t -= 8
    # TODO(synk): pad + mask for truly awkward dims; full-dim fallback for now.
    return dim


# --------------------------- tiled Linear (+bias) ----------------------------

def _linear_kernel(x_ref, w_ref, b_ref, o_ref, *, act, nk):
    k = pl.program_id(2)

    @pl.when(k == 0)
    def _():
        o_ref[...] = jnp.zeros_like(o_ref)

    # bf16 MXU operands, f32 accumulation directly into the resident out block.
    o_ref[...] += jnp.dot(x_ref[...].astype(w_ref.dtype), w_ref[...],
                          preferred_element_type=jnp.float32)

    @pl.when(k == nk - 1)
    def _():
        y = o_ref[...] + b_ref[...]
        if act == "gelu":
            # TODO(synk): HF BERT uses exact erf-GELU; tanh approximation kept
            # (numeric delta ~1e-3) for guaranteed Mosaic lowering.
            y = jax.nn.gelu(y, approximate=True)
        elif act == "tanh":
            y = jnp.tanh(y)
        o_ref[...] = y


def linear(x, w, b, act="none", tm=512, tn=512, tk=768):
    """x: [M, K] @ w: [K, N] + b: [N], tiled over (M, N, K)."""
    M, K = x.shape
    N = w.shape[1]
    tm = _pick_tile(M, tm)
    tn = _pick_tile(N, tn)
    tk = _pick_tile(K, tk)
    nk = K // tk
    return pl.pallas_call(
        functools.partial(_linear_kernel, act=act, nk=nk),
        out_shape=jax.ShapeDtypeStruct((M, N), jnp.float32),
        grid=(M // tm, N // tn, nk),
        in_specs=[pl.BlockSpec((tm, tk), lambda i, j, k: (i, k)),
                  pl.BlockSpec((tk, tn), lambda i, j, k: (k, j)),
                  pl.BlockSpec((1, tn), lambda i, j, k: (0, j))],
        out_specs=pl.BlockSpec((tm, tn), lambda i, j, k: (i, j)),
        compiler_params=pltpu.CompilerParams(
            dimension_semantics=("parallel", "parallel", "arbitrary")),
    )(x, w.astype(jnp.bfloat16), b.reshape(1, N))


# -------------------- LayerNorm (residual add fused in) ----------------------

def _ln_body(x, g_ref, b_ref, o_ref, eps):
    mu = jnp.mean(x, axis=-1, keepdims=True)
    var = jnp.maximum(jnp.mean(x * x, axis=-1, keepdims=True) - mu * mu, 0.0)
    y = (x - mu) * jax.lax.rsqrt(var + eps)
    o_ref[...] = (y * g_ref[...] + b_ref[...]).astype(o_ref.dtype)


def _ln_kernel(x_ref, g_ref, b_ref, o_ref, *, eps):
    _ln_body(x_ref[...], g_ref, b_ref, o_ref, eps)


def _add_ln_kernel(x_ref, r_ref, g_ref, b_ref, o_ref, *, eps):
    _ln_body(x_ref[...] + r_ref[...], g_ref, b_ref, o_ref, eps)


def layernorm(x, g, b, residual=None, eps=1e-12, tm=512):
    """Per-row LayerNorm over last axis; optionally fuses `x + residual`."""
    M, D = x.shape
    tm = _pick_tile(M, tm)
    row = pl.BlockSpec((tm, D), lambda i: (i, 0))
    vec = pl.BlockSpec((1, D), lambda i: (0, 0))
    if residual is None:
        kern = functools.partial(_ln_kernel, eps=eps)
        specs = [row, vec, vec]
        args = (x, g.reshape(1, D), b.reshape(1, D))
    else:
        kern = functools.partial(_add_ln_kernel, eps=eps)
        specs = [row, row, vec, vec]
        args = (x, residual, g.reshape(1, D), b.reshape(1, D))
    return pl.pallas_call(
        kern,
        out_shape=jax.ShapeDtypeStruct((M, D), jnp.float32),
        grid=(M // tm,),
        in_specs=specs,
        out_specs=row,
        compiler_params=pltpu.CompilerParams(dimension_semantics=("parallel",)),
    )(*args)


# ----------------------- attention: head-group grid --------------------------

def _attn_head(qh, kh, vh, bias, scale):
    # scale folded into Q (S x dh mults instead of S x S); dot_general
    # contracts dim 1 of both operands -> no explicit K transpose.
    q = (qh * scale).astype(jnp.bfloat16)
    s = jax.lax.dot_general(q, kh.astype(jnp.bfloat16),
                            (((1,), (1,)), ((), ())),
                            preferred_element_type=jnp.float32) + bias
    m = jnp.max(s, axis=-1, keepdims=True)
    p = jnp.exp(s - m)
    denom = jnp.sum(p, axis=-1, keepdims=True)
    p = p * pl.reciprocal(denom, approx=True)
    return jnp.dot(p.astype(jnp.bfloat16), vh.astype(jnp.bfloat16),
                   preferred_element_type=jnp.float32)
    # TODO(synk): add KV tiling (online softmax) for S >= 512 on v7x.


def _attn_group_kernel(q_ref, k_ref, v_ref, bias_ref, o_ref, *, hp, dh, scale):
    q = q_ref[0]          # [S, hp*dh]
    k = k_ref[0]
    v = v_ref[0]
    bias = bias_ref[0]    # [1, S] additive mask bias
    outs = []
    for h in range(hp):   # small static unroll (hp heads per grid step)
        sl = slice(h * dh, (h + 1) * dh)
        outs.append(_attn_head(q[:, sl], k[:, sl], v[:, sl], bias, scale))
    out = outs[0] if hp == 1 else jnp.concatenate(outs, axis=-1)
    o_ref[...] = out[None].astype(o_ref.dtype)


def _attn_full_kernel(qkv_ref, bias_ref, o_ref, *, num_heads, hidden, scale):
    # Fallback for tiny / unaligned configs: all heads in one step.
    qkv = qkv_ref[0]       # [S, 3D]
    bias = bias_ref[0]     # [1, S]
    dh = hidden // num_heads
    outs = []
    for h in range(num_heads):
        qh = qkv[:, h * dh:(h + 1) * dh]
        kh = qkv[:, hidden + h * dh:hidden + (h + 1) * dh]
        vh = qkv[:, 2 * hidden + h * dh:2 * hidden + (h + 1) * dh]
        outs.append(_attn_head(qh, kh, vh, bias, scale))
    out = outs[0] if num_heads == 1 else jnp.concatenate(outs, axis=-1)
    o_ref[...] = out[None].astype(o_ref.dtype)


def _heads_per_step(num_heads, dh):
    """Smallest head group whose lane width is a multiple of 128."""
    for cand in range(1, num_heads + 1):
        if num_heads % cand == 0 and (cand * dh) % 128 == 0:
            return cand
    return num_heads


def attention(qkv, bias, num_heads):
    """qkv: [B, S, 3D] fused QKV; bias: [B, 1, S]. Returns [B, S, D]."""
    B, S, threeD = qkv.shape
    D = threeD // 3
    dh = D // num_heads
    scale = 1.0 / float(dh) ** 0.5
    hp = _heads_per_step(num_heads, dh)
    gw = hp * dh                                  # head-group lane width

    if gw % 128 == 0:
        G = num_heads // hp                       # head groups per batch elem
        return pl.pallas_call(
            functools.partial(_attn_group_kernel, hp=hp, dh=dh, scale=scale),
            out_shape=jax.ShapeDtypeStruct((B, S, D), jnp.float32),
            grid=(B, G),
            in_specs=[pl.BlockSpec((1, S, gw), lambda b, g: (b, 0, g)),
                      pl.BlockSpec((1, S, gw), lambda b, g: (b, 0, G + g)),
                      pl.BlockSpec((1, S, gw), lambda b, g: (b, 0, 2 * G + g)),
                      pl.BlockSpec((1, 1, S), lambda b, g: (b, 0, 0))],
            out_specs=pl.BlockSpec((1, S, gw), lambda b, g: (b, 0, g)),
            compiler_params=pltpu.CompilerParams(
                dimension_semantics=("parallel", "parallel")),
        )(qkv, qkv, qkv, bias)

    # Unaligned (toy) fallback: whole QKV row per batch element.
    return pl.pallas_call(
        functools.partial(_attn_full_kernel, num_heads=num_heads, hidden=D,
                          scale=scale),
        out_shape=jax.ShapeDtypeStruct((B, S, D), jnp.float32),
        grid=(B,),
        in_specs=[pl.BlockSpec((1, S, threeD), lambda b: (b, 0, 0)),
                  pl.BlockSpec((1, 1, S), lambda b: (b, 0, 0))],
        out_specs=pl.BlockSpec((1, S, D), lambda b: (b, 0, 0)),
        compiler_params=pltpu.CompilerParams(dimension_semantics=("parallel",)),
    )(qkv, bias)


# ---------------------- fused FFN kernel (I-dim tiled) ------------------------

def _ffn_kernel(x_ref, wi_ref, bi_ref, wo_ref, bo_ref, o_ref, *, ni):
    j = pl.program_id(1)

    @pl.when(j == 0)
    def _():
        o_ref[...] = jnp.zeros_like(o_ref)

    h = jnp.dot(x_ref[...].astype(jnp.bfloat16), wi_ref[...],
                preferred_element_type=jnp.float32) + bi_ref[...]
    # TODO(synk): tanh-approx GELU vs HF exact erf GELU (delta ~1e-3).
    h = jax.nn.gelu(h, approximate=True)
    o_ref[...] += jnp.dot(h.astype(jnp.bfloat16), wo_ref[...],
                          preferred_element_type=jnp.float32)

    @pl.when(j == ni - 1)
    def _():
        o_ref[...] += bo_ref[...]


def ffn(x, wi, bi, wo, bo, tm=512, ti=512):
    """Fused x @ wi -> GELU -> @ wo + bo, tiled over rows AND the intermediate
    dimension; the [tm, ti] GELU chunk stays in VMEM/vregs, weights are never
    fully resident."""
    M, D = x.shape
    I = wi.shape[1]
    tm = _pick_tile(M, tm)
    ti = _pick_tile(I, ti)
    ni = I // ti
    return pl.pallas_call(
        functools.partial(_ffn_kernel, ni=ni),
        out_shape=jax.ShapeDtypeStruct((M, D), jnp.float32),
        grid=(M // tm, ni),
        in_specs=[pl.BlockSpec((tm, D), lambda i, j: (i, 0)),
                  pl.BlockSpec((D, ti), lambda i, j: (0, j)),
                  pl.BlockSpec((1, ti), lambda i, j: (0, j)),
                  pl.BlockSpec((ti, D), lambda i, j: (j, 0)),
                  pl.BlockSpec((1, D), lambda i, j: (0, 0))],
        out_specs=pl.BlockSpec((tm, D), lambda i, j: (i, 0)),
        compiler_params=pltpu.CompilerParams(
            dimension_semantics=("parallel", "arbitrary")),
    )(x, wi.astype(jnp.bfloat16), bi.reshape(1, I),
      wo.astype(jnp.bfloat16), bo.reshape(1, D))


# ------------------------------ BERT (glue) ----------------------------------

def encoder_layer(p, x, bias, num_heads):
    B, S, D = x.shape
    xf = x.reshape(B * S, D)

    qkv = linear(xf, p["w_qkv"], p["b_qkv"])                  # fused QKV matmul
    a = attention(qkv.reshape(B, S, 3 * D), bias, num_heads)  # [B, S, D]
    a = linear(a.reshape(B * S, D), p["wo"], p["bo"])         # output proj
    x1 = layernorm(a, p["ln1_g"], p["ln1_b"], residual=xf)    # fused add + LN

    h = ffn(x1, p["wi"], p["bi"], p["wo2"], p["bo2"])         # fused GELU FFN
    x2 = layernorm(h, p["ln2_g"], p["ln2_b"], residual=x1)    # fused add + LN
    return x2.reshape(B, S, D)


def bert_txt_forward(params, txt, mask, num_heads):
    """Returns the pooled output (= BERT output[1])."""
    B, S = txt.shape
    D = params["word_emb"].shape[1]

    # Embeddings (gather is JAX glue) + LayerNorm (Pallas)
    # TODO(synk): token_type_ids assumed all-zero (single-segment usage).
    x = (params["word_emb"][txt]
         + params["pos_emb"][:S][None, :, :]
         + params["type_emb"][0][None, None, :])
    x = layernorm(x.reshape(B * S, D),
                  params["emb_ln_g"], params["emb_ln_b"]).reshape(B, S, D)

    # Additive attention-mask bias (HuggingFace convention), lane-friendly [B,1,S]
    bias = ((1.0 - mask.astype(jnp.float32)) * -10000.0).reshape(B, 1, S)

    for layer in params["layers"]:
        x = encoder_layer(layer, x, bias, num_heads)

    # Pooler: dense + tanh on the [CLS] token only (no whole-tensor DMA).
    cls = x[:, 0, :]                                          # [B, D] JAX slice
    return linear(cls, params["pool_w"], params["pool_b"], act="tanh")


# ------------------------------ params init ----------------------------------

def init_params(key, vocab=1000, D=128, I=512, L=2, max_pos=128):
    keys = iter(jax.random.split(key, 16 + 16 * L))

    def nrm(shape, scale=0.02):
        return (scale * jax.random.normal(next(keys), shape)).astype(jnp.float32)

    params = {
        "word_emb": nrm((vocab, D)),
        "pos_emb": nrm((max_pos, D)),
        "type_emb": nrm((2, D)),
        "emb_ln_g": jnp.ones((D,), jnp.float32),
        "emb_ln_b": jnp.zeros((D,), jnp.float32),
        "pool_w": nrm((D, D)),
        "pool_b": jnp.zeros((D,), jnp.float32),
        "layers": [],
    }
    for _ in range(L):
        wq, wk, wv = nrm((D, D)), nrm((D, D)), nrm((D, D))
        params["layers"].append({
            # fused QKV weight [D, 3D] / bias [3D]
            "w_qkv": jnp.concatenate([wq, wk, wv], axis=1),
            "b_qkv": jnp.zeros((3 * D,), jnp.float32),
            "wo": nrm((D, D)), "bo": jnp.zeros((D,), jnp.float32),
            "ln1_g": jnp.ones((D,), jnp.float32),
            "ln1_b": jnp.zeros((D,), jnp.float32),
            "wi": nrm((D, I)), "bi": jnp.zeros((I,), jnp.float32),
            "wo2": nrm((I, D)), "bo2": jnp.zeros((D,), jnp.float32),
            "ln2_g": jnp.ones((D,), jnp.float32),
            "ln2_b": jnp.zeros((D,), jnp.float32),
        })
    return params


# ---------------------------------- main --------------------------------------

if __name__ == "__main__":
    # TODO(synk): weights are deterministic synthetic values (shapes follow a
    # scaled-down bert-base config), not the pretrained 'bert-base-uncased'.
    key = jax.random.PRNGKey(0)
    pkey, tkey = jax.random.split(key)

    # Small but lane-aligned shapes (D = 128 lanes, dh = 64 -> head-pair grid),
    # so the optimized attention / FFN / linear paths are actually exercised.
    B, S, D, H, I, L = 2, 128, 128, 2, 512, 2
    params = init_params(pkey, vocab=1000, D=D, I=I, L=L, max_pos=S)

    txt = jax.random.randint(tkey, (B, S), 0, 1000, dtype=jnp.int32)
    mask = jnp.ones((B, S), dtype=jnp.int32).at[1, 96:].set(0)  # pad row 1 tail

    fwd = jax.jit(functools.partial(bert_txt_forward, num_heads=H))
    pooled = jax.block_until_ready(fwd(params, txt, mask))

    assert pooled.shape == (B, D) and pooled.dtype == jnp.float32
    assert bool(jnp.all(jnp.isfinite(pooled)))
    print("KERNEL_OK")
</pallas_src>

<mosaic_0001>
module attributes {stable_mosaic.version = 11 : i64} {
  func.func @_ln_kernel(%arg0: i32, %arg1: memref<256x128xf32, #tpu.memory_space<vmem>>, %arg2: memref<1x128xf32, #tpu.memory_space<vmem>>, %arg3: memref<1x128xf32, #tpu.memory_space<vmem>>, %arg4: memref<256x128xf32, #tpu.memory_space<vmem>>) attributes {dimension_semantics = [#tpu.dimension_semantics<parallel>], iteration_bounds = array<i64: 1>, scalar_prefetch = 0 : i64, scratch_operands = 0 : i64, tpu.core_type = #tpu.core_type<tc>, window_params = [{transform_indices = @transform_0, window_bounds = array<i64: 256, 128>}, {pipeline_mode = #tpu.pipeline_mode<synchronous>, transform_indices = @transform_1, window_bounds = array<i64: 1, 128>}, {pipeline_mode = #tpu.pipeline_mode<synchronous>, transform_indices = @transform_2, window_bounds = array<i64: 1, 128>}, {transform_indices = @transform_3, window_bounds = array<i64: 256, 128>}]} {
    %c0 = arith.constant 0 : index
    %c0_0 = arith.constant 0 : index
    %0 = vector.load %arg1[%c0, %c0_0] : memref<256x128xf32, #tpu.memory_space<vmem>>, vector<256x128xf32>
    %cst = arith.constant dense<0.000000e+00> : vector<256xf32>
    %1 = vector.multi_reduction <add>, %0, %cst [1] : vector<256x128xf32> to vector<256xf32>
    %2 = vector.shape_cast %1 : vector<256xf32> to vector<256x1xf32>
    %cst_1 = arith.constant 1.280000e+02 : f32
    %3 = vector.broadcast %cst_1 : f32 to vector<256x1xf32>
    %4 = arith.divf %2, %3 : vector<256x1xf32>
    %5 = arith.mulf %0, %0 : vector<256x128xf32>
    %cst_2 = arith.constant dense<0.000000e+00> : vector<256xf32>
    %6 = vector.multi_reduction <add>, %5, %cst_2 [1] : vector<256x128xf32> to vector<256xf32>
    %7 = vector.shape_cast %6 : vector<256xf32> to vector<256x1xf32>
    %cst_3 = arith.constant 1.280000e+02 : f32
    %8 = vector.broadcast %cst_3 : f32 to vector<256x1xf32>
    %9 = arith.divf %7, %8 : vector<256x1xf32>
    %10 = arith.mulf %4, %4 : vector<256x1xf32>
    %11 = arith.subf %9, %10 : vector<256x1xf32>
    %cst_4 = arith.constant 0.000000e+00 : f32
    %12 = vector.broadcast %cst_4 : f32 to vector<256x1xf32>
    %13 = arith.maximumf %11, %12 : vector<256x1xf32>
    %14 = vector.broadcast %4 : vector<256x1xf32> to vector<256x128xf32>
    %15 = arith.subf %0, %14 : vector<256x128xf32>
    %cst_5 = arith.constant 9.99999996E-13 : f32
    %16 = vector.broadcast %cst_5 : f32 to vector<256x1xf32>
    %17 = arith.addf %13, %16 : vector<256x1xf32>
    %18 = math.rsqrt %17 : vector<256x1xf32>
    %19 = vector.broadcast %18 : vector<256x1xf32> to vector<256x128xf32>
    %20 = arith.mulf %15, %19 : vector<256x128xf32>
    %c0_6 = arith.constant 0 : index
    %c0_7 = arith.constant 0 : index
    %21 = vector.load %arg2[%c0_6, %c0_7] : memref<1x128xf32, #tpu.memory_space<vmem>>, vector<1x128xf32>
    %22 = vector.broadcast %21 : vector<1x128xf32> to vector<256x128xf32>
    %23 = arith.mulf %20, %22 : vector<256x128xf32>
    %c0_8 = arith.constant 0 : index
    %c0_9 = arith.constant 0 : index
    %24 = vector.load %arg3[%c0_8, %c0_9] : memref<1x128xf32, #tpu.memory_space<vmem>>, vector<1x128xf32>
    %25 = vector.broadcast %24 : vector<1x128xf32> to vector<256x128xf32>
    %26 = arith.addf %23, %25 : vector<256x128xf32>
    %c0_10 = arith.constant 0 : index
    %c0_11 = arith.constant 0 : index
    %27 = vector.load %arg4[%c0_10, %c0_11] : memref<256x128xf32, #tpu.memory_space<vmem>>, vector<256x128xf32>
    tpu.vector_store %arg4[%c0_10, %c0_11], %26 {strides = array<i32>} : memref<256x128xf32, #tpu.memory_space<vmem>>, vector<256x128xf32>,
    return
  }
  func.func @transform_0(%arg0: i32) -> (i32, i32) {
    %c0_i32 = arith.constant 0 : i32
    %c0_i32_0 = arith.constant 0 : i32
    return %arg0, %c0_i32 : i32, i32
  }
  func.func @transform_1(%arg0: i32) -> (i32, i32) {
    %c0_i32 = arith.constant 0 : i32
    %c0_i32_0 = arith.constant 0 : i32
    %c0_i32_1 = arith.constant 0 : i32
    return %c0_i32, %c0_i32_0 : i32, i32
  }
  func.func @transform_2(%arg0: i32) -> (i32, i32) {
    %c0_i32 = arith.constant 0 : i32
    %c0_i32_0 = arith.constant 0 : i32
    %c0_i32_1 = arith.constant 0 : i32
    return %c0_i32, %c0_i32_0 : i32, i32
  }
  func.func @transform_3(%arg0: i32) -> (i32, i32) {
    %c0_i32 = arith.constant 0 : i32
    %c0_i32_0 = arith.constant 0 : i32
    return %arg0, %c0_i32 : i32, i32
  }
}

module attributes {stable_mosaic.version = 11 : i64} {
  func.func @_linear_kernel(%arg0: i32, %arg1: i32, %arg2: i32, %arg3: memref<256x128xf32, #tpu.memory_space<vmem>>, %arg4: memref<128x384xbf16, #tpu.memory_space<vmem>>, %arg5: memref<1x384xf32, #tpu.memory_space<vmem>>, %arg6: memref<256x384xf32, #tpu.memory_space<vmem>>) attributes {dimension_semantics = [#tpu.dimension_semantics<parallel>, #tpu.dimension_semantics<parallel>, #tpu.dimension_semantics<arbitrary>], iteration_bounds = array<i64: 1, 1, 1>, scalar_prefetch = 0 : i64, scratch_operands = 0 : i64, tpu.core_type = #tpu.core_type<tc>, window_params = [{transform_indices = @transform_0, window_bounds = array<i64: 256, 128>}, {transform_indices = @transform_1, window_bounds = array<i64: 128, 384>}, {transform_indices = @transform_2, window_bounds = array<i64: 1, 384>}, {transform_indices = @transform_3, window_bounds = array<i64: 256, 384>}]} {
    %c0_i32 = arith.constant 0 : i32
    %0 = arith.cmpi eq, %arg2, %c0_i32 : i32
    %1 = arith.extui %0 : i1 to i32
    %c0_i32_0 = arith.constant 0 : i32
    %2 = arith.cmpi ne, %1, %c0_i32_0 : i32
    scf.if %2 {
      %cst_10 = arith.constant 0.000000e+00 : f32
      %13 = vector.broadcast %cst_10 : f32 to vector<256x384xf32>
      %c0_11 = arith.constant 0 : index
      %c0_12 = arith.constant 0 : index
      %14 = vector.load %arg6[%c0_11, %c0_12] : memref<256x384xf32, #tpu.memory_space<vmem>>, vector<256x384xf32>
      tpu.vector_store %arg6[%c0_11, %c0_12], %13 {strides = array<i32>} : memref<256x384xf32, #tpu.memory_space<vmem>>, vector<256x384xf32>,
    } else {
    }
    %c0 = arith.constant 0 : index
    %c0_1 = arith.constant 0 : index
    %3 = vector.load %arg6[%c0, %c0_1] : memref<256x384xf32, #tpu.memory_space<vmem>>, vector<256x384xf32>
    %c0_2 = arith.constant 0 : index
    %c0_3 = arith.constant 0 : index
    %4 = vector.load %arg3[%c0_2, %c0_3] : memref<256x128xf32, #tpu.memory_space<vmem>>, vector<256x128xf32>
    %5 = arith.truncf %4 : vector<256x128xf32> to vector<256x128xbf16>
    %c0_4 = arith.constant 0 : index
    %c0_5 = arith.constant 0 : index
    %6 = vector.load %arg4[%c0_4, %c0_5] : memref<128x384xbf16, #tpu.memory_space<vmem>>, vector<128x384xbf16>
    %cst = arith.constant dense<0.000000e+00> : vector<256x384xf32>
    %7 = tpu.matmul %5, %6, %cst {dimension_numbers = #tpu.dot_dimension_numbers<[1], [0], [0], [1], [0, 0, 1, 1], [], []>} : vector<256x128xbf16>, vector<128x384xbf16>, vector<256x384xf32> -> vector<256x384xf32>
    %8 = arith.addf %3, %7 : vector<256x384xf32>
    %c0_6 = arith.constant 0 : index
    %c0_7 = arith.constant 0 : index
    %9 = vector.load %arg6[%c0_6, %c0_7] : memref<256x384xf32, #tpu.memory_space<vmem>>, vector<256x384xf32>
    tpu.vector_store %arg6[%c0_6, %c0_7], %8 {strides = array<i32>} : memref<256x384xf32, #tpu.memory_space<vmem>>, vector<256x384xf32>,
    %c0_i32_8 = arith.constant 0 : i32
    %10 = arith.cmpi eq, %arg2, %c0_i32_8 : i32
    %11 = arith.extui %10 : i1 to i32
    %c0_i32_9 = arith.constant 0 : i32
    %12 = arith.cmpi ne, %11, %c0_i32_9 : i32
    scf.if %12 {
      %c0_10 = arith.constant 0 : index
      %c0_11 = arith.constant 0 : index
      %13 = vector.load %arg6[%c0_10, %c0_11] : memref<256x384xf32, #tpu.memory_space<vmem>>, vector<256x384xf32>
      %c0_12 = arith.constant 0 : index
      %c0_13 = arith.constant 0 : index
      %14 = vector.load %arg5[%c0_12, %c0_13] : memref<1x384xf32, #tpu.memory_space<vmem>>, vector<1x384xf32>
      %15 = vector.broadcast %14 : vector<1x384xf32> to vector<256x384xf32>
      %16 = arith.addf %13, %15 : vector<256x384xf32>
      %c0_14 = arith.constant 0 : index
      %c0_15 = arith.constant 0 : index
      %17 = vector.load %arg6[%c0_14, %c0_15] : memref<256x384xf32, #tpu.memory_space<vmem>>, vector<256x384xf32>
      tpu.vector_store %arg6[%c0_14, %c0_15], %16 {strides = array<i32>} : memref<256x384xf32, #tpu.memory_space<vmem>>, vector<256x384xf32>,
    } else {
    }
    return
  }
  func.func @transform_0(%arg0: i32, %arg1: i32, %arg2: i32) -> (i32, i32) {
    %c0_i32 = arith.constant 0 : i32
    return %arg0, %arg2 : i32, i32
  }
  func.func @transform_1(%arg0: i32, %arg1: i32, %arg2: i32) -> (i32, i32) {
    %c0_i32 = arith.constant 0 : i32
    return %arg2, %arg1 : i32, i32
  }
  func.func @transform_2(%arg0: i32, %arg1: i32, %arg2: i32) -> (i32, i32) {
    %c0_i32 = arith.constant 0 : i32
    %c0_i32_0 = arith.constant 0 : i32
    return %c0_i32, %arg1 : i32, i32
  }
  func.func @transform_3(%arg0: i32, %arg1: i32, %arg2: i32) -> (i32, i32) {
    %c0_i32 = arith.constant 0 : i32
    return %arg0, %arg1 : i32, i32
  }
}

module attributes {stable_mosaic.version = 11 : i64} {
  func.func @_attn_group_kernel(%arg0: i32, %arg1: i32, %arg2: memref<1x128x128xf32, #tpu.memory_space<vmem>>, %arg3: memref<1x128x128xf32, #tpu.memory_space<vmem>>, %arg4: memref<1x128x128xf32, #tpu.memory_space<vmem>>, %arg5: memref<1x1x128xf32, #tpu.memory_space<vmem>>, %arg6: memref<1x128x128xf32, #tpu.memory_space<vmem>>) attributes {dimension_semantics = [#tpu.dimension_semantics<parallel>, #tpu.dimension_semantics<parallel>], iteration_bounds = array<i64: 2, 1>, scalar_prefetch = 0 : i64, scratch_operands = 0 : i64, tpu.core_type = #tpu.core_type<tc>, window_params = [{transform_indices = @transform_0, window_bounds = array<i64: 1, 128, 128>}, {transform_indices = @transform_1, window_bounds = array<i64: 1, 128, 128>}, {transform_indices = @transform_2, window_bounds = array<i64: 1, 128, 128>}, {transform_indices = @transform_3, window_bounds = array<i64: 1, 1, 128>}, {transform_indices = @transform_4, window_bounds = array<i64: 1, 128, 128>}]} {
    %c0 = arith.constant 0 : index
    %c0_0 = arith.constant 0 : index
    %c0_1 = arith.constant 0 : index
    %0 = vector.load %arg2[%c0, %c0_0, %c0_1] : memref<1x128x128xf32, #tpu.memory_space<vmem>>, vector<1x128x128xf32>
    %1 = vector.shape_cast %0 : vector<1x128x128xf32> to vector<128x128xf32>
    %c0_2 = arith.constant 0 : index
    %c0_3 = arith.constant 0 : index
    %c0_4 = arith.constant 0 : index
    %2 = vector.load %arg3[%c0_2, %c0_3, %c0_4] : memref<1x128x128xf32, #tpu.memory_space<vmem>>, vector<1x128x128xf32>
    %3 = vector.shape_cast %2 : vector<1x128x128xf32> to vector<128x128xf32>
    %c0_5 = arith.constant 0 : index
    %c0_6 = arith.constant 0 : index
    %c0_7 = arith.constant 0 : index
    %4 = vector.load %arg4[%c0_5, %c0_6, %c0_7] : memref<1x128x128xf32, #tpu.memory_space<vmem>>, vector<1x128x128xf32>
    %5 = vector.shape_cast %4 : vector<1x128x128xf32> to vector<128x128xf32>
    %c0_8 = arith.constant 0 : index
    %c0_9 = arith.constant 0 : index
    %c0_10 = arith.constant 0 : index
    %6 = vector.load %arg5[%c0_8, %c0_9, %c0_10] : memref<1x1x128xf32, #tpu.memory_space<vmem>>, vector<1x1x128xf32>
    %7 = vector.shape_cast %6 : vector<1x1x128xf32> to vector<1x128xf32>
    %8 = vector.extract_strided_slice %1 {offsets = [0, 0], sizes = [128, 64], strides = [1, 1]} : vector<128x128xf32> to vector<128x64xf32>
    %9 = vector.extract_strided_slice %3 {offsets = [0, 0], sizes = [128, 64], strides = [1, 1]} : vector<128x128xf32> to vector<128x64xf32>
    %10 = vector.extract_strided_slice %5 {offsets = [0, 0], sizes = [128, 64], strides = [1, 1]} : vector<128x128xf32> to vector<128x64xf32>
    %cst = arith.constant 1.250000e-01 : f32
    %11 = vector.broadcast %cst : f32 to vector<128x64xf32>
    %12 = arith.mulf %8, %11 : vector<128x64xf32>
    %13 = arith.truncf %12 : vector<128x64xf32> to vector<128x64xbf16>
    %14 = arith.truncf %9 : vector<128x64xf32> to vector<128x64xbf16>
    %cst_11 = arith.constant dense<0.000000e+00> : vector<128x128xf32>
    %15 = tpu.matmul %13, %14, %cst_11 {dimension_numbers = #tpu.dot_dimension_numbers<[1], [1], [0], [0], [0, 0, 1, 0], [], []>} : vector<128x64xbf16>, vector<128x64xbf16>, vector<128x128xf32> -> vector<128x128xf32>
    %16 = vector.broadcast %7 : vector<1x128xf32> to vector<128x128xf32>
    %17 = arith.addf %15, %16 : vector<128x128xf32>
    %cst_12 = arith.constant dense<0xFF800000> : vector<128xf32>
    %18 = vector.multi_reduction <maximumf>, %17, %cst_12 [1] : vector<128x128xf32> to vector<128xf32>
    %19 = vector.shape_cast %18 : vector<128xf32> to vector<128x1xf32>
    %20 = vector.broadcast %19 : vector<128x1xf32> to vector<128x128xf32>
    %21 = arith.subf %17, %20 : vector<128x128xf32>
    %22 = math.exp %21 : vector<128x128xf32>
    %cst_13 = arith.constant dense<0.000000e+00> : vector<128xf32>
    %23 = vector.multi_reduction <add>, %22, %cst_13 [1] : vector<128x128xf32> to vector<128xf32>
    %24 = vector.shape_cast %23 : vector<128xf32> to vector<128x1xf32>
    %25 = tpu.reciprocal %24 {approx = true} : vector<128x1xf32> -> vector<128x1xf32>
    %26 = vector.broadcast %25 : vector<128x1xf32> to vector<128x128xf32>
    %27 = arith.mulf %22, %26 : vector<128x128xf32>
    %28 = arith.truncf %27 : vector<128x128xf32> to vector<128x128xbf16>
    %29 = arith.truncf %10 : vector<128x64xf32> to vector<128x64xbf16>
    %cst_14 = arith.constant dense<0.000000e+00> : vector<128x64xf32>
    %30 = tpu.matmul %28, %29, %cst_14 {dimension_numbers = #tpu.dot_dimension_numbers<[1], [0], [0], [1], [0, 0, 1, 1], [], []>} : vector<128x128xbf16>, vector<128x64xbf16>, vector<128x64xf32> -> vector<128x64xf32>
    %31 = vector.extract_strided_slice %1 {offsets = [0, 64], sizes = [128, 64], strides = [1, 1]} : vector<128x128xf32> to vector<128x64xf32>
    %32 = vector.extract_strided_slice %3 {offsets = [0, 64], sizes = [128, 64], strides = [1, 1]} : vector<128x128xf32> to vector<128x64xf32>
    %33 = vector.extract_strided_slice %5 {offsets = [0, 64], sizes = [128, 64], strides = [1, 1]} : vector<128x128xf32> to vector<128x64xf32>
    %cst_15 = arith.constant 1.250000e-01 : f32
    %34 = vector.broadcast %cst_15 : f32 to vector<128x64xf32>
    %35 = arith.mulf %31, %34 : vector<128x64xf32>
    %36 = arith.truncf %35 : vector<128x64xf32> to vector<128x64xbf16>
    %37 = arith.truncf %32 : vector<128x64xf32> to vector<128x64xbf16>
    %cst_16 = arith.constant dense<0.000000e+00> : vector<128x128xf32>
    %38 = tpu.matmul %36, %37, %cst_16 {dimension_numbers = #tpu.dot_dimension_numbers<[1], [1], [0], [0], [0, 0, 1, 0], [], []>} : vector<128x64xbf16>, vector<128x64xbf16>, vector<128x128xf32> -> vector<128x128xf32>
    %39 = vector.broadcast %7 : vector<1x128xf32> to vector<128x128xf32>
    %40 = arith.addf %38, %39 : vector<128x128xf32>
    %cst_17 = arith.constant dense<0xFF800000> : vector<128xf32>
    %41 = vector.multi_reduction <maximumf>, %40, %cst_17 [1] : vector<128x128xf32> to vector<128xf32>
    %42 = vector.shape_cast %41 : vector<128xf32> to vector<128x1xf32>
    %43 = vector.broadcast %42 : vector<128x1xf32> to vector<128x128xf32>
    %44 = arith.subf %40, %43 : vector<128x128xf32>
    %45 = math.exp %44 : vector<128x128xf32>
    %cst_18 = arith.constant dense<0.000000e+00> : vector<128xf32>
    %46 = vector.multi_reduction <add>, %45, %cst_18 [1] : vector<128x128xf32> to vector<128xf32>
    %47 = vector.shape_cast %46 : vector<128xf32> to vector<128x1xf32>
    %48 = tpu.reciprocal %47 {approx = true} : vector<128x1xf32> -> vector<128x1xf32>
    %49 = vector.broadcast %48 : vector<128x1xf32> to vector<128x128xf32>
    %50 = arith.mulf %45, %49 : vector<128x128xf32>
    %51 = arith.truncf %50 : vector<128x128xf32> to vector<128x128xbf16>
    %52 = arith.truncf %33 : vector<128x64xf32> to vector<128x64xbf16>
    %cst_19 = arith.constant dense<0.000000e+00> : vector<128x64xf32>
    %53 = tpu.matmul %51, %52, %cst_19 {dimension_numbers = #tpu.dot_dimension_numbers<[1], [0], [0], [1], [0, 0, 1, 1], [], []>} : vector<128x128xbf16>, vector<128x64xbf16>, vector<128x64xf32> -> vector<128x64xf32>
    %54 = tpu.concatenate %30, %53 in 1 : vector<128x64xf32>, vector<128x64xf32> -> vector<128x128xf32>
    %55 = vector.shape_cast %54 : vector<128x128xf32> to vector<1x128x128xf32>
    %c0_20 = arith.constant 0 : index
    %c0_21 = arith.constant 0 : index
    %c0_22 = arith.constant 0 : index
    %56 = vector.load %arg6[%c0_20, %c0_21, %c0_22] : memref<1x128x128xf32, #tpu.memory_space<vmem>>, vector<1x128x128xf32>
    tpu.vector_store %arg6[%c0_20, %c0_21, %c0_22], %55 {strides = array<i32>} : memref<1x128x128xf32, #tpu.memory_space<vmem>>, vector<1x128x128xf32>,
    return
  }
  func.func @transform_0(%arg0: i32, %arg1: i32) -> (i32, i32, i32) {
    %c0_i32 = arith.constant 0 : i32
    %c0_i32_0 = arith.constant 0 : i32
    return %arg0, %c0_i32, %arg1 : i32, i32, i32
  }
  func.func @transform_1(%arg0: i32, %arg1: i32) -> (i32, i32, i32) {
    %c1_i32 = arith.constant 1 : i32
    %0 = arith.addi %c1_i32, %arg1 : i32
    %c0_i32 = arith.constant 0 : i32
    %c0_i32_0 = arith.constant 0 : i32
    return %arg0, %c0_i32, %0 : i32, i32, i32
  }
  func.func @transform_2(%arg0: i32, %arg1: i32) -> (i32, i32, i32) {
    %c2_i32 = arith.constant 2 : i32
    %0 = arith.addi %c2_i32, %arg1 : i32
    %c0_i32 = arith.constant 0 : i32
    %c0_i32_0 = arith.constant 0 : i32
    return %arg0, %c0_i32, %0 : i32, i32, i32
  }
  func.func @transform_3(%arg0: i32, %arg1: i32) -> (i32, i32, i32) {
    %c0_i32 = arith.constant 0 : i32
    %c0_i32_0 = arith.constant 0 : i32
    %c0_i32_1 = arith.constant 0 : i32
    return %arg0, %c0_i32, %c0_i32_0 : i32, i32, i32
  }
  func.func @transform_4(%arg0: i32, %arg1: i32) -> (i32, i32, i32) {
    %c0_i32 = arith.constant 0 : i32
    %c0_i32_0 = arith.constant 0 : i32
    return %arg0, %c0_i32, %arg1 : i32, i32, i32
  }
}

module attributes {stable_mosaic.version = 11 : i64} {
  func.func @_linear_kernel(%arg0: i32, %arg1: i32, %arg2: i32, %arg3: memref<256x128xf32, #tpu.memory_space<vmem>>, %arg4: memref<128x128xbf16, #tpu.memory_space<vmem>>, %arg5: memref<1x128xf32, #tpu.memory_space<vmem>>, %arg6: memref<256x128xf32, #tpu.memory_space<vmem>>) attributes {dimension_semantics = [#tpu.dimension_semantics<parallel>, #tpu.dimension_semantics<parallel>, #tpu.dimension_semantics<arbitrary>], iteration_bounds = array<i64: 1, 1, 1>, scalar_prefetch = 0 : i64, scratch_operands = 0 : i64, tpu.core_type = #tpu.core_type<tc>, window_params = [{transform_indices = @transform_0, window_bounds = array<i64: 256, 128>}, {transform_indices = @transform_1, window_bounds = array<i64: 128, 128>}, {transform_indices = @transform_2, window_bounds = array<i64: 1, 128>}, {transform_indices = @transform_3, window_bounds = array<i64: 256, 128>}]} {
    %c0_i32 = arith.constant 0 : i32
    %0 = arith.cmpi eq, %arg2, %c0_i32 : i32
    %1 = arith.extui %0 : i1 to i32
    %c0_i32_0 = arith.constant 0 : i32
    %2 = arith.cmpi ne, %1, %c0_i32_0 : i32
    scf.if %2 {
      %cst_10 = arith.constant 0.000000e+00 : f32
      %13 = vector.broadcast %cst_10 : f32 to vector<256x128xf32>
      %c0_11 = arith.constant 0 : index
      %c0_12 = arith.constant 0 : index
      %14 = vector.load %arg6[%c0_11, %c0_12] : memref<256x128xf32, #tpu.memory_space<vmem>>, vector<256x128xf32>
      tpu.vector_store %arg6[%c0_11, %c0_12], %13 {strides = array<i32>} : memref<256x128xf32, #tpu.memory_space<vmem>>, vector<256x128xf32>,
    } else {
    }
    %c0 = arith.constant 0 : index
    %c0_1 = arith.constant 0 : index
    %3 = vector.load %arg6[%c0, %c0_1] : memref<256x128xf32, #tpu.memory_space<vmem>>, vector<256x128xf32>
    %c0_2 = arith.constant 0 : index
    %c0_3 = arith.constant 0 : index
    %4 = vector.load %arg3[%c0_2, %c0_3] : memref<256x128xf32, #tpu.memory_space<vmem>>, vector<256x128xf32>
    %5 = arith.truncf %4 : vector<256x128xf32> to vector<256x128xbf16>
    %c0_4 = arith.constant 0 : index
    %c0_5 = arith.constant 0 : index
    %6 = vector.load %arg4[%c0_4, %c0_5] : memref<128x128xbf16, #tpu.memory_space<vmem>>, vector<128x128xbf16>
    %cst = arith.constant dense<0.000000e+00> : vector<256x128xf32>
    %7 = tpu.matmul %5, %6, %cst {dimension_numbers = #tpu.dot_dimension_numbers<[1], [0], [0], [1], [0, 0, 1, 1], [], []>} : vector<256x128xbf16>, vector<128x128xbf16>, vector<256x128xf32> -> vector<256x128xf32>
    %8 = arith.addf %3, %7 : vector<256x128xf32>
    %c0_6 = arith.constant 0 : index
    %c0_7 = arith.constant 0 : index
    %9 = vector.load %arg6[%c0_6, %c0_7] : memref<256x128xf32, #tpu.memory_space<vmem>>, vector<256x128xf32>
    tpu.vector_store %arg6[%c0_6, %c0_7], %8 {strides = array<i32>} : memref<256x128xf32, #tpu.memory_space<vmem>>, vector<256x128xf32>,
    %c0_i32_8 = arith.constant 0 : i32
    %10 = arith.cmpi eq, %arg2, %c0_i32_8 : i32
    %11 = arith.extui %10 : i1 to i32
    %c0_i32_9 = arith.constant 0 : i32
    %12 = arith.cmpi ne, %11, %c0_i32_9 : i32
    scf.if %12 {
      %c0_10 = arith.constant 0 : index
      %c0_11 = arith.constant 0 : index
      %13 = vector.load %arg6[%c0_10, %c0_11] : memref<256x128xf32, #tpu.memory_space<vmem>>, vector<256x128xf32>
      %c0_12 = arith.constant 0 : index
      %c0_13 = arith.constant 0 : index
      %14 = vector.load %arg5[%c0_12, %c0_13] : memref<1x128xf32, #tpu.memory_space<vmem>>, vector<1x128xf32>
      %15 = vector.broadcast %14 : vector<1x128xf32> to vector<256x128xf32>
      %16 = arith.addf %13, %15 : vector<256x128xf32>
      %c0_14 = arith.constant 0 : index
      %c0_15 = arith.constant 0 : index
      %17 = vector.load %arg6[%c0_14, %c0_15] : memref<256x128xf32, #tpu.memory_space<vmem>>, vector<256x128xf32>
      tpu.vector_store %arg6[%c0_14, %c0_15], %16 {strides = array<i32>} : memref<256x128xf32, #tpu.memory_space<vmem>>, vector<256x128xf32>,
    } else {
    }
    return
  }
  func.func @transform_0(%arg0: i32, %arg1: i32, %arg2: i32) -> (i32, i32) {
    %c0_i32 = arith.constant 0 : i32
    return %arg0, %arg2 : i32, i32
  }
  func.func @transform_1(%arg0: i32, %arg1: i32, %arg2: i32) -> (i32, i32) {
    %c0_i32 = arith.constant 0 : i32
    return %arg2, %arg1 : i32, i32
  }
  func.func @transform_2(%arg0: i32, %arg1: i32, %arg2: i32) -> (i32, i32) {
    %c0_i32 = arith.constant 0 : i32
    %c0_i32_0 = arith.constant 0 : i32
    return %c0_i32, %arg1 : i32, i32
  }
  func.func @transform_3(%arg0: i32, %arg1: i32, %arg2: i32) -> (i32, i32) {
    %c0_i32 = arith.constant 0 : i32
    return %arg0, %arg1 : i32, i32
  }
}

module attributes {stable_mosaic.version = 11 : i64} {
  func.func @_add_ln_kernel(%arg0: i32, %arg1: memref<256x128xf32, #tpu.memory_space<vmem>>, %arg2: memref<256x128xf32, #tpu.memory_space<vmem>>, %arg3: memref<1x128xf32, #tpu.memory_space<vmem>>, %arg4: memref<1x128xf32, #tpu.memory_space<vmem>>, %arg5: memref<256x128xf32, #tpu.memory_space<vmem>>) attributes {dimension_semantics = [#tpu.dimension_semantics<parallel>], iteration_bounds = array<i64: 1>, scalar_prefetch = 0 : i64, scratch_operands = 0 : i64, tpu.core_type = #tpu.core_type<tc>, window_params = [{transform_indices = @transform_0, window_bounds = array<i64: 256, 128>}, {transform_indices = @transform_1, window_bounds = array<i64: 256, 128>}, {pipeline_mode = #tpu.pipeline_mode<synchronous>, transform_indices = @transform_2, window_bounds = array<i64: 1, 128>}, {pipeline_mode = #tpu.pipeline_mode<synchronous>, transform_indices = @transform_3, window_bounds = array<i64: 1, 128>}, {transform_indices = @transform_4, window_bounds = array<i64: 256, 128>}]} {
    %c0 = arith.constant 0 : index
    %c0_0 = arith.constant 0 : index
    %0 = vector.load %arg1[%c0, %c0_0] : memref<256x128xf32, #tpu.memory_space<vmem>>, vector<256x128xf32>
    %c0_1 = arith.constant 0 : index
    %c0_2 = arith.constant 0 : index
    %1 = vector.load %arg2[%c0_1, %c0_2] : memref<256x128xf32, #tpu.memory_space<vmem>>, vector<256x128xf32>
    %2 = arith.addf %0, %1 : vector<256x128xf32>
    %cst = arith.constant dense<0.000000e+00> : vector<256xf32>
    %3 = vector.multi_reduction <add>, %2, %cst [1] : vector<256x128xf32> to vector<256xf32>
    %4 = vector.shape_cast %3 : vector<256xf32> to vector<256x1xf32>
    %cst_3 = arith.constant 1.280000e+02 : f32
    %5 = vector.broadcast %cst_3 : f32 to vector<256x1xf32>
    %6 = arith.divf %4, %5 : vector<256x1xf32>
    %7 = arith.mulf %2, %2 : vector<256x128xf32>
    %cst_4 = arith.constant dense<0.000000e+00> : vector<256xf32>
    %8 = vector.multi_reduction <add>, %7, %cst_4 [1] : vector<256x128xf32> to vector<256xf32>
    %9 = vector.shape_cast %8 : vector<256xf32> to vector<256x1xf32>
    %cst_5 = arith.constant 1.280000e+02 : f32
    %10 = vector.broadcast %cst_5 : f32 to vector<256x1xf32>
    %11 = arith.divf %9, %10 : vector<256x1xf32>
    %12 = arith.mulf %6, %6 : vector<256x1xf32>
    %13 = arith.subf %11, %12 : vector<256x1xf32>
    %cst_6 = arith.constant 0.000000e+00 : f32
    %14 = vector.broadcast %cst_6 : f32 to vector<256x1xf32>
    %15 = arith.maximumf %13, %14 : vector<256x1xf32>
    %16 = vector.broadcast %6 : vector<256x1xf32> to vector<256x128xf32>
    %17 = arith.subf %2, %16 : vector<256x128xf32>
    %cst_7 = arith.constant 9.99999996E-13 : f32
    %18 = vector.broadcast %cst_7 : f32 to vector<256x1xf32>
    %19 = arith.addf %15, %18 : vector<256x1xf32>
    %20 = math.rsqrt %19 : vector<256x1xf32>
    %21 = vector.broadcast %20 : vector<256x1xf32> to vector<256x128xf32>
    %22 = arith.mulf %17, %21 : vector<256x128xf32>
    %c0_8 = arith.constant 0 : index
    %c0_9 = arith.constant 0 : index
    %23 = vector.load %arg3[%c0_8, %c0_9] : memref<1x128xf32, #tpu.memory_space<vmem>>, vector<1x128xf32>
    %24 = vector.broadcast %23 : vector<1x128xf32> to vector<256x128xf32>
    %25 = arith.mulf %22, %24 : vector<256x128xf32>
    %c0_10 = arith.constant 0 : index
    %c0_11 = arith.constant 0 : index
    %26 = vector.load %arg4[%c0_10, %c0_11] : memref<1x128xf32, #tpu.memory_space<vmem>>, vector<1x128xf32>
    %27 = vector.broadcast %26 : vector<1x128xf32> to vector<256x128xf32>
    %28 = arith.addf %25, %27 : vector<256x128xf32>
    %c0_12 = arith.constant 0 : index
    %c0_13 = arith.constant 0 : index
    %29 = vector.load %arg5[%c0_12, %c0_13] : memref<256x128xf32, #tpu.memory_space<vmem>>, vector<256x128xf32>
    tpu.vector_store %arg5[%c0_12, %c0_13], %28 {strides = array<i32>} : memref<256x128xf32, #tpu.memory_space<vmem>>, vector<256x128xf32>,
    return
  }
  func.func @transform_0(%arg0: i32) -> (i32, i32) {
    %c0_i32 = arith.constant 0 : i32
    %c0_i32_0 = arith.constant 0 : i32
    return %arg0, %c0_i32 : i32, i32
  }
  func.func @transform_1(%arg0: i32) -> (i32, i32) {
    %c0_i32 = arith.constant 0 : i32
    %c0_i32_0 = arith.constant 0 : i32
    return %arg0, %c0_i32 : i32, i32
  }
  func.func @transform_2(%arg0: i32) -> (i32, i32) {
    %c0_i32 = arith.constant 0 : i32
    %c0_i32_0 = arith.constant 0 : i32
    %c0_i32_1 = arith.constant 0 : i32
    return %c0_i32, %c0_i32_0 : i32, i32
  }
  func.func @transform_3(%arg0: i32) -> (i32, i32) {
    %c0_i32 = arith.constant 0 : i32
    %c0_i32_0 = arith.constant 0 : i32
    %c0_i32_1 = arith.constant 0 : i32
    return %c0_i32, %c0_i32_0 : i32, i32
  }
  func.func @transform_4(%arg0: i32) -> (i32, i32) {
    %c0_i32 = arith.constant 0 : i32
    %c0_i32_0 = arith.constant 0 : i32
    return %arg0, %c0_i32 : i32, i32
  }
}

module attributes {stable_mosaic.version = 11 : i64} {
  func.func @_linear_kernel(%arg0: i32, %arg1: i32, %arg2: i32, %arg3: memref<2x128xf32, #tpu.memory_space<vmem>>, %arg4: memref<128x128xbf16, #tpu.memory_space<vmem>>, %arg5: memref<1x128xf32, #tpu.memory_space<vmem>>, %arg6: memref<2x128xf32, #tpu.memory_space<vmem>>) attributes {dimension_semantics = [#tpu.dimension_semantics<parallel>, #tpu.dimension_semantics<parallel>, #tpu.dimension_semantics<arbitrary>], iteration_bounds = array<i64: 1, 1, 1>, scalar_prefetch = 0 : i64, scratch_operands = 0 : i64, tpu.core_type = #tpu.core_type<tc>, window_params = [{transform_indices = @transform_0, window_bounds = array<i64: 2, 128>}, {transform_indices = @transform_1, window_bounds = array<i64: 128, 128>}, {transform_indices = @transform_2, window_bounds = array<i64: 1, 128>}, {transform_indices = @transform_3, window_bounds = array<i64: 2, 128>}]} {
    %c0_i32 = arith.constant 0 : i32
    %0 = arith.cmpi eq, %arg2, %c0_i32 : i32
    %1 = arith.extui %0 : i1 to i32
    %c0_i32_0 = arith.constant 0 : i32
    %2 = arith.cmpi ne, %1, %c0_i32_0 : i32
    scf.if %2 {
      %cst_10 = arith.constant 0.000000e+00 : f32
      %13 = vector.broadcast %cst_10 : f32 to vector<2x128xf32>
      %c0_11 = arith.constant 0 : index
      %c0_12 = arith.constant 0 : index
      %14 = vector.load %arg6[%c0_11, %c0_12] : memref<2x128xf32, #tpu.memory_space<vmem>>, vector<2x128xf32>
      tpu.vector_store %arg6[%c0_11, %c0_12], %13 {strides = array<i32>} : memref<2x128xf32, #tpu.memory_space<vmem>>, vector<2x128xf32>,
    } else {
    }
    %c0 = arith.constant 0 : index
    %c0_1 = arith.constant 0 : index
    %3 = vector.load %arg6[%c0, %c0_1] : memref<2x128xf32, #tpu.memory_space<vmem>>, vector<2x128xf32>
    %c0_2 = arith.constant 0 : index
    %c0_3 = arith.constant 0 : index
    %4 = vector.load %arg3[%c0_2, %c0_3] : memref<2x128xf32, #tpu.memory_space<vmem>>, vector<2x128xf32>
    %5 = arith.truncf %4 : vector<2x128xf32> to vector<2x128xbf16>
    %c0_4 = arith.constant 0 : index
    %c0_5 = arith.constant 0 : index
    %6 = vector.load %arg4[%c0_4, %c0_5] : memref<128x128xbf16, #tpu.memory_space<vmem>>, vector<128x128xbf16>
    %cst = arith.constant dense<0.000000e+00> : vector<2x128xf32>
    %7 = tpu.matmul %5, %6, %cst {dimension_numbers = #tpu.dot_dimension_numbers<[1], [0], [0], [1], [0, 0, 1, 1], [], []>} : vector<2x128xbf16>, vector<128x128xbf16>, vector<2x128xf32> -> vector<2x128xf32>
    %8 = arith.addf %3, %7 : vector<2x128xf32>
    %c0_6 = arith.constant 0 : index
    %c0_7 = arith.constant 0 : index
    %9 = vector.load %arg6[%c0_6, %c0_7] : memref<2x128xf32, #tpu.memory_space<vmem>>, vector<2x128xf32>
    tpu.vector_store %arg6[%c0_6, %c0_7], %8 {strides = array<i32>} : memref<2x128xf32, #tpu.memory_space<vmem>>, vector<2x128xf32>,
    %c0_i32_8 = arith.constant 0 : i32
    %10 = arith.cmpi eq, %arg2, %c0_i32_8 : i32
    %11 = arith.extui %10 : i1 to i32
    %c0_i32_9 = arith.constant 0 : i32
    %12 = arith.cmpi ne, %11, %c0_i32_9 : i32
    scf.if %12 {
      %c0_10 = arith.constant 0 : index
      %c0_11 = arith.constant 0 : index
      %13 = vector.load %arg6[%c0_10, %c0_11] : memref<2x128xf32, #tpu.memory_space<vmem>>, vector<2x128xf32>
      %c0_12 = arith.constant 0 : index
      %c0_13 = arith.constant 0 : index
      %14 = vector.load %arg5[%c0_12, %c0_13] : memref<1x128xf32, #tpu.memory_space<vmem>>, vector<1x128xf32>
      %15 = vector.broadcast %14 : vector<1x128xf32> to vector<2x128xf32>
      %16 = arith.addf %13, %15 : vector<2x128xf32>
      %17 = math.tanh %16 : vector<2x128xf32>
      %c0_14 = arith.constant 0 : index
      %c0_15 = arith.constant 0 : index
      %18 = vector.load %arg6[%c0_14, %c0_15] : memref<2x128xf32, #tpu.memory_space<vmem>>, vector<2x128xf32>
      tpu.vector_store %arg6[%c0_14, %c0_15], %17 {strides = array<i32>} : memref<2x128xf32, #tpu.memory_space<vmem>>, vector<2x128xf32>,
    } else {
    }
    return
  }
  func.func @transform_0(%arg0: i32, %arg1: i32, %arg2: i32) -> (i32, i32) {
    %c0_i32 = arith.constant 0 : i32
    return %arg0, %arg2 : i32, i32
  }
  func.func @transform_1(%arg0: i32, %arg1: i32, %arg2: i32) -> (i32, i32) {
    %c0_i32 = arith.constant 0 : i32
    return %arg2, %arg1 : i32, i32
  }
  func.func @transform_2(%arg0: i32, %arg1: i32, %arg2: i32) -> (i32, i32) {
    %c0_i32 = arith.constant 0 : i32
    %c0_i32_0 = arith.constant 0 : i32
    return %c0_i32, %arg1 : i32, i32
  }
  func.func @transform_3(%arg0: i32, %arg1: i32, %arg2: i32) -> (i32, i32) {
    %c0_i32 = arith.constant 0 : i32
    return %arg0, %arg1 : i32, i32
  }
}

module attributes {stable_mosaic.version = 11 : i64} {
  func.func @_ffn_kernel(%arg0: i32, %arg1: i32, %arg2: memref<256x128xf32, #tpu.memory_space<vmem>>, %arg3: memref<128x512xbf16, #tpu.memory_space<vmem>>, %arg4: memref<1x512xf32, #tpu.memory_space<vmem>>, %arg5: memref<512x128xbf16, #tpu.memory_space<vmem>>, %arg6: memref<1x128xf32, #tpu.memory_space<vmem>>, %arg7: memref<256x128xf32, #tpu.memory_space<vmem>>) attributes {dimension_semantics = [#tpu.dimension_semantics<parallel>, #tpu.dimension_semantics<arbitrary>], iteration_bounds = array<i64: 1, 1>, scalar_prefetch = 0 : i64, scratch_operands = 0 : i64, tpu.core_type = #tpu.core_type<tc>, window_params = [{transform_indices = @transform_0, window_bounds = array<i64: 256, 128>}, {transform_indices = @transform_1, window_bounds = array<i64: 128, 512>}, {transform_indices = @transform_2, window_bounds = array<i64: 1, 512>}, {transform_indices = @transform_3, window_bounds = array<i64: 512, 128>}, {pipeline_mode = #tpu.pipeline_mode<synchronous>, transform_indices = @transform_4, window_bounds = array<i64: 1, 128>}, {transform_indices = @transform_5, window_bounds = array<i64: 256, 128>}]} {
    %c0_i32 = arith.constant 0 : i32
    %0 = arith.cmpi eq, %arg1, %c0_i32 : i32
    %1 = arith.extui %0 : i1 to i32
    %c0_i32_0 = arith.constant 0 : i32
    %2 = arith.cmpi ne, %1, %c0_i32_0 : i32
    scf.if %2 {
      %cst_19 = arith.constant 0.000000e+00 : f32
      %32 = vector.broadcast %cst_19 : f32 to vector<256x128xf32>
      %c0_20 = arith.constant 0 : index
      %c0_21 = arith.constant 0 : index
      %33 = vector.load %arg7[%c0_20, %c0_21] : memref<256x128xf32, #tpu.memory_space<vmem>>, vector<256x128xf32>
      tpu.vector_store %arg7[%c0_20, %c0_21], %32 {strides = array<i32>} : memref<256x128xf32, #tpu.memory_space<vmem>>, vector<256x128xf32>,
    } else {
    }
    %c0 = arith.constant 0 : index
    %c0_1 = arith.constant 0 : index
    %3 = vector.load %arg2[%c0, %c0_1] : memref<256x128xf32, #tpu.memory_space<vmem>>, vector<256x128xf32>
    %4 = arith.truncf %3 : vector<256x128xf32> to vector<256x128xbf16>
    %c0_2 = arith.constant 0 : index
    %c0_3 = arith.constant 0 : index
    %5 = vector.load %arg3[%c0_2, %c0_3] : memref<128x512xbf16, #tpu.memory_space<vmem>>, vector<128x512xbf16>
    %cst = arith.constant dense<0.000000e+00> : vector<256x512xf32>
    %6 = tpu.matmul %4, %5, %cst {dimension_numbers = #tpu.dot_dimension_numbers<[1], [0], [0], [1], [0, 0, 1, 1], [], []>} : vector<256x128xbf16>, vector<128x512xbf16>, vector<256x512xf32> -> vector<256x512xf32>
    %c0_4 = arith.constant 0 : index
    %c0_5 = arith.constant 0 : index
    %7 = vector.load %arg4[%c0_4, %c0_5] : memref<1x512xf32, #tpu.memory_space<vmem>>, vector<1x512xf32>
    %8 = vector.broadcast %7 : vector<1x512xf32> to vector<256x512xf32>
    %9 = arith.addf %6, %8 : vector<256x512xf32>
    %10 = arith.mulf %9, %9 : vector<256x512xf32>
    %11 = arith.mulf %9, %10 : vector<256x512xf32>
    %cst_6 = arith.constant 4.471500e-02 : f32
    %12 = vector.broadcast %cst_6 : f32 to vector<256x512xf32>
    %13 = arith.mulf %12, %11 : vector<256x512xf32>
    %14 = arith.addf %9, %13 : vector<256x512xf32>
    %cst_7 = arith.constant 0.797884583 : f32
    %15 = vector.broadcast %cst_7 : f32 to vector<256x512xf32>
    %16 = arith.mulf %15, %14 : vector<256x512xf32>
    %17 = math.tanh %16 : vector<256x512xf32>
    %cst_8 = arith.constant 1.000000e+00 : f32
    %18 = vector.broadcast %cst_8 : f32 to vector<256x512xf32>
    %19 = arith.addf %18, %17 : vector<256x512xf32>
    %cst_9 = arith.constant 5.000000e-01 : f32
    %20 = vector.broadcast %cst_9 : f32 to vector<256x512xf32>
    %21 = arith.mulf %20, %19 : vector<256x512xf32>
    %22 = arith.mulf %9, %21 : vector<256x512xf32>
    %c0_10 = arith.constant 0 : index
    %c0_11 = arith.constant 0 : index
    %23 = vector.load %arg7[%c0_10, %c0_11] : memref<256x128xf32, #tpu.memory_space<vmem>>, vector<256x128xf32>
    %24 = arith.truncf %22 : vector<256x512xf32> to vector<256x512xbf16>
    %c0_12 = arith.constant 0 : index
    %c0_13 = arith.constant 0 : index
    %25 = vector.load %arg5[%c0_12, %c0_13] : memref<512x128xbf16, #tpu.memory_space<vmem>>, vector<512x128xbf16>
    %cst_14 = arith.constant dense<0.000000e+00> : vector<256x128xf32>
    %26 = tpu.matmul %24, %25, %cst_14 {dimension_numbers = #tpu.dot_dimension_numbers<[1], [0], [0], [1], [0, 0, 1, 1], [], []>} : vector<256x512xbf16>, vector<512x128xbf16>, vector<256x128xf32> -> vector<256x128xf32>
    %27 = arith.addf %23, %26 : vector<256x128xf32>
    %c0_15 = arith.constant 0 : index
    %c0_16 = arith.constant 0 : index
    %28 = vector.load %arg7[%c0_15, %c0_16] : memref<256x128xf32, #tpu.memory_space<vmem>>, vector<256x128xf32>
    tpu.vector_store %arg7[%c0_15, %c0_16], %27 {strides = array<i32>} : memref<256x128xf32, #tpu.memory_space<vmem>>, vector<256x128xf32>,
    %c0_i32_17 = arith.constant 0 : i32
    %29 = arith.cmpi eq, %arg1, %c0_i32_17 : i32
    %30 = arith.extui %29 : i1 to i32
    %c0_i32_18 = arith.constant 0 : i32
    %31 = arith.cmpi ne, %30, %c0_i32_18 : i32
    scf.if %31 {
      %c0_19 = arith.constant 0 : index
      %c0_20 = arith.constant 0 : index
      %32 = vector.load %arg7[%c0_19, %c0_20] : memref<256x128xf32, #tpu.memory_space<vmem>>, vector<256x128xf32>
      %c0_21 = arith.constant 0 : index
      %c0_22 = arith.constant 0 : index
      %33 = vector.load %arg6[%c0_21, %c0_22] : memref<1x128xf32, #tpu.memory_space<vmem>>, vector<1x128xf32>
      %34 = vector.broadcast %33 : vector<1x128xf32> to vector<256x128xf32>
      %35 = arith.addf %32, %34 : vector<256x128xf32>
      %c0_23 = arith.constant 0 : index
      %c0_24 = arith.constant 0 : index
      %36 = vector.load %arg7[%c0_23, %c0_24] : memref<256x128xf32, #tpu.memory_space<vmem>>, vector<256x128xf32>
      tpu.vector_store %arg7[%c0_23, %c0_24], %35 {strides = array<i32>} : memref<256x128xf32, #tpu.memory_space<vmem>>, vector<256x128xf32>,
    } else {
    }
    return
  }
  func.func @transform_0(%arg0: i32, %arg1: i32) -> (i32, i32) {
    %c0_i32 = arith.constant 0 : i32
    %c0_i32_0 = arith.constant 0 : i32
    return %arg0, %c0_i32 : i32, i32
  }
  func.func @transform_1(%arg0: i32, %arg1: i32) -> (i32, i32) {
    %c0_i32 = arith.constant 0 : i32
    %c0_i32_0 = arith.constant 0 : i32
    return %c0_i32, %arg1 : i32, i32
  }
  func.func @transform_2(%arg0: i32, %arg1: i32) -> (i32, i32) {
    %c0_i32 = arith.constant 0 : i32
    %c0_i32_0 = arith.constant 0 : i32
    return %c0_i32, %arg1 : i32, i32
  }
  func.func @transform_3(%arg0: i32, %arg1: i32) -> (i32, i32) {
    %c0_i32 = arith.constant 0 : i32
    %c0_i32_0 = arith.constant 0 : i32
    return %arg1, %c0_i32 : i32, i32
  }
  func.func @transform_4(%arg0: i32, %arg1: i32) -> (i32, i32) {
    %c0_i32 = arith.constant 0 : i32
    %c0_i32_0 = arith.constant 0 : i32
    %c0_i32_1 = arith.constant 0 : i32
    return %c0_i32, %c0_i32_0 : i32, i32
  }
  func.func @transform_5(%arg0: i32, %arg1: i32) -> (i32, i32) {
    %c0_i32 = arith.constant 0 : i32
    %c0_i32_0 = arith.constant 0 : i32
    return %arg0, %c0_i32 : i32, i32
  }
}

</mosaic_0001>

<llo_original>
// kernel: bert_txt_forward.14
$region0: #{bert_txt_forward.14}
  #allocation0 [shape = 'u32[]', space=smem, size = 0x4, offset = 0x4, fixed_abs, tag = 'smem constant byte address 0x4 - core index']
  #allocation1 [shape = 'u32[144,128]{1,0:T(1,128)}', space=vmem, size = 0x12000, scoped, tag = 'internal scratch']
  %s0 = inlined_call_operand.vmem [shape: f32[256,128], index: 0, kind: input, shape index: {}]
  %s1 = inlined_call_operand.vmem [shape: f32[1,128], index: 1, kind: input, shape index: {}]
  %s2 = inlined_call_operand.vmem [shape: f32[1,128], index: 2, kind: input, shape index: {}]
  %s3 = inlined_call_operand.vmem [shape: f32[256,128], index: 3, kind: output, shape index: {}]
  %s4 = sld [smem:[#allocation0]]
  $region22: #{bert_txt_forward.14} parent=0
    _
  %s6 = ssub.s32 1, %s4
  %s7 = scalar_select 0, %s6, %s4
  // Predicated region
  $region2: #{bert_txt_forward.14} parent=0 // pred_check
    _
  $region3: #{bert_txt_forward.14} parent=0 // pred_check_branch
    %9 = sbr.rel (0) target = $region5
  $region4: #{bert_txt_forward.14} parent=0 // pred_region
    _
  $region5: #{bert_txt_forward.14} parent=0 // pred_fallthru
    _
  // Predicated region
  $region6: #{bert_txt_forward.14} parent=0 // pred_check
    _
  $region7: #{bert_txt_forward.14} parent=0 // pred_check_branch
    %11 = sbr.rel (0) target = $region9
  $region8: #{bert_txt_forward.14} parent=0 // pred_region
    _
  $region9: #{bert_txt_forward.14} parent=0 // pred_fallthru
    _
  // Predicated region
  $region10: #{bert_txt_forward.14} parent=0 // pred_check
    _
  $region11: #{bert_txt_forward.14} parent=0 // pred_check_branch
    %13 = sbr.rel (0) target = $region13
  $region12: #{bert_txt_forward.14} parent=0 // pred_region
    _
  $region13: #{bert_txt_forward.14} parent=0 // pred_fallthru
    _
  %v14 = vld [vmem:[%s0] sm:$0xff]
  %v15 = vld [vmem:[%s0 + $0x8] sm:$0xff]
  %v16 = vld [vmem:[%s0 + $0x10] sm:$0xff]
  %v17 = vld [vmem:[%s0 + $0x18] sm:$0xff]
  %v18 = vld [vmem:[%s0 + $0x20] sm:$0xff]
  %v19 = vld [vmem:[%s0 + $0x28] sm:$0xff]
  %v20 = vld [vmem:[%s0 + $0x30] sm:$0xff]
  %v21 = vld [vmem:[%s0 + $0x38] sm:$0xff]
  %v22 = vld [vmem:[%s0 + $0x40] sm:$0xff]
  %v23 = vld [vmem:[%s0 + $0x48] sm:$0xff]
  %v24 = vld [vmem:[%s0 + $0x50] sm:$0xff]
  %v25 = vld [vmem:[%s0 + $0x58] sm:$0xff]
  %v26 = vld [vmem:[%s0 + $0x60] sm:$0xff]
  %v27 = vld [vmem:[%s0 + $0x68] sm:$0xff]
  %v28 = vld [vmem:[%s0 + $0x70] sm:$0xff]
  %v29 = vld [vmem:[%s0 + $0x78] sm:$0xff]
  %v30 = vld [vmem:[%s0 + $0x80] sm:$0xff]
  %v31 = vld [vmem:[%s0 + $0x88] sm:$0xff]
  %v32 = vld [vmem:[%s0 + $0x90] sm:$0xff]
  %v33 = vld [vmem:[%s0 + $0x98] sm:$0xff]
  %v34 = vld [vmem:[%s0 + $0xa0] sm:$0xff]
  %v35 = vld [vmem:[%s0 + $0xa8] sm:$0xff]
  %v36 = vld [vmem:[%s0 + $0xb0] sm:$0xff]
  %v37 = vld [vmem:[%s0 + $0xb8] sm:$0xff]
  %v38 = vld [vmem:[%s0 + $0xc0] sm:$0xff]
  %v39 = vld [vmem:[%s0 + $0xc8] sm:$0xff]
  %v40 = vld [vmem:[%s0 + $0xd0] sm:$0xff]
  %v41 = vld [vmem:[%s0 + $0xd8] sm:$0xff]
  %v42 = vld [vmem:[%s0 + $0xe0] sm:$0xff]
  %v43 = vld [vmem:[%s0 + $0xe8] sm:$0xff]
  %v44 = vld [vmem:[%s0 + $0xf0] sm:$0xff]
  %v45 = vld [vmem:[%s0 + $0xf8] sm:$0xff]
  %46 = vadd.xlane.f32.xlu0 %v14
  %v47 = vpop.xlane.xlu0 %46
  %48 = vadd.xlane.f32.xlu0 %v15
  %v49 = vpop.xlane.xlu0 %48
  %50 = vadd.xlane.f32.xlu0 %v16
  %v51 = vpop.xlane.xlu0 %50
  %52 = vadd.xlane.f32.xlu0 %v17
  %v53 = vpop.xlane.xlu0 %52
  %54 = vadd.xlane.f32.xlu0 %v18
  %v55 = vpop.xlane.xlu0 %54
  %56 = vadd.xlane.f32.xlu0 %v19
  %v57 = vpop.xlane.xlu0 %56
  %58 = vadd.xlane.f32.xlu0 %v20
  %v59 = vpop.xlane.xlu0 %58
  %60 = vadd.xlane.f32.xlu0 %v21
  %v61 = vpop.xlane.xlu0 %60
  %62 = vadd.xlane.f32.xlu0 %v22
  %v63 = vpop.xlane.xlu0 %62
  %64 = vadd.xlane.f32.xlu0 %v23
  %v65 = vpop.xlane.xlu0 %64
  %66 = vadd.xlane.f32.xlu0 %v24
  %v67 = vpop.xlane.xlu0 %66
  %68 = vadd.xlane.f32.xlu0 %v25
  %v69 = vpop.xlane.xlu0 %68
  %70 = vadd.xlane.f32.xlu0 %v26
  %v71 = vpop.xlane.xlu0 %70
  %72 = vadd.xlane.f32.xlu0 %v27
  %v73 = vpop.xlane.xlu0 %72
  %74 = vadd.xlane.f32.xlu0 %v28
  %v75 = vpop.xlane.xlu0 %74
  %76 = vadd.xlane.f32.xlu0 %v29
  %v77 = vpop.xlane.xlu0 %76
  %78 = vadd.xlane.f32.xlu0 %v30
  %v79 = vpop.xlane.xlu0 %78
  %80 = vadd.xlane.f32.xlu0 %v31
  %v81 = vpop.xlane.xlu0 %80
  %82 = vadd.xlane.f32.xlu0 %v32
  %v83 = vpop.xlane.xlu0 %82
  %84 = vadd.xlane.f32.xlu0 %v33
  %v85 = vpop.xlane.xlu0 %84
  %86 = vadd.xlane.f32.xlu0 %v34
  %v87 = vpop.xlane.xlu0 %86
  %88 = vadd.xlane.f32.xlu0 %v35
  %v89 = vpop.xlane.xlu0 %88
  %90 = vadd.xlane.f32.xlu0 %v36
  %v91 = vpop.xlane.xlu0 %90
  %92 = vadd.xlane.f32.xlu0 %v37
  %v93 = vpop.xlane.xlu0 %92
  %94 = vadd.xlane.f32.xlu0 %v38
  %v95 = vpop.xlane.xlu0 %94
  %96 = vadd.xlane.f32.xlu0 %v39
  %v97 = vpop.xlane.xlu0 %96
  %98 = vadd.xlane.f32.xlu0 %v40
  %v99 = vpop.xlane.xlu0 %98
  %100 = vadd.xlane.f32.xlu0 %v41
  %v101 = vpop.xlane.xlu0 %100
  %102 = vadd.xlane.f32.xlu0 %v42
  %v103 = vpop.xlane.xlu0 %102
  %104 = vadd.xlane.f32.xlu0 %v43
  %v105 = vpop.xlane.xlu0 %104
  %106 = vadd.xlane.f32.xlu0 %v44
  %v107 = vpop.xlane.xlu0 %106
  %108 = vadd.xlane.f32.xlu0 %v45
  %v109 = vpop.xlane.xlu0 %108
  %v110 = vrcp.pop 128.0
  %v111 = vmul.f32 %v47, %v110
  %v112 = vmul.f32 %v49, %v110
  %v113 = vmul.f32 %v51, %v110
  %v114 = vmul.f32 %v53, %v110
  %v115 = vmul.f32 %v55, %v110
  %v116 = vmul.f32 %v57, %v110
  %v117 = vmul.f32 %v59, %v110
  %v118 = vmul.f32 %v61, %v110
  %v119 = vmul.f32 %v63, %v110
  %v120 = vmul.f32 %v65, %v110
  %v121 = vmul.f32 %v67, %v110
  %v122 = vmul.f32 %v69, %v110
  %v123 = vmul.f32 %v71, %v110
  %v124 = vmul.f32 %v73, %v110
  %v125 = vmul.f32 %v75, %v110
  %v126 = vmul.f32 %v77, %v110
  %v127 = vmul.f32 %v79, %v110
  %v128 = vmul.f32 %v81, %v110
  %v129 = vmul.f32 %v83, %v110
  %v130 = vmul.f32 %v85, %v110
  %v131 = vmul.f32 %v87, %v110
  %v132 = vmul.f32 %v89, %v110
  %v133 = vmul.f32 %v91, %v110
  %v134 = vmul.f32 %v93, %v110
  %v135 = vmul.f32 %v95, %v110
  %v136 = vmul.f32 %v97, %v110
  %v137 = vmul.f32 %v99, %v110
  %v138 = vmul.f32 %v101, %v110
  %v139 = vmul.f32 %v103, %v110
  %v140 = vmul.f32 %v105, %v110
  %v141 = vmul.f32 %v107, %v110
  %v142 = vmul.f32 %v109, %v110
  %v143 = vmul.f32 %v14, %v14
  %v144 = vmul.f32 %v15, %v15
  %v145 = vmul.f32 %v16, %v16
  %v146 = vmul.f32 %v17, %v17
  %v147 = vmul.f32 %v18, %v18
  %v148 = vmul.f32 %v19, %v19
  %v149 = vmul.f32 %v20, %v20
  %v150 = vmul.f32 %v21, %v21
  %v151 = vmul.f32 %v22, %v22
  %v152 = vmul.f32 %v23, %v23
  %v153 = vmul.f32 %v24, %v24
  %v154 = vmul.f32 %v25, %v25
  %v155 = vmul.f32 %v26, %v26
  %v156 = vmul.f32 %v27, %v27
  %v157 = vmul.f32 %v28, %v28
  %v158 = vmul.f32 %v29, %v29
  %v159 = vmul.f32 %v30, %v30
  %v160 = vmul.f32 %v31, %v31
  %v161 = vmul.f32 %v32, %v32
  %v162 = vmul.f32 %v33, %v33
  %v163 = vmul.f32 %v34, %v34
  %v164 = vmul.f32 %v35, %v35
  %v165 = vmul.f32 %v36, %v36
  %v166 = vmul.f32 %v37, %v37
  %v167 = vmul.f32 %v38, %v38
  %v168 = vmul.f32 %v39, %v39
  %v169 = vmul.f32 %v40, %v40
  %v170 = vmul.f32 %v41, %v41
  %v171 = vmul.f32 %v42, %v42
  %v172 = vmul.f32 %v43, %v43
  %v173 = vmul.f32 %v44, %v44
  %v174 = vmul.f32 %v45, %v45
  %175 = vadd.xlane.f32.xlu0 %v143
  %v176 = vpop.xlane.xlu0 %175
  %177 = vadd.xlane.f32.xlu0 %v144
  %v178 = vpop.xlane.xlu0 %177
  %179 = vadd.xlane.f32.xlu0 %v145
  %v180 = vpop.xlane.xlu0 %179
  %181 = vadd.xlane.f32.xlu0 %v146
  %v182 = vpop.xlane.xlu0 %181
  %183 = vadd.xlane.f32.xlu0 %v147
  %v184 = vpop.xlane.xlu0 %183
  %185 = vadd.xlane.f32.xlu0 %v148
  %v186 = vpop.xlane.xlu0 %185
  %187 = vadd.xlane.f32.xlu0 %v149
  %v188 = vpop.xlane.xlu0 %187
  %189 = vadd.xlane.f32.xlu0 %v150
  %v190 = vpop.xlane.xlu0 %189
  %191 = vadd.xlane.f32.xlu0 %v151
  %v192 = vpop.xlane.xlu0 %191
  %193 = vadd.xlane.f32.xlu0 %v152
  %v194 = vpop.xlane.xlu0 %193
  %195 = vadd.xlane.f32.xlu0 %v153
  %v196 = vpop.xlane.xlu0 %195
  %197 = vadd.xlane.f32.xlu0 %v154
  %v198 = vpop.xlane.xlu0 %197
  %199 = vadd.xlane.f32.xlu0 %v155
  %v200 = vpop.xlane.xlu0 %199
  %201 = vadd.xlane.f32.xlu0 %v156
  %v202 = vpop.xlane.xlu0 %201
  %203 = vadd.xlane.f32.xlu0 %v157
  %v204 = vpop.xlane.xlu0 %203
  %205 = vadd.xlane.f32.xlu0 %v158
  %v206 = vpop.xlane.xlu0 %205
  %207 = vadd.xlane.f32.xlu0 %v159
  %v208 = vpop.xlane.xlu0 %207
  %209 = vadd.xlane.f32.xlu0 %v160
  %v210 = vpop.xlane.xlu0 %209
  %211 = vadd.xlane.f32.xlu0 %v161
  %v212 = vpop.xlane.xlu0 %211
  %213 = vadd.xlane.f32.xlu0 %v162
  %v214 = vpop.xlane.xlu0 %213
  %215 = vadd.xlane.f32.xlu0 %v163
  %v216 = vpop.xlane.xlu0 %215
  %217 = vadd.xlane.f32.xlu0 %v164
  %v218 = vpop.xlane.xlu0 %217
  %219 = vadd.xlane.f32.xlu0 %v165
  %v220 = vpop.xlane.xlu0 %219
  %221 = vadd.xlane.f32.xlu0 %v166
  %v222 = vpop.xlane.xlu0 %221
  %223 = vadd.xlane.f32.xlu0 %v167
  %v224 = vpop.xlane.xlu0 %223
  %225 = vadd.xlane.f32.xlu0 %v168
  %v226 = vpop.xlane.xlu0 %225
  %227 = vadd.xlane.f32.xlu0 %v169
  %v228 = vpop.xlane.xlu0 %227
  %229 = vadd.xlane.f32.xlu0 %v170
  %v230 = vpop.xlane.xlu0 %229
  %231 = vadd.xlane.f32.xlu0 %v171
  %v232 = vpop.xlane.xlu0 %231
  %233 = vadd.xlane.f32.xlu0 %v172
  %v234 = vpop.xlane.xlu0 %233
  %235 = vadd.xlane.f32.xlu0 %v173
  %v236 = vpop.xlane.xlu0 %235
  %237 = vadd.xlane.f32.xlu0 %v174
  %v238 = vpop.xlane.xlu0 %237
  %v239 = vmul.f32 %v176, %v110
  %v240 = vmul.f32 %v178, %v110
  %v241 = vmul.f32 %v180, %v110
  %v242 = vmul.f32 %v182, %v110
  %v243 = vmul.f32 %v184, %v110
  %v244 = vmul.f32 %v186, %v110
  %v245 = vmul.f32 %v188, %v110
  %v246 = vmul.f32 %v190, %v110
  %v247 = vmul.f32 %v192, %v110
  %v248 = vmul.f32 %v194, %v110
  %v249 = vmul.f32 %v196, %v110
  %v250 = vmul.f32 %v198, %v110
  %v251 = vmul.f32 %v200, %v110
  %v252 = vmul.f32 %v202, %v110
  %v253 = vmul.f32 %v204, %v110
  %v254 = vmul.f32 %v206, %v110
  %v255 = vmul.f32 %v208, %v110
  %v256 = vmul.f32 %v210, %v110
  %v257 = vmul.f32 %v212, %v110
  %v258 = vmul.f32 %v214, %v110
  %v259 = vmul.f32 %v216, %v110
  %v260 = vmul.f32 %v218, %v110
  %v261 = vmul.f32 %v220, %v110
  %v262 = vmul.f32 %v222, %v110
  %v263 = vmul.f32 %v224, %v110
  %v264 = vmul.f32 %v226, %v110
  %v265 = vmul.f32 %v228, %v110
  %v266 = vmul.f32 %v230, %v110
  %v267 = vmul.f32 %v232, %v110
  %v268 = vmul.f32 %v234, %v110
  %v269 = vmul.f32 %v236, %v110
  %v270 = vmul.f32 %v238, %v110
  %v271 = vmul.f32 %v111, %v111
  %v272 = vmul.f32 %v112, %v112
  %v273 = vmul.f32 %v113, %v113
  %v274 = vmul.f32 %v114, %v114
  %v275 = vmul.f32 %v115, %v115
  %v276 = vmul.f32 %v116, %v116
  %v277 = vmul.f32 %v117, %v117
  %v278 = vmul.f32 %v118, %v118
  %v279 = vmul.f32 %v119, %v119
  %v280 = vmul.f32 %v120, %v120
  %v281 = vmul.f32 %v121, %v121
  %v282 = vmul.f32 %v122, %v122
  %v283 = vmul.f32 %v123, %v123
  %v284 = vmul.f32 %v124, %v124
  %v285 = vmul.f32 %v125, %v125
  %v286 = vmul.f32 %v126, %v126
  %v287 = vmul.f32 %v127, %v127
  %v288 = vmul.f32 %v128, %v128
  %v289 = vmul.f32 %v129, %v129
  %v290 = vmul.f32 %v130, %v130
  %v291 = vmul.f32 %v131, %v131
  %v292 = vmul.f32 %v132, %v132
  %v293 = vmul.f32 %v133, %v133
  %v294 = vmul.f32 %v134, %v134
  %v295 = vmul.f32 %v135, %v135
  %v296 = vmul.f32 %v136, %v136
  %v297 = vmul.f32 %v137, %v137
  %v298 = vmul.f32 %v138, %v138
  %v299 = vmul.f32 %v139, %v139
  %v300 = vmul.f32 %v140, %v140
  %v301 = vmul.f32 %v141, %v141
  %v302 = vmul.f32 %v142, %v142
  %v303 = vsub.f32 %v239, %v271
  %v304 = vsub.f32 %v240, %v272
  %v305 = vsub.f32 %v241, %v273
  %v306 = vsub.f32 %v242, %v274
  %v307 = vsub.f32 %v243, %v275
  %v308 = vsub.f32 %v244, %v276
  %v309 = vsub.f32 %v245, %v277
  %v310 = vsub.f32 %v246, %v278
  %v311 = vsub.f32 %v247, %v279
  %v312 = vsub.f32 %v248, %v280
  %v313 = vsub.f32 %v249, %v281
  %v314 = vsub.f32 %v250, %v282
  %v315 = vsub.f32 %v251, %v283
  %v316 = vsub.f32 %v252, %v284
  %v317 = vsub.f32 %v253, %v285
  %v318 = vsub.f32 %v254, %v286
  %v319 = vsub.f32 %v255, %v287
  %v320 = vsub.f32 %v256, %v288
  %v321 = vsub.f32 %v257, %v289
  %v322 = vsub.f32 %v258, %v290
  %v323 = vsub.f32 %v259, %v291
  %v324 = vsub.f32 %v260, %v292
  %v325 = vsub.f32 %v261, %v293
  %v326 = vsub.f32 %v262, %v294
  %v327 = vsub.f32 %v263, %v295
  %v328 = vsub.f32 %v264, %v296
  %v329 = vsub.f32 %v265, %v297
  %v330 = vsub.f32 %v266, %v298
  %v331 = vsub.f32 %v267, %v299
  %v332 = vsub.f32 %v268, %v300
  %v333 = vsub.f32 %v269, %v301
  %v334 = vsub.f32 %v270, %v302
  %v335 = vmax.f32 %v303, 0.0
  %v336 = vmax.f32 %v304, 0.0
  %v337 = vmax.f32 %v305, 0.0
  %v338 = vmax.f32 %v306, 0.0
  %v339 = vmax.f32 %v307, 0.0
  %v340 = vmax.f32 %v308, 0.0
  %v341 = vmax.f32 %v309, 0.0
  %v342 = vmax.f32 %v310, 0.0
  %v343 = vmax.f32 %v311, 0.0
  %v344 = vmax.f32 %v312, 0.0
  %v345 = vmax.f32 %v313, 0.0
  %v346 = vmax.f32 %v314, 0.0
  %v347 = vmax.f32 %v315, 0.0
  %v348 = vmax.f32 %v316, 0.0
  %v349 = vmax.f32 %v317, 0.0
  %v350 = vmax.f32 %v318, 0.0
  %v351 = vmax.f32 %v319, 0.0
  %v352 = vmax.f32 %v320, 0.0
  %v353 = vmax.f32 %v321, 0.0
  %v354 = vmax.f32 %v322, 0.0
  %v355 = vmax.f32 %v323, 0.0
  %v356 = vmax.f32 %v324, 0.0
  %v357 = vmax.f32 %v325, 0.0
  %v358 = vmax.f32 %v326, 0.0
  %v359 = vmax.f32 %v327, 0.0
  %v360 = vmax.f32 %v328, 0.0
  %v361 = vmax.f32 %v329, 0.0
  %v362 = vmax.f32 %v330, 0.0
  %v363 = vmax.f32 %v331, 0.0
  %v364 = vmax.f32 %v332, 0.0
  %v365 = vmax.f32 %v333, 0.0
  %v366 = vmax.f32 %v334, 0.0
  %v367 = vsub.f32 %v14, %v111
  %v368 = vsub.f32 %v15, %v112
  %v369 = vsub.f32 %v16, %v113
  %v370 = vsub.f32 %v17, %v114
  %v371 = vsub.f32 %v18, %v115
  %v372 = vsub.f32 %v19, %v116
  %v373 = vsub.f32 %v20, %v117
  %v374 = vsub.f32 %v21, %v118
  %v375 = vsub.f32 %v22, %v119
  %v376 = vsub.f32 %v23, %v120
  %v377 = vsub.f32 %v24, %v121
  %v378 = vsub.f32 %v25, %v122
  %v379 = vsub.f32 %v26, %v123
  %v380 = vsub.f32 %v27, %v124
  %v381 = vsub.f32 %v28, %v125
  %v382 = vsub.f32 %v29, %v126
  %v383 = vsub.f32 %v30, %v127
  %v384 = vsub.f32 %v31, %v128
  %v385 = vsub.f32 %v32, %v129
  %v386 = vsub.f32 %v33, %v130
  %v387 = vsub.f32 %v34, %v131
  %v388 = vsub.f32 %v35, %v132
  %v389 = vsub.f32 %v36, %v133
  %v390 = vsub.f32 %v37, %v134
  %v391 = vsub.f32 %v38, %v135
  %v392 = vsub.f32 %v39, %v136
  %v393 = vsub.f32 %v40, %v137
  %v394 = vsub.f32 %v41, %v138
  %v395 = vsub.f32 %v42, %v139
  %v396 = vsub.f32 %v43, %v140
  %v397 = vsub.f32 %v44, %v141
  %v398 = vsub.f32 %v45, %v142
  %v399 = vadd.f32 %v335, 1e-12
  %v400 = vadd.f32 %v336, 1e-12
  %v401 = vadd.f32 %v337, 1e-12
  %v402 = vadd.f32 %v338, 1e-12
  %v403 = vadd.f32 %v339, 1e-12
  %v404 = vadd.f32 %v340, 1e-12
  %v405 = vadd.f32 %v341, 1e-12
  %v406 = vadd.f32 %v342, 1e-12
  %v407 = vadd.f32 %v343, 1e-12
  %v408 = vadd.f32 %v344, 1e-12
  %v409 = vadd.f32 %v345, 1e-12
  %v410 = vadd.f32 %v346, 1e-12
  %v411 = vadd.f32 %v347, 1e-12
  %v412 = vadd.f32 %v348, 1e-12
  %v413 = vadd.f32 %v349, 1e-12
  %v414 = vadd.f32 %v350, 1e-12
  %v415 = vadd.f32 %v351, 1e-12
  %v416 = vadd.f32 %v352, 1e-12
  %v417 = vadd.f32 %v353, 1e-12
  %v418 = vadd.f32 %v354, 1e-12
  %v419 = vadd.f32 %v355, 1e-12
  %v420 = vadd.f32 %v356, 1e-12
  %v421 = vadd.f32 %v357, 1e-12
  %v422 = vadd.f32 %v358, 1e-12
  %v423 = vadd.f32 %v359, 1e-12
  %v424 = vadd.f32 %v360, 1e-12
  %v425 = vadd.f32 %v361, 1e-12
  %v426 = vadd.f32 %v362, 1e-12
  %v427 = vadd.f32 %v363, 1e-12
  %v428 = vadd.f32 %v364, 1e-12
  %v429 = vadd.f32 %v365, 1e-12
  %v430 = vadd.f32 %v366, 1e-12
  %v431 = vrsqrt.pop %v399
  %v432 = vrsqrt.pop %v400
  %v433 = vrsqrt.pop %v401
  %v434 = vrsqrt.pop %v402
  %v435 = vrsqrt.pop %v403
  %v436 = vrsqrt.pop %v404
  %v437 = vrsqrt.pop %v405
  %v438 = vrsqrt.pop %v406
  %v439 = vrsqrt.pop %v407
  %v440 = vrsqrt.pop %v408
  %v441 = vrsqrt.pop %v409
  %v442 = vrsqrt.pop %v410
  %v443 = vrsqrt.pop %v411
  %v444 = vrsqrt.pop %v412
  %v445 = vrsqrt.pop %v413
  %v446 = vrsqrt.pop %v414
  %v447 = vrsqrt.pop %v415
  %v448 = vrsqrt.pop %v416
  %v449 = vrsqrt.pop %v417
  %v450 = vrsqrt.pop %v418
  %v451 = vrsqrt.pop %v419
  %v452 = vrsqrt.pop %v420
  %v453 = vrsqrt.pop %v421
  %v454 = vrsqrt.pop %v422
  %v455 = vrsqrt.pop %v423
  %v456 = vrsqrt.pop %v424
  %v457 = vrsqrt.pop %v425
  %v458 = vrsqrt.pop %v426
  %v459 = vrsqrt.pop %v427
  %v460 = vrsqrt.pop %v428
  %v461 = vrsqrt.pop %v429
  %v462 = vrsqrt.pop %v430
  %v463 = vmul.f32 %v367, %v431
  %v464 = vmul.f32 %v368, %v432
  %v465 = vmul.f32 %v369, %v433
  %v466 = vmul.f32 %v370, %v434
  %v467 = vmul.f32 %v371, %v435
  %v468 = vmul.f32 %v372, %v436
  %v469 = vmul.f32 %v373, %v437
  %v470 = vmul.f32 %v374, %v438
  %v471 = vmul.f32 %v375, %v439
  %v472 = vmul.f32 %v376, %v440
  %v473 = vmul.f32 %v377, %v441
  %v474 = vmul.f32 %v378, %v442
  %v475 = vmul.f32 %v379, %v443
  %v476 = vmul.f32 %v380, %v444
  %v477 = vmul.f32 %v381, %v445
  %v478 = vmul.f32 %v382, %v446
  %v479 = vmul.f32 %v383, %v447
  %v480 = vmul.f32 %v384, %v448
  %v481 = vmul.f32 %v385, %v449
  %v482 = vmul.f32 %v386, %v450
  %v483 = vmul.f32 %v387, %v451
  %v484 = vmul.f32 %v388, %v452
  %v485 = vmul.f32 %v389, %v453
  %v486 = vmul.f32 %v390, %v454
  %v487 = vmul.f32 %v391, %v455
  %v488 = vmul.f32 %v392, %v456
  %v489 = vmul.f32 %v393, %v457
  %v490 = vmul.f32 %v394, %v458
  %v491 = vmul.f32 %v395, %v459
  %v492 = vmul.f32 %v396, %v460
  %v493 = vmul.f32 %v397, %v461
  %v494 = vmul.f32 %v398, %v462
  %v495 = vld [vmem:[%s1] sm:$0x1]
  %v497 = vlaneseq
  %v498 = vshrl.u32 %v497, 7
  %v499 = vsub.s32 0, %v498
  %v500 = vrot.slane %v495, %v499
  %v502 = vmul.f32 %v463, %v500
  %v503 = vmul.f32 %v464, %v500
  %v504 = vmul.f32 %v465, %v500
  %v505 = vmul.f32 %v466, %v500
  %v506 = vmul.f32 %v467, %v500
  %v507 = vmul.f32 %v468, %v500
  %v508 = vmul.f32 %v469, %v500
  %v509 = vmul.f32 %v470, %v500
  %v510 = vmul.f32 %v471, %v500
  %v511 = vmul.f32 %v472, %v500
  %v512 = vmul.f32 %v473, %v500
  %v513 = vmul.f32 %v474, %v500
  %v514 = vmul.f32 %v475, %v500
  %v515 = vmul.f32 %v476, %v500
  %v516 = vmul.f32 %v477, %v500
  %v517 = vmul.f32 %v478, %v500
  %v518 = vmul.f32 %v479, %v500
  %v519 = vmul.f32 %v480, %v500
  %v520 = vmul.f32 %v481, %v500
  %v521 = vmul.f32 %v482, %v500
  %v522 = vmul.f32 %v483, %v500
  %v523 = vmul.f32 %v484, %v500
  %v524 = vmul.f32 %v485, %v500
  %v525 = vmul.f32 %v486, %v500
  %v526 = vmul.f32 %v487, %v500
  %v527 = vmul.f32 %v488, %v500
  %v528 = vmul.f32 %v489, %v500
  %v529 = vmul.f32 %v490, %v500
  %v530 = vmul.f32 %v491, %v500
  %v531 = vmul.f32 %v492, %v500
  %v532 = vmul.f32 %v493, %v500
  %v533 = vmul.f32 %v494, %v500
  %v534 = vld [vmem:[%s2] sm:$0x1]
  %v536 = vlaneseq
  %v537 = vshrl.u32 %v536, 7
  %v538 = vsub.s32 0, %v537
  %v539 = vrot.slane %v534, %v538
  %v541 = vadd.f32 %v502, %v539
  %v542 = vadd.f32 %v503, %v539
  %v543 = vadd.f32 %v504, %v539
  %v544 = vadd.f32 %v505, %v539
  %v545 = vadd.f32 %v506, %v539
  %v546 = vadd.f32 %v507, %v539
  %v547 = vadd.f32 %v508, %v539
  %v548 = vadd.f32 %v509, %v539
  %v549 = vadd.f32 %v510, %v539
  %v550 = vadd.f32 %v511, %v539
  %v551 = vadd.f32 %v512, %v539
  %v552 = vadd.f32 %v513, %v539
  %v553 = vadd.f32 %v514, %v539
  %v554 = vadd.f32 %v515, %v539
  %v555 = vadd.f32 %v516, %v539
  %v556 = vadd.f32 %v517, %v539
  %v557 = vadd.f32 %v518, %v539
  %v558 = vadd.f32 %v519, %v539
  %v559 = vadd.f32 %v520, %v539
  %v560 = vadd.f32 %v521, %v539
  %v561 = vadd.f32 %v522, %v539
  %v562 = vadd.f32 %v523, %v539
  %v563 = vadd.f32 %v524, %v539
  %v564 = vadd.f32 %v525, %v539
  %v565 = vadd.f32 %v526, %v539
  %v566 = vadd.f32 %v527, %v539
  %v567 = vadd.f32 %v528, %v539
  %v568 = vadd.f32 %v529, %v539
  %v569 = vadd.f32 %v530, %v539
  %v570 = vadd.f32 %v531, %v539
  %v571 = vadd.f32 %v532, %v539
  %v572 = vadd.f32 %v533, %v539
  %573 = vst [vmem:[%s3] sm:$0xff] %v541
  %574 = vst [vmem:[%s3 + $0x8] sm:$0xff] %v542
  %575 = vst [vmem:[%s3 + $0x10] sm:$0xff] %v543
  %576 = vst [vmem:[%s3 + $0x18] sm:$0xff] %v544
  %577 = vst [vmem:[%s3 + $0x20] sm:$0xff] %v545
  %578 = vst [vmem:[%s3 + $0x28] sm:$0xff] %v546
  %579 = vst [vmem:[%s3 + $0x30] sm:$0xff] %v547
  %580 = vst [vmem:[%s3 + $0x38] sm:$0xff] %v548
  %581 = vst [vmem:[%s3 + $0x40] sm:$0xff] %v549
  %582 = vst [vmem:[%s3 + $0x48] sm:$0xff] %v550
  %583 = vst [vmem:[%s3 + $0x50] sm:$0xff] %v551
  %584 = vst [vmem:[%s3 + $0x58] sm:$0xff] %v552
  %585 = vst [vmem:[%s3 + $0x60] sm:$0xff] %v553
  %586 = vst [vmem:[%s3 + $0x68] sm:$0xff] %v554
  %587 = vst [vmem:[%s3 + $0x70] sm:$0xff] %v555
  %588 = vst [vmem:[%s3 + $0x78] sm:$0xff] %v556
  %589 = vst [vmem:[%s3 + $0x80] sm:$0xff] %v557
  %590 = vst [vmem:[%s3 + $0x88] sm:$0xff] %v558
  %591 = vst [vmem:[%s3 + $0x90] sm:$0xff] %v559
  %592 = vst [vmem:[%s3 + $0x98] sm:$0xff] %v560
  %593 = vst [vmem:[%s3 + $0xa0] sm:$0xff] %v561
  %594 = vst [vmem:[%s3 + $0xa8] sm:$0xff] %v562
  %595 = vst [vmem:[%s3 + $0xb0] sm:$0xff] %v563
  %596 = vst [vmem:[%s3 + $0xb8] sm:$0xff] %v564
  %597 = vst [vmem:[%s3 + $0xc0] sm:$0xff] %v565
  %598 = vst [vmem:[%s3 + $0xc8] sm:$0xff] %v566
  %599 = vst [vmem:[%s3 + $0xd0] sm:$0xff] %v567
  %600 = vst [vmem:[%s3 + $0xd8] sm:$0xff] %v568
  %601 = vst [vmem:[%s3 + $0xe0] sm:$0xff] %v569
  %602 = vst [vmem:[%s3 + $0xe8] sm:$0xff] %v570
  %603 = vst [vmem:[%s3 + $0xf0] sm:$0xff] %v571
  %604 = vst [vmem:[%s3 + $0xf8] sm:$0xff] %v572
  // Predicated region
  $region14: #{bert_txt_forward.14} parent=0 // pred_check
    _
  $region15: #{bert_txt_forward.14} parent=0 // pred_check_branch
    %606 = sbr.rel (0) target = $region17
  $region16: #{bert_txt_forward.14} parent=0 // pred_region
    _
  $region17: #{bert_txt_forward.14} parent=0 // pred_fallthru
    _
  // Predicated region
  $region18: #{bert_txt_forward.14} parent=0 // pred_check
    _
  $region19: #{bert_txt_forward.14} parent=0 // pred_check_branch
    %608 = sbr.rel (0) target = $region21
  $region20: #{bert_txt_forward.14} parent=0 // pred_region
    _
  $region21: #{bert_txt_forward.14} parent=0 // pred_fallthru
    _

// kernel: bert_txt_forward.17
$region0: #{bert_txt_forward.17}
  #allocation0 [shape = 'u32[]', space=smem, size = 0x4, offset = 0x4, fixed_abs, tag = 'smem constant byte address 0x4 - core index']
  #allocation1 [shape = 'u32[144,128]{1,0:T(1,128)}', space=vmem, size = 0x12000, scoped, tag = 'internal scratch']
  %s0 = inlined_call_operand.vmem [shape: f32[256,128], index: 0, kind: input, shape index: {}]
  %s1 = inlined_call_operand.vmem [shape: bf16[128,128], index: 1, kind: input, shape index: {}]
  %s2 = inlined_call_operand.vmem [shape: f32[1,128], index: 2, kind: input, shape index: {}]
  %s3 = inlined_call_operand.vmem [shape: f32[256,128], index: 3, kind: output, shape index: {}]
  %s4 = sld [smem:[#allocation0]]
  $region30: #{bert_txt_forward.17} parent=0
    _
  %s6 = ssub.s32 1, %s4
  %s7 = scalar_select 0, %s6, %s4
  // Predicated region
  $region2: #{bert_txt_forward.17} parent=0 // pred_check
    _
  $region3: #{bert_txt_forward.17} parent=0 // pred_check_branch
    %9 = sbr.rel (0) target = $region5
  $region4: #{bert_txt_forward.17} parent=0 // pred_region
    _
  $region5: #{bert_txt_forward.17} parent=0 // pred_fallthru
    _
  // Predicated region
  $region6: #{bert_txt_forward.17} parent=0 // pred_check
    _
  $region7: #{bert_txt_forward.17} parent=0 // pred_check_branch
    %11 = sbr.rel (0) target = $region9
  $region8: #{bert_txt_forward.17} parent=0 // pred_region
    _
  $region9: #{bert_txt_forward.17} parent=0 // pred_fallthru
    _
  // Predicated region
  $region10: #{bert_txt_forward.17} parent=0 // pred_check
    _
  $region11: #{bert_txt_forward.17} parent=0 // pred_check_branch
    %13 = sbr.rel (0) target = $region13
  $region12: #{bert_txt_forward.17} parent=0 // pred_region
    _
  $region13: #{bert_txt_forward.17} parent=0 // pred_fallthru
    _
  %p15 = scmp.eq.s32.totalorder 0, 0
  // Predicated region
  $region14: #{bert_txt_forward.17} parent=0 // pred_check
    %p16 = pneg %p15
  $region15: #{bert_txt_forward.17} parent=0 // pred_check_branch
    %18 = sbr.rel (%p16) target = $region17
  $region16: #{bert_txt_forward.17} parent=0 // pred_region
    %19 = vst [vmem:[%s3] sm:$0xff] 0.0
    %20 = vst [vmem:[%s3 + $0x8] sm:$0xff] 0.0
    %21 = vst [vmem:[%s3 + $0x10] sm:$0xff] 0.0
    %22 = vst [vmem:[%s3 + $0x18] sm:$0xff] 0.0
    %23 = vst [vmem:[%s3 + $0x20] sm:$0xff] 0.0
    %24 = vst [vmem:[%s3 + $0x28] sm:$0xff] 0.0
    %25 = vst [vmem:[%s3 + $0x30] sm:$0xff] 0.0
    %26 = vst [vmem:[%s3 + $0x38] sm:$0xff] 0.0
    %27 = vst [vmem:[%s3 + $0x40] sm:$0xff] 0.0
    %28 = vst [vmem:[%s3 + $0x48] sm:$0xff] 0.0
    %29 = vst [vmem:[%s3 + $0x50] sm:$0xff] 0.0
    %30 = vst [vmem:[%s3 + $0x58] sm:$0xff] 0.0
    %31 = vst [vmem:[%s3 + $0x60] sm:$0xff] 0.0
    %32 = vst [vmem:[%s3 + $0x68] sm:$0xff] 0.0
    %33 = vst [vmem:[%s3 + $0x70] sm:$0xff] 0.0
    %34 = vst [vmem:[%s3 + $0x78] sm:$0xff] 0.0
    %35 = vst [vmem:[%s3 + $0x80] sm:$0xff] 0.0
    %36 = vst [vmem:[%s3 + $0x88] sm:$0xff] 0.0
    %37 = vst [vmem:[%s3 + $0x90] sm:$0xff] 0.0
    %38 = vst [vmem:[%s3 + $0x98] sm:$0xff] 0.0
    %39 = vst [vmem:[%s3 + $0xa0] sm:$0xff] 0.0
    %40 = vst [vmem:[%s3 + $0xa8] sm:$0xff] 0.0
    %41 = vst [vmem:[%s3 + $0xb0] sm:$0xff] 0.0
    %42 = vst [vmem:[%s3 + $0xb8] sm:$0xff] 0.0
    %43 = vst [vmem:[%s3 + $0xc0] sm:$0xff] 0.0
    %44 = vst [vmem:[%s3 + $0xc8] sm:$0xff] 0.0
    %45 = vst [vmem:[%s3 + $0xd0] sm:$0xff] 0.0
    %46 = vst [vmem:[%s3 + $0xd8] sm:$0xff] 0.0
    %47 = vst [vmem:[%s3 + $0xe0] sm:$0xff] 0.0
    %48 = vst [vmem:[%s3 + $0xe8] sm:$0xff] 0.0
    %49 = vst [vmem:[%s3 + $0xf0] sm:$0xff] 0.0
    %50 = vst [vmem:[%s3 + $0xf8] sm:$0xff] 0.0
  $region17: #{bert_txt_forward.17} parent=0 // pred_fallthru
    _
  %v51 = vld [vmem:[%s3] sm:$0xff]
  %v52 = vld [vmem:[%s3 + $0x8] sm:$0xff]
  %v53 = vld [vmem:[%s3 + $0x10] sm:$0xff]
  %v54 = vld [vmem:[%s3 + $0x18] sm:$0xff]
  %v55 = vld [vmem:[%s3 + $0x20] sm:$0xff]
  %v56 = vld [vmem:[%s3 + $0x28] sm:$0xff]
  %v57 = vld [vmem:[%s3 + $0x30] sm:$0xff]
  %v58 = vld [vmem:[%s3 + $0x38] sm:$0xff]
  %v59 = vld [vmem:[%s3 + $0x40] sm:$0xff]
  %v60 = vld [vmem:[%s3 + $0x48] sm:$0xff]
  %v61 = vld [vmem:[%s3 + $0x50] sm:$0xff]
  %v62 = vld [vmem:[%s3 + $0x58] sm:$0xff]
  %v63 = vld [vmem:[%s3 + $0x60] sm:$0xff]
  %v64 = vld [vmem:[%s3 + $0x68] sm:$0xff]
  %v65 = vld [vmem:[%s3 + $0x70] sm:$0xff]
  %v66 = vld [vmem:[%s3 + $0x78] sm:$0xff]
  %v67 = vld [vmem:[%s3 + $0x80] sm:$0xff]
  %v68 = vld [vmem:[%s3 + $0x88] sm:$0xff]
  %v69 = vld [vmem:[%s3 + $0x90] sm:$0xff]
  %v70 = vld [vmem:[%s3 + $0x98] sm:$0xff]
  %v71 = vld [vmem:[%s3 + $0xa0] sm:$0xff]
  %v72 = vld [vmem:[%s3 + $0xa8] sm:$0xff]
  %v73 = vld [vmem:[%s3 + $0xb0] sm:$0xff]
  %v74 = vld [vmem:[%s3 + $0xb8] sm:$0xff]
  %v75 = vld [vmem:[%s3 + $0xc0] sm:$0xff]
  %v76 = vld [vmem:[%s3 + $0xc8] sm:$0xff]
  %v77 = vld [vmem:[%s3 + $0xd0] sm:$0xff]
  %v78 = vld [vmem:[%s3 + $0xd8] sm:$0xff]
  %v79 = vld [vmem:[%s3 + $0xe0] sm:$0xff]
  %v80 = vld [vmem:[%s3 + $0xe8] sm:$0xff]
  %v81 = vld [vmem:[%s3 + $0xf0] sm:$0xff]
  %v82 = vld [vmem:[%s3 + $0xf8] sm:$0xff]
  %v83 = vld [vmem:[%s0] sm:$0xff]
  %v84 = vld [vmem:[%s0 + $0x8] sm:$0xff]
  %v85 = vld [vmem:[%s0 + $0x10] sm:$0xff]
  %v86 = vld [vmem:[%s0 + $0x18] sm:$0xff]
  %v87 = vld [vmem:[%s0 + $0x20] sm:$0xff]
  %v88 = vld [vmem:[%s0 + $0x28] sm:$0xff]
  %v89 = vld [vmem:[%s0 + $0x30] sm:$0xff]
  %v90 = vld [vmem:[%s0 + $0x38] sm:$0xff]
  %v91 = vld [vmem:[%s0 + $0x40] sm:$0xff]
  %v92 = vld [vmem:[%s0 + $0x48] sm:$0xff]
  %v93 = vld [vmem:[%s0 + $0x50] sm:$0xff]
  %v94 = vld [vmem:[%s0 + $0x58] sm:$0xff]
  %v95 = vld [vmem:[%s0 + $0x60] sm:$0xff]
  %v96 = vld [vmem:[%s0 + $0x68] sm:$0xff]
  %v97 = vld [vmem:[%s0 + $0x70] sm:$0xff]
  %v98 = vld [vmem:[%s0 + $0x78] sm:$0xff]
  %v99 = vld [vmem:[%s0 + $0x80] sm:$0xff]
  %v100 = vld [vmem:[%s0 + $0x88] sm:$0xff]
  %v101 = vld [vmem:[%s0 + $0x90] sm:$0xff]
  %v102 = vld [vmem:[%s0 + $0x98] sm:$0xff]
  %v103 = vld [vmem:[%s0 + $0xa0] sm:$0xff]
  %v104 = vld [vmem:[%s0 + $0xa8] sm:$0xff]
  %v105 = vld [vmem:[%s0 + $0xb0] sm:$0xff]
  %v106 = vld [vmem:[%s0 + $0xb8] sm:$0xff]
  %v107 = vld [vmem:[%s0 + $0xc0] sm:$0xff]
  %v108 = vld [vmem:[%s0 + $0xc8] sm:$0xff]
  %v109 = vld [vmem:[%s0 + $0xd0] sm:$0xff]
  %v110 = vld [vmem:[%s0 + $0xd8] sm:$0xff]
  %v111 = vld [vmem:[%s0 + $0xe0] sm:$0xff]
  %v112 = vld [vmem:[%s0 + $0xe8] sm:$0xff]
  %v113 = vld [vmem:[%s0 + $0xf0] sm:$0xff]
  %v114 = vld [vmem:[%s0 + $0xf8] sm:$0xff]
  %v115 = vpack.c.bf16 %v84, %v83
  %v116 = vpack.c.bf16 %v86, %v85
  %v117 = vpack.c.bf16 %v88, %v87
  %v118 = vpack.c.bf16 %v90, %v89
  %v119 = vpack.c.bf16 %v92, %v91
  %v120 = vpack.c.bf16 %v94, %v93
  %v121 = vpack.c.bf16 %v96, %v95
  %v122 = vpack.c.bf16 %v98, %v97
  %v123 = vpack.c.bf16 %v100, %v99
  %v124 = vpack.c.bf16 %v102, %v101
  %v125 = vpack.c.bf16 %v104, %v103
  %v126 = vpack.c.bf16 %v106, %v105
  %v127 = vpack.c.bf16 %v108, %v107
  %v128 = vpack.c.bf16 %v110, %v109
  %v129 = vpack.c.bf16 %v112, %v111
  %v130 = vpack.c.bf16 %v114, %v113
  %v131 = vld [vmem:[%s1] sm:$0xf]
  %v132 = vld [vmem:[%s1 + $0x4] sm:$0xf]
  %v133 = vld [vmem:[%s1 + $0x8] sm:$0xf]
  %v134 = vld [vmem:[%s1 + $0xc] sm:$0xf]
  %v135 = vld [vmem:[%s1 + $0x10] sm:$0xf]
  %v136 = vld [vmem:[%s1 + $0x14] sm:$0xf]
  %v137 = vld [vmem:[%s1 + $0x18] sm:$0xf]
  %v138 = vld [vmem:[%s1 + $0x1c] sm:$0xf]
  %v139 = vld [vmem:[%s1 + $0x20] sm:$0xf]
  %v140 = vld [vmem:[%s1 + $0x24] sm:$0xf]
  %v141 = vld [vmem:[%s1 + $0x28] sm:$0xf]
  %v142 = vld [vmem:[%s1 + $0x2c] sm:$0xf]
  %v143 = vld [vmem:[%s1 + $0x30] sm:$0xf]
  %v144 = vld [vmem:[%s1 + $0x34] sm:$0xf]
  %v145 = vld [vmem:[%s1 + $0x38] sm:$0xf]
  %v146 = vld [vmem:[%s1 + $0x3c] sm:$0xf]
  %v163 = vunpack.c.l.b16 %v131
  %v164 = vunpack.c.l.b16 %v132
  %v165 = vunpack.c.l.b16 %v133
  %v166 = vunpack.c.l.b16 %v134
  %v167 = vunpack.c.l.b16 %v135
  %v168 = vunpack.c.l.b16 %v136
  %v169 = vunpack.c.l.b16 %v137
  %v170 = vunpack.c.l.b16 %v138
  %v171 = vunpack.c.l.b16 %v139
  %v172 = vunpack.c.l.b16 %v140
  %v173 = vunpack.c.l.b16 %v141
  %v174 = vunpack.c.l.b16 %v142
  %v175 = vunpack.c.l.b16 %v143
  %v176 = vunpack.c.l.b16 %v144
  %v177 = vunpack.c.l.b16 %v145
  %v178 = vunpack.c.l.b16 %v146
  %v179 = vpack.c.b16 %v164, %v163
  %v180 = vpack.c.b16 %v166, %v165
  %v181 = vpack.c.b16 %v168, %v167
  %v182 = vpack.c.b16 %v170, %v169
  %v183 = vpack.c.b16 %v172, %v171
  %v184 = vpack.c.b16 %v174, %v173
  %v185 = vpack.c.b16 %v176, %v175
  %v186 = vpack.c.b16 %v178, %v177
  %195 = vmatprep.subr.bf16.mxu0 0
  %196 = vmatpush1.bf16.msra.mxu0 %v179
  %197 = vmatprep.subr.bf16.mxu0 0
  %198 = vmatpush1.bf16.msra.mxu0 %v180
  %199 = vmatprep.subr.bf16.mxu0 0
  %200 = vmatpush1.bf16.msra.mxu0 %v181
  %201 = vmatprep.subr.bf16.mxu0 0
  %202 = vmatpush1.bf16.msra.mxu0 %v182
  %203 = vmatprep.subr.bf16.mxu0 0
  %204 = vmatpush1.bf16.msra.mxu0 %v183
  %205 = vmatprep.subr.bf16.mxu0 0
  %206 = vmatpush1.bf16.msra.mxu0 %v184
  %207 = vmatprep.subr.bf16.mxu0 0
  %208 = vmatpush1.bf16.msra.mxu0 %v185
  %209 = vmatprep.subr.bf16.mxu0 0
  %210 = vmatpush1.bf16.msra.mxu0 %v186
  %211 = vmatprep.subr.bf16.mxu0 0
  %212 = vmatpush1.bf16.msra.mxu0 0
  %213 = vmatprep.subr.bf16.mxu0 0
  %214 = vmatpush1.bf16.msra.mxu0 0
  %215 = vmatprep.subr.bf16.mxu0 0
  %216 = vmatpush1.bf16.msra.mxu0 0
  %217 = vmatprep.subr.bf16.mxu0 0
  %218 = vmatpush1.bf16.msra.mxu0 0
  %219 = vmatprep.subr.bf16.mxu0 0
  %220 = vmatpush1.bf16.msra.mxu0 0
  %221 = vmatprep.subr.bf16.mxu0 0
  %222 = vmatpush1.bf16.msra.mxu0 0
  %223 = vmatprep.subr.bf16.mxu0 0
  %224 = vmatpush1.bf16.msra.mxu0 0
  %225 = vmatprep.subr.bf16.mxu0 0
  %226 = vmatpush1.bf16.msra.mxu0 0
  %227 = vmatprep.mubr.bf16.mxu0 0
  %228 = vmatmul.mubr.bf16.gmra.mrb[0].mxu0 %v115
  %v229 = vpop.f32.mrb[0].mxu0
  %v230 = vadd.f32 0.0, %v229
  %v231 = vpop.f32.mrb[0].mxu0
  %v232 = vpop.f32.mrb[0].mxu0
  %v233 = vadd.f32 0.0, %v232
  %v234 = vpop.f32.mrb[0].mxu0
  %235 = vmatprep.mubr.bf16.mxu0 0
  %236 = vmatmul.mubr.bf16.gmra.mrb[0].mxu0 %v116
  %v237 = vpop.f32.mrb[0].mxu0
  %v238 = vadd.f32 0.0, %v237
  %v239 = vpop.f32.mrb[0].mxu0
  %v240 = vpop.f32.mrb[0].mxu0
  %v241 = vadd.f32 0.0, %v240
  %v242 = vpop.f32.mrb[0].mxu0
  %243 = vmatprep.mubr.bf16.mxu0 0
  %244 = vmatmul.mubr.bf16.gmra.mrb[0].mxu0 %v117
  %v245 = vpop.f32.mrb[0].mxu0
  %v246 = vadd.f32 0.0, %v245
  %v247 = vpop.f32.mrb[0].mxu0
  %v248 = vpop.f32.mrb[0].mxu0
  %v249 = vadd.f32 0.0, %v248
  %v250 = vpop.f32.mrb[0].mxu0
  %251 = vmatprep.mubr.bf16.mxu0 0
  %252 = vmatmul.mubr.bf16.gmra.mrb[0].mxu0 %v118
  %v253 = vpop.f32.mrb[0].mxu0
  %v254 = vadd.f32 0.0, %v253
  %v255 = vpop.f32.mrb[0].mxu0
  %v256 = vpop.f32.mrb[0].mxu0
  %v257 = vadd.f32 0.0, %v256
  %v258 = vpop.f32.mrb[0].mxu0
  %259 = vmatprep.mubr.bf16.mxu0 0
  %260 = vmatmul.mubr.bf16.gmra.mrb[0].mxu0 %v119
  %v261 = vpop.f32.mrb[0].mxu0
  %v262 = vadd.f32 0.0, %v261
  %v263 = vpop.f32.mrb[0].mxu0
  %v264 = vpop.f32.mrb[0].mxu0
  %v265 = vadd.f32 0.0, %v264
  %v266 = vpop.f32.mrb[0].mxu0
  %267 = vmatprep.mubr.bf16.mxu0 0
  %268 = vmatmul.mubr.bf16.gmra.mrb[0].mxu0 %v120
  %v269 = vpop.f32.mrb[0].mxu0
  %v270 = vadd.f32 0.0, %v269
  %v271 = vpop.f32.mrb[0].mxu0
  %v272 = vpop.f32.mrb[0].mxu0
  %v273 = vadd.f32 0.0, %v272
  %v274 = vpop.f32.mrb[0].mxu0
  %275 = vmatprep.mubr.bf16.mxu0 0
  %276 = vmatmul.mubr.bf16.gmra.mrb[0].mxu0 %v121
  %v277 = vpop.f32.mrb[0].mxu0
  %v278 = vadd.f32 0.0, %v277
  %v279 = vpop.f32.mrb[0].mxu0
  %v280 = vpop.f32.mrb[0].mxu0
  %v281 = vadd.f32 0.0, %v280
  %v282 = vpop.f32.mrb[0].mxu0
  %283 = vmatprep.mubr.bf16.mxu0 0
  %284 = vmatmul.mubr.bf16.gmra.mrb[0].mxu0 %v122
  %v285 = vpop.f32.mrb[0].mxu0
  %v286 = vadd.f32 0.0, %v285
  %v287 = vpop.f32.mrb[0].mxu0
  %v288 = vpop.f32.mrb[0].mxu0
  %v289 = vadd.f32 0.0, %v288
  %v290 = vpop.f32.mrb[0].mxu0
  %291 = vmatprep.mubr.bf16.mxu0 0
  %292 = vmatmul.mubr.bf16.gmra.mrb[0].mxu0 %v123
  %v293 = vpop.f32.mrb[0].mxu0
  %v294 = vadd.f32 0.0, %v293
  %v295 = vpop.f32.mrb[0].mxu0
  %v296 = vpop.f32.mrb[0].mxu0
  %v297 = vadd.f32 0.0, %v296
  %v298 = vpop.f32.mrb[0].mxu0
  %299 = vmatprep.mubr.bf16.mxu0 0
  %300 = vmatmul.mubr.bf16.gmra.mrb[0].mxu0 %v124
  %v301 = vpop.f32.mrb[0].mxu0
  %v302 = vadd.f32 0.0, %v301
  %v303 = vpop.f32.mrb[0].mxu0
  %v304 = vpop.f32.mrb[0].mxu0
  %v305 = vadd.f32 0.0, %v304
  %v306 = vpop.f32.mrb[0].mxu0
  %307 = vmatprep.mubr.bf16.mxu0 0
  %308 = vmatmul.mubr.bf16.gmra.mrb[0].mxu0 %v125
  %v309 = vpop.f32.mrb[0].mxu0
  %v310 = vadd.f32 0.0, %v309
  %v311 = vpop.f32.mrb[0].mxu0
  %v312 = vpop.f32.mrb[0].mxu0
  %v313 = vadd.f32 0.0, %v312
  %v314 = vpop.f32.mrb[0].mxu0
  %315 = vmatprep.mubr.bf16.mxu0 0
  %316 = vmatmul.mubr.bf16.gmra.mrb[0].mxu0 %v126
  %v317 = vpop.f32.mrb[0].mxu0
  %v318 = vadd.f32 0.0, %v317
  %v319 = vpop.f32.mrb[0].mxu0
  %v320 = vpop.f32.mrb[0].mxu0
  %v321 = vadd.f32 0.0, %v320
  %v322 = vpop.f32.mrb[0].mxu0
  %323 = vmatprep.mubr.bf16.mxu0 0
  %324 = vmatmul.mubr.bf16.gmra.mrb[0].mxu0 %v127
  %v325 = vpop.f32.mrb[0].mxu0
  %v326 = vadd.f32 0.0, %v325
  %v327 = vpop.f32.mrb[0].mxu0
  %v328 = vpop.f32.mrb[0].mxu0
  %v329 = vadd.f32 0.0, %v328
  %v330 = vpop.f32.mrb[0].mxu0
  %331 = vmatprep.mubr.bf16.mxu0 0
  %332 = vmatmul.mubr.bf16.gmra.mrb[0].mxu0 %v128
  %v333 = vpop.f32.mrb[0].mxu0
  %v334 = vadd.f32 0.0, %v333
  %v335 = vpop.f32.mrb[0].mxu0
  %v336 = vpop.f32.mrb[0].mxu0
  %v337 = vadd.f32 0.0, %v336
  %v338 = vpop.f32.mrb[0].mxu0
  %339 = vmatprep.mubr.bf16.mxu0 0
  %340 = vmatmul.mubr.bf16.gmra.mrb[0].mxu0 %v129
  %v341 = vpop.f32.mrb[0].mxu0
  %v342 = vadd.f32 0.0, %v341
  %v343 = vpop.f32.mrb[0].mxu0
  %v344 = vpop.f32.mrb[0].mxu0
  %v345 = vadd.f32 0.0, %v344
  %v346 = vpop.f32.mrb[0].mxu0
  %347 = vmatprep.mubr.bf16.mxu0 0
  %348 = vmatmul.mubr.bf16.gmra.mrb[0].mxu0 %v130
  %v349 = vpop.f32.mrb[0].mxu0
  %v350 = vadd.f32 0.0, %v349
  %v351 = vpop.f32.mrb[0].mxu0
  %v352 = vpop.f32.mrb[0].mxu0
  %v353 = vadd.f32 0.0, %v352
  %v354 = vpop.f32.mrb[0].mxu0
  %355 = vdwg.mxu0
  %v356 = vadd.f32 %v51, %v230
  %v357 = vadd.f32 %v52, %v233
  %v358 = vadd.f32 %v53, %v238
  %v359 = vadd.f32 %v54, %v241
  %v360 = vadd.f32 %v55, %v246
  %v361 = vadd.f32 %v56, %v249
  %v362 = vadd.f32 %v57, %v254
  %v363 = vadd.f32 %v58, %v257
  %v364 = vadd.f32 %v59, %v262
  %v365 = vadd.f32 %v60, %v265
  %v366 = vadd.f32 %v61, %v270
  %v367 = vadd.f32 %v62, %v273
  %v368 = vadd.f32 %v63, %v278
  %v369 = vadd.f32 %v64, %v281
  %v370 = vadd.f32 %v65, %v286
  %v371 = vadd.f32 %v66, %v289
  %v372 = vadd.f32 %v67, %v294
  %v373 = vadd.f32 %v68, %v297
  %v374 = vadd.f32 %v69, %v302
  %v375 = vadd.f32 %v70, %v305
  %v376 = vadd.f32 %v71, %v310
  %v377 = vadd.f32 %v72, %v313
  %v378 = vadd.f32 %v73, %v318
  %v379 = vadd.f32 %v74, %v321
  %v380 = vadd.f32 %v75, %v326
  %v381 = vadd.f32 %v76, %v329
  %v382 = vadd.f32 %v77, %v334
  %v383 = vadd.f32 %v78, %v337
  %v384 = vadd.f32 %v79, %v342
  %v385 = vadd.f32 %v80, %v345
  %v386 = vadd.f32 %v81, %v350
  %v387 = vadd.f32 %v82, %v353
  %388 = vst [vmem:[%s3] sm:$0xff] %v356
  %389 = vst [vmem:[%s3 + $0x8] sm:$0xff] %v357
  %390 = vst [vmem:[%s3 + $0x10] sm:$0xff] %v358
  %391 = vst [vmem:[%s3 + $0x18] sm:$0xff] %v359
  %392 = vst [vmem:[%s3 + $0x20] sm:$0xff] %v360
  %393 = vst [vmem:[%s3 + $0x28] sm:$0xff] %v361
  %394 = vst [vmem:[%s3 + $0x30] sm:$0xff] %v362
  %395 = vst [vmem:[%s3 + $0x38] sm:$0xff] %v363
  %396 = vst [vmem:[%s3 + $0x40] sm:$0xff] %v364
  %397 = vst [vmem:[%s3 + $0x48] sm:$0xff] %v365
  %398 = vst [vmem:[%s3 + $0x50] sm:$0xff] %v366
  %399 = vst [vmem:[%s3 + $0x58] sm:$0xff] %v367
  %400 = vst [vmem:[%s3 + $0x60] sm:$0xff] %v368
  %401 = vst [vmem:[%s3 + $0x68] sm:$0xff] %v369
  %402 = vst [vmem:[%s3 + $0x70] sm:$0xff] %v370
  %403 = vst [vmem:[%s3 + $0x78] sm:$0xff] %v371
  %404 = vst [vmem:[%s3 + $0x80] sm:$0xff] %v372
  %405 = vst [vmem:[%s3 + $0x88] sm:$0xff] %v373
  %406 = vst [vmem:[%s3 + $0x90] sm:$0xff] %v374
  %407 = vst [vmem:[%s3 + $0x98] sm:$0xff] %v375
  %408 = vst [vmem:[%s3 + $0xa0] sm:$0xff] %v376
  %409 = vst [vmem:[%s3 + $0xa8] sm:$0xff] %v377
  %410 = vst [vmem:[%s3 + $0xb0] sm:$0xff] %v378
  %411 = vst [vmem:[%s3 + $0xb8] sm:$0xff] %v379
  %412 = vst [vmem:[%s3 + $0xc0] sm:$0xff] %v380
  %413 = vst [vmem:[%s3 + $0xc8] sm:$0xff] %v381
  %414 = vst [vmem:[%s3 + $0xd0] sm:$0xff] %v382
  %415 = vst [vmem:[%s3 + $0xd8] sm:$0xff] %v383
  %416 = vst [vmem:[%s3 + $0xe0] sm:$0xff] %v384
  %417 = vst [vmem:[%s3 + $0xe8] sm:$0xff] %v385
  %418 = vst [vmem:[%s3 + $0xf0] sm:$0xff] %v386
  %419 = vst [vmem:[%s3 + $0xf8] sm:$0xff] %v387
  // Predicated region
  $region18: #{bert_txt_forward.17} parent=0 // pred_check
    %p420 = pneg %p15
  $region19: #{bert_txt_forward.17} parent=0 // pred_check_branch
    %422 = sbr.rel (%p420) target = $region21
  $region20: #{bert_txt_forward.17} parent=0 // pred_region
    %v423 = vld [vmem:[%s3] sm:$0xff]
    %v424 = vld [vmem:[%s3 + $0x8] sm:$0xff]
    %v425 = vld [vmem:[%s3 + $0x10] sm:$0xff]
    %v426 = vld [vmem:[%s3 + $0x18] sm:$0xff]
    %v427 = vld [vmem:[%s3 + $0x20] sm:$0xff]
    %v428 = vld [vmem:[%s3 + $0x28] sm:$0xff]
    %v429 = vld [vmem:[%s3 + $0x30] sm:$0xff]
    %v430 = vld [vmem:[%s3 + $0x38] sm:$0xff]
    %v431 = vld [vmem:[%s3 + $0x40] sm:$0xff]
    %v432 = vld [vmem:[%s3 + $0x48] sm:$0xff]
    %v433 = vld [vmem:[%s3 + $0x50] sm:$0xff]
    %v434 = vld [vmem:[%s3 + $0x58] sm:$0xff]
    %v435 = vld [vmem:[%s3 + $0x60] sm:$0xff]
    %v436 = vld [vmem:[%s3 + $0x68] sm:$0xff]
    %v437 = vld [vmem:[%s3 + $0x70] sm:$0xff]
    %v438 = vld [vmem:[%s3 + $0x78] sm:$0xff]
    %v439 = vld [vmem:[%s3 + $0x80] sm:$0xff]
    %v440 = vld [vmem:[%s3 + $0x88] sm:$0xff]
    %v441 = vld [vmem:[%s3 + $0x90] sm:$0xff]
    %v442 = vld [vmem:[%s3 + $0x98] sm:$0xff]
    %v443 = vld [vmem:[%s3 + $0xa0] sm:$0xff]
    %v444 = vld [vmem:[%s3 + $0xa8] sm:$0xff]
    %v445 = vld [vmem:[%s3 + $0xb0] sm:$0xff]
    %v446 = vld [vmem:[%s3 + $0xb8] sm:$0xff]
    %v447 = vld [vmem:[%s3 + $0xc0] sm:$0xff]
    %v448 = vld [vmem:[%s3 + $0xc8] sm:$0xff]
    %v449 = vld [vmem:[%s3 + $0xd0] sm:$0xff]
    %v450 = vld [vmem:[%s3 + $0xd8] sm:$0xff]
    %v451 = vld [vmem:[%s3 + $0xe0] sm:$0xff]
    %v452 = vld [vmem:[%s3 + $0xe8] sm:$0xff]
    %v453 = vld [vmem:[%s3 + $0xf0] sm:$0xff]
    %v454 = vld [vmem:[%s3 + $0xf8] sm:$0xff]
    %v455 = vld [vmem:[%s2] sm:$0x1]
    %v457 = vlaneseq
    %v458 = vshrl.u32 %v457, 7
    %v459 = vsub.s32 0, %v458
    %v460 = vrot.slane %v455, %v459
    %v462 = vadd.f32 %v423, %v460
    %v463 = vadd.f32 %v424, %v460
    %v464 = vadd.f32 %v425, %v460
    %v465 = vadd.f32 %v426, %v460
    %v466 = vadd.f32 %v427, %v460
    %v467 = vadd.f32 %v428, %v460
    %v468 = vadd.f32 %v429, %v460
    %v469 = vadd.f32 %v430, %v460
    %v470 = vadd.f32 %v431, %v460
    %v471 = vadd.f32 %v432, %v460
    %v472 = vadd.f32 %v433, %v460
    %v473 = vadd.f32 %v434, %v460
    %v474 = vadd.f32 %v435, %v460
    %v475 = vadd.f32 %v436, %v460
    %v476 = vadd.f32 %v437, %v460
    %v477 = vadd.f32 %v438, %v460
    %v478 = vadd.f32 %v439, %v460
    %v479 = vadd.f32 %v440, %v460
    %v480 = vadd.f32 %v441, %v460
    %v481 = vadd.f32 %v442, %v460
    %v482 = vadd.f32 %v443, %v460
    %v483 = vadd.f32 %v444, %v460
    %v484 = vadd.f32 %v445, %v460
    %v485 = vadd.f32 %v446, %v460
    %v486 = vadd.f32 %v447, %v460
    %v487 = vadd.f32 %v448, %v460
    %v488 = vadd.f32 %v449, %v460
    %v489 = vadd.f32 %v450, %v460
    %v490 = vadd.f32 %v451, %v460
    %v491 = vadd.f32 %v452, %v460
    %v492 = vadd.f32 %v453, %v460
    %v493 = vadd.f32 %v454, %v460
    %494 = vst [vmem:[%s3] sm:$0xff] %v462
    %495 = vst [vmem:[%s3 + $0x8] sm:$0xff] %v463
    %496 = vst [vmem:[%s3 + $0x10] sm:$0xff] %v464
    %497 = vst [vmem:[%s3 + $0x18] sm:$0xff] %v465
    %498 = vst [vmem:[%s3 + $0x20] sm:$0xff] %v466
    %499 = vst [vmem:[%s3 + $0x28] sm:$0xff] %v467
    %500 = vst [vmem:[%s3 + $0x30] sm:$0xff] %v468
    %501 = vst [vmem:[%s3 + $0x38] sm:$0xff] %v469
    %502 = vst [vmem:[%s3 + $0x40] sm:$0xff] %v470
    %503 = vst [vmem:[%s3 + $0x48] sm:$0xff] %v471
    %504 = vst [vmem:[%s3 + $0x50] sm:$0xff] %v472
    %505 = vst [vmem:[%s3 + $0x58] sm:$0xff] %v473
    %506 = vst [vmem:[%s3 + $0x60] sm:$0xff] %v474
    %507 = vst [vmem:[%s3 + $0x68] sm:$0xff] %v475
    %508 = vst [vmem:[%s3 + $0x70] sm:$0xff] %v476
    %509 = vst [vmem:[%s3 + $0x78] sm:$0xff] %v477
    %510 = vst [vmem:[%s3 + $0x80] sm:$0xff] %v478
    %511 = vst [vmem:[%s3 + $0x88] sm:$0xff] %v479
    %512 = vst [vmem:[%s3 + $0x90] sm:$0xff] %v480
    %513 = vst [vmem:[%s3 + $0x98] sm:$0xff] %v481
    %514 = vst [vmem:[%s3 + $0xa0] sm:$0xff] %v482
    %515 = vst [vmem:[%s3 + $0xa8] sm:$0xff] %v483
    %516 = vst [vmem:[%s3 + $0xb0] sm:$0xff] %v484
    %517 = vst [vmem:[%s3 + $0xb8] sm:$0xff] %v485
    %518 = vst [vmem:[%s3 + $0xc0] sm:$0xff] %v486
    %519 = vst [vmem:[%s3 + $0xc8] sm:$0xff] %v487
    %520 = vst [vmem:[%s3 + $0xd0] sm:$0xff] %v488
    %521 = vst [vmem:[%s3 + $0xd8] sm:$0xff] %v489
    %522 = vst [vmem:[%s3 + $0xe0] sm:$0xff] %v490
    %523 = vst [vmem:[%s3 + $0xe8] sm:$0xff] %v491
    %524 = vst [vmem:[%s3 + $0xf0] sm:$0xff] %v492
    %525 = vst [vmem:[%s3 + $0xf8] sm:$0xff] %v493
  $region21: #{bert_txt_forward.17} parent=0 // pred_fallthru
    _
  // Predicated region
  $region22: #{bert_txt_forward.17} parent=0 // pred_check
    _
  $region23: #{bert_txt_forward.17} parent=0 // pred_check_branch
    %527 = sbr.rel (0) target = $region25
  $region24: #{bert_txt_forward.17} parent=0 // pred_region
    _
  $region25: #{bert_txt_forward.17} parent=0 // pred_fallthru
    _
  // Predicated region
  $region26: #{bert_txt_forward.17} parent=0 // pred_check
    _
  $region27: #{bert_txt_forward.17} parent=0 // pred_check_branch
    %529 = sbr.rel (0) target = $region29
  $region28: #{bert_txt_forward.17} parent=0 // pred_region
    _
  $region29: #{bert_txt_forward.17} parent=0 // pred_fallthru
    _

// kernel: bert_txt_forward.16
$region0: #{bert_txt_forward.16}
  #allocation0 [shape = 'u32[]', space=smem, size = 0x4, offset = 0x4, fixed_abs, tag = 'smem constant byte address 0x4 - core index']
  #allocation1 [shape = 'u32[144,128]{1,0:T(1,128)}', space=vmem, size = 0x12000, scoped, tag = 'internal scratch']
  %s0 = inlined_call_operand.vmem [shape: f32[2,128,384], index: 0, kind: input, shape index: {}, may-alias: {0,1,2}]
  %s1 = inlined_call_operand.vmem [shape: f32[2,128,384], index: 1, kind: input, shape index: {}, may-alias: {0,1,2}]
  %s2 = inlined_call_operand.vmem [shape: f32[2,128,384], index: 2, kind: input, shape index: {}, may-alias: {0,1,2}]
  %s3 = inlined_call_operand.vmem [shape: f32[2,1,128], index: 3, kind: input, shape index: {}]
  %s4 = inlined_call_operand.vmem [shape: f32[2,128,128], index: 4, kind: output, shape index: {}]
  %s5 = sld [smem:[#allocation0]]
  $region163: #{bert_txt_forward.16} parent=0
    _
  %s7 = ssub.s32 1, %s5
  %s8 = scalar_select 0, %s7, %s5
  $region1: #{bert_txt_forward.16} parent=0
    #allocation2 [shape = 'u8[131072]{0}', space=vmem, size = 0x20000, scoped, tag = 'input window, operand 0']
    #allocation3 [shape = 'u8[131072]{0}', space=vmem, size = 0x20000, scoped, tag = 'input window, operand 1']
    #allocation4 [shape = 'u8[131072]{0}', space=vmem, size = 0x20000, scoped, tag = 'input window, operand 2']
    loop: start=0, step=1, limit=4
    $region2: #{bert_txt_forward.16} parent=1 // loop_pre_header
      _
    $region3: #{bert_txt_forward.16} parent=1 // loop_header
      %s10 = sphi 0, %s14
      %p11 = scmp.ge.s32.totalorder %s10, 4
      %s17 = sphi 0, %s29
      %s18 = sphi 0, %s25
      %s19 = sphi 0, %s17
      %s20 = sphi 0, %s18
      %s21 = sphi 0, %s19
      %s22 = sphi 0, %s20
      %s34 = sphi 0, %s36
      %s37 = sphi 0, %s34
      %s38 = sphi 0, %s37
      %s54 = sphi 0, %s38
      %s64 = sphi 0, %s66
      %s67 = sphi 0, %s64
      %s68 = sphi 0, %s67
      %s84 = sphi 0, %s68
      %s94 = sphi 0, %s96
      %s97 = sphi 0, %s94
      %s98 = sphi 0, %s97
      %s114 = sphi 0, %s98
      %s120 = sphi 0, %s122
      %s123 = sphi 0, %s120
      %s124 = sphi 0, %s123
      %s140 = sphi 0, %s124
      %s148 = sphi 0, %s150
      %s151 = sphi 0, %s148
      %s152 = sphi 0, %s151
      %s168 = sphi 0, %s152
    $region4: #{bert_txt_forward.16} parent=1 // loop_header_branch
      %13 = sbr.rel (%p11) target = $region8
    $region5: #{bert_txt_forward.16} parent=1 // loop_body
      %s15 = ssub.s32 %s10, 1
      %s16 = ssub.s32 %s10, 2
      %s23 = sadd.s32 1, %s18
      %p24 = scmp.ge.s32.totalorder %s23, 1
      %s25 = scalar_select %p24, 0, %s23
      %s26 = sadd.s32 1, %s17
      %s27 = scalar_select %p24, %s26, %s17
      %p28 = scmp.ge.s32.totalorder %s27, 2
      %s29 = scalar_select %p28, 0, %s27
      %s30 = ssub.s32 %s17, %s29
      %s31 = ssub.s32 %s18, %s25
      %s32 = sor.u32 %s30, %s31
      %p33 = scmp.eq.s32.totalorder %s32, 0
      %s35 = sadd.s32 %s34, 1
      %s36 = scalar_select %p33, %s34, %s35
      %p39 = pneg %p33
      %p40 = scmp.eq.s32.totalorder %s10, 1
      %p41 = por %p39, %p40
      %p42 = scmp.ne.s32.totalorder %s34, %s37
      %p43 = scmp.eq.s32.totalorder %s10, 0
      %p44 = por %p42, %p43
      %p45 = scmp.ne.s32.totalorder %s34, %s37
      %p46 = scmp.eq.s32.totalorder %s15, 1
      %p47 = por %p45, %p46
      %p48 = scmp.ne.s32.totalorder %s37, %s38
      %p49 = scmp.eq.s32.totalorder %s15, 0
      %p50 = por %p48, %p49
      %p51 = scmp.ne.s32.totalorder %s37, %s38
      %p52 = scmp.eq.s32.totalorder %s16, 1
      %p53 = por %p51, %p52
      %p55 = scmp.ne.s32.totalorder %s38, %s54
      %p56 = scmp.eq.s32.totalorder %s16, 0
      %p57 = por %p55, %p56
      %s58 = sadd.s32 %s18, 1
      %s59 = sadd.s32 %s25, 1
      %s60 = ssub.s32 %s17, %s29
      %s61 = ssub.s32 %s58, %s59
      %s62 = sor.u32 %s60, %s61
      %p63 = scmp.eq.s32.totalorder %s62, 0
      %s65 = sadd.s32 %s64, 1
      %s66 = scalar_select %p63, %s64, %s65
      %p69 = pneg %p63
      %p70 = scmp.eq.s32.totalorder %s10, 1
      %p71 = por %p69, %p70
      %p72 = scmp.ne.s32.totalorder %s64, %s67
      %p73 = scmp.eq.s32.totalorder %s10, 0
      %p74 = por %p72, %p73
      %p75 = scmp.ne.s32.totalorder %s64, %s67
      %p76 = scmp.eq.s32.totalorder %s15, 1
      %p77 = por %p75, %p76
      %p78 = scmp.ne.s32.totalorder %s67, %s68
      %p79 = scmp.eq.s32.totalorder %s15, 0
      %p80 = por %p78, %p79
      %p81 = scmp.ne.s32.totalorder %s67, %s68
      %p82 = scmp.eq.s32.totalorder %s16, 1
      %p83 = por %p81, %p82
      %p85 = scmp.ne.s32.totalorder %s68, %s84
      %p86 = scmp.eq.s32.totalorder %s16, 0
      %p87 = por %p85, %p86
      %s88 = sadd.s32 %s18, 2
      %s89 = sadd.s32 %s25, 2
      %s90 = ssub.s32 %s17, %s29
      %s91 = ssub.s32 %s88, %s89
      %s92 = sor.u32 %s90, %s91
      %p93 = scmp.eq.s32.totalorder %s92, 0
      %s95 = sadd.s32 %s94, 1
      %s96 = scalar_select %p93, %s94, %s95
      %p99 = pneg %p93
      %p100 = scmp.eq.s32.totalorder %s10, 1
      %p101 = por %p99, %p100
      %p102 = scmp.ne.s32.totalorder %s94, %s97
      %p103 = scmp.eq.s32.totalorder %s10, 0
      %p104 = por %p102, %p103
      %p105 = scmp.ne.s32.totalorder %s94, %s97
      %p106 = scmp.eq.s32.totalorder %s15, 1
      %p107 = por %p105, %p106
      %p108 = scmp.ne.s32.totalorder %s97, %s98
      %p109 = scmp.eq.s32.totalorder %s15, 0
      %p110 = por %p108, %p109
      %p111 = scmp.ne.s32.totalorder %s97, %s98
      %p112 = scmp.eq.s32.totalorder %s16, 1
      %p113 = por %p111, %p112
      %p115 = scmp.ne.s32.totalorder %s98, %s114
      %p116 = scmp.eq.s32.totalorder %s16, 0
      %p117 = por %p115, %p116
      %s118 = ssub.s32 %s17, %s29
      %p119 = scmp.eq.s32.totalorder %s118, 0
      %s121 = sadd.s32 %s120, 1
      %s122 = scalar_select %p119, %s120, %s121
      %p125 = pneg %p119
      %p126 = scmp.eq.s32.totalorder %s10, 1
      %p127 = por %p125, %p126
      %p128 = scmp.ne.s32.totalorder %s120, %s123
      %p129 = scmp.eq.s32.totalorder %s10, 0
      %p130 = por %p128, %p129
      %p131 = scmp.ne.s32.totalorder %s120, %s123
      %p132 = scmp.eq.s32.totalorder %s15, 1
      %p133 = por %p131, %p132
      %p134 = scmp.ne.s32.totalorder %s123, %s124
      %p135 = scmp.eq.s32.totalorder %s15, 0
      %p136 = por %p134, %p135
      %p137 = scmp.ne.s32.totalorder %s123, %s124
      %p138 = scmp.eq.s32.totalorder %s16, 1
      %p139 = por %p137, %p138
      %p141 = scmp.ne.s32.totalorder %s124, %s140
      %p142 = scmp.eq.s32.totalorder %s16, 0
      %p143 = por %p141, %p142
      %s144 = ssub.s32 %s17, %s29
      %s145 = ssub.s32 %s18, %s25
      %s146 = sor.u32 %s144, %s145
      %p147 = scmp.eq.s32.totalorder %s146, 0
      %s149 = sadd.s32 %s148, 1
      %s150 = scalar_select %p147, %s148, %s149
      %p153 = pneg %p147
      %p154 = scmp.eq.s32.totalorder %s10, 1
      %p155 = por %p153, %p154
      %p156 = scmp.ne.s32.totalorder %s148, %s151
      %p157 = scmp.eq.s32.totalorder %s10, 0
      %p158 = por %p156, %p157
      %p159 = scmp.ne.s32.totalorder %s148, %s151
      %p160 = scmp.eq.s32.totalorder %s15, 1
      %p161 = por %p159, %p160
      %p162 = scmp.ne.s32.totalorder %s151, %s152
      %p163 = scmp.eq.s32.totalorder %s15, 0
      %p164 = por %p162, %p163
      %p165 = scmp.ne.s32.totalorder %s151, %s152
      %p166 = scmp.eq.s32.totalorder %s16, 1
      %p167 = por %p165, %p166
      %p169 = scmp.ne.s32.totalorder %s152, %s168
      %p170 = scmp.eq.s32.totalorder %s16, 0
      %p171 = por %p169, %p170
      %p172 = scmp.le.s32.totalorder 1, %s10
      %p173 = scmp.lt.s32.totalorder %s10, 3
      %p174 = pnand %p172, %p173
      %p175 = pneg %p174
      // Predicated region
      $region9: #{bert_txt_forward.16} parent=5 // pred_check
        _
      $region10: #{bert_txt_forward.16} parent=5 // pred_check_branch
        %177 = sbr.rel (%p174) target = $region12
      $region11: #{bert_txt_forward.16} parent=5 // pred_region
        %s178 = ssub.s32 %s10, 1
      $region12: #{bert_txt_forward.16} parent=5 // pred_fallthru
        _
      %p179 = scmp.lt.s32.totalorder %s10, 2
      // Predicated region
      $region13: #{bert_txt_forward.16} parent=5 // pred_check
        %p180 = pneg %p179
      $region14: #{bert_txt_forward.16} parent=5 // pred_check_branch
        %182 = sbr.rel (%p180) target = $region16
      $region15: #{bert_txt_forward.16} parent=5 // pred_region
        // Predicated region
        $region17: #{bert_txt_forward.16} parent=15 // pred_check
          %p183 = pneg %p44
        $region18: #{bert_txt_forward.16} parent=15 // pred_check_branch
          %185 = sbr.rel (%p183) target = $region20
        $region19: #{bert_txt_forward.16} parent=15 // pred_region
          %s186 = sand.u32 %s34, 1
          %s187 = sand.u32 %s34, 1
          %s188 = smul.addr %s187, 128
          %s189 = scalar_lea.vmem [#allocation2], %s188
          %s190 = smul.addr %s17, 48
          %s191 = sadd.s32 %s18, %s190
          %s192 = smul.addr %s191, 8
          %s193 = scalar_lea.vmem %s0, %s192
          // Predicated region
          $region21: #{bert_txt_forward.16} parent=19 // pred_check
            _
          $region22: #{bert_txt_forward.16} parent=19 // pred_check_branch
            %195 = sbr.rel (0) target = $region24
          $region23: #{bert_txt_forward.16} parent=19 // pred_region
            // Predicated region
            $region25: #{bert_txt_forward.16} parent=23 // pred_check
              _
            $region26: #{bert_txt_forward.16} parent=23 // pred_check_branch
              %197 = sbr.rel (0) target = $region28
            $region27: #{bert_txt_forward.16} parent=23 // pred_region
              // Predicated region
              $region40: #{bert_txt_forward.16} parent=27 // pred_check
                _
              $region41: #{bert_txt_forward.16} parent=27 // pred_check_branch
                %242 = sbr.rel (0) target = $region43
              $region42: #{bert_txt_forward.16} parent=27 // pred_region
                loop: start=0, step=1, limit=1
                $region44: #{bert_txt_forward.16} parent=42 // loop_pre_header
                  _
                $region45: #{bert_txt_forward.16} parent=42 // loop_header
                  %s244 = sphi 0, %s248
                  %p245 = scmp.ge.s32.totalorder %s244, 1
                  %s249 = sphi %s193, %s193
                  %s250 = sphi %s189, %s189
                $region46: #{bert_txt_forward.16} parent=42 // loop_header_branch
                  %247 = sbr.rel (%p245) target = $region50
                $region47: #{bert_txt_forward.16} parent=42 // loop_body
                  %v251 = vld [vmem:[%s249] sm:$0xff]
                  %252 = vst [vmem:[%s250] sm:$0xff] %v251
                  %v253 = vld [vmem:[%s249 + $0x18] sm:$0xff]
                  %254 = vst [vmem:[%s250 + $0x8] sm:$0xff] %v253
                  %v255 = vld [vmem:[%s249 + $0x30] sm:$0xff]
                  %256 = vst [vmem:[%s250 + $0x10] sm:$0xff] %v255
                  %v257 = vld [vmem:[%s249 + $0x48] sm:$0xff]
                  %258 = vst [vmem:[%s250 + $0x18] sm:$0xff] %v257
                  %v259 = vld [vmem:[%s249 + $0x60] sm:$0xff]
                  %260 = vst [vmem:[%s250 + $0x20] sm:$0xff] %v259
                  %v261 = vld [vmem:[%s249 + $0x78] sm:$0xff]
                  %262 = vst [vmem:[%s250 + $0x28] sm:$0xff] %v261
                  %v263 = vld [vmem:[%s249 + $0x90] sm:$0xff]
                  %264 = vst [vmem:[%s250 + $0x30] sm:$0xff] %v263
                  %v265 = vld [vmem:[%s249 + $0xa8] sm:$0xff]
                  %266 = vst [vmem:[%s250 + $0x38] sm:$0xff] %v265
                  %v267 = vld [vmem:[%s249 + $0xc0] sm:$0xff]
                  %268 = vst [vmem:[%s250 + $0x40] sm:$0xff] %v267
                  %v269 = vld [vmem:[%s249 + $0xd8] sm:$0xff]
                  %270 = vst [vmem:[%s250 + $0x48] sm:$0xff] %v269
                  %v271 = vld [vmem:[%s249 + $0xf0] sm:$0xff]
                  %272 = vst [vmem:[%s250 + $0x50] sm:$0xff] %v271
                  %v273 = vld [vmem:[%s249 + $0x108] sm:$0xff]
                  %274 = vst [vmem:[%s250 + $0x58] sm:$0xff] %v273
                  %v275 = vld [vmem:[%s249 + $0x120] sm:$0xff]
                  %276 = vst [vmem:[%s250 + $0x60] sm:$0xff] %v275
                  %v277 = vld [vmem:[%s249 + $0x138] sm:$0xff]
                  %278 = vst [vmem:[%s250 + $0x68] sm:$0xff] %v277
                  %v279 = vld [vmem:[%s249 + $0x150] sm:$0xff]
                  %280 = vst [vmem:[%s250 + $0x70] sm:$0xff] %v279
                  %v281 = vld [vmem:[%s249 + $0x168] sm:$0xff]
                  %282 = vst [vmem:[%s250 + $0x78] sm:$0xff] %v281
                $region48: #{bert_txt_forward.16} parent=42 // loop_footer
                  %s248 = sadd.s32 1, %s244
                $region49: #{bert_txt_forward.16} parent=42 // loop_footer_branch
                  %243 = sbr.rel target = $region45
                $region50: #{bert_txt_forward.16} parent=42 // loop_exit
                  _
              $region43: #{bert_txt_forward.16} parent=27 // pred_fallthru
                _
              // Predicated region
              $region51: #{bert_txt_forward.16} parent=27 // pred_check
                _
              $region52: #{bert_txt_forward.16} parent=27 // pred_check_branch
                %284 = sbr.rel target = $region54
              $region53: #{bert_txt_forward.16} parent=27 // pred_region
                _
              $region54: #{bert_txt_forward.16} parent=27 // pred_fallthru
                _
            $region28: #{bert_txt_forward.16} parent=23 // pred_fallthru
              _
            // Predicated region
            $region29: #{bert_txt_forward.16} parent=23 // pred_check
              _
            $region30: #{bert_txt_forward.16} parent=23 // pred_check_branch
              %199 = sbr.rel target = $region32
            $region31: #{bert_txt_forward.16} parent=23 // pred_region
              loop: start=0, step=1, limit=1
              $region33: #{bert_txt_forward.16} parent=31 // loop_pre_header
                _
              $region34: #{bert_txt_forward.16} parent=31 // loop_header
                %s202 = sphi 0, %s206
                %p203 = scmp.ge.s32.totalorder %s202, 1
                %s207 = sphi %s193, %s193
                %s208 = sphi %s189, %s189
              $region35: #{bert_txt_forward.16} parent=31 // loop_header_branch
                %205 = sbr.rel (%p203) target = $region39
              $region36: #{bert_txt_forward.16} parent=31 // loop_body
                %v209 = vld [vmem:[%s207] sm:$0xff]
                %210 = vst [vmem:[%s208] sm:$0xff] %v209
                %v211 = vld [vmem:[%s207 + $0x18] sm:$0xff]
                %212 = vst [vmem:[%s208 + $0x8] sm:$0xff] %v211
                %v213 = vld [vmem:[%s207 + $0x30] sm:$0xff]
                %214 = vst [vmem:[%s208 + $0x10] sm:$0xff] %v213
                %v215 = vld [vmem:[%s207 + $0x48] sm:$0xff]
                %216 = vst [vmem:[%s208 + $0x18] sm:$0xff] %v215
                %v217 = vld [vmem:[%s207 + $0x60] sm:$0xff]
                %218 = vst [vmem:[%s208 + $0x20] sm:$0xff] %v217
                %v219 = vld [vmem:[%s207 + $0x78] sm:$0xff]
                %220 = vst [vmem:[%s208 + $0x28] sm:$0xff] %v219
                %v221 = vld [vmem:[%s207 + $0x90] sm:$0xff]
                %222 = vst [vmem:[%s208 + $0x30] sm:$0xff] %v221
                %v223 = vld [vmem:[%s207 + $0xa8] sm:$0xff]
                %224 = vst [vmem:[%s208 + $0x38] sm:$0xff] %v223
                %v225 = vld [vmem:[%s207 + $0xc0] sm:$0xff]
                %226 = vst [vmem:[%s208 + $0x40] sm:$0xff] %v225
                %v227 = vld [vmem:[%s207 + $0xd8] sm:$0xff]
                %228 = vst [vmem:[%s208 + $0x48] sm:$0xff] %v227
                %v229 = vld [vmem:[%s207 + $0xf0] sm:$0xff]
                %230 = vst [vmem:[%s208 + $0x50] sm:$0xff] %v229
                %v231 = vld [vmem:[%s207 + $0x108] sm:$0xff]
                %232 = vst [vmem:[%s208 + $0x58] sm:$0xff] %v231
                %v233 = vld [vmem:[%s207 + $0x120] sm:$0xff]
                %234 = vst [vmem:[%s208 + $0x60] sm:$0xff] %v233
                %v235 = vld [vmem:[%s207 + $0x138] sm:$0xff]
                %236 = vst [vmem:[%s208 + $0x68] sm:$0xff] %v235
                %v237 = vld [vmem:[%s207 + $0x150] sm:$0xff]
                %238 = vst [vmem:[%s208 + $0x70] sm:$0xff] %v237
                %v239 = vld [vmem:[%s207 + $0x168] sm:$0xff]
                %240 = vst [vmem:[%s208 + $0x78] sm:$0xff] %v239
              $region37: #{bert_txt_forward.16} parent=31 // loop_footer
                %s206 = sadd.s32 1, %s202
              $region38: #{bert_txt_forward.16} parent=31 // loop_footer_branch
                %201 = sbr.rel target = $region34
              $region39: #{bert_txt_forward.16} parent=31 // loop_exit
                _
            $region32: #{bert_txt_forward.16} parent=23 // pred_fallthru
              _
          $region24: #{bert_txt_forward.16} parent=19 // pred_fallthru
            _
          %285 = vnop
        $region20: #{bert_txt_forward.16} parent=15 // pred_fallthru
          _
        // Predicated region
        $region55: #{bert_txt_forward.16} parent=15 // pred_check
          %p286 = pneg %p74
        $region56: #{bert_txt_forward.16} parent=15 // pred_check_branch
          %288 = sbr.rel (%p286) target = $region58
        $region57: #{bert_txt_forward.16} parent=15 // pred_region
          %s289 = sand.u32 %s64, 1
          %s290 = sand.u32 %s64, 1
          %s291 = smul.addr %s290, 128
          %s292 = scalar_lea.vmem [#allocation3], %s291
          %s293 = sadd.s32 %s18, 1
          %s294 = smul.addr %s17, 48
          %s295 = sadd.s32 %s293, %s294
          %s296 = smul.addr %s295, 8
          %s297 = scalar_lea.vmem %s1, %s296
          // Predicated region
          $region59: #{bert_txt_forward.16} parent=57 // pred_check
            _
          $region60: #{bert_txt_forward.16} parent=57 // pred_check_branch
            %299 = sbr.rel (0) target = $region62
          $region61: #{bert_txt_forward.16} parent=57 // pred_region
            // Predicated region
            $region63: #{bert_txt_forward.16} parent=61 // pred_check
              _
            $region64: #{bert_txt_forward.16} parent=61 // pred_check_branch
              %301 = sbr.rel (0) target = $region66
            $region65: #{bert_txt_forward.16} parent=61 // pred_region
              // Predicated region
              $region78: #{bert_txt_forward.16} parent=65 // pred_check
                _
              $region79: #{bert_txt_forward.16} parent=65 // pred_check_branch
                %346 = sbr.rel (0) target = $region81
              $region80: #{bert_txt_forward.16} parent=65 // pred_region
                loop: start=0, step=1, limit=1
                $region82: #{bert_txt_forward.16} parent=80 // loop_pre_header
                  _
                $region83: #{bert_txt_forward.16} parent=80 // loop_header
                  %s348 = sphi 0, %s352
                  %p349 = scmp.ge.s32.totalorder %s348, 1
                  %s353 = sphi %s297, %s297
                  %s354 = sphi %s292, %s292
                $region84: #{bert_txt_forward.16} parent=80 // loop_header_branch
                  %351 = sbr.rel (%p349) target = $region88
                $region85: #{bert_txt_forward.16} parent=80 // loop_body
                  %v355 = vld [vmem:[%s353] sm:$0xff]
                  %356 = vst [vmem:[%s354] sm:$0xff] %v355
                  %v357 = vld [vmem:[%s353 + $0x18] sm:$0xff]
                  %358 = vst [vmem:[%s354 + $0x8] sm:$0xff] %v357
                  %v359 = vld [vmem:[%s353 + $0x30] sm:$0xff]
                  %360 = vst [vmem:[%s354 + $0x10] sm:$0xff] %v359
                  %v361 = vld [vmem:[%s353 + $0x48] sm:$0xff]
                  %362 = vst [vmem:[%s354 + $0x18] sm:$0xff] %v361
                  %v363 = vld [vmem:[%s353 + $0x60] sm:$0xff]
                  %364 = vst [vmem:[%s354 + $0x20] sm:$0xff] %v363
                  %v365 = vld [vmem:[%s353 + $0x78] sm:$0xff]
                  %366 = vst [vmem:[%s354 + $0x28] sm:$0xff] %v365
                  %v367 = vld [vmem:[%s353 + $0x90] sm:$0xff]
                  %368 = vst [vmem:[%s354 + $0x30] sm:$0xff] %v367
                  %v369 = vld [vmem:[%s353 + $0xa8] sm:$0xff]
                  %370 = vst [vmem:[%s354 + $0x38] sm:$0xff] %v369
                  %v371 = vld [vmem:[%s353 + $0xc0] sm:$0xff]
                  %372 = vst [vmem:[%s354 + $0x40] sm:$0xff] %v371
                  %v373 = vld [vmem:[%s353 + $0xd8] sm:$0xff]
                  %374 = vst [vmem:[%s354 + $0x48] sm:$0xff] %v373
                  %v375 = vld [vmem:[%s353 + $0xf0] sm:$0xff]
                  %376 = vst [vmem:[%s354 + $0x50] sm:$0xff] %v375
                  %v377 = vld [vmem:[%s353 + $0x108] sm:$0xff]
                  %378 = vst [vmem:[%s354 + $0x58] sm:$0xff] %v377
                  %v379 = vld [vmem:[%s353 + $0x120] sm:$0xff]
                  %380 = vst [vmem:[%s354 + $0x60] sm:$0xff] %v379
                  %v381 = vld [vmem:[%s353 + $0x138] sm:$0xff]
                  %382 = vst [vmem:[%s354 + $0x68] sm:$0xff] %v381
                  %v383 = vld [vmem:[%s353 + $0x150] sm:$0xff]
                  %384 = vst [vmem:[%s354 + $0x70] sm:$0xff] %v383
                  %v385 = vld [vmem:[%s353 + $0x168] sm:$0xff]
                  %386 = vst [vmem:[%s354 + $0x78] sm:$0xff] %v385
                $region86: #{bert_txt_forward.16} parent=80 // loop_footer
                  %s352 = sadd.s32 1, %s348
                $region87: #{bert_txt_forward.16} parent=80 // loop_footer_branch
                  %347 = sbr.rel target = $region83
                $region88: #{bert_txt_forward.16} parent=80 // loop_exit
                  _
              $region81: #{bert_txt_forward.16} parent=65 // pred_fallthru
                _
              // Predicated region
              $region89: #{bert_txt_forward.16} parent=65 // pred_check
                _
              $region90: #{bert_txt_forward.16} parent=65 // pred_check_branch
                %388 = sbr.rel target = $region92
              $region91: #{bert_txt_forward.16} parent=65 // pred_region
                _
              $region92: #{bert_txt_forward.16} parent=65 // pred_fallthru
                _
            $region66: #{bert_txt_forward.16} parent=61 // pred_fallthru
              _
            // Predicated region
            $region67: #{bert_txt_forward.16} parent=61 // pred_check
              _
            $region68: #{bert_txt_forward.16} parent=61 // pred_check_branch
              %303 = sbr.rel target = $region70
            $region69: #{bert_txt_forward.16} parent=61 // pred_region
              loop: start=0, step=1, limit=1
              $region71: #{bert_txt_forward.16} parent=69 // loop_pre_header
                _
              $region72: #{bert_txt_forward.16} parent=69 // loop_header
                %s306 = sphi 0, %s310
                %p307 = scmp.ge.s32.totalorder %s306, 1
                %s311 = sphi %s297, %s297
                %s312 = sphi %s292, %s292
              $region73: #{bert_txt_forward.16} parent=69 // loop_header_branch
                %309 = sbr.rel (%p307) target = $region77
              $region74: #{bert_txt_forward.16} parent=69 // loop_body
                %v313 = vld [vmem:[%s311] sm:$0xff]
                %314 = vst [vmem:[%s312] sm:$0xff] %v313
                %v315 = vld [vmem:[%s311 + $0x18] sm:$0xff]
                %316 = vst [vmem:[%s312 + $0x8] sm:$0xff] %v315
                %v317 = vld [vmem:[%s311 + $0x30] sm:$0xff]
                %318 = vst [vmem:[%s312 + $0x10] sm:$0xff] %v317
                %v319 = vld [vmem:[%s311 + $0x48] sm:$0xff]
                %320 = vst [vmem:[%s312 + $0x18] sm:$0xff] %v319
                %v321 = vld [vmem:[%s311 + $0x60] sm:$0xff]
                %322 = vst [vmem:[%s312 + $0x20] sm:$0xff] %v321
                %v323 = vld [vmem:[%s311 + $0x78] sm:$0xff]
                %324 = vst [vmem:[%s312 + $0x28] sm:$0xff] %v323
                %v325 = vld [vmem:[%s311 + $0x90] sm:$0xff]
                %326 = vst [vmem:[%s312 + $0x30] sm:$0xff] %v325
                %v327 = vld [vmem:[%s311 + $0xa8] sm:$0xff]
                %328 = vst [vmem:[%s312 + $0x38] sm:$0xff] %v327
                %v329 = vld [vmem:[%s311 + $0xc0] sm:$0xff]
                %330 = vst [vmem:[%s312 + $0x40] sm:$0xff] %v329
                %v331 = vld [vmem:[%s311 + $0xd8] sm:$0xff]
                %332 = vst [vmem:[%s312 + $0x48] sm:$0xff] %v331
                %v333 = vld [vmem:[%s311 + $0xf0] sm:$0xff]
                %334 = vst [vmem:[%s312 + $0x50] sm:$0xff] %v333
                %v335 = vld [vmem:[%s311 + $0x108] sm:$0xff]
                %336 = vst [vmem:[%s312 + $0x58] sm:$0xff] %v335
                %v337 = vld [vmem:[%s311 + $0x120] sm:$0xff]
                %338 = vst [vmem:[%s312 + $0x60] sm:$0xff] %v337
                %v339 = vld [vmem:[%s311 + $0x138] sm:$0xff]
                %340 = vst [vmem:[%s312 + $0x68] sm:$0xff] %v339
                %v341 = vld [vmem:[%s311 + $0x150] sm:$0xff]
                %342 = vst [vmem:[%s312 + $0x70] sm:$0xff] %v341
                %v343 = vld [vmem:[%s311 + $0x168] sm:$0xff]
                %344 = vst [vmem:[%s312 + $0x78] sm:$0xff] %v343
              $region75: #{bert_txt_forward.16} parent=69 // loop_footer
                %s310 = sadd.s32 1, %s306
              $region76: #{bert_txt_forward.16} parent=69 // loop_footer_branch
                %305 = sbr.rel target = $region72
              $region77: #{bert_txt_forward.16} parent=69 // loop_exit
                _
            $region70: #{bert_txt_forward.16} parent=61 // pred_fallthru
              _
          $region62: #{bert_txt_forward.16} parent=57 // pred_fallthru
            _
          %389 = vnop
        $region58: #{bert_txt_forward.16} parent=15 // pred_fallthru
          _
        // Predicated region
        $region93: #{bert_txt_forward.16} parent=15 // pred_check
          %p390 = pneg %p104
        $region94: #{bert_txt_forward.16} parent=15 // pred_check_branch
          %392 = sbr.rel (%p390) target = $region96
        $region95: #{bert_txt_forward.16} parent=15 // pred_region
          %s393 = sand.u32 %s94, 1
          %s394 = sand.u32 %s94, 1
          %s395 = smul.addr %s394, 128
          %s396 = scalar_lea.vmem [#allocation4], %s395
          %s397 = sadd.s32 %s18, 2
          %s398 = smul.addr %s17, 48
          %s399 = sadd.s32 %s397, %s398
          %s400 = smul.addr %s399, 8
          %s401 = scalar_lea.vmem %s2, %s400
          // Predicated region
          $region97: #{bert_txt_forward.16} parent=95 // pred_check
            _
          $region98: #{bert_txt_forward.16} parent=95 // pred_check_branch
            %403 = sbr.rel (0) target = $region100
          $region99: #{bert_txt_forward.16} parent=95 // pred_region
            // Predicated region
            $region101: #{bert_txt_forward.16} parent=99 // pred_check
              _
            $region102: #{bert_txt_forward.16} parent=99 // pred_check_branch
              %405 = sbr.rel (0) target = $region104
            $region103: #{bert_txt_forward.16} parent=99 // pred_region
              // Predicated region
              $region116: #{bert_txt_forward.16} parent=103 // pred_check
                _
              $region117: #{bert_txt_forward.16} parent=103 // pred_check_branch
                %450 = sbr.rel (0) target = $region119
              $region118: #{bert_txt_forward.16} parent=103 // pred_region
                loop: start=0, step=1, limit=1
                $region120: #{bert_txt_forward.16} parent=118 // loop_pre_header
                  _
                $region121: #{bert_txt_forward.16} parent=118 // loop_header
                  %s452 = sphi 0, %s456
                  %p453 = scmp.ge.s32.totalorder %s452, 1
                  %s457 = sphi %s401, %s401
                  %s458 = sphi %s396, %s396
                $region122: #{bert_txt_forward.16} parent=118 // loop_header_branch
                  %455 = sbr.rel (%p453) target = $region126
                $region123: #{bert_txt_forward.16} parent=118 // loop_body
                  %v459 = vld [vmem:[%s457] sm:$0xff]
                  %460 = vst [vmem:[%s458] sm:$0xff] %v459
                  %v461 = vld [vmem:[%s457 + $0x18] sm:$0xff]
                  %462 = vst [vmem:[%s458 + $0x8] sm:$0xff] %v461
                  %v463 = vld [vmem:[%s457 + $0x30] sm:$0xff]
                  %464 = vst [vmem:[%s458 + $0x10] sm:$0xff] %v463
                  %v465 = vld [vmem:[%s457 + $0x48] sm:$0xff]
                  %466 = vst [vmem:[%s458 + $0x18] sm:$0xff] %v465
                  %v467 = vld [vmem:[%s457 + $0x60] sm:$0xff]
                  %468 = vst [vmem:[%s458 + $0x20] sm:$0xff] %v467
                  %v469 = vld [vmem:[%s457 + $0x78] sm:$0xff]
                  %470 = vst [vmem:[%s458 + $0x28] sm:$0xff] %v469
                  %v471 = vld [vmem:[%s457 + $0x90] sm:$0xff]
                  %472 = vst [vmem:[%s458 + $0x30] sm:$0xff] %v471
                  %v473 = vld [vmem:[%s457 + $0xa8] sm:$0xff]
                  %474 = vst [vmem:[%s458 + $0x38] sm:$0xff] %v473
                  %v475 = vld [vmem:[%s457 + $0xc0] sm:$0xff]
                  %476 = vst [vmem:[%s458 + $0x40] sm:$0xff] %v475
                  %v477 = vld [vmem:[%s457 + $0xd8] sm:$0xff]
                  %478 = vst [vmem:[%s458 + $0x48] sm:$0xff] %v477
                  %v479 = vld [vmem:[%s457 + $0xf0] sm:$0xff]
                  %480 = vst [vmem:[%s458 + $0x50] sm:$0xff] %v479
                  %v481 = vld [vmem:[%s457 + $0x108] sm:$0xff]
                  %482 = vst [vmem:[%s458 + $0x58] sm:$0xff] %v481
                  %v483 = vld [vmem:[%s457 + $0x120] sm:$0xff]
                  %484 = vst [vmem:[%s458 + $0x60] sm:$0xff] %v483
                  %v485 = vld [vmem:[%s457 + $0x138] sm:$0xff]
                  %486 = vst [vmem:[%s458 + $0x68] sm:$0xff] %v485
                  %v487 = vld [vmem:[%s457 + $0x150] sm:$0xff]
                  %488 = vst [vmem:[%s458 + $0x70] sm:$0xff] %v487
                  %v489 = vld [vmem:[%s457 + $0x168] sm:$0xff]
                  %490 = vst [vmem:[%s458 + $0x78] sm:$0xff] %v489
                $region124: #{bert_txt_forward.16} parent=118 // loop_footer
                  %s456 = sadd.s32 1, %s452
                $region125: #{bert_txt_forward.16} parent=118 // loop_footer_branch
                  %451 = sbr.rel target = $region121
                $region126: #{bert_txt_forward.16} parent=118 // loop_exit
                  _
              $region119: #{bert_txt_forward.16} parent=103 // pred_fallthru
                _
              // Predicated region
              $region127: #{bert_txt_forward.16} parent=103 // pred_check
                _
              $region128: #{bert_txt_forward.16} parent=103 // pred_check_branch
                %492 = sbr.rel target = $region130
              $region129: #{bert_txt_forward.16} parent=103 // pred_region
                _
              $region130: #{bert_txt_forward.16} parent=103 // pred_fallthru
                _
            $region104: #{bert_txt_forward.16} parent=99 // pred_fallthru
              _
            // Predicated region
            $region105: #{bert_txt_forward.16} parent=99 // pred_check
              _
            $region106: #{bert_txt_forward.16} parent=99 // pred_check_branch
              %407 = sbr.rel target = $region108
            $region107: #{bert_txt_forward.16} parent=99 // pred_region
              loop: start=0, step=1, limit=1
              $region109: #{bert_txt_forward.16} parent=107 // loop_pre_header
                _
              $region110: #{bert_txt_forward.16} parent=107 // loop_header
                %s410 = sphi 0, %s414
                %p411 = scmp.ge.s32.totalorder %s410, 1
                %s415 = sphi %s401, %s401
                %s416 = sphi %s396, %s396
              $region111: #{bert_txt_forward.16} parent=107 // loop_header_branch
                %413 = sbr.rel (%p411) target = $region115
              $region112: #{bert_txt_forward.16} parent=107 // loop_body
                %v417 = vld [vmem:[%s415] sm:$0xff]
                %418 = vst [vmem:[%s416] sm:$0xff] %v417
                %v419 = vld [vmem:[%s415 + $0x18] sm:$0xff]
                %420 = vst [vmem:[%s416 + $0x8] sm:$0xff] %v419
                %v421 = vld [vmem:[%s415 + $0x30] sm:$0xff]
                %422 = vst [vmem:[%s416 + $0x10] sm:$0xff] %v421
                %v423 = vld [vmem:[%s415 + $0x48] sm:$0xff]
                %424 = vst [vmem:[%s416 + $0x18] sm:$0xff] %v423
                %v425 = vld [vmem:[%s415 + $0x60] sm:$0xff]
                %426 = vst [vmem:[%s416 + $0x20] sm:$0xff] %v425
                %v427 = vld [vmem:[%s415 + $0x78] sm:$0xff]
                %428 = vst [vmem:[%s416 + $0x28] sm:$0xff] %v427
                %v429 = vld [vmem:[%s415 + $0x90] sm:$0xff]
                %430 = vst [vmem:[%s416 + $0x30] sm:$0xff] %v429
                %v431 = vld [vmem:[%s415 + $0xa8] sm:$0xff]
                %432 = vst [vmem:[%s416 + $0x38] sm:$0xff] %v431
                %v433 = vld [vmem:[%s415 + $0xc0] sm:$0xff]
                %434 = vst [vmem:[%s416 + $0x40] sm:$0xff] %v433
                %v435 = vld [vmem:[%s415 + $0xd8] sm:$0xff]
                %436 = vst [vmem:[%s416 + $0x48] sm:$0xff] %v435
                %v437 = vld [vmem:[%s415 + $0xf0] sm:$0xff]
                %438 = vst [vmem:[%s416 + $0x50] sm:$0xff] %v437
                %v439 = vld [vmem:[%s415 + $0x108] sm:$0xff]
                %440 = vst [vmem:[%s416 + $0x58] sm:$0xff] %v439
                %v441 = vld [vmem:[%s415 + $0x120] sm:$0xff]
                %442 = vst [vmem:[%s416 + $0x60] sm:$0xff] %v441
                %v443 = vld [vmem:[%s415 + $0x138] sm:$0xff]
                %444 = vst [vmem:[%s416 + $0x68] sm:$0xff] %v443
                %v445 = vld [vmem:[%s415 + $0x150] sm:$0xff]
                %446 = vst [vmem:[%s416 + $0x70] sm:$0xff] %v445
                %v447 = vld [vmem:[%s415 + $0x168] sm:$0xff]
                %448 = vst [vmem:[%s416 + $0x78] sm:$0xff] %v447
              $region113: #{bert_txt_forward.16} parent=107 // loop_footer
                %s414 = sadd.s32 1, %s410
              $region114: #{bert_txt_forward.16} parent=107 // loop_footer_branch
                %409 = sbr.rel target = $region110
              $region115: #{bert_txt_forward.16} parent=107 // loop_exit
                _
            $region108: #{bert_txt_forward.16} parent=99 // pred_fallthru
              _
          $region100: #{bert_txt_forward.16} parent=95 // pred_fallthru
            _
          %493 = vnop
        $region96: #{bert_txt_forward.16} parent=15 // pred_fallthru
          _
        // Predicated region
        $region131: #{bert_txt_forward.16} parent=15 // pred_check
          %p494 = pneg %p130
        $region132: #{bert_txt_forward.16} parent=15 // pred_check_branch
          %496 = sbr.rel (%p494) target = $region134
        $region133: #{bert_txt_forward.16} parent=15 // pred_region
          %p497 = scmp.lt.s32.totalorder %s17, 1
          %s498 = scalar_select %p497, %s17, 1
          %s499 = scalar_lea.vmem %s3, %s498
        $region134: #{bert_txt_forward.16} parent=15 // pred_fallthru
          _
      $region16: #{bert_txt_forward.16} parent=5 // pred_fallthru
        _
      %p500 = scmp.le.s32.totalorder 1, %s10
      %p501 = scmp.lt.s32.totalorder %s10, 3
      %p502 = pnand %p500, %p501
      %p503 = pneg %p502
      // Predicated region
      $region135: #{bert_txt_forward.16} parent=5 // pred_check
        _
      $region136: #{bert_txt_forward.16} parent=5 // pred_check_branch
        %505 = sbr.rel (%p502) target = $region138
      $region137: #{bert_txt_forward.16} parent=5 // pred_region
        %s506 = ssub.s32 %s10, 1
        %s507 = sand.u32 %s37, 1
        %s508 = sand.u32 %s37, 1
        %s509 = smul.addr %s508, 128
        %s510 = scalar_lea.vmem [#allocation2], %s509
        // Predicated region
        $region139: #{bert_txt_forward.16} parent=137 // pred_check
          %p511 = pneg %p50
        $region140: #{bert_txt_forward.16} parent=137 // pred_check_branch
          %513 = sbr.rel (%p511) target = $region142
        $region141: #{bert_txt_forward.16} parent=137 // pred_region
          _
        $region142: #{bert_txt_forward.16} parent=137 // pred_fallthru
          _
        %s514 = sand.u32 %s67, 1
        %s515 = sand.u32 %s67, 1
        %s516 = smul.addr %s515, 128
        %s517 = scalar_lea.vmem [#allocation3], %s516
        // Predicated region
        $region143: #{bert_txt_forward.16} parent=137 // pred_check
          %p518 = pneg %p80
        $region144: #{bert_txt_forward.16} parent=137 // pred_check_branch
          %520 = sbr.rel (%p518) target = $region146
        $region145: #{bert_txt_forward.16} parent=137 // pred_region
          _
        $region146: #{bert_txt_forward.16} parent=137 // pred_fallthru
          _
        %s521 = sand.u32 %s97, 1
        %s522 = sand.u32 %s97, 1
        %s523 = smul.addr %s522, 128
        %s524 = scalar_lea.vmem [#allocation4], %s523
        // Predicated region
        $region147: #{bert_txt_forward.16} parent=137 // pred_check
          %p525 = pneg %p110
        $region148: #{bert_txt_forward.16} parent=137 // pred_check_branch
          %527 = sbr.rel (%p525) target = $region150
        $region149: #{bert_txt_forward.16} parent=137 // pred_region
          _
        $region150: #{bert_txt_forward.16} parent=137 // pred_fallthru
          _
        %s528 = sand.u32 %s37, 1
        %s529 = sand.u32 %s37, 1
        %s530 = smul.addr %s529, 128
        %s531 = scalar_lea.vmem [#allocation2], %s530
        %p532 = pneg %p50
        %p533 = pneg %p47
        %s534 = sand.u32 %s67, 1
        %s535 = sand.u32 %s67, 1
        %s536 = smul.addr %s535, 128
        %s537 = scalar_lea.vmem [#allocation3], %s536
        %p538 = pneg %p80
        %p539 = pneg %p77
        %s540 = sand.u32 %s97, 1
        %s541 = sand.u32 %s97, 1
        %s542 = smul.addr %s541, 128
        %s543 = scalar_lea.vmem [#allocation4], %s542
        %p544 = pneg %p110
        %p545 = pneg %p107
        %p546 = scmp.lt.s32.totalorder %s19, 1
        %s547 = scalar_select %p546, %s19, 1
        %s548 = scalar_lea.vmem %s3, %s547
        %p549 = pneg %p136
        %p550 = pneg %p133
        %p551 = pneg %p164
        %p552 = pneg %p161
        %p553 = scmp.lt.s32.totalorder %s19, 1
        %s554 = scalar_select %p553, %s19, 1
        %p555 = scmp.lt.s32.totalorder %s20, 0
        %s556 = scalar_select %p555, %s20, 0
        %s557 = smul.addr %s554, 16
        %s558 = sadd.s32 %s556, %s557
        %s559 = smul.addr %s558, 8
        %s560 = scalar_lea.vmem %s4, %s559
        %s561 = sadd.s32 %s20, 1
        %s562 = sadd.s32 %s20, 2
        %p563 = scmp.lt.s32.totalorder %s19, 1
        %s564 = scalar_select %p563, %s19, 1
        %s565 = scalar_lea.vmem %s3, %s564
        %p566 = scmp.lt.s32.totalorder %s19, 1
        %s567 = scalar_select %p566, %s19, 1
        %p568 = scmp.lt.s32.totalorder %s20, 0
        %s569 = scalar_select %p568, %s20, 0
        %s570 = smul.addr %s567, 16
        %s571 = sadd.s32 %s569, %s570
        %s572 = smul.addr %s571, 8
        %s573 = scalar_lea.vmem %s4, %s572
        %v575 = vld [vmem:[%s510] sm:$0xff]
        %v576 = vld [vmem:[%s510 + $0x8] sm:$0xff]
        %v577 = vld [vmem:[%s510 + $0x10] sm:$0xff]
        %v578 = vld [vmem:[%s510 + $0x18] sm:$0xff]
        %v579 = vld [vmem:[%s510 + $0x20] sm:$0xff]
        %v580 = vld [vmem:[%s510 + $0x28] sm:$0xff]
        %v581 = vld [vmem:[%s510 + $0x30] sm:$0xff]
        %v582 = vld [vmem:[%s510 + $0x38] sm:$0xff]
        %v583 = vld [vmem:[%s510 + $0x40] sm:$0xff]
        %v584 = vld [vmem:[%s510 + $0x48] sm:$0xff]
        %v585 = vld [vmem:[%s510 + $0x50] sm:$0xff]
        %v586 = vld [vmem:[%s510 + $0x58] sm:$0xff]
        %v587 = vld [vmem:[%s510 + $0x60] sm:$0xff]
        %v588 = vld [vmem:[%s510 + $0x68] sm:$0xff]
        %v589 = vld [vmem:[%s510 + $0x70] sm:$0xff]
        %v590 = vld [vmem:[%s510 + $0x78] sm:$0xff]
        %v591 = vld [vmem:[%s517] sm:$0xff]
        %v592 = vld [vmem:[%s517 + $0x8] sm:$0xff]
        %v593 = vld [vmem:[%s517 + $0x10] sm:$0xff]
        %v594 = vld [vmem:[%s517 + $0x18] sm:$0xff]
        %v595 = vld [vmem:[%s517 + $0x20] sm:$0xff]
        %v596 = vld [vmem:[%s517 + $0x28] sm:$0xff]
        %v597 = vld [vmem:[%s517 + $0x30] sm:$0xff]
        %v598 = vld [vmem:[%s517 + $0x38] sm:$0xff]
        %v599 = vld [vmem:[%s517 + $0x40] sm:$0xff]
        %v600 = vld [vmem:[%s517 + $0x48] sm:$0xff]
        %v601 = vld [vmem:[%s517 + $0x50] sm:$0xff]
        %v602 = vld [vmem:[%s517 + $0x58] sm:$0xff]
        %v603 = vld [vmem:[%s517 + $0x60] sm:$0xff]
        %v604 = vld [vmem:[%s517 + $0x68] sm:$0xff]
        %v605 = vld [vmem:[%s517 + $0x70] sm:$0xff]
        %v606 = vld [vmem:[%s517 + $0x78] sm:$0xff]
        %v607 = vld [vmem:[%s524] sm:$0xff]
        %v608 = vld [vmem:[%s524 + $0x8] sm:$0xff]
        %v609 = vld [vmem:[%s524 + $0x10] sm:$0xff]
        %v610 = vld [vmem:[%s524 + $0x18] sm:$0xff]
        %v611 = vld [vmem:[%s524 + $0x20] sm:$0xff]
        %v612 = vld [vmem:[%s524 + $0x28] sm:$0xff]
        %v613 = vld [vmem:[%s524 + $0x30] sm:$0xff]
        %v614 = vld [vmem:[%s524 + $0x38] sm:$0xff]
        %v615 = vld [vmem:[%s524 + $0x40] sm:$0xff]
        %v616 = vld [vmem:[%s524 + $0x48] sm:$0xff]
        %v617 = vld [vmem:[%s524 + $0x50] sm:$0xff]
        %v618 = vld [vmem:[%s524 + $0x58] sm:$0xff]
        %v619 = vld [vmem:[%s524 + $0x60] sm:$0xff]
        %v620 = vld [vmem:[%s524 + $0x68] sm:$0xff]
        %v621 = vld [vmem:[%s524 + $0x70] sm:$0xff]
        %v622 = vld [vmem:[%s524 + $0x78] sm:$0xff]
        %v623 = vld [vmem:[%s565] sm:$0x1]
        %v624 = vmul.f32 %v575, 0.125
        %v625 = vmul.f32 %v576, 0.125
        %v626 = vmul.f32 %v577, 0.125
        %v627 = vmul.f32 %v578, 0.125
        %v628 = vmul.f32 %v579, 0.125
        %v629 = vmul.f32 %v580, 0.125
        %v630 = vmul.f32 %v581, 0.125
        %v631 = vmul.f32 %v582, 0.125
        %v632 = vmul.f32 %v583, 0.125
        %v633 = vmul.f32 %v584, 0.125
        %v634 = vmul.f32 %v585, 0.125
        %v635 = vmul.f32 %v586, 0.125
        %v636 = vmul.f32 %v587, 0.125
        %v637 = vmul.f32 %v588, 0.125
        %v638 = vmul.f32 %v589, 0.125
        %v639 = vmul.f32 %v590, 0.125
        %v640 = vpack.c.bf16 %v625, %v624
        %v641 = vpack.c.bf16 %v627, %v626
        %v642 = vpack.c.bf16 %v629, %v628
        %v643 = vpack.c.bf16 %v631, %v630
        %v644 = vpack.c.bf16 %v633, %v632
        %v645 = vpack.c.bf16 %v635, %v634
        %v646 = vpack.c.bf16 %v637, %v636
        %v647 = vpack.c.bf16 %v639, %v638
        %v648 = vpack.c.bf16 %v592, %v591
        %v649 = vpack.c.bf16 %v594, %v593
        %v650 = vpack.c.bf16 %v596, %v595
        %v651 = vpack.c.bf16 %v598, %v597
        %v652 = vpack.c.bf16 %v600, %v599
        %v653 = vpack.c.bf16 %v602, %v601
        %v654 = vpack.c.bf16 %v604, %v603
        %v655 = vpack.c.bf16 %v606, %v605
        %v657 = vlaneseq
        %v658 = vshrl.u32 %v657, 7
        %v659 = vsub.s32 0, %v658
        %v660 = vrot.slane %v623, %v659
        %vm662 = vcmask 523264
        %v664 = vsel %vm662, %v640, 0
        %v667 = vsel %vm662, %v641, 0
        %v670 = vsel %vm662, %v642, 0
        %v673 = vsel %vm662, %v643, 0
        %v676 = vsel %vm662, %v644, 0
        %v679 = vsel %vm662, %v645, 0
        %v682 = vsel %vm662, %v646, 0
        %v685 = vsel %vm662, %v647, 0
        %v688 = vsel %vm662, %v648, 0
        %v691 = vsel %vm662, %v649, 0
        %v694 = vsel %vm662, %v650, 0
        %v697 = vsel %vm662, %v651, 0
        %v700 = vsel %vm662, %v652, 0
        %v703 = vsel %vm662, %v653, 0
        %v706 = vsel %vm662, %v654, 0
        %v709 = vsel %vm662, %v655, 0
        %711 = vmatprep.subr.bf16.mxu0 0
        %712 = vmatpush1.bf16.xpose.msra.mxu0 %v688
        %713 = vmatprep.subr.bf16.mxu0 0
        %714 = vmatpush1.bf16.xpose.msra.mxu0 %v691
        %715 = vmatprep.subr.bf16.mxu0 0
        %716 = vmatpush1.bf16.xpose.msra.mxu0 %v694
        %717 = vmatprep.subr.bf16.mxu0 0
        %718 = vmatpush1.bf16.xpose.msra.mxu0 %v697
        %719 = vmatprep.subr.bf16.mxu0 0
        %720 = vmatpush1.bf16.xpose.msra.mxu0 %v700
        %721 = vmatprep.subr.bf16.mxu0 0
        %722 = vmatpush1.bf16.xpose.msra.mxu0 %v703
        %723 = vmatprep.subr.bf16.mxu0 0
        %724 = vmatpush1.bf16.xpose.msra.mxu0 %v706
        %725 = vmatprep.subr.bf16.mxu0 0
        %726 = vmatpush1.bf16.xpose.msra.mxu0 %v709
        %727 = vmatprep.subr.bf16.mxu0 0
        %728 = vmatpush1.bf16.xpose.msra.mxu0 0
        %729 = vmatprep.subr.bf16.mxu0 0
        %730 = vmatpush1.bf16.xpose.msra.mxu0 0
        %731 = vmatprep.subr.bf16.mxu0 0
        %732 = vmatpush1.bf16.xpose.msra.mxu0 0
        %733 = vmatprep.subr.bf16.mxu0 0
        %734 = vmatpush1.bf16.xpose.msra.mxu0 0
        %735 = vmatprep.subr.bf16.mxu0 0
        %736 = vmatpush1.bf16.xpose.msra.mxu0 0
        %737 = vmatprep.subr.bf16.mxu0 0
        %738 = vmatpush1.bf16.xpose.msra.mxu0 0
        %739 = vmatprep.subr.bf16.mxu0 0
        %740 = vmatpush1.bf16.xpose.msra.mxu0 0
        %741 = vmatprep.subr.bf16.mxu0 0
        %742 = vmatpush1.bf16.xpose.msra.mxu0 0
        %743 = vmatprep.mubr.bf16.mxu0 0
        %744 = vmatmul.mubr.bf16.gmra.mrb[0].mxu0 %v664
        %v745 = vpop.f32.mrb[0].mxu0
        %v746 = vadd.f32 %v660, %v745
        %v747 = vpop.f32.mrb[0].mxu0
        %v748 = vpop.f32.mrb[0].mxu0
        %v749 = vadd.f32 %v660, %v748
        %v750 = vpop.f32.mrb[0].mxu0
        %751 = vmatprep.mubr.bf16.mxu0 0
        %752 = vmatmul.mubr.bf16.gmra.mrb[0].mxu0 %v667
        %v753 = vpop.f32.mrb[0].mxu0
        %v754 = vadd.f32 %v660, %v753
        %v755 = vpop.f32.mrb[0].mxu0
        %v756 = vpop.f32.mrb[0].mxu0
        %v757 = vadd.f32 %v660, %v756
        %v758 = vpop.f32.mrb[0].mxu0
        %759 = vmatprep.mubr.bf16.mxu0 0
        %760 = vmatmul.mubr.bf16.gmra.mrb[0].mxu0 %v670
        %v761 = vpop.f32.mrb[0].mxu0
        %v762 = vadd.f32 %v660, %v761
        %v763 = vpop.f32.mrb[0].mxu0
        %v764 = vpop.f32.mrb[0].mxu0
        %v765 = vadd.f32 %v660, %v764
        %v766 = vpop.f32.mrb[0].mxu0
        %767 = vmatprep.mubr.bf16.mxu0 0
        %768 = vmatmul.mubr.bf16.gmra.mrb[0].mxu0 %v673
        %v769 = vpop.f32.mrb[0].mxu0
        %v770 = vadd.f32 %v660, %v769
        %v771 = vpop.f32.mrb[0].mxu0
        %v772 = vpop.f32.mrb[0].mxu0
        %v773 = vadd.f32 %v660, %v772
        %v774 = vpop.f32.mrb[0].mxu0
        %775 = vmatprep.mubr.bf16.mxu0 0
        %776 = vmatmul.mubr.bf16.gmra.mrb[0].mxu0 %v676
        %v777 = vpop.f32.mrb[0].mxu0
        %v778 = vadd.f32 %v660, %v777
        %v779 = vpop.f32.mrb[0].mxu0
        %v780 = vpop.f32.mrb[0].mxu0
        %v781 = vadd.f32 %v660, %v780
        %v782 = vpop.f32.mrb[0].mxu0
        %783 = vmatprep.mubr.bf16.mxu0 0
        %784 = vmatmul.mubr.bf16.gmra.mrb[0].mxu0 %v679
        %v785 = vpop.f32.mrb[0].mxu0
        %v786 = vadd.f32 %v660, %v785
        %v787 = vpop.f32.mrb[0].mxu0
        %v788 = vpop.f32.mrb[0].mxu0
        %v789 = vadd.f32 %v660, %v788
        %v790 = vpop.f32.mrb[0].mxu0
        %791 = vmatprep.mubr.bf16.mxu0 0
        %792 = vmatmul.mubr.bf16.gmra.mrb[0].mxu0 %v682
        %v793 = vpop.f32.mrb[0].mxu0
        %v794 = vadd.f32 %v660, %v793
        %v795 = vpop.f32.mrb[0].mxu0
        %v796 = vpop.f32.mrb[0].mxu0
        %v797 = vadd.f32 %v660, %v796
        %v798 = vpop.f32.mrb[0].mxu0
        %799 = vmatprep.mubr.bf16.mxu0 0
        %800 = vmatmul.mubr.bf16.gmra.mrb[0].mxu0 %v685
        %v801 = vpop.f32.mrb[0].mxu0
        %v802 = vadd.f32 %v660, %v801
        %v803 = vpop.f32.mrb[0].mxu0
        %v804 = vpop.f32.mrb[0].mxu0
        %v805 = vadd.f32 %v660, %v804
        %v806 = vpop.f32.mrb[0].mxu0
        %807 = vdwg.mxu0
        %808 = vmax.xlane.f32.xlu0 %v746
        %v809 = vpop.xlane.xlu0 %808
        %810 = vmax.xlane.f32.xlu0 %v749
        %v811 = vpop.xlane.xlu0 %810
        %812 = vmax.xlane.f32.xlu0 %v754
        %v813 = vpop.xlane.xlu0 %812
        %814 = vmax.xlane.f32.xlu0 %v757
        %v815 = vpop.xlane.xlu0 %814
        %816 = vmax.xlane.f32.xlu0 %v762
        %v817 = vpop.xlane.xlu0 %816
        %818 = vmax.xlane.f32.xlu0 %v765
        %v819 = vpop.xlane.xlu0 %818
        %820 = vmax.xlane.f32.xlu0 %v770
        %v821 = vpop.xlane.xlu0 %820
        %822 = vmax.xlane.f32.xlu0 %v773
        %v823 = vpop.xlane.xlu0 %822
        %824 = vmax.xlane.f32.xlu0 %v778
        %v825 = vpop.xlane.xlu0 %824
        %826 = vmax.xlane.f32.xlu0 %v781
        %v827 = vpop.xlane.xlu0 %826
        %828 = vmax.xlane.f32.xlu0 %v786
        %v829 = vpop.xlane.xlu0 %828
        %830 = vmax.xlane.f32.xlu0 %v789
        %v831 = vpop.xlane.xlu0 %830
        %832 = vmax.xlane.f32.xlu0 %v794
        %v833 = vpop.xlane.xlu0 %832
        %834 = vmax.xlane.f32.xlu0 %v797
        %v835 = vpop.xlane.xlu0 %834
        %836 = vmax.xlane.f32.xlu0 %v802
        %v837 = vpop.xlane.xlu0 %836
        %838 = vmax.xlane.f32.xlu0 %v805
        %v839 = vpop.xlane.xlu0 %838
        %v840 = vsub.f32 %v746, %v809
        %v841 = vsub.f32 %v749, %v811
        %v842 = vsub.f32 %v754, %v813
        %v843 = vsub.f32 %v757, %v815
        %v844 = vsub.f32 %v762, %v817
        %v845 = vsub.f32 %v765, %v819
        %v846 = vsub.f32 %v770, %v821
        %v847 = vsub.f32 %v773, %v823
        %v848 = vsub.f32 %v778, %v825
        %v849 = vsub.f32 %v781, %v827
        %v850 = vsub.f32 %v786, %v829
        %v851 = vsub.f32 %v789, %v831
        %v852 = vsub.f32 %v794, %v833
        %v853 = vsub.f32 %v797, %v835
        %v854 = vsub.f32 %v802, %v837
        %v855 = vsub.f32 %v805, %v839
        %v856 = vmul.f32 %v840, 1.442695
        %v857 = vpow.pop %v856
        %v858 = vmul.f32 %v841, 1.442695
        %v859 = vpow.pop %v858
        %v860 = vmul.f32 %v842, 1.442695
        %v861 = vpow.pop %v860
        %v862 = vmul.f32 %v843, 1.442695
        %v863 = vpow.pop %v862
        %v864 = vmul.f32 %v844, 1.442695
        %v865 = vpow.pop %v864
        %v866 = vmul.f32 %v845, 1.442695
        %v867 = vpow.pop %v866
        %v868 = vmul.f32 %v846, 1.442695
        %v869 = vpow.pop %v868
        %v870 = vmul.f32 %v847, 1.442695
        %v871 = vpow.pop %v870
        %v872 = vmul.f32 %v848, 1.442695
        %v873 = vpow.pop %v872
        %v874 = vmul.f32 %v849, 1.442695
        %v875 = vpow.pop %v874
        %v876 = vmul.f32 %v850, 1.442695
        %v877 = vpow.pop %v876
        %v878 = vmul.f32 %v851, 1.442695
        %v879 = vpow.pop %v878
        %v880 = vmul.f32 %v852, 1.442695
        %v881 = vpow.pop %v880
        %v882 = vmul.f32 %v853, 1.442695
        %v883 = vpow.pop %v882
        %v884 = vmul.f32 %v854, 1.442695
        %v885 = vpow.pop %v884
        %v886 = vmul.f32 %v855, 1.442695
        %v887 = vpow.pop %v886
        %888 = vadd.xlane.f32.xlu0 %v857
        %v889 = vpop.xlane.xlu0 %888
        %890 = vadd.xlane.f32.xlu0 %v859
        %v891 = vpop.xlane.xlu0 %890
        %892 = vadd.xlane.f32.xlu0 %v861
        %v893 = vpop.xlane.xlu0 %892
        %894 = vadd.xlane.f32.xlu0 %v863
        %v895 = vpop.xlane.xlu0 %894
        %896 = vadd.xlane.f32.xlu0 %v865
        %v897 = vpop.xlane.xlu0 %896
        %898 = vadd.xlane.f32.xlu0 %v867
        %v899 = vpop.xlane.xlu0 %898
        %900 = vadd.xlane.f32.xlu0 %v869
        %v901 = vpop.xlane.xlu0 %900
        %902 = vadd.xlane.f32.xlu0 %v871
        %v903 = vpop.xlane.xlu0 %902
        %904 = vadd.xlane.f32.xlu0 %v873
        %v905 = vpop.xlane.xlu0 %904
        %906 = vadd.xlane.f32.xlu0 %v875
        %v907 = vpop.xlane.xlu0 %906
        %908 = vadd.xlane.f32.xlu0 %v877
        %v909 = vpop.xlane.xlu0 %908
        %910 = vadd.xlane.f32.xlu0 %v879
        %v911 = vpop.xlane.xlu0 %910
        %912 = vadd.xlane.f32.xlu0 %v881
        %v913 = vpop.xlane.xlu0 %912
        %914 = vadd.xlane.f32.xlu0 %v883
        %v915 = vpop.xlane.xlu0 %914
        %916 = vadd.xlane.f32.xlu0 %v885
        %v917 = vpop.xlane.xlu0 %916
        %918 = vadd.xlane.f32.xlu0 %v887
        %v919 = vpop.xlane.xlu0 %918
        %v920 = vrcp.pop %v889
        %v921 = vrcp.pop %v891
        %v922 = vrcp.pop %v893
        %v923 = vrcp.pop %v895
        %v924 = vrcp.pop %v897
        %v925 = vrcp.pop %v899
        %v926 = vrcp.pop %v901
        %v927 = vrcp.pop %v903
        %v928 = vrcp.pop %v905
        %v929 = vrcp.pop %v907
        %v930 = vrcp.pop %v909
        %v931 = vrcp.pop %v911
        %v932 = vrcp.pop %v913
        %v933 = vrcp.pop %v915
        %v934 = vrcp.pop %v917
        %v935 = vrcp.pop %v919
        %v936 = vmul.f32 %v857, %v920
        %v937 = vmul.f32 %v859, %v921
        %v938 = vmul.f32 %v861, %v922
        %v939 = vmul.f32 %v863, %v923
        %v940 = vmul.f32 %v865, %v924
        %v941 = vmul.f32 %v867, %v925
        %v942 = vmul.f32 %v869, %v926
        %v943 = vmul.f32 %v871, %v927
        %v944 = vmul.f32 %v873, %v928
        %v945 = vmul.f32 %v875, %v929
        %v946 = vmul.f32 %v877, %v930
        %v947 = vmul.f32 %v879, %v931
        %v948 = vmul.f32 %v881, %v932
        %v949 = vmul.f32 %v883, %v933
        %v950 = vmul.f32 %v885, %v934
        %v951 = vmul.f32 %v887, %v935
        %v952 = vpack.c.bf16 %v937, %v936
        %v953 = vpack.c.bf16 %v939, %v938
        %v954 = vpack.c.bf16 %v941, %v940
        %v955 = vpack.c.bf16 %v943, %v942
        %v956 = vpack.c.bf16 %v945, %v944
        %v957 = vpack.c.bf16 %v947, %v946
        %v958 = vpack.c.bf16 %v949, %v948
        %v959 = vpack.c.bf16 %v951, %v950
        %v960 = vpack.c.bf16 %v608, %v607
        %v961 = vpack.c.bf16 %v610, %v609
        %v962 = vpack.c.bf16 %v612, %v611
        %v963 = vpack.c.bf16 %v614, %v613
        %v964 = vpack.c.bf16 %v616, %v615
        %v965 = vpack.c.bf16 %v618, %v617
        %v966 = vpack.c.bf16 %v620, %v619
        %v967 = vpack.c.bf16 %v622, %v621
        %968 = vmatprep.subr.bf16.mxu0 0
        %969 = vmatpush1.bf16.msra.mxu0 %v960
        %970 = vmatprep.subr.bf16.mxu0 0
        %971 = vmatpush1.bf16.msra.mxu0 %v961
        %972 = vmatprep.subr.bf16.mxu0 0
        %973 = vmatpush1.bf16.msra.mxu0 %v962
        %974 = vmatprep.subr.bf16.mxu0 0
        %975 = vmatpush1.bf16.msra.mxu0 %v963
        %976 = vmatprep.subr.bf16.mxu0 0
        %977 = vmatpush1.bf16.msra.mxu0 %v964
        %978 = vmatprep.subr.bf16.mxu0 0
        %979 = vmatpush1.bf16.msra.mxu0 %v965
        %980 = vmatprep.subr.bf16.mxu0 0
        %981 = vmatpush1.bf16.msra.mxu0 %v966
        %982 = vmatprep.subr.bf16.mxu0 0
        %983 = vmatpush1.bf16.msra.mxu0 %v967
        %984 = vmatprep.subr.bf16.mxu0 0
        %985 = vmatpush1.bf16.msra.mxu0 0
        %986 = vmatprep.subr.bf16.mxu0 0
        %987 = vmatpush1.bf16.msra.mxu0 0
        %988 = vmatprep.subr.bf16.mxu0 0
        %989 = vmatpush1.bf16.msra.mxu0 0
        %990 = vmatprep.subr.bf16.mxu0 0
        %991 = vmatpush1.bf16.msra.mxu0 0
        %992 = vmatprep.subr.bf16.mxu0 0
        %993 = vmatpush1.bf16.msra.mxu0 0
        %994 = vmatprep.subr.bf16.mxu0 0
        %995 = vmatpush1.bf16.msra.mxu0 0
        %996 = vmatprep.subr.bf16.mxu0 0
        %997 = vmatpush1.bf16.msra.mxu0 0
        %998 = vmatprep.subr.bf16.mxu0 0
        %999 = vmatpush1.bf16.msra.mxu0 0
        %1000 = vmatprep.mubr.bf16.mxu0 0
        %1001 = vmatmul.mubr.bf16.gmra.mrb[0].mxu0 %v952
        %v1002 = vpop.f32.mrb[0].mxu0
        %v1003 = vadd.f32 0.0, %v1002
        %v1004 = vpop.f32.mrb[0].mxu0
        %v1005 = vpop.f32.mrb[0].mxu0
        %v1006 = vadd.f32 0.0, %v1005
        %v1007 = vpop.f32.mrb[0].mxu0
        %1008 = vmatprep.mubr.bf16.mxu0 0
        %1009 = vmatmul.mubr.bf16.gmra.mrb[0].mxu0 %v953
        %v1010 = vpop.f32.mrb[0].mxu0
        %v1011 = vadd.f32 0.0, %v1010
        %v1012 = vpop.f32.mrb[0].mxu0
        %v1013 = vpop.f32.mrb[0].mxu0
        %v1014 = vadd.f32 0.0, %v1013
        %v1015 = vpop.f32.mrb[0].mxu0
        %1016 = vmatprep.mubr.bf16.mxu0 0
        %1017 = vmatmul.mubr.bf16.gmra.mrb[0].mxu0 %v954
        %v1018 = vpop.f32.mrb[0].mxu0
        %v1019 = vadd.f32 0.0, %v1018
        %v1020 = vpop.f32.mrb[0].mxu0
        %v1021 = vpop.f32.mrb[0].mxu0
        %v1022 = vadd.f32 0.0, %v1021
        %v1023 = vpop.f32.mrb[0].mxu0
        %1024 = vmatprep.mubr.bf16.mxu0 0
        %1025 = vmatmul.mubr.bf16.gmra.mrb[0].mxu0 %v955
        %v1026 = vpop.f32.mrb[0].mxu0
        %v1027 = vadd.f32 0.0, %v1026
        %v1028 = vpop.f32.mrb[0].mxu0
        %v1029 = vpop.f32.mrb[0].mxu0
        %v1030 = vadd.f32 0.0, %v1029
        %v1031 = vpop.f32.mrb[0].mxu0
        %1032 = vmatprep.mubr.bf16.mxu0 0
        %1033 = vmatmul.mubr.bf16.gmra.mrb[0].mxu0 %v956
        %v1034 = vpop.f32.mrb[0].mxu0
        %v1035 = vadd.f32 0.0, %v1034
        %v1036 = vpop.f32.mrb[0].mxu0
        %v1037 = vpop.f32.mrb[0].mxu0
        %v1038 = vadd.f32 0.0, %v1037
        %v1039 = vpop.f32.mrb[0].mxu0
        %1040 = vmatprep.mubr.bf16.mxu0 0
        %1041 = vmatmul.mubr.bf16.gmra.mrb[0].mxu0 %v957
        %v1042 = vpop.f32.mrb[0].mxu0
        %v1043 = vadd.f32 0.0, %v1042
        %v1044 = vpop.f32.mrb[0].mxu0
        %v1045 = vpop.f32.mrb[0].mxu0
        %v1046 = vadd.f32 0.0, %v1045
        %v1047 = vpop.f32.mrb[0].mxu0
        %1048 = vmatprep.mubr.bf16.mxu0 0
        %1049 = vmatmul.mubr.bf16.gmra.mrb[0].mxu0 %v958
        %v1050 = vpop.f32.mrb[0].mxu0
        %v1051 = vadd.f32 0.0, %v1050
        %v1052 = vpop.f32.mrb[0].mxu0
        %v1053 = vpop.f32.mrb[0].mxu0
        %v1054 = vadd.f32 0.0, %v1053
        %v1055 = vpop.f32.mrb[0].mxu0
        %1056 = vmatprep.mubr.bf16.mxu0 0
        %1057 = vmatmul.mubr.bf16.gmra.mrb[0].mxu0 %v959
        %v1058 = vpop.f32.mrb[0].mxu0
        %v1059 = vadd.f32 0.0, %v1058
        %v1060 = vpop.f32.mrb[0].mxu0
        %v1061 = vpop.f32.mrb[0].mxu0
        %v1062 = vadd.f32 0.0, %v1061
        %v1063 = vpop.f32.mrb[0].mxu0
        %1064 = vdwg.mxu0
        %1073 = vrot.lane.b32.xlu0 %v640, 64
        %v1074 = vpop.permute.xlu0 %1073
        %1075 = vrot.lane.b32.xlu0 %v641, 64
        %v1076 = vpop.permute.xlu0 %1075
        %1077 = vrot.lane.b32.xlu0 %v642, 64
        %v1078 = vpop.permute.xlu0 %1077
        %1079 = vrot.lane.b32.xlu0 %v643, 64
        %v1080 = vpop.permute.xlu0 %1079
        %1081 = vrot.lane.b32.xlu0 %v644, 64
        %v1082 = vpop.permute.xlu0 %1081
        %1083 = vrot.lane.b32.xlu0 %v645, 64
        %v1084 = vpop.permute.xlu0 %1083
        %1085 = vrot.lane.b32.xlu0 %v646, 64
        %v1086 = vpop.permute.xlu0 %1085
        %1087 = vrot.lane.b32.xlu0 %v647, 64
        %v1088 = vpop.permute.xlu0 %1087
        %1097 = vrot.lane.b32.xlu0 %v648, 64
        %v1098 = vpop.permute.xlu0 %1097
        %1099 = vrot.lane.b32.xlu0 %v649, 64
        %v1100 = vpop.permute.xlu0 %1099
        %1101 = vrot.lane.b32.xlu0 %v650, 64
        %v1102 = vpop.permute.xlu0 %1101
        %1103 = vrot.lane.b32.xlu0 %v651, 64
        %v1104 = vpop.permute.xlu0 %1103
        %1105 = vrot.lane.b32.xlu0 %v652, 64
        %v1106 = vpop.permute.xlu0 %1105
        %1107 = vrot.lane.b32.xlu0 %v653, 64
        %v1108 = vpop.permute.xlu0 %1107
        %1109 = vrot.lane.b32.xlu0 %v654, 64
        %v1110 = vpop.permute.xlu0 %1109
        %1111 = vrot.lane.b32.xlu0 %v655, 64
        %v1112 = vpop.permute.xlu0 %1111
        %v1114 = vsel %vm662, %v1074, 0
        %v1117 = vsel %vm662, %v1076, 0
        %v1120 = vsel %vm662, %v1078, 0
        %v1123 = vsel %vm662, %v1080, 0
        %v1126 = vsel %vm662, %v1082, 0
        %v1129 = vsel %vm662, %v1084, 0
        %v1132 = vsel %vm662, %v1086, 0
        %v1135 = vsel %vm662, %v1088, 0
        %v1138 = vsel %vm662, %v1098, 0
        %v1141 = vsel %vm662, %v1100, 0
        %v1144 = vsel %vm662, %v1102, 0
        %v1147 = vsel %vm662, %v1104, 0
        %v1150 = vsel %vm662, %v1106, 0
        %v1153 = vsel %vm662, %v1108, 0
        %v1156 = vsel %vm662, %v1110, 0
        %v1159 = vsel %vm662, %v1112, 0
        %1161 = vmatprep.subr.bf16.mxu0 0
        %1162 = vmatpush1.bf16.xpose.msra.mxu0 %v1138
        %1163 = vmatprep.subr.bf16.mxu0 0
        %1164 = vmatpush1.bf16.xpose.msra.mxu0 %v1141
        %1165 = vmatprep.subr.bf16.mxu0 0
        %1166 = vmatpush1.bf16.xpose.msra.mxu0 %v1144
        %1167 = vmatprep.subr.bf16.mxu0 0
        %1168 = vmatpush1.bf16.xpose.msra.mxu0 %v1147
        %1169 = vmatprep.subr.bf16.mxu0 0
        %1170 = vmatpush1.bf16.xpose.msra.mxu0 %v1150
        %1171 = vmatprep.subr.bf16.mxu0 0
        %1172 = vmatpush1.bf16.xpose.msra.mxu0 %v1153
        %1173 = vmatprep.subr.bf16.mxu0 0
        %1174 = vmatpush1.bf16.xpose.msra.mxu0 %v1156
        %1175 = vmatprep.subr.bf16.mxu0 0
        %1176 = vmatpush1.bf16.xpose.msra.mxu0 %v1159
        %1177 = vmatprep.subr.bf16.mxu0 0
        %1178 = vmatpush1.bf16.xpose.msra.mxu0 0
        %1179 = vmatprep.subr.bf16.mxu0 0
        %1180 = vmatpush1.bf16.xpose.msra.mxu0 0
        %1181 = vmatprep.subr.bf16.mxu0 0
        %1182 = vmatpush1.bf16.xpose.msra.mxu0 0
        %1183 = vmatprep.subr.bf16.mxu0 0
        %1184 = vmatpush1.bf16.xpose.msra.mxu0 0
        %1185 = vmatprep.subr.bf16.mxu0 0
        %1186 = vmatpush1.bf16.xpose.msra.mxu0 0
        %1187 = vmatprep.subr.bf16.mxu0 0
        %1188 = vmatpush1.bf16.xpose.msra.mxu0 0
        %1189 = vmatprep.subr.bf16.mxu0 0
        %1190 = vmatpush1.bf16.xpose.msra.mxu0 0
        %1191 = vmatprep.subr.bf16.mxu0 0
        %1192 = vmatpush1.bf16.xpose.msra.mxu0 0
        %1193 = vmatprep.mubr.bf16.mxu0 0
        %1194 = vmatmul.mubr.bf16.gmra.mrb[0].mxu0 %v1114
        %v1195 = vpop.f32.mrb[0].mxu0
        %v1196 = vadd.f32 %v660, %v1195
        %v1197 = vpop.f32.mrb[0].mxu0
        %v1198 = vpop.f32.mrb[0].mxu0
        %v1199 = vadd.f32 %v660, %v1198
        %v1200 = vpop.f32.mrb[0].mxu0
        %1201 = vmatprep.mubr.bf16.mxu0 0
        %1202 = vmatmul.mubr.bf16.gmra.mrb[0].mxu0 %v1117
        %v1203 = vpop.f32.mrb[0].mxu0
        %v1204 = vadd.f32 %v660, %v1203
        %v1205 = vpop.f32.mrb[0].mxu0
        %v1206 = vpop.f32.mrb[0].mxu0
        %v1207 = vadd.f32 %v660, %v1206
        %v1208 = vpop.f32.mrb[0].mxu0
        %1209 = vmatprep.mubr.bf16.mxu0 0
        %1210 = vmatmul.mubr.bf16.gmra.mrb[0].mxu0 %v1120
        %v1211 = vpop.f32.mrb[0].mxu0
        %v1212 = vadd.f32 %v660, %v1211
        %v1213 = vpop.f32.mrb[0].mxu0
        %v1214 = vpop.f32.mrb[0].mxu0
        %v1215 = vadd.f32 %v660, %v1214
        %v1216 = vpop.f32.mrb[0].mxu0
        %1217 = vmatprep.mubr.bf16.mxu0 0
        %1218 = vmatmul.mubr.bf16.gmra.mrb[0].mxu0 %v1123
        %v1219 = vpop.f32.mrb[0].mxu0
        %v1220 = vadd.f32 %v660, %v1219
        %v1221 = vpop.f32.mrb[0].mxu0
        %v1222 = vpop.f32.mrb[0].mxu0
        %v1223 = vadd.f32 %v660, %v1222
        %v1224 = vpop.f32.mrb[0].mxu0
        %1225 = vmatprep.mubr.bf16.mxu0 0
        %1226 = vmatmul.mubr.bf16.gmra.mrb[0].mxu0 %v1126
        %v1227 = vpop.f32.mrb[0].mxu0
        %v1228 = vadd.f32 %v660, %v1227
        %v1229 = vpop.f32.mrb[0].mxu0
        %v1230 = vpop.f32.mrb[0].mxu0
        %v1231 = vadd.f32 %v660, %v1230
        %v1232 = vpop.f32.mrb[0].mxu0
        %1233 = vmatprep.mubr.bf16.mxu0 0
        %1234 = vmatmul.mubr.bf16.gmra.mrb[0].mxu0 %v1129
        %v1235 = vpop.f32.mrb[0].mxu0
        %v1236 = vadd.f32 %v660, %v1235
        %v1237 = vpop.f32.mrb[0].mxu0
        %v1238 = vpop.f32.mrb[0].mxu0
        %v1239 = vadd.f32 %v660, %v1238
        %v1240 = vpop.f32.mrb[0].mxu0
        %1241 = vmatprep.mubr.bf16.mxu0 0
        %1242 = vmatmul.mubr.bf16.gmra.mrb[0].mxu0 %v1132
        %v1243 = vpop.f32.mrb[0].mxu0
        %v1244 = vadd.f32 %v660, %v1243
        %v1245 = vpop.f32.mrb[0].mxu0
        %v1246 = vpop.f32.mrb[0].mxu0
        %v1247 = vadd.f32 %v660, %v1246
        %v1248 = vpop.f32.mrb[0].mxu0
        %1249 = vmatprep.mubr.bf16.mxu0 0
        %1250 = vmatmul.mubr.bf16.gmra.mrb[0].mxu0 %v1135
        %v1251 = vpop.f32.mrb[0].mxu0
        %v1252 = vadd.f32 %v660, %v1251
        %v1253 = vpop.f32.mrb[0].mxu0
        %v1254 = vpop.f32.mrb[0].mxu0
        %v1255 = vadd.f32 %v660, %v1254
        %v1256 = vpop.f32.mrb[0].mxu0
        %1257 = vdwg.mxu0
        %1258 = vmax.xlane.f32.xlu0 %v1196
        %v1259 = vpop.xlane.xlu0 %1258
        %1260 = vmax.xlane.f32.xlu0 %v1199
        %v1261 = vpop.xlane.xlu0 %1260
        %1262 = vmax.xlane.f32.xlu0 %v1204
        %v1263 = vpop.xlane.xlu0 %1262
        %1264 = vmax.xlane.f32.xlu0 %v1207
        %v1265 = vpop.xlane.xlu0 %1264
        %1266 = vmax.xlane.f32.xlu0 %v1212
        %v1267 = vpop.xlane.xlu0 %1266
        %1268 = vmax.xlane.f32.xlu0 %v1215
        %v1269 = vpop.xlane.xlu0 %1268
        %1270 = vmax.xlane.f32.xlu0 %v1220
        %v1271 = vpop.xlane.xlu0 %1270
        %1272 = vmax.xlane.f32.xlu0 %v1223
        %v1273 = vpop.xlane.xlu0 %1272
        %1274 = vmax.xlane.f32.xlu0 %v1228
        %v1275 = vpop.xlane.xlu0 %1274
        %1276 = vmax.xlane.f32.xlu0 %v1231
        %v1277 = vpop.xlane.xlu0 %1276
        %1278 = vmax.xlane.f32.xlu0 %v1236
        %v1279 = vpop.xlane.xlu0 %1278
        %1280 = vmax.xlane.f32.xlu0 %v1239
        %v1281 = vpop.xlane.xlu0 %1280
        %1282 = vmax.xlane.f32.xlu0 %v1244
        %v1283 = vpop.xlane.xlu0 %1282
        %1284 = vmax.xlane.f32.xlu0 %v1247
        %v1285 = vpop.xlane.xlu0 %1284
        %1286 = vmax.xlane.f32.xlu0 %v1252
        %v1287 = vpop.xlane.xlu0 %1286
        %1288 = vmax.xlane.f32.xlu0 %v1255
        %v1289 = vpop.xlane.xlu0 %1288
        %v1290 = vsub.f32 %v1196, %v1259
        %v1291 = vsub.f32 %v1199, %v1261
        %v1292 = vsub.f32 %v1204, %v1263
        %v1293 = vsub.f32 %v1207, %v1265
        %v1294 = vsub.f32 %v1212, %v1267
        %v1295 = vsub.f32 %v1215, %v1269
        %v1296 = vsub.f32 %v1220, %v1271
        %v1297 = vsub.f32 %v1223, %v1273
        %v1298 = vsub.f32 %v1228, %v1275
        %v1299 = vsub.f32 %v1231, %v1277
        %v1300 = vsub.f32 %v1236, %v1279
        %v1301 = vsub.f32 %v1239, %v1281
        %v1302 = vsub.f32 %v1244, %v1283
        %v1303 = vsub.f32 %v1247, %v1285
        %v1304 = vsub.f32 %v1252, %v1287
        %v1305 = vsub.f32 %v1255, %v1289
        %v1306 = vmul.f32 %v1290, 1.442695
        %v1307 = vpow.pop %v1306
        %v1308 = vmul.f32 %v1291, 1.442695
        %v1309 = vpow.pop %v1308
        %v1310 = vmul.f32 %v1292, 1.442695
        %v1311 = vpow.pop %v1310
        %v1312 = vmul.f32 %v1293, 1.442695
        %v1313 = vpow.pop %v1312
        %v1314 = vmul.f32 %v1294, 1.442695
        %v1315 = vpow.pop %v1314
        %v1316 = vmul.f32 %v1295, 1.442695
        %v1317 = vpow.pop %v1316
        %v1318 = vmul.f32 %v1296, 1.442695
        %v1319 = vpow.pop %v1318
        %v1320 = vmul.f32 %v1297, 1.442695
        %v1321 = vpow.pop %v1320
        %v1322 = vmul.f32 %v1298, 1.442695
        %v1323 = vpow.pop %v1322
        %v1324 = vmul.f32 %v1299, 1.442695
        %v1325 = vpow.pop %v1324
        %v1326 = vmul.f32 %v1300, 1.442695
        %v1327 = vpow.pop %v1326
        %v1328 = vmul.f32 %v1301, 1.442695
        %v1329 = vpow.pop %v1328
        %v1330 = vmul.f32 %v1302, 1.442695
        %v1331 = vpow.pop %v1330
        %v1332 = vmul.f32 %v1303, 1.442695
        %v1333 = vpow.pop %v1332
        %v1334 = vmul.f32 %v1304, 1.442695
        %v1335 = vpow.pop %v1334
        %v1336 = vmul.f32 %v1305, 1.442695
        %v1337 = vpow.pop %v1336
        %1338 = vadd.xlane.f32.xlu0 %v1307
        %v1339 = vpop.xlane.xlu0 %1338
        %1340 = vadd.xlane.f32.xlu0 %v1309
        %v1341 = vpop.xlane.xlu0 %1340
        %1342 = vadd.xlane.f32.xlu0 %v1311
        %v1343 = vpop.xlane.xlu0 %1342
        %1344 = vadd.xlane.f32.xlu0 %v1313
        %v1345 = vpop.xlane.xlu0 %1344
        %1346 = vadd.xlane.f32.xlu0 %v1315
        %v1347 = vpop.xlane.xlu0 %1346
        %1348 = vadd.xlane.f32.xlu0 %v1317
        %v1349 = vpop.xlane.xlu0 %1348
        %1350 = vadd.xlane.f32.xlu0 %v1319
        %v1351 = vpop.xlane.xlu0 %1350
        %1352 = vadd.xlane.f32.xlu0 %v1321
        %v1353 = vpop.xlane.xlu0 %1352
        %1354 = vadd.xlane.f32.xlu0 %v1323
        %v1355 = vpop.xlane.xlu0 %1354
        %1356 = vadd.xlane.f32.xlu0 %v1325
        %v1357 = vpop.xlane.xlu0 %1356
        %1358 = vadd.xlane.f32.xlu0 %v1327
        %v1359 = vpop.xlane.xlu0 %1358
        %1360 = vadd.xlane.f32.xlu0 %v1329
        %v1361 = vpop.xlane.xlu0 %1360
        %1362 = vadd.xlane.f32.xlu0 %v1331
        %v1363 = vpop.xlane.xlu0 %1362
        %1364 = vadd.xlane.f32.xlu0 %v1333
        %v1365 = vpop.xlane.xlu0 %1364
        %1366 = vadd.xlane.f32.xlu0 %v1335
        %v1367 = vpop.xlane.xlu0 %1366
        %1368 = vadd.xlane.f32.xlu0 %v1337
        %v1369 = vpop.xlane.xlu0 %1368
        %v1370 = vrcp.pop %v1339
        %v1371 = vrcp.pop %v1341
        %v1372 = vrcp.pop %v1343
        %v1373 = vrcp.pop %v1345
        %v1374 = vrcp.pop %v1347
        %v1375 = vrcp.pop %v1349
        %v1376 = vrcp.pop %v1351
        %v1377 = vrcp.pop %v1353
        %v1378 = vrcp.pop %v1355
        %v1379 = vrcp.pop %v1357
        %v1380 = vrcp.pop %v1359
        %v1381 = vrcp.pop %v1361
        %v1382 = vrcp.pop %v1363
        %v1383 = vrcp.pop %v1365
        %v1384 = vrcp.pop %v1367
        %v1385 = vrcp.pop %v1369
        %v1386 = vmul.f32 %v1307, %v1370
        %v1387 = vmul.f32 %v1309, %v1371
        %v1388 = vmul.f32 %v1311, %v1372
        %v1389 = vmul.f32 %v1313, %v1373
        %v1390 = vmul.f32 %v1315, %v1374
        %v1391 = vmul.f32 %v1317, %v1375
        %v1392 = vmul.f32 %v1319, %v1376
        %v1393 = vmul.f32 %v1321, %v1377
        %v1394 = vmul.f32 %v1323, %v1378
        %v1395 = vmul.f32 %v1325, %v1379
        %v1396 = vmul.f32 %v1327, %v1380
        %v1397 = vmul.f32 %v1329, %v1381
        %v1398 = vmul.f32 %v1331, %v1382
        %v1399 = vmul.f32 %v1333, %v1383
        %v1400 = vmul.f32 %v1335, %v1384
        %v1401 = vmul.f32 %v1337, %v1385
        %v1402 = vpack.c.bf16 %v1387, %v1386
        %v1403 = vpack.c.bf16 %v1389, %v1388
        %v1404 = vpack.c.bf16 %v1391, %v1390
        %v1405 = vpack.c.bf16 %v1393, %v1392
        %v1406 = vpack.c.bf16 %v1395, %v1394
        %v1407 = vpack.c.bf16 %v1397, %v1396
        %v1408 = vpack.c.bf16 %v1399, %v1398
        %v1409 = vpack.c.bf16 %v1401, %v1400
        %1418 = vrot.lane.b32.xlu0 %v960, 64
        %v1419 = vpop.permute.xlu0 %1418
        %1420 = vrot.lane.b32.xlu0 %v961, 64
        %v1421 = vpop.permute.xlu0 %1420
        %1422 = vrot.lane.b32.xlu0 %v962, 64
        %v1423 = vpop.permute.xlu0 %1422
        %1424 = vrot.lane.b32.xlu0 %v963, 64
        %v1425 = vpop.permute.xlu0 %1424
        %1426 = vrot.lane.b32.xlu0 %v964, 64
        %v1427 = vpop.permute.xlu0 %1426
        %1428 = vrot.lane.b32.xlu0 %v965, 64
        %v1429 = vpop.permute.xlu0 %1428
        %1430 = vrot.lane.b32.xlu0 %v966, 64
        %v1431 = vpop.permute.xlu0 %1430
        %1432 = vrot.lane.b32.xlu0 %v967, 64
        %v1433 = vpop.permute.xlu0 %1432
        %1442 = vmatprep.subr.bf16.mxu0 0
        %1443 = vmatpush1.bf16.msra.mxu0 %v1419
        %1444 = vmatprep.subr.bf16.mxu0 0
        %1445 = vmatpush1.bf16.msra.mxu0 %v1421
        %1446 = vmatprep.subr.bf16.mxu0 0
        %1447 = vmatpush1.bf16.msra.mxu0 %v1423
        %1448 = vmatprep.subr.bf16.mxu0 0
        %1449 = vmatpush1.bf16.msra.mxu0 %v1425
        %1450 = vmatprep.subr.bf16.mxu0 0
        %1451 = vmatpush1.bf16.msra.mxu0 %v1427
        %1452 = vmatprep.subr.bf16.mxu0 0
        %1453 = vmatpush1.bf16.msra.mxu0 %v1429
        %1454 = vmatprep.subr.bf16.mxu0 0
        %1455 = vmatpush1.bf16.msra.mxu0 %v1431
        %1456 = vmatprep.subr.bf16.mxu0 0
        %1457 = vmatpush1.bf16.msra.mxu0 %v1433
        %1458 = vmatprep.subr.bf16.mxu0 0
        %1459 = vmatpush1.bf16.msra.mxu0 0
        %1460 = vmatprep.subr.bf16.mxu0 0
        %1461 = vmatpush1.bf16.msra.mxu0 0
        %1462 = vmatprep.subr.bf16.mxu0 0
        %1463 = vmatpush1.bf16.msra.mxu0 0
        %1464 = vmatprep.subr.bf16.mxu0 0
        %1465 = vmatpush1.bf16.msra.mxu0 0
        %1466 = vmatprep.subr.bf16.mxu0 0
        %1467 = vmatpush1.bf16.msra.mxu0 0
        %1468 = vmatprep.subr.bf16.mxu0 0
        %1469 = vmatpush1.bf16.msra.mxu0 0
        %1470 = vmatprep.subr.bf16.mxu0 0
        %1471 = vmatpush1.bf16.msra.mxu0 0
        %1472 = vmatprep.subr.bf16.mxu0 0
        %1473 = vmatpush1.bf16.msra.mxu0 0
        %1474 = vmatprep.mubr.bf16.mxu0 0
        %1475 = vmatmul.mubr.bf16.gmra.mrb[0].mxu0 %v1402
        %v1476 = vpop.f32.mrb[0].mxu0
        %v1477 = vadd.f32 0.0, %v1476
        %v1478 = vpop.f32.mrb[0].mxu0
        %v1479 = vpop.f32.mrb[0].mxu0
        %v1480 = vadd.f32 0.0, %v1479
        %v1481 = vpop.f32.mrb[0].mxu0
        %1482 = vmatprep.mubr.bf16.mxu0 0
        %1483 = vmatmul.mubr.bf16.gmra.mrb[0].mxu0 %v1403
        %v1484 = vpop.f32.mrb[0].mxu0
        %v1485 = vadd.f32 0.0, %v1484
        %v1486 = vpop.f32.mrb[0].mxu0
        %v1487 = vpop.f32.mrb[0].mxu0
        %v1488 = vadd.f32 0.0, %v1487
        %v1489 = vpop.f32.mrb[0].mxu0
        %1490 = vmatprep.mubr.bf16.mxu0 0
        %1491 = vmatmul.mubr.bf16.gmra.mrb[0].mxu0 %v1404
        %v1492 = vpop.f32.mrb[0].mxu0
        %v1493 = vadd.f32 0.0, %v1492
        %v1494 = vpop.f32.mrb[0].mxu0
        %v1495 = vpop.f32.mrb[0].mxu0
        %v1496 = vadd.f32 0.0, %v1495
        %v1497 = vpop.f32.mrb[0].mxu0
        %1498 = vmatprep.mubr.bf16.mxu0 0
        %1499 = vmatmul.mubr.bf16.gmra.mrb[0].mxu0 %v1405
        %v1500 = vpop.f32.mrb[0].mxu0
        %v1501 = vadd.f32 0.0, %v1500
        %v1502 = vpop.f32.mrb[0].mxu0
        %v1503 = vpop.f32.mrb[0].mxu0
        %v1504 = vadd.f32 0.0, %v1503
        %v1505 = vpop.f32.mrb[0].mxu0
        %1506 = vmatprep.mubr.bf16.mxu0 0
        %1507 = vmatmul.mubr.bf16.gmra.mrb[0].mxu0 %v1406
        %v1508 = vpop.f32.mrb[0].mxu0
        %v1509 = vadd.f32 0.0, %v1508
        %v1510 = vpop.f32.mrb[0].mxu0
        %v1511 = vpop.f32.mrb[0].mxu0
        %v1512 = vadd.f32 0.0, %v1511
        %v1513 = vpop.f32.mrb[0].mxu0
        %1514 = vmatprep.mubr.bf16.mxu0 0
        %1515 = vmatmul.mubr.bf16.gmra.mrb[0].mxu0 %v1407
        %v1516 = vpop.f32.mrb[0].mxu0
        %v1517 = vadd.f32 0.0, %v1516
        %v1518 = vpop.f32.mrb[0].mxu0
        %v1519 = vpop.f32.mrb[0].mxu0
        %v1520 = vadd.f32 0.0, %v1519
        %v1521 = vpop.f32.mrb[0].mxu0
        %1522 = vmatprep.mubr.bf16.mxu0 0
        %1523 = vmatmul.mubr.bf16.gmra.mrb[0].mxu0 %v1408
        %v1524 = vpop.f32.mrb[0].mxu0
        %v1525 = vadd.f32 0.0, %v1524
        %v1526 = vpop.f32.mrb[0].mxu0
        %v1527 = vpop.f32.mrb[0].mxu0
        %v1528 = vadd.f32 0.0, %v1527
        %v1529 = vpop.f32.mrb[0].mxu0
        %1530 = vmatprep.mubr.bf16.mxu0 0
        %1531 = vmatmul.mubr.bf16.gmra.mrb[0].mxu0 %v1409
        %v1532 = vpop.f32.mrb[0].mxu0
        %v1533 = vadd.f32 0.0, %v1532
        %v1534 = vpop.f32.mrb[0].mxu0
        %v1535 = vpop.f32.mrb[0].mxu0
        %v1536 = vadd.f32 0.0, %v1535
        %v1537 = vpop.f32.mrb[0].mxu0
        %1538 = vdwg.mxu0
        %1555 = vrot.lane.b32.xlu0 %v1477, 64
        %v1556 = vpop.permute.xlu0 %1555
        %1557 = vrot.lane.b32.xlu0 %v1480, 64
        %v1558 = vpop.permute.xlu0 %1557
        %1559 = vrot.lane.b32.xlu0 %v1485, 64
        %v1560 = vpop.permute.xlu0 %1559
        %1561 = vrot.lane.b32.xlu0 %v1488, 64
        %v1562 = vpop.permute.xlu0 %1561
        %1563 = vrot.lane.b32.xlu0 %v1493, 64
        %v1564 = vpop.permute.xlu0 %1563
        %1565 = vrot.lane.b32.xlu0 %v1496, 64
        %v1566 = vpop.permute.xlu0 %1565
        %1567 = vrot.lane.b32.xlu0 %v1501, 64
        %v1568 = vpop.permute.xlu0 %1567
        %1569 = vrot.lane.b32.xlu0 %v1504, 64
        %v1570 = vpop.permute.xlu0 %1569
        %1571 = vrot.lane.b32.xlu0 %v1509, 64
        %v1572 = vpop.permute.xlu0 %1571
        %1573 = vrot.lane.b32.xlu0 %v1512, 64
        %v1574 = vpop.permute.xlu0 %1573
        %1575 = vrot.lane.b32.xlu0 %v1517, 64
        %v1576 = vpop.permute.xlu0 %1575
        %1577 = vrot.lane.b32.xlu0 %v1520, 64
        %v1578 = vpop.permute.xlu0 %1577
        %1579 = vrot.lane.b32.xlu0 %v1525, 64
        %v1580 = vpop.permute.xlu0 %1579
        %1581 = vrot.lane.b32.xlu0 %v1528, 64
        %v1582 = vpop.permute.xlu0 %1581
        %1583 = vrot.lane.b32.xlu0 %v1533, 64
        %v1584 = vpop.permute.xlu0 %1583
        %1585 = vrot.lane.b32.xlu0 %v1536, 64
        %v1586 = vpop.permute.xlu0 %1585
        %v1603 = vsel %vm662, %v1003, %v1556
        %v1604 = vsel %vm662, %v1006, %v1558
        %v1605 = vsel %vm662, %v1011, %v1560
        %v1606 = vsel %vm662, %v1014, %v1562
        %v1607 = vsel %vm662, %v1019, %v1564
        %v1608 = vsel %vm662, %v1022, %v1566
        %v1609 = vsel %vm662, %v1027, %v1568
        %v1610 = vsel %vm662, %v1030, %v1570
        %v1611 = vsel %vm662, %v1035, %v1572
        %v1612 = vsel %vm662, %v1038, %v1574
        %v1613 = vsel %vm662, %v1043, %v1576
        %v1614 = vsel %vm662, %v1046, %v1578
        %v1615 = vsel %vm662, %v1051, %v1580
        %v1616 = vsel %vm662, %v1054, %v1582
        %v1617 = vsel %vm662, %v1059, %v1584
        %v1618 = vsel %vm662, %v1062, %v1586
        %1619 = vst [vmem:[%s573] sm:$0xff] %v1603
        %1620 = vst [vmem:[%s573 + $0x8] sm:$0xff] %v1604
        %1621 = vst [vmem:[%s573 + $0x10] sm:$0xff] %v1605
        %1622 = vst [vmem:[%s573 + $0x18] sm:$0xff] %v1606
        %1623 = vst [vmem:[%s573 + $0x20] sm:$0xff] %v1607
        %1624 = vst [vmem:[%s573 + $0x28] sm:$0xff] %v1608
        %1625 = vst [vmem:[%s573 + $0x30] sm:$0xff] %v1609
        %1626 = vst [vmem:[%s573 + $0x38] sm:$0xff] %v1610
        %1627 = vst [vmem:[%s573 + $0x40] sm:$0xff] %v1611
        %1628 = vst [vmem:[%s573 + $0x48] sm:$0xff] %v1612
        %1629 = vst [vmem:[%s573 + $0x50] sm:$0xff] %v1613
        %1630 = vst [vmem:[%s573 + $0x58] sm:$0xff] %v1614
        %1631 = vst [vmem:[%s573 + $0x60] sm:$0xff] %v1615
        %1632 = vst [vmem:[%s573 + $0x68] sm:$0xff] %v1616
        %1633 = vst [vmem:[%s573 + $0x70] sm:$0xff] %v1617
        %1634 = vst [vmem:[%s573 + $0x78] sm:$0xff] %v1618
        %p1635 = scmp.lt.s32.totalorder %s19, 1
        %s1636 = scalar_select %p1635, %s19, 1
        %p1637 = scmp.lt.s32.totalorder %s20, 0
        %s1638 = scalar_select %p1637, %s20, 0
        %s1639 = smul.addr %s1636, 16
        %s1640 = sadd.s32 %s1638, %s1639
        %s1641 = smul.addr %s1640, 8
        %s1642 = scalar_lea.vmem %s4, %s1641
        // Predicated region
        $region151: #{bert_txt_forward.16} parent=137 // pred_check
          %p1643 = pneg %p161
        $region152: #{bert_txt_forward.16} parent=137 // pred_check_branch
          %1645 = sbr.rel (%p1643) target = $region154
        $region153: #{bert_txt_forward.16} parent=137 // pred_region
          _
        $region154: #{bert_txt_forward.16} parent=137 // pred_fallthru
          _
      $region138: #{bert_txt_forward.16} parent=5 // pred_fallthru
        _
      %p1646 = scmp.le.s32.totalorder 2, %s10
      // Predicated region
      $region155: #{bert_txt_forward.16} parent=5 // pred_check
        %p1647 = pneg %p1646
      $region156: #{bert_txt_forward.16} parent=5 // pred_check_branch
        %1649 = sbr.rel (%p1647) target = $region158
      $region157: #{bert_txt_forward.16} parent=5 // pred_region
        %s1650 = ssub.s32 %s10, 2
        // Predicated region
        $region159: #{bert_txt_forward.16} parent=157 // pred_check
          %p1651 = pneg %p167
        $region160: #{bert_txt_forward.16} parent=157 // pred_check_branch
          %1653 = sbr.rel (%p1651) target = $region162
        $region161: #{bert_txt_forward.16} parent=157 // pred_region
          %p1654 = scmp.lt.s32.totalorder %s21, 1
          %s1655 = scalar_select %p1654, %s21, 1
          %p1656 = scmp.lt.s32.totalorder %s22, 0
          %s1657 = scalar_select %p1656, %s22, 0
          %s1658 = smul.addr %s1655, 16
          %s1659 = sadd.s32 %s1657, %s1658
          %s1660 = smul.addr %s1659, 8
          %s1661 = scalar_lea.vmem %s4, %s1660
        $region162: #{bert_txt_forward.16} parent=157 // pred_fallthru
          _
      $region158: #{bert_txt_forward.16} parent=5 // pred_fallthru
        _
    $region6: #{bert_txt_forward.16} parent=1 // loop_footer
      %s14 = sadd.s32 1, %s10
    $region7: #{bert_txt_forward.16} parent=1 // loop_footer_branch
      %9 = sbr.rel target = $region3
    $region8: #{bert_txt_forward.16} parent=1 // loop_exit
      _

// kernel: bert_txt_forward.15
$region0: #{bert_txt_forward.15}
  #allocation0 [shape = 'u32[]', space=smem, size = 0x4, offset = 0x4, fixed_abs, tag = 'smem constant byte address 0x4 - core index']
  #allocation1 [shape = 'u32[144,128]{1,0:T(1,128)}', space=vmem, size = 0x12000, scoped, tag = 'internal scratch']
  %s0 = inlined_call_operand.vmem [shape: f32[256,128], index: 0, kind: input, shape index: {}]
  %s1 = inlined_call_operand.vmem [shape: bf16[128,384], index: 1, kind: input, shape index: {}]
  %s2 = inlined_call_operand.vmem [shape: f32[1,384], index: 2, kind: input, shape index: {}]
  %s3 = inlined_call_operand.vmem [shape: f32[256,384], index: 3, kind: output, shape index: {}]
  %s4 = sld [smem:[#allocation0]]
  $region30: #{bert_txt_forward.15} parent=0
    _
  %s6 = ssub.s32 1, %s4
  %s7 = scalar_select 0, %s6, %s4
  // Predicated region
  $region2: #{bert_txt_forward.15} parent=0 // pred_check
    _
  $region3: #{bert_txt_forward.15} parent=0 // pred_check_branch
    %9 = sbr.rel (0) target = $region5
  $region4: #{bert_txt_forward.15} parent=0 // pred_region
    _
  $region5: #{bert_txt_forward.15} parent=0 // pred_fallthru
    _
  // Predicated region
  $region6: #{bert_txt_forward.15} parent=0 // pred_check
    _
  $region7: #{bert_txt_forward.15} parent=0 // pred_check_branch
    %11 = sbr.rel (0) target = $region9
  $region8: #{bert_txt_forward.15} parent=0 // pred_region
    _
  $region9: #{bert_txt_forward.15} parent=0 // pred_fallthru
    _
  // Predicated region
  $region10: #{bert_txt_forward.15} parent=0 // pred_check
    _
  $region11: #{bert_txt_forward.15} parent=0 // pred_check_branch
    %13 = sbr.rel (0) target = $region13
  $region12: #{bert_txt_forward.15} parent=0 // pred_region
    _
  $region13: #{bert_txt_forward.15} parent=0 // pred_fallthru
    _
  %p15 = scmp.eq.s32.totalorder 0, 0
  // Predicated region
  $region14: #{bert_txt_forward.15} parent=0 // pred_check
    %p16 = pneg %p15
  $region15: #{bert_txt_forward.15} parent=0 // pred_check_branch
    %18 = sbr.rel (%p16) target = $region17
  $region16: #{bert_txt_forward.15} parent=0 // pred_region
    %19 = vst [vmem:[%s3] sm:$0xff] 0.0
    %20 = vst [vmem:[%s3 + $0x8] sm:$0xff] 0.0
    %21 = vst [vmem:[%s3 + $0x10] sm:$0xff] 0.0
    %22 = vst [vmem:[%s3 + $0x18] sm:$0xff] 0.0
    %23 = vst [vmem:[%s3 + $0x20] sm:$0xff] 0.0
    %24 = vst [vmem:[%s3 + $0x28] sm:$0xff] 0.0
    %25 = vst [vmem:[%s3 + $0x30] sm:$0xff] 0.0
    %26 = vst [vmem:[%s3 + $0x38] sm:$0xff] 0.0
    %27 = vst [vmem:[%s3 + $0x40] sm:$0xff] 0.0
    %28 = vst [vmem:[%s3 + $0x48] sm:$0xff] 0.0
    %29 = vst [vmem:[%s3 + $0x50] sm:$0xff] 0.0
    %30 = vst [vmem:[%s3 + $0x58] sm:$0xff] 0.0
    %31 = vst [vmem:[%s3 + $0x60] sm:$0xff] 0.0
    %32 = vst [vmem:[%s3 + $0x68] sm:$0xff] 0.0
    %33 = vst [vmem:[%s3 + $0x70] sm:$0xff] 0.0
    %34 = vst [vmem:[%s3 + $0x78] sm:$0xff] 0.0
    %35 = vst [vmem:[%s3 + $0x80] sm:$0xff] 0.0
    %36 = vst [vmem:[%s3 + $0x88] sm:$0xff] 0.0
    %37 = vst [vmem:[%s3 + $0x90] sm:$0xff] 0.0
    %38 = vst [vmem:[%s3 + $0x98] sm:$0xff] 0.0
    %39 = vst [vmem:[%s3 + $0xa0] sm:$0xff] 0.0
    %40 = vst [vmem:[%s3 + $0xa8] sm:$0xff] 0.0
    %41 = vst [vmem:[%s3 + $0xb0] sm:$0xff] 0.0
    %42 = vst [vmem:[%s3 + $0xb8] sm:$0xff] 0.0
    %43 = vst [vmem:[%s3 + $0xc0] sm:$0xff] 0.0
    %44 = vst [vmem:[%s3 + $0xc8] sm:$0xff] 0.0
    %45 = vst [vmem:[%s3 + $0xd0] sm:$0xff] 0.0
    %46 = vst [vmem:[%s3 + $0xd8] sm:$0xff] 0.0
    %47 = vst [vmem:[%s3 + $0xe0] sm:$0xff] 0.0
    %48 = vst [vmem:[%s3 + $0xe8] sm:$0xff] 0.0
    %49 = vst [vmem:[%s3 + $0xf0] sm:$0xff] 0.0
    %50 = vst [vmem:[%s3 + $0xf8] sm:$0xff] 0.0
    %51 = vst [vmem:[%s3 + $0x100] sm:$0xff] 0.0
    %52 = vst [vmem:[%s3 + $0x108] sm:$0xff] 0.0
    %53 = vst [vmem:[%s3 + $0x110] sm:$0xff] 0.0
    %54 = vst [vmem:[%s3 + $0x118] sm:$0xff] 0.0
    %55 = vst [vmem:[%s3 + $0x120] sm:$0xff] 0.0
    %56 = vst [vmem:[%s3 + $0x128] sm:$0xff] 0.0
    %57 = vst [vmem:[%s3 + $0x130] sm:$0xff] 0.0
    %58 = vst [vmem:[%s3 + $0x138] sm:$0xff] 0.0
    %59 = vst [vmem:[%s3 + $0x140] sm:$0xff] 0.0
    %60 = vst [vmem:[%s3 + $0x148] sm:$0xff] 0.0
    %61 = vst [vmem:[%s3 + $0x150] sm:$0xff] 0.0
    %62 = vst [vmem:[%s3 + $0x158] sm:$0xff] 0.0
    %63 = vst [vmem:[%s3 + $0x160] sm:$0xff] 0.0
    %64 = vst [vmem:[%s3 + $0x168] sm:$0xff] 0.0
    %65 = vst [vmem:[%s3 + $0x170] sm:$0xff] 0.0
    %66 = vst [vmem:[%s3 + $0x178] sm:$0xff] 0.0
    %67 = vst [vmem:[%s3 + $0x180] sm:$0xff] 0.0
    %68 = vst [vmem:[%s3 + $0x188] sm:$0xff] 0.0
    %69 = vst [vmem:[%s3 + $0x190] sm:$0xff] 0.0
    %70 = vst [vmem:[%s3 + $0x198] sm:$0xff] 0.0
    %71 = vst [vmem:[%s3 + $0x1a0] sm:$0xff] 0.0
    %72 = vst [vmem:[%s3 + $0x1a8] sm:$0xff] 0.0
    %73 = vst [vmem:[%s3 + $0x1b0] sm:$0xff] 0.0
    %74 = vst [vmem:[%s3 + $0x1b8] sm:$0xff] 0.0
    %75 = vst [vmem:[%s3 + $0x1c0] sm:$0xff] 0.0
    %76 = vst [vmem:[%s3 + $0x1c8] sm:$0xff] 0.0
    %77 = vst [vmem:[%s3 + $0x1d0] sm:$0xff] 0.0
    %78 = vst [vmem:[%s3 + $0x1d8] sm:$0xff] 0.0
    %79 = vst [vmem:[%s3 + $0x1e0] sm:$0xff] 0.0
    %80 = vst [vmem:[%s3 + $0x1e8] sm:$0xff] 0.0
    %81 = vst [vmem:[%s3 + $0x1f0] sm:$0xff] 0.0
    %82 = vst [vmem:[%s3 + $0x1f8] sm:$0xff] 0.0
    %83 = vst [vmem:[%s3 + $0x200] sm:$0xff] 0.0
    %84 = vst [vmem:[%s3 + $0x208] sm:$0xff] 0.0
    %85 = vst [vmem:[%s3 + $0x210] sm:$0xff] 0.0
    %86 = vst [vmem:[%s3 + $0x218] sm:$0xff] 0.0
    %87 = vst [vmem:[%s3 + $0x220] sm:$0xff] 0.0
    %88 = vst [vmem:[%s3 + $0x228] sm:$0xff] 0.0
    %89 = vst [vmem:[%s3 + $0x230] sm:$0xff] 0.0
    %90 = vst [vmem:[%s3 + $0x238] sm:$0xff] 0.0
    %91 = vst [vmem:[%s3 + $0x240] sm:$0xff] 0.0
    %92 = vst [vmem:[%s3 + $0x248] sm:$0xff] 0.0
    %93 = vst [vmem:[%s3 + $0x250] sm:$0xff] 0.0
    %94 = vst [vmem:[%s3 + $0x258] sm:$0xff] 0.0
    %95 = vst [vmem:[%s3 + $0x260] sm:$0xff] 0.0
    %96 = vst [vmem:[%s3 + $0x268] sm:$0xff] 0.0
    %97 = vst [vmem:[%s3 + $0x270] sm:$0xff] 0.0
    %98 = vst [vmem:[%s3 + $0x278] sm:$0xff] 0.0
    %99 = vst [vmem:[%s3 + $0x280] sm:$0xff] 0.0
    %100 = vst [vmem:[%s3 + $0x288] sm:$0xff] 0.0
    %101 = vst [vmem:[%s3 + $0x290] sm:$0xff] 0.0
    %102 = vst [vmem:[%s3 + $0x298] sm:$0xff] 0.0
    %103 = vst [vmem:[%s3 + $0x2a0] sm:$0xff] 0.0
    %104 = vst [vmem:[%s3 + $0x2a8] sm:$0xff] 0.0
    %105 = vst [vmem:[%s3 + $0x2b0] sm:$0xff] 0.0
    %106 = vst [vmem:[%s3 + $0x2b8] sm:$0xff] 0.0
    %107 = vst [vmem:[%s3 + $0x2c0] sm:$0xff] 0.0
    %108 = vst [vmem:[%s3 + $0x2c8] sm:$0xff] 0.0
    %109 = vst [vmem:[%s3 + $0x2d0] sm:$0xff] 0.0
    %110 = vst [vmem:[%s3 + $0x2d8] sm:$0xff] 0.0
    %111 = vst [vmem:[%s3 + $0x2e0] sm:$0xff] 0.0
    %112 = vst [vmem:[%s3 + $0x2e8] sm:$0xff] 0.0
    %113 = vst [vmem:[%s3 + $0x2f0] sm:$0xff] 0.0
    %114 = vst [vmem:[%s3 + $0x2f8] sm:$0xff] 0.0
  $region17: #{bert_txt_forward.15} parent=0 // pred_fallthru
    _
  %v115 = vld [vmem:[%s3] sm:$0xff]
  %v116 = vld [vmem:[%s3 + $0x8] sm:$0xff]
  %v117 = vld [vmem:[%s3 + $0x10] sm:$0xff]
  %v118 = vld [vmem:[%s3 + $0x18] sm:$0xff]
  %v119 = vld [vmem:[%s3 + $0x20] sm:$0xff]
  %v120 = vld [vmem:[%s3 + $0x28] sm:$0xff]
  %v121 = vld [vmem:[%s3 + $0x30] sm:$0xff]
  %v122 = vld [vmem:[%s3 + $0x38] sm:$0xff]
  %v123 = vld [vmem:[%s3 + $0x40] sm:$0xff]
  %v124 = vld [vmem:[%s3 + $0x48] sm:$0xff]
  %v125 = vld [vmem:[%s3 + $0x50] sm:$0xff]
  %v126 = vld [vmem:[%s3 + $0x58] sm:$0xff]
  %v127 = vld [vmem:[%s3 + $0x60] sm:$0xff]
  %v128 = vld [vmem:[%s3 + $0x68] sm:$0xff]
  %v129 = vld [vmem:[%s3 + $0x70] sm:$0xff]
  %v130 = vld [vmem:[%s3 + $0x78] sm:$0xff]
  %v131 = vld [vmem:[%s3 + $0x80] sm:$0xff]
  %v132 = vld [vmem:[%s3 + $0x88] sm:$0xff]
  %v133 = vld [vmem:[%s3 + $0x90] sm:$0xff]
  %v134 = vld [vmem:[%s3 + $0x98] sm:$0xff]
  %v135 = vld [vmem:[%s3 + $0xa0] sm:$0xff]
  %v136 = vld [vmem:[%s3 + $0xa8] sm:$0xff]
  %v137 = vld [vmem:[%s3 + $0xb0] sm:$0xff]
  %v138 = vld [vmem:[%s3 + $0xb8] sm:$0xff]
  %v139 = vld [vmem:[%s3 + $0xc0] sm:$0xff]
  %v140 = vld [vmem:[%s3 + $0xc8] sm:$0xff]
  %v141 = vld [vmem:[%s3 + $0xd0] sm:$0xff]
  %v142 = vld [vmem:[%s3 + $0xd8] sm:$0xff]
  %v143 = vld [vmem:[%s3 + $0xe0] sm:$0xff]
  %v144 = vld [vmem:[%s3 + $0xe8] sm:$0xff]
  %v145 = vld [vmem:[%s3 + $0xf0] sm:$0xff]
  %v146 = vld [vmem:[%s3 + $0xf8] sm:$0xff]
  %v147 = vld [vmem:[%s3 + $0x100] sm:$0xff]
  %v148 = vld [vmem:[%s3 + $0x108] sm:$0xff]
  %v149 = vld [vmem:[%s3 + $0x110] sm:$0xff]
  %v150 = vld [vmem:[%s3 + $0x118] sm:$0xff]
  %v151 = vld [vmem:[%s3 + $0x120] sm:$0xff]
  %v152 = vld [vmem:[%s3 + $0x128] sm:$0xff]
  %v153 = vld [vmem:[%s3 + $0x130] sm:$0xff]
  %v154 = vld [vmem:[%s3 + $0x138] sm:$0xff]
  %v155 = vld [vmem:[%s3 + $0x140] sm:$0xff]
  %v156 = vld [vmem:[%s3 + $0x148] sm:$0xff]
  %v157 = vld [vmem:[%s3 + $0x150] sm:$0xff]
  %v158 = vld [vmem:[%s3 + $0x158] sm:$0xff]
  %v159 = vld [vmem:[%s3 + $0x160] sm:$0xff]
  %v160 = vld [vmem:[%s3 + $0x168] sm:$0xff]
  %v161 = vld [vmem:[%s3 + $0x170] sm:$0xff]
  %v162 = vld [vmem:[%s3 + $0x178] sm:$0xff]
  %v163 = vld [vmem:[%s3 + $0x180] sm:$0xff]
  %v164 = vld [vmem:[%s3 + $0x188] sm:$0xff]
  %v165 = vld [vmem:[%s3 + $0x190] sm:$0xff]
  %v166 = vld [vmem:[%s3 + $0x198] sm:$0xff]
  %v167 = vld [vmem:[%s3 + $0x1a0] sm:$0xff]
  %v168 = vld [vmem:[%s3 + $0x1a8] sm:$0xff]
  %v169 = vld [vmem:[%s3 + $0x1b0] sm:$0xff]
  %v170 = vld [vmem:[%s3 + $0x1b8] sm:$0xff]
  %v171 = vld [vmem:[%s3 + $0x1c0] sm:$0xff]
  %v172 = vld [vmem:[%s3 + $0x1c8] sm:$0xff]
  %v173 = vld [vmem:[%s3 + $0x1d0] sm:$0xff]
  %v174 = vld [vmem:[%s3 + $0x1d8] sm:$0xff]
  %v175 = vld [vmem:[%s3 + $0x1e0] sm:$0xff]
  %v176 = vld [vmem:[%s3 + $0x1e8] sm:$0xff]
  %v177 = vld [vmem:[%s3 + $0x1f0] sm:$0xff]
  %v178 = vld [vmem:[%s3 + $0x1f8] sm:$0xff]
  %v179 = vld [vmem:[%s3 + $0x200] sm:$0xff]
  %v180 = vld [vmem:[%s3 + $0x208] sm:$0xff]
  %v181 = vld [vmem:[%s3 + $0x210] sm:$0xff]
  %v182 = vld [vmem:[%s3 + $0x218] sm:$0xff]
  %v183 = vld [vmem:[%s3 + $0x220] sm:$0xff]
  %v184 = vld [vmem:[%s3 + $0x228] sm:$0xff]
  %v185 = vld [vmem:[%s3 + $0x230] sm:$0xff]
  %v186 = vld [vmem:[%s3 + $0x238] sm:$0xff]
  %v187 = vld [vmem:[%s3 + $0x240] sm:$0xff]
  %v188 = vld [vmem:[%s3 + $0x248] sm:$0xff]
  %v189 = vld [vmem:[%s3 + $0x250] sm:$0xff]
  %v190 = vld [vmem:[%s3 + $0x258] sm:$0xff]
  %v191 = vld [vmem:[%s3 + $0x260] sm:$0xff]
  %v192 = vld [vmem:[%s3 + $0x268] sm:$0xff]
  %v193 = vld [vmem:[%s3 + $0x270] sm:$0xff]
  %v194 = vld [vmem:[%s3 + $0x278] sm:$0xff]
  %v195 = vld [vmem:[%s3 + $0x280] sm:$0xff]
  %v196 = vld [vmem:[%s3 + $0x288] sm:$0xff]
  %v197 = vld [vmem:[%s3 + $0x290] sm:$0xff]
  %v198 = vld [vmem:[%s3 + $0x298] sm:$0xff]
  %v199 = vld [vmem:[%s3 + $0x2a0] sm:$0xff]
  %v200 = vld [vmem:[%s3 + $0x2a8] sm:$0xff]
  %v201 = vld [vmem:[%s3 + $0x2b0] sm:$0xff]
  %v202 = vld [vmem:[%s3 + $0x2b8] sm:$0xff]
  %v203 = vld [vmem:[%s3 + $0x2c0] sm:$0xff]
  %v204 = vld [vmem:[%s3 + $0x2c8] sm:$0xff]
  %v205 = vld [vmem:[%s3 + $0x2d0] sm:$0xff]
  %v206 = vld [vmem:[%s3 + $0x2d8] sm:$0xff]
  %v207 = vld [vmem:[%s3 + $0x2e0] sm:$0xff]
  %v208 = vld [vmem:[%s3 + $0x2e8] sm:$0xff]
  %v209 = vld [vmem:[%s3 + $0x2f0] sm:$0xff]
  %v210 = vld [vmem:[%s3 + $0x2f8] sm:$0xff]
  %v211 = vld [vmem:[%s0] sm:$0xff]
  %v212 = vld [vmem:[%s0 + $0x8] sm:$0xff]
  %v213 = vld [vmem:[%s0 + $0x10] sm:$0xff]
  %v214 = vld [vmem:[%s0 + $0x18] sm:$0xff]
  %v215 = vld [vmem:[%s0 + $0x20] sm:$0xff]
  %v216 = vld [vmem:[%s0 + $0x28] sm:$0xff]
  %v217 = vld [vmem:[%s0 + $0x30] sm:$0xff]
  %v218 = vld [vmem:[%s0 + $0x38] sm:$0xff]
  %v219 = vld [vmem:[%s0 + $0x40] sm:$0xff]
  %v220 = vld [vmem:[%s0 + $0x48] sm:$0xff]
  %v221 = vld [vmem:[%s0 + $0x50] sm:$0xff]
  %v222 = vld [vmem:[%s0 + $0x58] sm:$0xff]
  %v223 = vld [vmem:[%s0 + $0x60] sm:$0xff]
  %v224 = vld [vmem:[%s0 + $0x68] sm:$0xff]
  %v225 = vld [vmem:[%s0 + $0x70] sm:$0xff]
  %v226 = vld [vmem:[%s0 + $0x78] sm:$0xff]
  %v227 = vld [vmem:[%s0 + $0x80] sm:$0xff]
  %v228 = vld [vmem:[%s0 + $0x88] sm:$0xff]
  %v229 = vld [vmem:[%s0 + $0x90] sm:$0xff]
  %v230 = vld [vmem:[%s0 + $0x98] sm:$0xff]
  %v231 = vld [vmem:[%s0 + $0xa0] sm:$0xff]
  %v232 = vld [vmem:[%s0 + $0xa8] sm:$0xff]
  %v233 = vld [vmem:[%s0 + $0xb0] sm:$0xff]
  %v234 = vld [vmem:[%s0 + $0xb8] sm:$0xff]
  %v235 = vld [vmem:[%s0 + $0xc0] sm:$0xff]
  %v236 = vld [vmem:[%s0 + $0xc8] sm:$0xff]
  %v237 = vld [vmem:[%s0 + $0xd0] sm:$0xff]
  %v238 = vld [vmem:[%s0 + $0xd8] sm:$0xff]
  %v239 = vld [vmem:[%s0 + $0xe0] sm:$0xff]
  %v240 = vld [vmem:[%s0 + $0xe8] sm:$0xff]
  %v241 = vld [vmem:[%s0 + $0xf0] sm:$0xff]
  %v242 = vld [vmem:[%s0 + $0xf8] sm:$0xff]
  %v243 = vpack.c.bf16 %v212, %v211
  %v244 = vpack.c.bf16 %v214, %v213
  %v245 = vpack.c.bf16 %v216, %v215
  %v246 = vpack.c.bf16 %v218, %v217
  %v247 = vpack.c.bf16 %v220, %v219
  %v248 = vpack.c.bf16 %v222, %v221
  %v249 = vpack.c.bf16 %v224, %v223
  %v250 = vpack.c.bf16 %v226, %v225
  %v251 = vpack.c.bf16 %v228, %v227
  %v252 = vpack.c.bf16 %v230, %v229
  %v253 = vpack.c.bf16 %v232, %v231
  %v254 = vpack.c.bf16 %v234, %v233
  %v255 = vpack.c.bf16 %v236, %v235
  %v256 = vpack.c.bf16 %v238, %v237
  %v257 = vpack.c.bf16 %v240, %v239
  %v258 = vpack.c.bf16 %v242, %v241
  %v259 = vld [vmem:[%s1] sm:$0xff]
  %v260 = vld [vmem:[%s1 + $0x8] sm:$0xf]
  %v261 = vld [vmem:[%s1 + $0xc] sm:$0xff]
  %v262 = vld [vmem:[%s1 + $0x14] sm:$0xf]
  %v263 = vld [vmem:[%s1 + $0x18] sm:$0xff]
  %v264 = vld [vmem:[%s1 + $0x20] sm:$0xf]
  %v265 = vld [vmem:[%s1 + $0x24] sm:$0xff]
  %v266 = vld [vmem:[%s1 + $0x2c] sm:$0xf]
  %v267 = vld [vmem:[%s1 + $0x30] sm:$0xff]
  %v268 = vld [vmem:[%s1 + $0x38] sm:$0xf]
  %v269 = vld [vmem:[%s1 + $0x3c] sm:$0xff]
  %v270 = vld [vmem:[%s1 + $0x44] sm:$0xf]
  %v271 = vld [vmem:[%s1 + $0x48] sm:$0xff]
  %v272 = vld [vmem:[%s1 + $0x50] sm:$0xf]
  %v273 = vld [vmem:[%s1 + $0x54] sm:$0xff]
  %v274 = vld [vmem:[%s1 + $0x5c] sm:$0xf]
  %v275 = vld [vmem:[%s1 + $0x60] sm:$0xff]
  %v276 = vld [vmem:[%s1 + $0x68] sm:$0xf]
  %v277 = vld [vmem:[%s1 + $0x6c] sm:$0xff]
  %v278 = vld [vmem:[%s1 + $0x74] sm:$0xf]
  %v279 = vld [vmem:[%s1 + $0x78] sm:$0xff]
  %v280 = vld [vmem:[%s1 + $0x80] sm:$0xf]
  %v281 = vld [vmem:[%s1 + $0x84] sm:$0xff]
  %v282 = vld [vmem:[%s1 + $0x8c] sm:$0xf]
  %v283 = vld [vmem:[%s1 + $0x90] sm:$0xff]
  %v284 = vld [vmem:[%s1 + $0x98] sm:$0xf]
  %v285 = vld [vmem:[%s1 + $0x9c] sm:$0xff]
  %v286 = vld [vmem:[%s1 + $0xa4] sm:$0xf]
  %v287 = vld [vmem:[%s1 + $0xa8] sm:$0xff]
  %v288 = vld [vmem:[%s1 + $0xb0] sm:$0xf]
  %v289 = vld [vmem:[%s1 + $0xb4] sm:$0xff]
  %v290 = vld [vmem:[%s1 + $0xbc] sm:$0xf]
  %v323 = vunpack.c.l.b16 %v259
  %v324 = vunpack.c.h.b16 %v259
  %v325 = vunpack.c.l.b16 %v260
  %v326 = vunpack.c.l.b16 %v261
  %v327 = vunpack.c.h.b16 %v261
  %v328 = vunpack.c.l.b16 %v262
  %v329 = vunpack.c.l.b16 %v263
  %v330 = vunpack.c.h.b16 %v263
  %v331 = vunpack.c.l.b16 %v264
  %v332 = vunpack.c.l.b16 %v265
  %v333 = vunpack.c.h.b16 %v265
  %v334 = vunpack.c.l.b16 %v266
  %v335 = vunpack.c.l.b16 %v267
  %v336 = vunpack.c.h.b16 %v267
  %v337 = vunpack.c.l.b16 %v268
  %v338 = vunpack.c.l.b16 %v269
  %v339 = vunpack.c.h.b16 %v269
  %v340 = vunpack.c.l.b16 %v270
  %v341 = vunpack.c.l.b16 %v271
  %v342 = vunpack.c.h.b16 %v271
  %v343 = vunpack.c.l.b16 %v272
  %v344 = vunpack.c.l.b16 %v273
  %v345 = vunpack.c.h.b16 %v273
  %v346 = vunpack.c.l.b16 %v274
  %v347 = vunpack.c.l.b16 %v275
  %v348 = vunpack.c.h.b16 %v275
  %v349 = vunpack.c.l.b16 %v276
  %v350 = vunpack.c.l.b16 %v277
  %v351 = vunpack.c.h.b16 %v277
  %v352 = vunpack.c.l.b16 %v278
  %v353 = vunpack.c.l.b16 %v279
  %v354 = vunpack.c.h.b16 %v279
  %v355 = vunpack.c.l.b16 %v280
  %v356 = vunpack.c.l.b16 %v281
  %v357 = vunpack.c.h.b16 %v281
  %v358 = vunpack.c.l.b16 %v282
  %v359 = vunpack.c.l.b16 %v283
  %v360 = vunpack.c.h.b16 %v283
  %v361 = vunpack.c.l.b16 %v284
  %v362 = vunpack.c.l.b16 %v285
  %v363 = vunpack.c.h.b16 %v285
  %v364 = vunpack.c.l.b16 %v286
  %v365 = vunpack.c.l.b16 %v287
  %v366 = vunpack.c.h.b16 %v287
  %v367 = vunpack.c.l.b16 %v288
  %v368 = vunpack.c.l.b16 %v289
  %v369 = vunpack.c.h.b16 %v289
  %v370 = vunpack.c.l.b16 %v290
  %v371 = vpack.c.b16 %v326, %v323
  %v372 = vpack.c.b16 %v327, %v324
  %v373 = vpack.c.b16 %v328, %v325
  %v374 = vpack.c.b16 %v332, %v329
  %v375 = vpack.c.b16 %v333, %v330
  %v376 = vpack.c.b16 %v334, %v331
  %v377 = vpack.c.b16 %v338, %v335
  %v378 = vpack.c.b16 %v339, %v336
  %v379 = vpack.c.b16 %v340, %v337
  %v380 = vpack.c.b16 %v344, %v341
  %v381 = vpack.c.b16 %v345, %v342
  %v382 = vpack.c.b16 %v346, %v343
  %v383 = vpack.c.b16 %v350, %v347
  %v384 = vpack.c.b16 %v351, %v348
  %v385 = vpack.c.b16 %v352, %v349
  %v386 = vpack.c.b16 %v356, %v353
  %v387 = vpack.c.b16 %v357, %v354
  %v388 = vpack.c.b16 %v358, %v355
  %v389 = vpack.c.b16 %v362, %v359
  %v390 = vpack.c.b16 %v363, %v360
  %v391 = vpack.c.b16 %v364, %v361
  %v392 = vpack.c.b16 %v368, %v365
  %v393 = vpack.c.b16 %v369, %v366
  %v394 = vpack.c.b16 %v370, %v367
  %419 = vmatprep.subr.bf16.mxu0 %v372
  %420 = vmatpush1.bf16.msra.mxu0 %v371
  %421 = vmatprep.subr.bf16.mxu0 %v375
  %422 = vmatpush1.bf16.msra.mxu0 %v374
  %423 = vmatprep.subr.bf16.mxu0 %v378
  %424 = vmatpush1.bf16.msra.mxu0 %v377
  %425 = vmatprep.subr.bf16.mxu0 %v381
  %426 = vmatpush1.bf16.msra.mxu0 %v380
  %427 = vmatprep.subr.bf16.mxu0 %v384
  %428 = vmatpush1.bf16.msra.mxu0 %v383
  %429 = vmatprep.subr.bf16.mxu0 %v387
  %430 = vmatpush1.bf16.msra.mxu0 %v386
  %431 = vmatprep.subr.bf16.mxu0 %v390
  %432 = vmatpush1.bf16.msra.mxu0 %v389
  %433 = vmatprep.subr.bf16.mxu0 %v393
  %434 = vmatpush1.bf16.msra.mxu0 %v392
  %435 = vmatprep.subr.bf16.mxu0 0
  %436 = vmatpush1.bf16.msra.mxu0 0
  %437 = vmatprep.subr.bf16.mxu0 0
  %438 = vmatpush1.bf16.msra.mxu0 0
  %439 = vmatprep.subr.bf16.mxu0 0
  %440 = vmatpush1.bf16.msra.mxu0 0
  %441 = vmatprep.subr.bf16.mxu0 0
  %442 = vmatpush1.bf16.msra.mxu0 0
  %443 = vmatprep.subr.bf16.mxu0 0
  %444 = vmatpush1.bf16.msra.mxu0 0
  %445 = vmatprep.subr.bf16.mxu0 0
  %446 = vmatpush1.bf16.msra.mxu0 0
  %447 = vmatprep.subr.bf16.mxu0 0
  %448 = vmatpush1.bf16.msra.mxu0 0
  %449 = vmatprep.subr.bf16.mxu0 0
  %450 = vmatpush1.bf16.msra.mxu0 0
  %451 = vmatprep.mubr.bf16.mxu0 0
  %452 = vmatmul.mubr.bf16.gmra.mrb[0].mxu0 %v243
  %v453 = vpop.f32.mrb[0].mxu0
  %v454 = vadd.f32 0.0, %v453
  %v455 = vpop.f32.mrb[0].mxu0
  %v456 = vadd.f32 0.0, %v455
  %v457 = vpop.f32.mrb[0].mxu0
  %v458 = vadd.f32 0.0, %v457
  %v459 = vpop.f32.mrb[0].mxu0
  %v460 = vadd.f32 0.0, %v459
  %461 = vmatprep.mubr.bf16.mxu0 0
  %462 = vmatmul.mubr.bf16.gmra.mrb[0].mxu0 %v244
  %v463 = vpop.f32.mrb[0].mxu0
  %v464 = vadd.f32 0.0, %v463
  %v465 = vpop.f32.mrb[0].mxu0
  %v466 = vadd.f32 0.0, %v465
  %v467 = vpop.f32.mrb[0].mxu0
  %v468 = vadd.f32 0.0, %v467
  %v469 = vpop.f32.mrb[0].mxu0
  %v470 = vadd.f32 0.0, %v469
  %471 = vmatprep.mubr.bf16.mxu0 0
  %472 = vmatmul.mubr.bf16.gmra.mrb[0].mxu0 %v245
  %v473 = vpop.f32.mrb[0].mxu0
  %v474 = vadd.f32 0.0, %v473
  %v475 = vpop.f32.mrb[0].mxu0
  %v476 = vadd.f32 0.0, %v475
  %v477 = vpop.f32.mrb[0].mxu0
  %v478 = vadd.f32 0.0, %v477
  %v479 = vpop.f32.mrb[0].mxu0
  %v480 = vadd.f32 0.0, %v479
  %481 = vmatprep.mubr.bf16.mxu0 0
  %482 = vmatmul.mubr.bf16.gmra.mrb[0].mxu0 %v246
  %v483 = vpop.f32.mrb[0].mxu0
  %v484 = vadd.f32 0.0, %v483
  %v485 = vpop.f32.mrb[0].mxu0
  %v486 = vadd.f32 0.0, %v485
  %v487 = vpop.f32.mrb[0].mxu0
  %v488 = vadd.f32 0.0, %v487
  %v489 = vpop.f32.mrb[0].mxu0
  %v490 = vadd.f32 0.0, %v489
  %491 = vmatprep.mubr.bf16.mxu0 0
  %492 = vmatmul.mubr.bf16.gmra.mrb[0].mxu0 %v247
  %v493 = vpop.f32.mrb[0].mxu0
  %v494 = vadd.f32 0.0, %v493
  %v495 = vpop.f32.mrb[0].mxu0
  %v496 = vadd.f32 0.0, %v495
  %v497 = vpop.f32.mrb[0].mxu0
  %v498 = vadd.f32 0.0, %v497
  %v499 = vpop.f32.mrb[0].mxu0
  %v500 = vadd.f32 0.0, %v499
  %501 = vmatprep.mubr.bf16.mxu0 0
  %502 = vmatmul.mubr.bf16.gmra.mrb[0].mxu0 %v248
  %v503 = vpop.f32.mrb[0].mxu0
  %v504 = vadd.f32 0.0, %v503
  %v505 = vpop.f32.mrb[0].mxu0
  %v506 = vadd.f32 0.0, %v505
  %v507 = vpop.f32.mrb[0].mxu0
  %v508 = vadd.f32 0.0, %v507
  %v509 = vpop.f32.mrb[0].mxu0
  %v510 = vadd.f32 0.0, %v509
  %511 = vmatprep.mubr.bf16.mxu0 0
  %512 = vmatmul.mubr.bf16.gmra.mrb[0].mxu0 %v249
  %v513 = vpop.f32.mrb[0].mxu0
  %v514 = vadd.f32 0.0, %v513
  %v515 = vpop.f32.mrb[0].mxu0
  %v516 = vadd.f32 0.0, %v515
  %v517 = vpop.f32.mrb[0].mxu0
  %v518 = vadd.f32 0.0, %v517
  %v519 = vpop.f32.mrb[0].mxu0
  %v520 = vadd.f32 0.0, %v519
  %521 = vmatprep.mubr.bf16.mxu0 0
  %522 = vmatmul.mubr.bf16.gmra.mrb[0].mxu0 %v250
  %v523 = vpop.f32.mrb[0].mxu0
  %v524 = vadd.f32 0.0, %v523
  %v525 = vpop.f32.mrb[0].mxu0
  %v526 = vadd.f32 0.0, %v525
  %v527 = vpop.f32.mrb[0].mxu0
  %v528 = vadd.f32 0.0, %v527
  %v529 = vpop.f32.mrb[0].mxu0
  %v530 = vadd.f32 0.0, %v529
  %531 = vmatprep.mubr.bf16.mxu0 0
  %532 = vmatmul.mubr.bf16.gmra.mrb[0].mxu0 %v251
  %v533 = vpop.f32.mrb[0].mxu0
  %v534 = vadd.f32 0.0, %v533
  %v535 = vpop.f32.mrb[0].mxu0
  %v536 = vadd.f32 0.0, %v535
  %v537 = vpop.f32.mrb[0].mxu0
  %v538 = vadd.f32 0.0, %v537
  %v539 = vpop.f32.mrb[0].mxu0
  %v540 = vadd.f32 0.0, %v539
  %541 = vmatprep.mubr.bf16.mxu0 0
  %542 = vmatmul.mubr.bf16.gmra.mrb[0].mxu0 %v252
  %v543 = vpop.f32.mrb[0].mxu0
  %v544 = vadd.f32 0.0, %v543
  %v545 = vpop.f32.mrb[0].mxu0
  %v546 = vadd.f32 0.0, %v545
  %v547 = vpop.f32.mrb[0].mxu0
  %v548 = vadd.f32 0.0, %v547
  %v549 = vpop.f32.mrb[0].mxu0
  %v550 = vadd.f32 0.0, %v549
  %551 = vmatprep.mubr.bf16.mxu0 0
  %552 = vmatmul.mubr.bf16.gmra.mrb[0].mxu0 %v253
  %v553 = vpop.f32.mrb[0].mxu0
  %v554 = vadd.f32 0.0, %v553
  %v555 = vpop.f32.mrb[0].mxu0
  %v556 = vadd.f32 0.0, %v555
  %v557 = vpop.f32.mrb[0].mxu0
  %v558 = vadd.f32 0.0, %v557
  %v559 = vpop.f32.mrb[0].mxu0
  %v560 = vadd.f32 0.0, %v559
  %561 = vmatprep.mubr.bf16.mxu0 0
  %562 = vmatmul.mubr.bf16.gmra.mrb[0].mxu0 %v254
  %v563 = vpop.f32.mrb[0].mxu0
  %v564 = vadd.f32 0.0, %v563
  %v565 = vpop.f32.mrb[0].mxu0
  %v566 = vadd.f32 0.0, %v565
  %v567 = vpop.f32.mrb[0].mxu0
  %v568 = vadd.f32 0.0, %v567
  %v569 = vpop.f32.mrb[0].mxu0
  %v570 = vadd.f32 0.0, %v569
  %571 = vmatprep.mubr.bf16.mxu0 0
  %572 = vmatmul.mubr.bf16.gmra.mrb[0].mxu0 %v255
  %v573 = vpop.f32.mrb[0].mxu0
  %v574 = vadd.f32 0.0, %v573
  %v575 = vpop.f32.mrb[0].mxu0
  %v576 = vadd.f32 0.0, %v575
  %v577 = vpop.f32.mrb[0].mxu0
  %v578 = vadd.f32 0.0, %v577
  %v579 = vpop.f32.mrb[0].mxu0
  %v580 = vadd.f32 0.0, %v579
  %581 = vmatprep.mubr.bf16.mxu0 0
  %582 = vmatmul.mubr.bf16.gmra.mrb[0].mxu0 %v256
  %v583 = vpop.f32.mrb[0].mxu0
  %v584 = vadd.f32 0.0, %v583
  %v585 = vpop.f32.mrb[0].mxu0
  %v586 = vadd.f32 0.0, %v585
  %v587 = vpop.f32.mrb[0].mxu0
  %v588 = vadd.f32 0.0, %v587
  %v589 = vpop.f32.mrb[0].mxu0
  %v590 = vadd.f32 0.0, %v589
  %591 = vmatprep.mubr.bf16.mxu0 0
  %592 = vmatmul.mubr.bf16.gmra.mrb[0].mxu0 %v257
  %v593 = vpop.f32.mrb[0].mxu0
  %v594 = vadd.f32 0.0, %v593
  %v595 = vpop.f32.mrb[0].mxu0
  %v596 = vadd.f32 0.0, %v595
  %v597 = vpop.f32.mrb[0].mxu0
  %v598 = vadd.f32 0.0, %v597
  %v599 = vpop.f32.mrb[0].mxu0
  %v600 = vadd.f32 0.0, %v599
  %601 = vmatprep.mubr.bf16.mxu0 0
  %602 = vmatmul.mubr.bf16.gmra.mrb[0].mxu0 %v258
  %v603 = vpop.f32.mrb[0].mxu0
  %v604 = vadd.f32 0.0, %v603
  %v605 = vpop.f32.mrb[0].mxu0
  %v606 = vadd.f32 0.0, %v605
  %v607 = vpop.f32.mrb[0].mxu0
  %v608 = vadd.f32 0.0, %v607
  %v609 = vpop.f32.mrb[0].mxu0
  %v610 = vadd.f32 0.0, %v609
  %611 = vdwg.mxu0
  %612 = vmatprep.subr.bf16.mxu0 0
  %613 = vmatpush1.bf16.msra.mxu0 %v373
  %614 = vmatprep.subr.bf16.mxu0 0
  %615 = vmatpush1.bf16.msra.mxu0 %v376
  %616 = vmatprep.subr.bf16.mxu0 0
  %617 = vmatpush1.bf16.msra.mxu0 %v379
  %618 = vmatprep.subr.bf16.mxu0 0
  %619 = vmatpush1.bf16.msra.mxu0 %v382
  %620 = vmatprep.subr.bf16.mxu0 0
  %621 = vmatpush1.bf16.msra.mxu0 %v385
  %622 = vmatprep.subr.bf16.mxu0 0
  %623 = vmatpush1.bf16.msra.mxu0 %v388
  %624 = vmatprep.subr.bf16.mxu0 0
  %625 = vmatpush1.bf16.msra.mxu0 %v391
  %626 = vmatprep.subr.bf16.mxu0 0
  %627 = vmatpush1.bf16.msra.mxu0 %v394
  %628 = vmatprep.subr.bf16.mxu0 0
  %629 = vmatpush1.bf16.msra.mxu0 0
  %630 = vmatprep.subr.bf16.mxu0 0
  %631 = vmatpush1.bf16.msra.mxu0 0
  %632 = vmatprep.subr.bf16.mxu0 0
  %633 = vmatpush1.bf16.msra.mxu0 0
  %634 = vmatprep.subr.bf16.mxu0 0
  %635 = vmatpush1.bf16.msra.mxu0 0
  %636 = vmatprep.subr.bf16.mxu0 0
  %637 = vmatpush1.bf16.msra.mxu0 0
  %638 = vmatprep.subr.bf16.mxu0 0
  %639 = vmatpush1.bf16.msra.mxu0 0
  %640 = vmatprep.subr.bf16.mxu0 0
  %641 = vmatpush1.bf16.msra.mxu0 0
  %642 = vmatprep.subr.bf16.mxu0 0
  %643 = vmatpush1.bf16.msra.mxu0 0
  %644 = vmatprep.mubr.bf16.mxu0 0
  %645 = vmatmul.mubr.bf16.gmra.mrb[0].mxu0 %v243
  %v646 = vpop.f32.mrb[0].mxu0
  %v647 = vadd.f32 0.0, %v646
  %v648 = vpop.f32.mrb[0].mxu0
  %v649 = vpop.f32.mrb[0].mxu0
  %v650 = vadd.f32 0.0, %v649
  %v651 = vpop.f32.mrb[0].mxu0
  %652 = vmatprep.mubr.bf16.mxu0 0
  %653 = vmatmul.mubr.bf16.gmra.mrb[0].mxu0 %v244
  %v654 = vpop.f32.mrb[0].mxu0
  %v655 = vadd.f32 0.0, %v654
  %v656 = vpop.f32.mrb[0].mxu0
  %v657 = vpop.f32.mrb[0].mxu0
  %v658 = vadd.f32 0.0, %v657
  %v659 = vpop.f32.mrb[0].mxu0
  %660 = vmatprep.mubr.bf16.mxu0 0
  %661 = vmatmul.mubr.bf16.gmra.mrb[0].mxu0 %v245
  %v662 = vpop.f32.mrb[0].mxu0
  %v663 = vadd.f32 0.0, %v662
  %v664 = vpop.f32.mrb[0].mxu0
  %v665 = vpop.f32.mrb[0].mxu0
  %v666 = vadd.f32 0.0, %v665
  %v667 = vpop.f32.mrb[0].mxu0
  %668 = vmatprep.mubr.bf16.mxu0 0
  %669 = vmatmul.mubr.bf16.gmra.mrb[0].mxu0 %v246
  %v670 = vpop.f32.mrb[0].mxu0
  %v671 = vadd.f32 0.0, %v670
  %v672 = vpop.f32.mrb[0].mxu0
  %v673 = vpop.f32.mrb[0].mxu0
  %v674 = vadd.f32 0.0, %v673
  %v675 = vpop.f32.mrb[0].mxu0
  %676 = vmatprep.mubr.bf16.mxu0 0
  %677 = vmatmul.mubr.bf16.gmra.mrb[0].mxu0 %v247
  %v678 = vpop.f32.mrb[0].mxu0
  %v679 = vadd.f32 0.0, %v678
  %v680 = vpop.f32.mrb[0].mxu0
  %v681 = vpop.f32.mrb[0].mxu0
  %v682 = vadd.f32 0.0, %v681
  %v683 = vpop.f32.mrb[0].mxu0
  %684 = vmatprep.mubr.bf16.mxu0 0
  %685 = vmatmul.mubr.bf16.gmra.mrb[0].mxu0 %v248
  %v686 = vpop.f32.mrb[0].mxu0
  %v687 = vadd.f32 0.0, %v686
  %v688 = vpop.f32.mrb[0].mxu0
  %v689 = vpop.f32.mrb[0].mxu0
  %v690 = vadd.f32 0.0, %v689
  %v691 = vpop.f32.mrb[0].mxu0
  %692 = vmatprep.mubr.bf16.mxu0 0
  %693 = vmatmul.mubr.bf16.gmra.mrb[0].mxu0 %v249
  %v694 = vpop.f32.mrb[0].mxu0
  %v695 = vadd.f32 0.0, %v694
  %v696 = vpop.f32.mrb[0].mxu0
  %v697 = vpop.f32.mrb[0].mxu0
  %v698 = vadd.f32 0.0, %v697
  %v699 = vpop.f32.mrb[0].mxu0
  %700 = vmatprep.mubr.bf16.mxu0 0
  %701 = vmatmul.mubr.bf16.gmra.mrb[0].mxu0 %v250
  %v702 = vpop.f32.mrb[0].mxu0
  %v703 = vadd.f32 0.0, %v702
  %v704 = vpop.f32.mrb[0].mxu0
  %v705 = vpop.f32.mrb[0].mxu0
  %v706 = vadd.f32 0.0, %v705
  %v707 = vpop.f32.mrb[0].mxu0
  %708 = vmatprep.mubr.bf16.mxu0 0
  %709 = vmatmul.mubr.bf16.gmra.mrb[0].mxu0 %v251
  %v710 = vpop.f32.mrb[0].mxu0
  %v711 = vadd.f32 0.0, %v710
  %v712 = vpop.f32.mrb[0].mxu0
  %v713 = vpop.f32.mrb[0].mxu0
  %v714 = vadd.f32 0.0, %v713
  %v715 = vpop.f32.mrb[0].mxu0
  %716 = vmatprep.mubr.bf16.mxu0 0
  %717 = vmatmul.mubr.bf16.gmra.mrb[0].mxu0 %v252
  %v718 = vpop.f32.mrb[0].mxu0
  %v719 = vadd.f32 0.0, %v718
  %v720 = vpop.f32.mrb[0].mxu0
  %v721 = vpop.f32.mrb[0].mxu0
  %v722 = vadd.f32 0.0, %v721
  %v723 = vpop.f32.mrb[0].mxu0
  %724 = vmatprep.mubr.bf16.mxu0 0
  %725 = vmatmul.mubr.bf16.gmra.mrb[0].mxu0 %v253
  %v726 = vpop.f32.mrb[0].mxu0
  %v727 = vadd.f32 0.0, %v726
  %v728 = vpop.f32.mrb[0].mxu0
  %v729 = vpop.f32.mrb[0].mxu0
  %v730 = vadd.f32 0.0, %v729
  %v731 = vpop.f32.mrb[0].mxu0
  %732 = vmatprep.mubr.bf16.mxu0 0
  %733 = vmatmul.mubr.bf16.gmra.mrb[0].mxu0 %v254
  %v734 = vpop.f32.mrb[0].mxu0
  %v735 = vadd.f32 0.0, %v734
  %v736 = vpop.f32.mrb[0].mxu0
  %v737 = vpop.f32.mrb[0].mxu0
  %v738 = vadd.f32 0.0, %v737
  %v739 = vpop.f32.mrb[0].mxu0
  %740 = vmatprep.mubr.bf16.mxu0 0
  %741 = vmatmul.mubr.bf16.gmra.mrb[0].mxu0 %v255
  %v742 = vpop.f32.mrb[0].mxu0
  %v743 = vadd.f32 0.0, %v742
  %v744 = vpop.f32.mrb[0].mxu0
  %v745 = vpop.f32.mrb[0].mxu0
  %v746 = vadd.f32 0.0, %v745
  %v747 = vpop.f32.mrb[0].mxu0
  %748 = vmatprep.mubr.bf16.mxu0 0
  %749 = vmatmul.mubr.bf16.gmra.mrb[0].mxu0 %v256
  %v750 = vpop.f32.mrb[0].mxu0
  %v751 = vadd.f32 0.0, %v750
  %v752 = vpop.f32.mrb[0].mxu0
  %v753 = vpop.f32.mrb[0].mxu0
  %v754 = vadd.f32 0.0, %v753
  %v755 = vpop.f32.mrb[0].mxu0
  %756 = vmatprep.mubr.bf16.mxu0 0
  %757 = vmatmul.mubr.bf16.gmra.mrb[0].mxu0 %v257
  %v758 = vpop.f32.mrb[0].mxu0
  %v759 = vadd.f32 0.0, %v758
  %v760 = vpop.f32.mrb[0].mxu0
  %v761 = vpop.f32.mrb[0].mxu0
  %v762 = vadd.f32 0.0, %v761
  %v763 = vpop.f32.mrb[0].mxu0
  %764 = vmatprep.mubr.bf16.mxu0 0
  %765 = vmatmul.mubr.bf16.gmra.mrb[0].mxu0 %v258
  %v766 = vpop.f32.mrb[0].mxu0
  %v767 = vadd.f32 0.0, %v766
  %v768 = vpop.f32.mrb[0].mxu0
  %v769 = vpop.f32.mrb[0].mxu0
  %v770 = vadd.f32 0.0, %v769
  %v771 = vpop.f32.mrb[0].mxu0
  %772 = vdwg.mxu0
  %v773 = vadd.f32 %v115, %v454
  %v774 = vadd.f32 %v116, %v456
  %v775 = vadd.f32 %v117, %v647
  %v776 = vadd.f32 %v118, %v458
  %v777 = vadd.f32 %v119, %v460
  %v778 = vadd.f32 %v120, %v650
  %v779 = vadd.f32 %v121, %v464
  %v780 = vadd.f32 %v122, %v466
  %v781 = vadd.f32 %v123, %v655
  %v782 = vadd.f32 %v124, %v468
  %v783 = vadd.f32 %v125, %v470
  %v784 = vadd.f32 %v126, %v658
  %v785 = vadd.f32 %v127, %v474
  %v786 = vadd.f32 %v128, %v476
  %v787 = vadd.f32 %v129, %v663
  %v788 = vadd.f32 %v130, %v478
  %v789 = vadd.f32 %v131, %v480
  %v790 = vadd.f32 %v132, %v666
  %v791 = vadd.f32 %v133, %v484
  %v792 = vadd.f32 %v134, %v486
  %v793 = vadd.f32 %v135, %v671
  %v794 = vadd.f32 %v136, %v488
  %v795 = vadd.f32 %v137, %v490
  %v796 = vadd.f32 %v138, %v674
  %v797 = vadd.f32 %v139, %v494
  %v798 = vadd.f32 %v140, %v496
  %v799 = vadd.f32 %v141, %v679
  %v800 = vadd.f32 %v142, %v498
  %v801 = vadd.f32 %v143, %v500
  %v802 = vadd.f32 %v144, %v682
  %v803 = vadd.f32 %v145, %v504
  %v804 = vadd.f32 %v146, %v506
  %v805 = vadd.f32 %v147, %v687
  %v806 = vadd.f32 %v148, %v508
  %v807 = vadd.f32 %v149, %v510
  %v808 = vadd.f32 %v150, %v690
  %v809 = vadd.f32 %v151, %v514
  %v810 = vadd.f32 %v152, %v516
  %v811 = vadd.f32 %v153, %v695
  %v812 = vadd.f32 %v154, %v518
  %v813 = vadd.f32 %v155, %v520
  %v814 = vadd.f32 %v156, %v698
  %v815 = vadd.f32 %v157, %v524
  %v816 = vadd.f32 %v158, %v526
  %v817 = vadd.f32 %v159, %v703
  %v818 = vadd.f32 %v160, %v528
  %v819 = vadd.f32 %v161, %v530
  %v820 = vadd.f32 %v162, %v706
  %v821 = vadd.f32 %v163, %v534
  %v822 = vadd.f32 %v164, %v536
  %v823 = vadd.f32 %v165, %v711
  %v824 = vadd.f32 %v166, %v538
  %v825 = vadd.f32 %v167, %v540
  %v826 = vadd.f32 %v168, %v714
  %v827 = vadd.f32 %v169, %v544
  %v828 = vadd.f32 %v170, %v546
  %v829 = vadd.f32 %v171, %v719
  %v830 = vadd.f32 %v172, %v548
  %v831 = vadd.f32 %v173, %v550
  %v832 = vadd.f32 %v174, %v722
  %v833 = vadd.f32 %v175, %v554
  %v834 = vadd.f32 %v176, %v556
  %v835 = vadd.f32 %v177, %v727
  %v836 = vadd.f32 %v178, %v558
  %v837 = vadd.f32 %v179, %v560
  %v838 = vadd.f32 %v180, %v730
  %v839 = vadd.f32 %v181, %v564
  %v840 = vadd.f32 %v182, %v566
  %v841 = vadd.f32 %v183, %v735
  %v842 = vadd.f32 %v184, %v568
  %v843 = vadd.f32 %v185, %v570
  %v844 = vadd.f32 %v186, %v738
  %v845 = vadd.f32 %v187, %v574
  %v846 = vadd.f32 %v188, %v576
  %v847 = vadd.f32 %v189, %v743
  %v848 = vadd.f32 %v190, %v578
  %v849 = vadd.f32 %v191, %v580
  %v850 = vadd.f32 %v192, %v746
  %v851 = vadd.f32 %v193, %v584
  %v852 = vadd.f32 %v194, %v586
  %v853 = vadd.f32 %v195, %v751
  %v854 = vadd.f32 %v196, %v588
  %v855 = vadd.f32 %v197, %v590
  %v856 = vadd.f32 %v198, %v754
  %v857 = vadd.f32 %v199, %v594
  %v858 = vadd.f32 %v200, %v596
  %v859 = vadd.f32 %v201, %v759
  %v860 = vadd.f32 %v202, %v598
  %v861 = vadd.f32 %v203, %v600
  %v862 = vadd.f32 %v204, %v762
  %v863 = vadd.f32 %v205, %v604
  %v864 = vadd.f32 %v206, %v606
  %v865 = vadd.f32 %v207, %v767
  %v866 = vadd.f32 %v208, %v608
  %v867 = vadd.f32 %v209, %v610
  %v868 = vadd.f32 %v210, %v770
  %869 = vst [vmem:[%s3] sm:$0xff] %v773
  %870 = vst [vmem:[%s3 + $0x8] sm:$0xff] %v774
  %871 = vst [vmem:[%s3 + $0x10] sm:$0xff] %v775
  %872 = vst [vmem:[%s3 + $0x18] sm:$0xff] %v776
  %873 = vst [vmem:[%s3 + $0x20] sm:$0xff] %v777
  %874 = vst [vmem:[%s3 + $0x28] sm:$0xff] %v778
  %875 = vst [vmem:[%s3 + $0x30] sm:$0xff] %v779
  %876 = vst [vmem:[%s3 + $0x38] sm:$0xff] %v780
  %877 = vst [vmem:[%s3 + $0x40] sm:$0xff] %v781
  %878 = vst [vmem:[%s3 + $0x48] sm:$0xff] %v782
  %879 = vst [vmem:[%s3 + $0x50] sm:$0xff] %v783
  %880 = vst [vmem:[%s3 + $0x58] sm:$0xff] %v784
  %881 = vst [vmem:[%s3 + $0x60] sm:$0xff] %v785
  %882 = vst [vmem:[%s3 + $0x68] sm:$0xff] %v786
  %883 = vst [vmem:[%s3 + $0x70] sm:$0xff] %v787
  %884 = vst [vmem:[%s3 + $0x78] sm:$0xff] %v788
  %885 = vst [vmem:[%s3 + $0x80] sm:$0xff] %v789
  %886 = vst [vmem:[%s3 + $0x88] sm:$0xff] %v790
  %887 = vst [vmem:[%s3 + $0x90] sm:$0xff] %v791
  %888 = vst [vmem:[%s3 + $0x98] sm:$0xff] %v792
  %889 = vst [vmem:[%s3 + $0xa0] sm:$0xff] %v793
  %890 = vst [vmem:[%s3 + $0xa8] sm:$0xff] %v794
  %891 = vst [vmem:[%s3 + $0xb0] sm:$0xff] %v795
  %892 = vst [vmem:[%s3 + $0xb8] sm:$0xff] %v796
  %893 = vst [vmem:[%s3 + $0xc0] sm:$0xff] %v797
  %894 = vst [vmem:[%s3 + $0xc8] sm:$0xff] %v798
  %895 = vst [vmem:[%s3 + $0xd0] sm:$0xff] %v799
  %896 = vst [vmem:[%s3 + $0xd8] sm:$0xff] %v800
  %897 = vst [vmem:[%s3 + $0xe0] sm:$0xff] %v801
  %898 = vst [vmem:[%s3 + $0xe8] sm:$0xff] %v802
  %899 = vst [vmem:[%s3 + $0xf0] sm:$0xff] %v803
  %900 = vst [vmem:[%s3 + $0xf8] sm:$0xff] %v804
  %901 = vst [vmem:[%s3 + $0x100] sm:$0xff] %v805
  %902 = vst [vmem:[%s3 + $0x108] sm:$0xff] %v806
  %903 = vst [vmem:[%s3 + $0x110] sm:$0xff] %v807
  %904 = vst [vmem:[%s3 + $0x118] sm:$0xff] %v808
  %905 = vst [vmem:[%s3 + $0x120] sm:$0xff] %v809
  %906 = vst [vmem:[%s3 + $0x128] sm:$0xff] %v810
  %907 = vst [vmem:[%s3 + $0x130] sm:$0xff] %v811
  %908 = vst [vmem:[%s3 + $0x138] sm:$0xff] %v812
  %909 = vst [vmem:[%s3 + $0x140] sm:$0xff] %v813
  %910 = vst [vmem:[%s3 + $0x148] sm:$0xff] %v814
  %911 = vst [vmem:[%s3 + $0x150] sm:$0xff] %v815
  %912 = vst [vmem:[%s3 + $0x158] sm:$0xff] %v816
  %913 = vst [vmem:[%s3 + $0x160] sm:$0xff] %v817
  %914 = vst [vmem:[%s3 + $0x168] sm:$0xff] %v818
  %915 = vst [vmem:[%s3 + $0x170] sm:$0xff] %v819
  %916 = vst [vmem:[%s3 + $0x178] sm:$0xff] %v820
  %917 = vst [vmem:[%s3 + $0x180] sm:$0xff] %v821
  %918 = vst [vmem:[%s3 + $0x188] sm:$0xff] %v822
  %919 = vst [vmem:[%s3 + $0x190] sm:$0xff] %v823
  %920 = vst [vmem:[%s3 + $0x198] sm:$0xff] %v824
  %921 = vst [vmem:[%s3 + $0x1a0] sm:$0xff] %v825
  %922 = vst [vmem:[%s3 + $0x1a8] sm:$0xff] %v826
  %923 = vst [vmem:[%s3 + $0x1b0] sm:$0xff] %v827
  %924 = vst [vmem:[%s3 + $0x1b8] sm:$0xff] %v828
  %925 = vst [vmem:[%s3 + $0x1c0] sm:$0xff] %v829
  %926 = vst [vmem:[%s3 + $0x1c8] sm:$0xff] %v830
  %927 = vst [vmem:[%s3 + $0x1d0] sm:$0xff] %v831
  %928 = vst [vmem:[%s3 + $0x1d8] sm:$0xff] %v832
  %929 = vst [vmem:[%s3 + $0x1e0] sm:$0xff] %v833
  %930 = vst [vmem:[%s3 + $0x1e8] sm:$0xff] %v834
  %931 = vst [vmem:[%s3 + $0x1f0] sm:$0xff] %v835
  %932 = vst [vmem:[%s3 + $0x1f8] sm:$0xff] %v836
  %933 = vst [vmem:[%s3 + $0x200] sm:$0xff] %v837
  %934 = vst [vmem:[%s3 + $0x208] sm:$0xff] %v838
  %935 = vst [vmem:[%s3 + $0x210] sm:$0xff] %v839
  %936 = vst [vmem:[%s3 + $0x218] sm:$0xff] %v840
  %937 = vst [vmem:[%s3 + $0x220] sm:$0xff] %v841
  %938 = vst [vmem:[%s3 + $0x228] sm:$0xff] %v842
  %939 = vst [vmem:[%s3 + $0x230] sm:$0xff] %v843
  %940 = vst [vmem:[%s3 + $0x238] sm:$0xff] %v844
  %941 = vst [vmem:[%s3 + $0x240] sm:$0xff] %v845
  %942 = vst [vmem:[%s3 + $0x248] sm:$0xff] %v846
  %943 = vst [vmem:[%s3 + $0x250] sm:$0xff] %v847
  %944 = vst [vmem:[%s3 + $0x258] sm:$0xff] %v848
  %945 = vst [vmem:[%s3 + $0x260] sm:$0xff] %v849
  %946 = vst [vmem:[%s3 + $0x268] sm:$0xff] %v850
  %947 = vst [vmem:[%s3 + $0x270] sm:$0xff] %v851
  %948 = vst [vmem:[%s3 + $0x278] sm:$0xff] %v852
  %949 = vst [vmem:[%s3 + $0x280] sm:$0xff] %v853
  %950 = vst [vmem:[%s3 + $0x288] sm:$0xff] %v854
  %951 = vst [vmem:[%s3 + $0x290] sm:$0xff] %v855
  %952 = vst [vmem:[%s3 + $0x298] sm:$0xff] %v856
  %953 = vst [vmem:[%s3 + $0x2a0] sm:$0xff] %v857
  %954 = vst [vmem:[%s3 + $0x2a8] sm:$0xff] %v858
  %955 = vst [vmem:[%s3 + $0x2b0] sm:$0xff] %v859
  %956 = vst [vmem:[%s3 + $0x2b8] sm:$0xff] %v860
  %957 = vst [vmem:[%s3 + $0x2c0] sm:$0xff] %v861
  %958 = vst [vmem:[%s3 + $0x2c8] sm:$0xff] %v862
  %959 = vst [vmem:[%s3 + $0x2d0] sm:$0xff] %v863
  %960 = vst [vmem:[%s3 + $0x2d8] sm:$0xff] %v864
  %961 = vst [vmem:[%s3 + $0x2e0] sm:$0xff] %v865
  %962 = vst [vmem:[%s3 + $0x2e8] sm:$0xff] %v866
  %963 = vst [vmem:[%s3 + $0x2f0] sm:$0xff] %v867
  %964 = vst [vmem:[%s3 + $0x2f8] sm:$0xff] %v868
  // Predicated region
  $region18: #{bert_txt_forward.15} parent=0 // pred_check
    %p965 = pneg %p15
  $region19: #{bert_txt_forward.15} parent=0 // pred_check_branch
    %967 = sbr.rel (%p965) target = $region21
  $region20: #{bert_txt_forward.15} parent=0 // pred_region
    %v968 = vld [vmem:[%s3] sm:$0xff]
    %v969 = vld [vmem:[%s3 + $0x8] sm:$0xff]
    %v970 = vld [vmem:[%s3 + $0x10] sm:$0xff]
    %v971 = vld [vmem:[%s3 + $0x18] sm:$0xff]
    %v972 = vld [vmem:[%s3 + $0x20] sm:$0xff]
    %v973 = vld [vmem:[%s3 + $0x28] sm:$0xff]
    %v974 = vld [vmem:[%s3 + $0x30] sm:$0xff]
    %v975 = vld [vmem:[%s3 + $0x38] sm:$0xff]
    %v976 = vld [vmem:[%s3 + $0x40] sm:$0xff]
    %v977 = vld [vmem:[%s3 + $0x48] sm:$0xff]
    %v978 = vld [vmem:[%s3 + $0x50] sm:$0xff]
    %v979 = vld [vmem:[%s3 + $0x58] sm:$0xff]
    %v980 = vld [vmem:[%s3 + $0x60] sm:$0xff]
    %v981 = vld [vmem:[%s3 + $0x68] sm:$0xff]
    %v982 = vld [vmem:[%s3 + $0x70] sm:$0xff]
    %v983 = vld [vmem:[%s3 + $0x78] sm:$0xff]
    %v984 = vld [vmem:[%s3 + $0x80] sm:$0xff]
    %v985 = vld [vmem:[%s3 + $0x88] sm:$0xff]
    %v986 = vld [vmem:[%s3 + $0x90] sm:$0xff]
    %v987 = vld [vmem:[%s3 + $0x98] sm:$0xff]
    %v988 = vld [vmem:[%s3 + $0xa0] sm:$0xff]
    %v989 = vld [vmem:[%s3 + $0xa8] sm:$0xff]
    %v990 = vld [vmem:[%s3 + $0xb0] sm:$0xff]
    %v991 = vld [vmem:[%s3 + $0xb8] sm:$0xff]
    %v992 = vld [vmem:[%s3 + $0xc0] sm:$0xff]
    %v993 = vld [vmem:[%s3 + $0xc8] sm:$0xff]
    %v994 = vld [vmem:[%s3 + $0xd0] sm:$0xff]
    %v995 = vld [vmem:[%s3 + $0xd8] sm:$0xff]
    %v996 = vld [vmem:[%s3 + $0xe0] sm:$0xff]
    %v997 = vld [vmem:[%s3 + $0xe8] sm:$0xff]
    %v998 = vld [vmem:[%s3 + $0xf0] sm:$0xff]
    %v999 = vld [vmem:[%s3 + $0xf8] sm:$0xff]
    %v1000 = vld [vmem:[%s3 + $0x100] sm:$0xff]
    %v1001 = vld [vmem:[%s3 + $0x108] sm:$0xff]
    %v1002 = vld [vmem:[%s3 + $0x110] sm:$0xff]
    %v1003 = vld [vmem:[%s3 + $0x118] sm:$0xff]
    %v1004 = vld [vmem:[%s3 + $0x120] sm:$0xff]
    %v1005 = vld [vmem:[%s3 + $0x128] sm:$0xff]
    %v1006 = vld [vmem:[%s3 + $0x130] sm:$0xff]
    %v1007 = vld [vmem:[%s3 + $0x138] sm:$0xff]
    %v1008 = vld [vmem:[%s3 + $0x140] sm:$0xff]
    %v1009 = vld [vmem:[%s3 + $0x148] sm:$0xff]
    %v1010 = vld [vmem:[%s3 + $0x150] sm:$0xff]
    %v1011 = vld [vmem:[%s3 + $0x158] sm:$0xff]
    %v1012 = vld [vmem:[%s3 + $0x160] sm:$0xff]
    %v1013 = vld [vmem:[%s3 + $0x168] sm:$0xff]
    %v1014 = vld [vmem:[%s3 + $0x170] sm:$0xff]
    %v1015 = vld [vmem:[%s3 + $0x178] sm:$0xff]
    %v1016 = vld [vmem:[%s3 + $0x180] sm:$0xff]
    %v1017 = vld [vmem:[%s3 + $0x188] sm:$0xff]
    %v1018 = vld [vmem:[%s3 + $0x190] sm:$0xff]
    %v1019 = vld [vmem:[%s3 + $0x198] sm:$0xff]
    %v1020 = vld [vmem:[%s3 + $0x1a0] sm:$0xff]
    %v1021 = vld [vmem:[%s3 + $0x1a8] sm:$0xff]
    %v1022 = vld [vmem:[%s3 + $0x1b0] sm:$0xff]
    %v1023 = vld [vmem:[%s3 + $0x1b8] sm:$0xff]
    %v1024 = vld [vmem:[%s3 + $0x1c0] sm:$0xff]
    %v1025 = vld [vmem:[%s3 + $0x1c8] sm:$0xff]
    %v1026 = vld [vmem:[%s3 + $0x1d0] sm:$0xff]
    %v1027 = vld [vmem:[%s3 + $0x1d8] sm:$0xff]
    %v1028 = vld [vmem:[%s3 + $0x1e0] sm:$0xff]
    %v1029 = vld [vmem:[%s3 + $0x1e8] sm:$0xff]
    %v1030 = vld [vmem:[%s3 + $0x1f0] sm:$0xff]
    %v1031 = vld [vmem:[%s3 + $0x1f8] sm:$0xff]
    %v1032 = vld [vmem:[%s3 + $0x200] sm:$0xff]
    %v1033 = vld [vmem:[%s3 + $0x208] sm:$0xff]
    %v1034 = vld [vmem:[%s3 + $0x210] sm:$0xff]
    %v1035 = vld [vmem:[%s3 + $0x218] sm:$0xff]
    %v1036 = vld [vmem:[%s3 + $0x220] sm:$0xff]
    %v1037 = vld [vmem:[%s3 + $0x228] sm:$0xff]
    %v1038 = vld [vmem:[%s3 + $0x230] sm:$0xff]
    %v1039 = vld [vmem:[%s3 + $0x238] sm:$0xff]
    %v1040 = vld [vmem:[%s3 + $0x240] sm:$0xff]
    %v1041 = vld [vmem:[%s3 + $0x248] sm:$0xff]
    %v1042 = vld [vmem:[%s3 + $0x250] sm:$0xff]
    %v1043 = vld [vmem:[%s3 + $0x258] sm:$0xff]
    %v1044 = vld [vmem:[%s3 + $0x260] sm:$0xff]
    %v1045 = vld [vmem:[%s3 + $0x268] sm:$0xff]
    %v1046 = vld [vmem:[%s3 + $0x270] sm:$0xff]
    %v1047 = vld [vmem:[%s3 + $0x278] sm:$0xff]
    %v1048 = vld [vmem:[%s3 + $0x280] sm:$0xff]
    %v1049 = vld [vmem:[%s3 + $0x288] sm:$0xff]
    %v1050 = vld [vmem:[%s3 + $0x290] sm:$0xff]
    %v1051 = vld [vmem:[%s3 + $0x298] sm:$0xff]
    %v1052 = vld [vmem:[%s3 + $0x2a0] sm:$0xff]
    %v1053 = vld [vmem:[%s3 + $0x2a8] sm:$0xff]
    %v1054 = vld [vmem:[%s3 + $0x2b0] sm:$0xff]
    %v1055 = vld [vmem:[%s3 + $0x2b8] sm:$0xff]
    %v1056 = vld [vmem:[%s3 + $0x2c0] sm:$0xff]
    %v1057 = vld [vmem:[%s3 + $0x2c8] sm:$0xff]
    %v1058 = vld [vmem:[%s3 + $0x2d0] sm:$0xff]
    %v1059 = vld [vmem:[%s3 + $0x2d8] sm:$0xff]
    %v1060 = vld [vmem:[%s3 + $0x2e0] sm:$0xff]
    %v1061 = vld [vmem:[%s3 + $0x2e8] sm:$0xff]
    %v1062 = vld [vmem:[%s3 + $0x2f0] sm:$0xff]
    %v1063 = vld [vmem:[%s3 + $0x2f8] sm:$0xff]
    %v1064 = vld [vmem:[%s2] sm:$0x7]
    %v1066 = vlaneseq
    %v1067 = vshrl.u32 %v1066, 7
    %v1068 = vsub.s32 0, %v1067
    %v1069 = vrot.slane %v1064, %v1068
    %v1070 = vlaneseq
    %v1071 = vshrl.u32 %v1070, 7
    %v1072 = vsub.s32 1, %v1071
    %v1073 = vrot.slane %v1064, %v1072
    %v1074 = vlaneseq
    %v1075 = vshrl.u32 %v1074, 7
    %v1076 = vsub.s32 2, %v1075
    %v1077 = vrot.slane %v1064, %v1076
    %v1081 = vadd.f32 %v968, %v1069
    %v1082 = vadd.f32 %v969, %v1073
    %v1083 = vadd.f32 %v970, %v1077
    %v1084 = vadd.f32 %v971, %v1069
    %v1085 = vadd.f32 %v972, %v1073
    %v1086 = vadd.f32 %v973, %v1077
    %v1087 = vadd.f32 %v974, %v1069
    %v1088 = vadd.f32 %v975, %v1073
    %v1089 = vadd.f32 %v976, %v1077
    %v1090 = vadd.f32 %v977, %v1069
    %v1091 = vadd.f32 %v978, %v1073
    %v1092 = vadd.f32 %v979, %v1077
    %v1093 = vadd.f32 %v980, %v1069
    %v1094 = vadd.f32 %v981, %v1073
    %v1095 = vadd.f32 %v982, %v1077
    %v1096 = vadd.f32 %v983, %v1069
    %v1097 = vadd.f32 %v984, %v1073
    %v1098 = vadd.f32 %v985, %v1077
    %v1099 = vadd.f32 %v986, %v1069
    %v1100 = vadd.f32 %v987, %v1073
    %v1101 = vadd.f32 %v988, %v1077
    %v1102 = vadd.f32 %v989, %v1069
    %v1103 = vadd.f32 %v990, %v1073
    %v1104 = vadd.f32 %v991, %v1077
    %v1105 = vadd.f32 %v992, %v1069
    %v1106 = vadd.f32 %v993, %v1073
    %v1107 = vadd.f32 %v994, %v1077
    %v1108 = vadd.f32 %v995, %v1069
    %v1109 = vadd.f32 %v996, %v1073
    %v1110 = vadd.f32 %v997, %v1077
    %v1111 = vadd.f32 %v998, %v1069
    %v1112 = vadd.f32 %v999, %v1073
    %v1113 = vadd.f32 %v1000, %v1077
    %v1114 = vadd.f32 %v1001, %v1069
    %v1115 = vadd.f32 %v1002, %v1073
    %v1116 = vadd.f32 %v1003, %v1077
    %v1117 = vadd.f32 %v1004, %v1069
    %v1118 = vadd.f32 %v1005, %v1073
    %v1119 = vadd.f32 %v1006, %v1077
    %v1120 = vadd.f32 %v1007, %v1069
    %v1121 = vadd.f32 %v1008, %v1073
    %v1122 = vadd.f32 %v1009, %v1077
    %v1123 = vadd.f32 %v1010, %v1069
    %v1124 = vadd.f32 %v1011, %v1073
    %v1125 = vadd.f32 %v1012, %v1077
    %v1126 = vadd.f32 %v1013, %v1069
    %v1127 = vadd.f32 %v1014, %v1073
    %v1128 = vadd.f32 %v1015, %v1077
    %v1129 = vadd.f32 %v1016, %v1069
    %v1130 = vadd.f32 %v1017, %v1073
    %v1131 = vadd.f32 %v1018, %v1077
    %v1132 = vadd.f32 %v1019, %v1069
    %v1133 = vadd.f32 %v1020, %v1073
    %v1134 = vadd.f32 %v1021, %v1077
    %v1135 = vadd.f32 %v1022, %v1069
    %v1136 = vadd.f32 %v1023, %v1073
    %v1137 = vadd.f32 %v1024, %v1077
    %v1138 = vadd.f32 %v1025, %v1069
    %v1139 = vadd.f32 %v1026, %v1073
    %v1140 = vadd.f32 %v1027, %v1077
    %v1141 = vadd.f32 %v1028, %v1069
    %v1142 = vadd.f32 %v1029, %v1073
    %v1143 = vadd.f32 %v1030, %v1077
    %v1144 = vadd.f32 %v1031, %v1069
    %v1145 = vadd.f32 %v1032, %v1073
    %v1146 = vadd.f32 %v1033, %v1077
    %v1147 = vadd.f32 %v1034, %v1069
    %v1148 = vadd.f32 %v1035, %v1073
    %v1149 = vadd.f32 %v1036, %v1077
    %v1150 = vadd.f32 %v1037, %v1069
    %v1151 = vadd.f32 %v1038, %v1073
    %v1152 = vadd.f32 %v1039, %v1077
    %v1153 = vadd.f32 %v1040, %v1069
    %v1154 = vadd.f32 %v1041, %v1073
    %v1155 = vadd.f32 %v1042, %v1077
    %v1156 = vadd.f32 %v1043, %v1069
    %v1157 = vadd.f32 %v1044, %v1073
    %v1158 = vadd.f32 %v1045, %v1077
    %v1159 = vadd.f32 %v1046, %v1069
    %v1160 = vadd.f32 %v1047, %v1073
    %v1161 = vadd.f32 %v1048, %v1077
    %v1162 = vadd.f32 %v1049, %v1069
    %v1163 = vadd.f32 %v1050, %v1073
    %v1164 = vadd.f32 %v1051, %v1077
    %v1165 = vadd.f32 %v1052, %v1069
    %v1166 = vadd.f32 %v1053, %v1073
    %v1167 = vadd.f32 %v1054, %v1077
    %v1168 = vadd.f32 %v1055, %v1069
    %v1169 = vadd.f32 %v1056, %v1073
    %v1170 = vadd.f32 %v1057, %v1077
    %v1171 = vadd.f32 %v1058, %v1069
    %v1172 = vadd.f32 %v1059, %v1073
    %v1173 = vadd.f32 %v1060, %v1077
    %v1174 = vadd.f32 %v1061, %v1069
    %v1175 = vadd.f32 %v1062, %v1073
    %v1176 = vadd.f32 %v1063, %v1077
    %1177 = vst [vmem:[%s3] sm:$0xff] %v1081
    %1178 = vst [vmem:[%s3 + $0x8] sm:$0xff] %v1082
    %1179 = vst [vmem:[%s3 + $0x10] sm:$0xff] %v1083
    %1180 = vst [vmem:[%s3 + $0x18] sm:$0xff] %v1084
    %1181 = vst [vmem:[%s3 + $0x20] sm:$0xff] %v1085
    %1182 = vst [vmem:[%s3 + $0x28] sm:$0xff] %v1086
    %1183 = vst [vmem:[%s3 + $0x30] sm:$0xff] %v1087
    %1184 = vst [vmem:[%s3 + $0x38] sm:$0xff] %v1088
    %1185 = vst [vmem:[%s3 + $0x40] sm:$0xff] %v1089
    %1186 = vst [vmem:[%s3 + $0x48] sm:$0xff] %v1090
    %1187 = vst [vmem:[%s3 + $0x50] sm:$0xff] %v1091
    %1188 = vst [vmem:[%s3 + $0x58] sm:$0xff] %v1092
    %1189 = vst [vmem:[%s3 + $0x60] sm:$0xff] %v1093
    %1190 = vst [vmem:[%s3 + $0x68] sm:$0xff] %v1094
    %1191 = vst [vmem:[%s3 + $0x70] sm:$0xff] %v1095
    %1192 = vst [vmem:[%s3 + $0x78] sm:$0xff] %v1096
    %1193 = vst [vmem:[%s3 + $0x80] sm:$0xff] %v1097
    %1194 = vst [vmem:[%s3 + $0x88] sm:$0xff] %v1098
    %1195 = vst [vmem:[%s3 + $0x90] sm:$0xff] %v1099
    %1196 = vst [vmem:[%s3 + $0x98] sm:$0xff] %v1100
    %1197 = vst [vmem:[%s3 + $0xa0] sm:$0xff] %v1101
    %1198 = vst [vmem:[%s3 + $0xa8] sm:$0xff] %v1102
    %1199 = vst [vmem:[%s3 + $0xb0] sm:$0xff] %v1103
    %1200 = vst [vmem:[%s3 + $0xb8] sm:$0xff] %v1104
    %1201 = vst [vmem:[%s3 + $0xc0] sm:$0xff] %v1105
    %1202 = vst [vmem:[%s3 + $0xc8] sm:$0xff] %v1106
    %1203 = vst [vmem:[%s3 + $0xd0] sm:$0xff] %v1107
    %1204 = vst [vmem:[%s3 + $0xd8] sm:$0xff] %v1108
    %1205 = vst [vmem:[%s3 + $0xe0] sm:$0xff] %v1109
    %1206 = vst [vmem:[%s3 + $0xe8] sm:$0xff] %v1110
    %1207 = vst [vmem:[%s3 + $0xf0] sm:$0xff] %v1111
    %1208 = vst [vmem:[%s3 + $0xf8] sm:$0xff] %v1112
    %1209 = vst [vmem:[%s3 + $0x100] sm:$0xff] %v1113
    %1210 = vst [vmem:[%s3 + $0x108] sm:$0xff] %v1114
    %1211 = vst [vmem:[%s3 + $0x110] sm:$0xff] %v1115
    %1212 = vst [vmem:[%s3 + $0x118] sm:$0xff] %v1116
    %1213 = vst [vmem:[%s3 + $0x120] sm:$0xff] %v1117
    %1214 = vst [vmem:[%s3 + $0x128] sm:$0xff] %v1118
    %1215 = vst [vmem:[%s3 + $0x130] sm:$0xff] %v1119
    %1216 = vst [vmem:[%s3 + $0x138] sm:$0xff] %v1120
    %1217 = vst [vmem:[%s3 + $0x140] sm:$0xff] %v1121
    %1218 = vst [vmem:[%s3 + $0x148] sm:$0xff] %v1122
    %1219 = vst [vmem:[%s3 + $0x150] sm:$0xff] %v1123
    %1220 = vst [vmem:[%s3 + $0x158] sm:$0xff] %v1124
    %1221 = vst [vmem:[%s3 + $0x160] sm:$0xff] %v1125
    %1222 = vst [vmem:[%s3 + $0x168] sm:$0xff] %v1126
    %1223 = vst [vmem:[%s3 + $0x170] sm:$0xff] %v1127
    %1224 = vst [vmem:[%s3 + $0x178] sm:$0xff] %v1128
    %1225 = vst [vmem:[%s3 + $0x180] sm:$0xff] %v1129
    %1226 = vst [vmem:[%s3 + $0x188] sm:$0xff] %v1130
    %1227 = vst [vmem:[%s3 + $0x190] sm:$0xff] %v1131
    %1228 = vst [vmem:[%s3 + $0x198] sm:$0xff] %v1132
    %1229 = vst [vmem:[%s3 + $0x1a0] sm:$0xff] %v1133
    %1230 = vst [vmem:[%s3 + $0x1a8] sm:$0xff] %v1134
    %1231 = vst [vmem:[%s3 + $0x1b0] sm:$0xff] %v1135
    %1232 = vst [vmem:[%s3 + $0x1b8] sm:$0xff] %v1136
    %1233 = vst [vmem:[%s3 + $0x1c0] sm:$0xff] %v1137
    %1234 = vst [vmem:[%s3 + $0x1c8] sm:$0xff] %v1138
    %1235 = vst [vmem:[%s3 + $0x1d0] sm:$0xff] %v1139
    %1236 = vst [vmem:[%s3 + $0x1d8] sm:$0xff] %v1140
    %1237 = vst [vmem:[%s3 + $0x1e0] sm:$0xff] %v1141
    %1238 = vst [vmem:[%s3 + $0x1e8] sm:$0xff] %v1142
    %1239 = vst [vmem:[%s3 + $0x1f0] sm:$0xff] %v1143
    %1240 = vst [vmem:[%s3 + $0x1f8] sm:$0xff] %v1144
    %1241 = vst [vmem:[%s3 + $0x200] sm:$0xff] %v1145
    %1242 = vst [vmem:[%s3 + $0x208] sm:$0xff] %v1146
    %1243 = vst [vmem:[%s3 + $0x210] sm:$0xff] %v1147
    %1244 = vst [vmem:[%s3 + $0x218] sm:$0xff] %v1148
    %1245 = vst [vmem:[%s3 + $0x220] sm:$0xff] %v1149
    %1246 = vst [vmem:[%s3 + $0x228] sm:$0xff] %v1150
    %1247 = vst [vmem:[%s3 + $0x230] sm:$0xff] %v1151
    %1248 = vst [vmem:[%s3 + $0x238] sm:$0xff] %v1152
    %1249 = vst [vmem:[%s3 + $0x240] sm:$0xff] %v1153
    %1250 = vst [vmem:[%s3 + $0x248] sm:$0xff] %v1154
    %1251 = vst [vmem:[%s3 + $0x250] sm:$0xff] %v1155
    %1252 = vst [vmem:[%s3 + $0x258] sm:$0xff] %v1156
    %1253 = vst [vmem:[%s3 + $0x260] sm:$0xff] %v1157
    %1254 = vst [vmem:[%s3 + $0x268] sm:$0xff] %v1158
    %1255 = vst [vmem:[%s3 + $0x270] sm:$0xff] %v1159
    %1256 = vst [vmem:[%s3 + $0x278] sm:$0xff] %v1160
    %1257 = vst [vmem:[%s3 + $0x280] sm:$0xff] %v1161
    %1258 = vst [vmem:[%s3 + $0x288] sm:$0xff] %v1162
    %1259 = vst [vmem:[%s3 + $0x290] sm:$0xff] %v1163
    %1260 = vst [vmem:[%s3 + $0x298] sm:$0xff] %v1164
    %1261 = vst [vmem:[%s3 + $0x2a0] sm:$0xff] %v1165
    %1262 = vst [vmem:[%s3 + $0x2a8] sm:$0xff] %v1166
    %1263 = vst [vmem:[%s3 + $0x2b0] sm:$0xff] %v1167
    %1264 = vst [vmem:[%s3 + $0x2b8] sm:$0xff] %v1168
    %1265 = vst [vmem:[%s3 + $0x2c0] sm:$0xff] %v1169
    %1266 = vst [vmem:[%s3 + $0x2c8] sm:$0xff] %v1170
    %1267 = vst [vmem:[%s3 + $0x2d0] sm:$0xff] %v1171
    %1268 = vst [vmem:[%s3 + $0x2d8] sm:$0xff] %v1172
    %1269 = vst [vmem:[%s3 + $0x2e0] sm:$0xff] %v1173
    %1270 = vst [vmem:[%s3 + $0x2e8] sm:$0xff] %v1174
    %1271 = vst [vmem:[%s3 + $0x2f0] sm:$0xff] %v1175
    %1272 = vst [vmem:[%s3 + $0x2f8] sm:$0xff] %v1176
  $region21: #{bert_txt_forward.15} parent=0 // pred_fallthru
    _
  // Predicated region
  $region22: #{bert_txt_forward.15} parent=0 // pred_check
    _
  $region23: #{bert_txt_forward.15} parent=0 // pred_check_branch
    %1274 = sbr.rel (0) target = $region25
  $region24: #{bert_txt_forward.15} parent=0 // pred_region
    _
  $region25: #{bert_txt_forward.15} parent=0 // pred_fallthru
    _
  // Predicated region
  $region26: #{bert_txt_forward.15} parent=0 // pred_check
    _
  $region27: #{bert_txt_forward.15} parent=0 // pred_check_branch
    %1276 = sbr.rel (0) target = $region29
  $region28: #{bert_txt_forward.15} parent=0 // pred_region
    _
  $region29: #{bert_txt_forward.15} parent=0 // pred_fallthru
    _

// kernel: bert_txt_forward.18
$region0: #{bert_txt_forward.18}
  #allocation0 [shape = 'u32[]', space=smem, size = 0x4, offset = 0x4, fixed_abs, tag = 'smem constant byte address 0x4 - core index']
  #allocation1 [shape = 'u32[144,128]{1,0:T(1,128)}', space=vmem, size = 0x12000, scoped, tag = 'internal scratch']
  %s0 = inlined_call_operand.vmem [shape: f32[256,128], index: 0, kind: input, shape index: {}]
  %s1 = inlined_call_operand.vmem [shape: f32[256,128], index: 1, kind: input, shape index: {}]
  %s2 = inlined_call_operand.vmem [shape: f32[1,128], index: 2, kind: input, shape index: {}]
  %s3 = inlined_call_operand.vmem [shape: f32[1,128], index: 3, kind: input, shape index: {}]
  %s4 = inlined_call_operand.vmem [shape: f32[256,128], index: 4, kind: output, shape index: {}]
  %s5 = sld [smem:[#allocation0]]
  $region26: #{bert_txt_forward.18} parent=0
    _
  %s7 = ssub.s32 1, %s5
  %s8 = scalar_select 0, %s7, %s5
  // Predicated region
  $region2: #{bert_txt_forward.18} parent=0 // pred_check
    _
  $region3: #{bert_txt_forward.18} parent=0 // pred_check_branch
    %10 = sbr.rel (0) target = $region5
  $region4: #{bert_txt_forward.18} parent=0 // pred_region
    _
  $region5: #{bert_txt_forward.18} parent=0 // pred_fallthru
    _
  // Predicated region
  $region6: #{bert_txt_forward.18} parent=0 // pred_check
    _
  $region7: #{bert_txt_forward.18} parent=0 // pred_check_branch
    %12 = sbr.rel (0) target = $region9
  $region8: #{bert_txt_forward.18} parent=0 // pred_region
    _
  $region9: #{bert_txt_forward.18} parent=0 // pred_fallthru
    _
  // Predicated region
  $region10: #{bert_txt_forward.18} parent=0 // pred_check
    _
  $region11: #{bert_txt_forward.18} parent=0 // pred_check_branch
    %14 = sbr.rel (0) target = $region13
  $region12: #{bert_txt_forward.18} parent=0 // pred_region
    _
  $region13: #{bert_txt_forward.18} parent=0 // pred_fallthru
    _
  // Predicated region
  $region14: #{bert_txt_forward.18} parent=0 // pred_check
    _
  $region15: #{bert_txt_forward.18} parent=0 // pred_check_branch
    %16 = sbr.rel (0) target = $region17
  $region16: #{bert_txt_forward.18} parent=0 // pred_region
    _
  $region17: #{bert_txt_forward.18} parent=0 // pred_fallthru
    _
  %v17 = vld [vmem:[%s0] sm:$0xff]
  %v18 = vld [vmem:[%s0 + $0x8] sm:$0xff]
  %v19 = vld [vmem:[%s0 + $0x10] sm:$0xff]
  %v20 = vld [vmem:[%s0 + $0x18] sm:$0xff]
  %v21 = vld [vmem:[%s0 + $0x20] sm:$0xff]
  %v22 = vld [vmem:[%s0 + $0x28] sm:$0xff]
  %v23 = vld [vmem:[%s0 + $0x30] sm:$0xff]
  %v24 = vld [vmem:[%s0 + $0x38] sm:$0xff]
  %v25 = vld [vmem:[%s0 + $0x40] sm:$0xff]
  %v26 = vld [vmem:[%s0 + $0x48] sm:$0xff]
  %v27 = vld [vmem:[%s0 + $0x50] sm:$0xff]
  %v28 = vld [vmem:[%s0 + $0x58] sm:$0xff]
  %v29 = vld [vmem:[%s0 + $0x60] sm:$0xff]
  %v30 = vld [vmem:[%s0 + $0x68] sm:$0xff]
  %v31 = vld [vmem:[%s0 + $0x70] sm:$0xff]
  %v32 = vld [vmem:[%s0 + $0x78] sm:$0xff]
  %v33 = vld [vmem:[%s0 + $0x80] sm:$0xff]
  %v34 = vld [vmem:[%s0 + $0x88] sm:$0xff]
  %v35 = vld [vmem:[%s0 + $0x90] sm:$0xff]
  %v36 = vld [vmem:[%s0 + $0x98] sm:$0xff]
  %v37 = vld [vmem:[%s0 + $0xa0] sm:$0xff]
  %v38 = vld [vmem:[%s0 + $0xa8] sm:$0xff]
  %v39 = vld [vmem:[%s0 + $0xb0] sm:$0xff]
  %v40 = vld [vmem:[%s0 + $0xb8] sm:$0xff]
  %v41 = vld [vmem:[%s0 + $0xc0] sm:$0xff]
  %v42 = vld [vmem:[%s0 + $0xc8] sm:$0xff]
  %v43 = vld [vmem:[%s0 + $0xd0] sm:$0xff]
  %v44 = vld [vmem:[%s0 + $0xd8] sm:$0xff]
  %v45 = vld [vmem:[%s0 + $0xe0] sm:$0xff]
  %v46 = vld [vmem:[%s0 + $0xe8] sm:$0xff]
  %v47 = vld [vmem:[%s0 + $0xf0] sm:$0xff]
  %v48 = vld [vmem:[%s0 + $0xf8] sm:$0xff]
  %v49 = vld [vmem:[%s1] sm:$0xff]
  %v50 = vld [vmem:[%s1 + $0x8] sm:$0xff]
  %v51 = vld [vmem:[%s1 + $0x10] sm:$0xff]
  %v52 = vld [vmem:[%s1 + $0x18] sm:$0xff]
  %v53 = vld [vmem:[%s1 + $0x20] sm:$0xff]
  %v54 = vld [vmem:[%s1 + $0x28] sm:$0xff]
  %v55 = vld [vmem:[%s1 + $0x30] sm:$0xff]
  %v56 = vld [vmem:[%s1 + $0x38] sm:$0xff]
  %v57 = vld [vmem:[%s1 + $0x40] sm:$0xff]
  %v58 = vld [vmem:[%s1 + $0x48] sm:$0xff]
  %v59 = vld [vmem:[%s1 + $0x50] sm:$0xff]
  %v60 = vld [vmem:[%s1 + $0x58] sm:$0xff]
  %v61 = vld [vmem:[%s1 + $0x60] sm:$0xff]
  %v62 = vld [vmem:[%s1 + $0x68] sm:$0xff]
  %v63 = vld [vmem:[%s1 + $0x70] sm:$0xff]
  %v64 = vld [vmem:[%s1 + $0x78] sm:$0xff]
  %v65 = vld [vmem:[%s1 + $0x80] sm:$0xff]
  %v66 = vld [vmem:[%s1 + $0x88] sm:$0xff]
  %v67 = vld [vmem:[%s1 + $0x90] sm:$0xff]
  %v68 = vld [vmem:[%s1 + $0x98] sm:$0xff]
  %v69 = vld [vmem:[%s1 + $0xa0] sm:$0xff]
  %v70 = vld [vmem:[%s1 + $0xa8] sm:$0xff]
  %v71 = vld [vmem:[%s1 + $0xb0] sm:$0xff]
  %v72 = vld [vmem:[%s1 + $0xb8] sm:$0xff]
  %v73 = vld [vmem:[%s1 + $0xc0] sm:$0xff]
  %v74 = vld [vmem:[%s1 + $0xc8] sm:$0xff]
  %v75 = vld [vmem:[%s1 + $0xd0] sm:$0xff]
  %v76 = vld [vmem:[%s1 + $0xd8] sm:$0xff]
  %v77 = vld [vmem:[%s1 + $0xe0] sm:$0xff]
  %v78 = vld [vmem:[%s1 + $0xe8] sm:$0xff]
  %v79 = vld [vmem:[%s1 + $0xf0] sm:$0xff]
  %v80 = vld [vmem:[%s1 + $0xf8] sm:$0xff]
  %v81 = vadd.f32 %v17, %v49
  %v82 = vadd.f32 %v18, %v50
  %v83 = vadd.f32 %v19, %v51
  %v84 = vadd.f32 %v20, %v52
  %v85 = vadd.f32 %v21, %v53
  %v86 = vadd.f32 %v22, %v54
  %v87 = vadd.f32 %v23, %v55
  %v88 = vadd.f32 %v24, %v56
  %v89 = vadd.f32 %v25, %v57
  %v90 = vadd.f32 %v26, %v58
  %v91 = vadd.f32 %v27, %v59
  %v92 = vadd.f32 %v28, %v60
  %v93 = vadd.f32 %v29, %v61
  %v94 = vadd.f32 %v30, %v62
  %v95 = vadd.f32 %v31, %v63
  %v96 = vadd.f32 %v32, %v64
  %v97 = vadd.f32 %v33, %v65
  %v98 = vadd.f32 %v34, %v66
  %v99 = vadd.f32 %v35, %v67
  %v100 = vadd.f32 %v36, %v68
  %v101 = vadd.f32 %v37, %v69
  %v102 = vadd.f32 %v38, %v70
  %v103 = vadd.f32 %v39, %v71
  %v104 = vadd.f32 %v40, %v72
  %v105 = vadd.f32 %v41, %v73
  %v106 = vadd.f32 %v42, %v74
  %v107 = vadd.f32 %v43, %v75
  %v108 = vadd.f32 %v44, %v76
  %v109 = vadd.f32 %v45, %v77
  %v110 = vadd.f32 %v46, %v78
  %v111 = vadd.f32 %v47, %v79
  %v112 = vadd.f32 %v48, %v80
  %113 = vadd.xlane.f32.xlu0 %v81
  %v114 = vpop.xlane.xlu0 %113
  %115 = vadd.xlane.f32.xlu0 %v82
  %v116 = vpop.xlane.xlu0 %115
  %117 = vadd.xlane.f32.xlu0 %v83
  %v118 = vpop.xlane.xlu0 %117
  %119 = vadd.xlane.f32.xlu0 %v84
  %v120 = vpop.xlane.xlu0 %119
  %121 = vadd.xlane.f32.xlu0 %v85
  %v122 = vpop.xlane.xlu0 %121
  %123 = vadd.xlane.f32.xlu0 %v86
  %v124 = vpop.xlane.xlu0 %123
  %125 = vadd.xlane.f32.xlu0 %v87
  %v126 = vpop.xlane.xlu0 %125
  %127 = vadd.xlane.f32.xlu0 %v88
  %v128 = vpop.xlane.xlu0 %127
  %129 = vadd.xlane.f32.xlu0 %v89
  %v130 = vpop.xlane.xlu0 %129
  %131 = vadd.xlane.f32.xlu0 %v90
  %v132 = vpop.xlane.xlu0 %131
  %133 = vadd.xlane.f32.xlu0 %v91
  %v134 = vpop.xlane.xlu0 %133
  %135 = vadd.xlane.f32.xlu0 %v92
  %v136 = vpop.xlane.xlu0 %135
  %137 = vadd.xlane.f32.xlu0 %v93
  %v138 = vpop.xlane.xlu0 %137
  %139 = vadd.xlane.f32.xlu0 %v94
  %v140 = vpop.xlane.xlu0 %139
  %141 = vadd.xlane.f32.xlu0 %v95
  %v142 = vpop.xlane.xlu0 %141
  %143 = vadd.xlane.f32.xlu0 %v96
  %v144 = vpop.xlane.xlu0 %143
  %145 = vadd.xlane.f32.xlu0 %v97
  %v146 = vpop.xlane.xlu0 %145
  %147 = vadd.xlane.f32.xlu0 %v98
  %v148 = vpop.xlane.xlu0 %147
  %149 = vadd.xlane.f32.xlu0 %v99
  %v150 = vpop.xlane.xlu0 %149
  %151 = vadd.xlane.f32.xlu0 %v100
  %v152 = vpop.xlane.xlu0 %151
  %153 = vadd.xlane.f32.xlu0 %v101
  %v154 = vpop.xlane.xlu0 %153
  %155 = vadd.xlane.f32.xlu0 %v102
  %v156 = vpop.xlane.xlu0 %155
  %157 = vadd.xlane.f32.xlu0 %v103
  %v158 = vpop.xlane.xlu0 %157
  %159 = vadd.xlane.f32.xlu0 %v104
  %v160 = vpop.xlane.xlu0 %159
  %161 = vadd.xlane.f32.xlu0 %v105
  %v162 = vpop.xlane.xlu0 %161
  %163 = vadd.xlane.f32.xlu0 %v106
  %v164 = vpop.xlane.xlu0 %163
  %165 = vadd.xlane.f32.xlu0 %v107
  %v166 = vpop.xlane.xlu0 %165
  %167 = vadd.xlane.f32.xlu0 %v108
  %v168 = vpop.xlane.xlu0 %167
  %169 = vadd.xlane.f32.xlu0 %v109
  %v170 = vpop.xlane.xlu0 %169
  %171 = vadd.xlane.f32.xlu0 %v110
  %v172 = vpop.xlane.xlu0 %171
  %173 = vadd.xlane.f32.xlu0 %v111
  %v174 = vpop.xlane.xlu0 %173
  %175 = vadd.xlane.f32.xlu0 %v112
  %v176 = vpop.xlane.xlu0 %175
  %v177 = vrcp.pop 128.0
  %v178 = vmul.f32 %v114, %v177
  %v179 = vmul.f32 %v116, %v177
  %v180 = vmul.f32 %v118, %v177
  %v181 = vmul.f32 %v120, %v177
  %v182 = vmul.f32 %v122, %v177
  %v183 = vmul.f32 %v124, %v177
  %v184 = vmul.f32 %v126, %v177
  %v185 = vmul.f32 %v128, %v177
  %v186 = vmul.f32 %v130, %v177
  %v187 = vmul.f32 %v132, %v177
  %v188 = vmul.f32 %v134, %v177
  %v189 = vmul.f32 %v136, %v177
  %v190 = vmul.f32 %v138, %v177
  %v191 = vmul.f32 %v140, %v177
  %v192 = vmul.f32 %v142, %v177
  %v193 = vmul.f32 %v144, %v177
  %v194 = vmul.f32 %v146, %v177
  %v195 = vmul.f32 %v148, %v177
  %v196 = vmul.f32 %v150, %v177
  %v197 = vmul.f32 %v152, %v177
  %v198 = vmul.f32 %v154, %v177
  %v199 = vmul.f32 %v156, %v177
  %v200 = vmul.f32 %v158, %v177
  %v201 = vmul.f32 %v160, %v177
  %v202 = vmul.f32 %v162, %v177
  %v203 = vmul.f32 %v164, %v177
  %v204 = vmul.f32 %v166, %v177
  %v205 = vmul.f32 %v168, %v177
  %v206 = vmul.f32 %v170, %v177
  %v207 = vmul.f32 %v172, %v177
  %v208 = vmul.f32 %v174, %v177
  %v209 = vmul.f32 %v176, %v177
  %v210 = vmul.f32 %v81, %v81
  %v211 = vmul.f32 %v82, %v82
  %v212 = vmul.f32 %v83, %v83
  %v213 = vmul.f32 %v84, %v84
  %v214 = vmul.f32 %v85, %v85
  %v215 = vmul.f32 %v86, %v86
  %v216 = vmul.f32 %v87, %v87
  %v217 = vmul.f32 %v88, %v88
  %v218 = vmul.f32 %v89, %v89
  %v219 = vmul.f32 %v90, %v90
  %v220 = vmul.f32 %v91, %v91
  %v221 = vmul.f32 %v92, %v92
  %v222 = vmul.f32 %v93, %v93
  %v223 = vmul.f32 %v94, %v94
  %v224 = vmul.f32 %v95, %v95
  %v225 = vmul.f32 %v96, %v96
  %v226 = vmul.f32 %v97, %v97
  %v227 = vmul.f32 %v98, %v98
  %v228 = vmul.f32 %v99, %v99
  %v229 = vmul.f32 %v100, %v100
  %v230 = vmul.f32 %v101, %v101
  %v231 = vmul.f32 %v102, %v102
  %v232 = vmul.f32 %v103, %v103
  %v233 = vmul.f32 %v104, %v104
  %v234 = vmul.f32 %v105, %v105
  %v235 = vmul.f32 %v106, %v106
  %v236 = vmul.f32 %v107, %v107
  %v237 = vmul.f32 %v108, %v108
  %v238 = vmul.f32 %v109, %v109
  %v239 = vmul.f32 %v110, %v110
  %v240 = vmul.f32 %v111, %v111
  %v241 = vmul.f32 %v112, %v112
  %242 = vadd.xlane.f32.xlu0 %v210
  %v243 = vpop.xlane.xlu0 %242
  %244 = vadd.xlane.f32.xlu0 %v211
  %v245 = vpop.xlane.xlu0 %244
  %246 = vadd.xlane.f32.xlu0 %v212
  %v247 = vpop.xlane.xlu0 %246
  %248 = vadd.xlane.f32.xlu0 %v213
  %v249 = vpop.xlane.xlu0 %248
  %250 = vadd.xlane.f32.xlu0 %v214
  %v251 = vpop.xlane.xlu0 %250
  %252 = vadd.xlane.f32.xlu0 %v215
  %v253 = vpop.xlane.xlu0 %252
  %254 = vadd.xlane.f32.xlu0 %v216
  %v255 = vpop.xlane.xlu0 %254
  %256 = vadd.xlane.f32.xlu0 %v217
  %v257 = vpop.xlane.xlu0 %256
  %258 = vadd.xlane.f32.xlu0 %v218
  %v259 = vpop.xlane.xlu0 %258
  %260 = vadd.xlane.f32.xlu0 %v219
  %v261 = vpop.xlane.xlu0 %260
  %262 = vadd.xlane.f32.xlu0 %v220
  %v263 = vpop.xlane.xlu0 %262
  %264 = vadd.xlane.f32.xlu0 %v221
  %v265 = vpop.xlane.xlu0 %264
  %266 = vadd.xlane.f32.xlu0 %v222
  %v267 = vpop.xlane.xlu0 %266
  %268 = vadd.xlane.f32.xlu0 %v223
  %v269 = vpop.xlane.xlu0 %268
  %270 = vadd.xlane.f32.xlu0 %v224
  %v271 = vpop.xlane.xlu0 %270
  %272 = vadd.xlane.f32.xlu0 %v225
  %v273 = vpop.xlane.xlu0 %272
  %274 = vadd.xlane.f32.xlu0 %v226
  %v275 = vpop.xlane.xlu0 %274
  %276 = vadd.xlane.f32.xlu0 %v227
  %v277 = vpop.xlane.xlu0 %276
  %278 = vadd.xlane.f32.xlu0 %v228
  %v279 = vpop.xlane.xlu0 %278
  %280 = vadd.xlane.f32.xlu0 %v229
  %v281 = vpop.xlane.xlu0 %280
  %282 = vadd.xlane.f32.xlu0 %v230
  %v283 = vpop.xlane.xlu0 %282
  %284 = vadd.xlane.f32.xlu0 %v231
  %v285 = vpop.xlane.xlu0 %284
  %286 = vadd.xlane.f32.xlu0 %v232
  %v287 = vpop.xlane.xlu0 %286
  %288 = vadd.xlane.f32.xlu0 %v233
  %v289 = vpop.xlane.xlu0 %288
  %290 = vadd.xlane.f32.xlu0 %v234
  %v291 = vpop.xlane.xlu0 %290
  %292 = vadd.xlane.f32.xlu0 %v235
  %v293 = vpop.xlane.xlu0 %292
  %294 = vadd.xlane.f32.xlu0 %v236
  %v295 = vpop.xlane.xlu0 %294
  %296 = vadd.xlane.f32.xlu0 %v237
  %v297 = vpop.xlane.xlu0 %296
  %298 = vadd.xlane.f32.xlu0 %v238
  %v299 = vpop.xlane.xlu0 %298
  %300 = vadd.xlane.f32.xlu0 %v239
  %v301 = vpop.xlane.xlu0 %300
  %302 = vadd.xlane.f32.xlu0 %v240
  %v303 = vpop.xlane.xlu0 %302
  %304 = vadd.xlane.f32.xlu0 %v241
  %v305 = vpop.xlane.xlu0 %304
  %v306 = vmul.f32 %v243, %v177
  %v307 = vmul.f32 %v245, %v177
  %v308 = vmul.f32 %v247, %v177
  %v309 = vmul.f32 %v249, %v177
  %v310 = vmul.f32 %v251, %v177
  %v311 = vmul.f32 %v253, %v177
  %v312 = vmul.f32 %v255, %v177
  %v313 = vmul.f32 %v257, %v177
  %v314 = vmul.f32 %v259, %v177
  %v315 = vmul.f32 %v261, %v177
  %v316 = vmul.f32 %v263, %v177
  %v317 = vmul.f32 %v265, %v177
  %v318 = vmul.f32 %v267, %v177
  %v319 = vmul.f32 %v269, %v177
  %v320 = vmul.f32 %v271, %v177
  %v321 = vmul.f32 %v273, %v177
  %v322 = vmul.f32 %v275, %v177
  %v323 = vmul.f32 %v277, %v177
  %v324 = vmul.f32 %v279, %v177
  %v325 = vmul.f32 %v281, %v177
  %v326 = vmul.f32 %v283, %v177
  %v327 = vmul.f32 %v285, %v177
  %v328 = vmul.f32 %v287, %v177
  %v329 = vmul.f32 %v289, %v177
  %v330 = vmul.f32 %v291, %v177
  %v331 = vmul.f32 %v293, %v177
  %v332 = vmul.f32 %v295, %v177
  %v333 = vmul.f32 %v297, %v177
  %v334 = vmul.f32 %v299, %v177
  %v335 = vmul.f32 %v301, %v177
  %v336 = vmul.f32 %v303, %v177
  %v337 = vmul.f32 %v305, %v177
  %v338 = vmul.f32 %v178, %v178
  %v339 = vmul.f32 %v179, %v179
  %v340 = vmul.f32 %v180, %v180
  %v341 = vmul.f32 %v181, %v181
  %v342 = vmul.f32 %v182, %v182
  %v343 = vmul.f32 %v183, %v183
  %v344 = vmul.f32 %v184, %v184
  %v345 = vmul.f32 %v185, %v185
  %v346 = vmul.f32 %v186, %v186
  %v347 = vmul.f32 %v187, %v187
  %v348 = vmul.f32 %v188, %v188
  %v349 = vmul.f32 %v189, %v189
  %v350 = vmul.f32 %v190, %v190
  %v351 = vmul.f32 %v191, %v191
  %v352 = vmul.f32 %v192, %v192
  %v353 = vmul.f32 %v193, %v193
  %v354 = vmul.f32 %v194, %v194
  %v355 = vmul.f32 %v195, %v195
  %v356 = vmul.f32 %v196, %v196
  %v357 = vmul.f32 %v197, %v197
  %v358 = vmul.f32 %v198, %v198
  %v359 = vmul.f32 %v199, %v199
  %v360 = vmul.f32 %v200, %v200
  %v361 = vmul.f32 %v201, %v201
  %v362 = vmul.f32 %v202, %v202
  %v363 = vmul.f32 %v203, %v203
  %v364 = vmul.f32 %v204, %v204
  %v365 = vmul.f32 %v205, %v205
  %v366 = vmul.f32 %v206, %v206
  %v367 = vmul.f32 %v207, %v207
  %v368 = vmul.f32 %v208, %v208
  %v369 = vmul.f32 %v209, %v209
  %v370 = vsub.f32 %v306, %v338
  %v371 = vsub.f32 %v307, %v339
  %v372 = vsub.f32 %v308, %v340
  %v373 = vsub.f32 %v309, %v341
  %v374 = vsub.f32 %v310, %v342
  %v375 = vsub.f32 %v311, %v343
  %v376 = vsub.f32 %v312, %v344
  %v377 = vsub.f32 %v313, %v345
  %v378 = vsub.f32 %v314, %v346
  %v379 = vsub.f32 %v315, %v347
  %v380 = vsub.f32 %v316, %v348
  %v381 = vsub.f32 %v317, %v349
  %v382 = vsub.f32 %v318, %v350
  %v383 = vsub.f32 %v319, %v351
  %v384 = vsub.f32 %v320, %v352
  %v385 = vsub.f32 %v321, %v353
  %v386 = vsub.f32 %v322, %v354
  %v387 = vsub.f32 %v323, %v355
  %v388 = vsub.f32 %v324, %v356
  %v389 = vsub.f32 %v325, %v357
  %v390 = vsub.f32 %v326, %v358
  %v391 = vsub.f32 %v327, %v359
  %v392 = vsub.f32 %v328, %v360
  %v393 = vsub.f32 %v329, %v361
  %v394 = vsub.f32 %v330, %v362
  %v395 = vsub.f32 %v331, %v363
  %v396 = vsub.f32 %v332, %v364
  %v397 = vsub.f32 %v333, %v365
  %v398 = vsub.f32 %v334, %v366
  %v399 = vsub.f32 %v335, %v367
  %v400 = vsub.f32 %v336, %v368
  %v401 = vsub.f32 %v337, %v369
  %v402 = vmax.f32 %v370, 0.0
  %v403 = vmax.f32 %v371, 0.0
  %v404 = vmax.f32 %v372, 0.0
  %v405 = vmax.f32 %v373, 0.0
  %v406 = vmax.f32 %v374, 0.0
  %v407 = vmax.f32 %v375, 0.0
  %v408 = vmax.f32 %v376, 0.0
  %v409 = vmax.f32 %v377, 0.0
  %v410 = vmax.f32 %v378, 0.0
  %v411 = vmax.f32 %v379, 0.0
  %v412 = vmax.f32 %v380, 0.0
  %v413 = vmax.f32 %v381, 0.0
  %v414 = vmax.f32 %v382, 0.0
  %v415 = vmax.f32 %v383, 0.0
  %v416 = vmax.f32 %v384, 0.0
  %v417 = vmax.f32 %v385, 0.0
  %v418 = vmax.f32 %v386, 0.0
  %v419 = vmax.f32 %v387, 0.0
  %v420 = vmax.f32 %v388, 0.0
  %v421 = vmax.f32 %v389, 0.0
  %v422 = vmax.f32 %v390, 0.0
  %v423 = vmax.f32 %v391, 0.0
  %v424 = vmax.f32 %v392, 0.0
  %v425 = vmax.f32 %v393, 0.0
  %v426 = vmax.f32 %v394, 0.0
  %v427 = vmax.f32 %v395, 0.0
  %v428 = vmax.f32 %v396, 0.0
  %v429 = vmax.f32 %v397, 0.0
  %v430 = vmax.f32 %v398, 0.0
  %v431 = vmax.f32 %v399, 0.0
  %v432 = vmax.f32 %v400, 0.0
  %v433 = vmax.f32 %v401, 0.0
  %v434 = vsub.f32 %v81, %v178
  %v435 = vsub.f32 %v82, %v179
  %v436 = vsub.f32 %v83, %v180
  %v437 = vsub.f32 %v84, %v181
  %v438 = vsub.f32 %v85, %v182
  %v439 = vsub.f32 %v86, %v183
  %v440 = vsub.f32 %v87, %v184
  %v441 = vsub.f32 %v88, %v185
  %v442 = vsub.f32 %v89, %v186
  %v443 = vsub.f32 %v90, %v187
  %v444 = vsub.f32 %v91, %v188
  %v445 = vsub.f32 %v92, %v189
  %v446 = vsub.f32 %v93, %v190
  %v447 = vsub.f32 %v94, %v191
  %v448 = vsub.f32 %v95, %v192
  %v449 = vsub.f32 %v96, %v193
  %v450 = vsub.f32 %v97, %v194
  %v451 = vsub.f32 %v98, %v195
  %v452 = vsub.f32 %v99, %v196
  %v453 = vsub.f32 %v100, %v197
  %v454 = vsub.f32 %v101, %v198
  %v455 = vsub.f32 %v102, %v199
  %v456 = vsub.f32 %v103, %v200
  %v457 = vsub.f32 %v104, %v201
  %v458 = vsub.f32 %v105, %v202
  %v459 = vsub.f32 %v106, %v203
  %v460 = vsub.f32 %v107, %v204
  %v461 = vsub.f32 %v108, %v205
  %v462 = vsub.f32 %v109, %v206
  %v463 = vsub.f32 %v110, %v207
  %v464 = vsub.f32 %v111, %v208
  %v465 = vsub.f32 %v112, %v209
  %v466 = vadd.f32 %v402, 1e-12
  %v467 = vadd.f32 %v403, 1e-12
  %v468 = vadd.f32 %v404, 1e-12
  %v469 = vadd.f32 %v405, 1e-12
  %v470 = vadd.f32 %v406, 1e-12
  %v471 = vadd.f32 %v407, 1e-12
  %v472 = vadd.f32 %v408, 1e-12
  %v473 = vadd.f32 %v409, 1e-12
  %v474 = vadd.f32 %v410, 1e-12
  %v475 = vadd.f32 %v411, 1e-12
  %v476 = vadd.f32 %v412, 1e-12
  %v477 = vadd.f32 %v413, 1e-12
  %v478 = vadd.f32 %v414, 1e-12
  %v479 = vadd.f32 %v415, 1e-12
  %v480 = vadd.f32 %v416, 1e-12
  %v481 = vadd.f32 %v417, 1e-12
  %v482 = vadd.f32 %v418, 1e-12
  %v483 = vadd.f32 %v419, 1e-12
  %v484 = vadd.f32 %v420, 1e-12
  %v485 = vadd.f32 %v421, 1e-12
  %v486 = vadd.f32 %v422, 1e-12
  %v487 = vadd.f32 %v423, 1e-12
  %v488 = vadd.f32 %v424, 1e-12
  %v489 = vadd.f32 %v425, 1e-12
  %v490 = vadd.f32 %v426, 1e-12
  %v491 = vadd.f32 %v427, 1e-12
  %v492 = vadd.f32 %v428, 1e-12
  %v493 = vadd.f32 %v429, 1e-12
  %v494 = vadd.f32 %v430, 1e-12
  %v495 = vadd.f32 %v431, 1e-12
  %v496 = vadd.f32 %v432, 1e-12
  %v497 = vadd.f32 %v433, 1e-12
  %v498 = vrsqrt.pop %v466
  %v499 = vrsqrt.pop %v467
  %v500 = vrsqrt.pop %v468
  %v501 = vrsqrt.pop %v469
  %v502 = vrsqrt.pop %v470
  %v503 = vrsqrt.pop %v471
  %v504 = vrsqrt.pop %v472
  %v505 = vrsqrt.pop %v473
  %v506 = vrsqrt.pop %v474
  %v507 = vrsqrt.pop %v475
  %v508 = vrsqrt.pop %v476
  %v509 = vrsqrt.pop %v477
  %v510 = vrsqrt.pop %v478
  %v511 = vrsqrt.pop %v479
  %v512 = vrsqrt.pop %v480
  %v513 = vrsqrt.pop %v481
  %v514 = vrsqrt.pop %v482
  %v515 = vrsqrt.pop %v483
  %v516 = vrsqrt.pop %v484
  %v517 = vrsqrt.pop %v485
  %v518 = vrsqrt.pop %v486
  %v519 = vrsqrt.pop %v487
  %v520 = vrsqrt.pop %v488
  %v521 = vrsqrt.pop %v489
  %v522 = vrsqrt.pop %v490
  %v523 = vrsqrt.pop %v491
  %v524 = vrsqrt.pop %v492
  %v525 = vrsqrt.pop %v493
  %v526 = vrsqrt.pop %v494
  %v527 = vrsqrt.pop %v495
  %v528 = vrsqrt.pop %v496
  %v529 = vrsqrt.pop %v497
  %v530 = vmul.f32 %v434, %v498
  %v531 = vmul.f32 %v435, %v499
  %v532 = vmul.f32 %v436, %v500
  %v533 = vmul.f32 %v437, %v501
  %v534 = vmul.f32 %v438, %v502
  %v535 = vmul.f32 %v439, %v503
  %v536 = vmul.f32 %v440, %v504
  %v537 = vmul.f32 %v441, %v505
  %v538 = vmul.f32 %v442, %v506
  %v539 = vmul.f32 %v443, %v507
  %v540 = vmul.f32 %v444, %v508
  %v541 = vmul.f32 %v445, %v509
  %v542 = vmul.f32 %v446, %v510
  %v543 = vmul.f32 %v447, %v511
  %v544 = vmul.f32 %v448, %v512
  %v545 = vmul.f32 %v449, %v513
  %v546 = vmul.f32 %v450, %v514
  %v547 = vmul.f32 %v451, %v515
  %v548 = vmul.f32 %v452, %v516
  %v549 = vmul.f32 %v453, %v517
  %v550 = vmul.f32 %v454, %v518
  %v551 = vmul.f32 %v455, %v519
  %v552 = vmul.f32 %v456, %v520
  %v553 = vmul.f32 %v457, %v521
  %v554 = vmul.f32 %v458, %v522
  %v555 = vmul.f32 %v459, %v523
  %v556 = vmul.f32 %v460, %v524
  %v557 = vmul.f32 %v461, %v525
  %v558 = vmul.f32 %v462, %v526
  %v559 = vmul.f32 %v463, %v527
  %v560 = vmul.f32 %v464, %v528
  %v561 = vmul.f32 %v465, %v529
  %v562 = vld [vmem:[%s2] sm:$0x1]
  %v564 = vlaneseq
  %v565 = vshrl.u32 %v564, 7
  %v566 = vsub.s32 0, %v565
  %v567 = vrot.slane %v562, %v566
  %v569 = vmul.f32 %v530, %v567
  %v570 = vmul.f32 %v531, %v567
  %v571 = vmul.f32 %v532, %v567
  %v572 = vmul.f32 %v533, %v567
  %v573 = vmul.f32 %v534, %v567
  %v574 = vmul.f32 %v535, %v567
  %v575 = vmul.f32 %v536, %v567
  %v576 = vmul.f32 %v537, %v567
  %v577 = vmul.f32 %v538, %v567
  %v578 = vmul.f32 %v539, %v567
  %v579 = vmul.f32 %v540, %v567
  %v580 = vmul.f32 %v541, %v567
  %v581 = vmul.f32 %v542, %v567
  %v582 = vmul.f32 %v543, %v567
  %v583 = vmul.f32 %v544, %v567
  %v584 = vmul.f32 %v545, %v567
  %v585 = vmul.f32 %v546, %v567
  %v586 = vmul.f32 %v547, %v567
  %v587 = vmul.f32 %v548, %v567
  %v588 = vmul.f32 %v549, %v567
  %v589 = vmul.f32 %v550, %v567
  %v590 = vmul.f32 %v551, %v567
  %v591 = vmul.f32 %v552, %v567
  %v592 = vmul.f32 %v553, %v567
  %v593 = vmul.f32 %v554, %v567
  %v594 = vmul.f32 %v555, %v567
  %v595 = vmul.f32 %v556, %v567
  %v596 = vmul.f32 %v557, %v567
  %v597 = vmul.f32 %v558, %v567
  %v598 = vmul.f32 %v559, %v567
  %v599 = vmul.f32 %v560, %v567
  %v600 = vmul.f32 %v561, %v567
  %v601 = vld [vmem:[%s3] sm:$0x1]
  %v603 = vlaneseq
  %v604 = vshrl.u32 %v603, 7
  %v605 = vsub.s32 0, %v604
  %v606 = vrot.slane %v601, %v605
  %v608 = vadd.f32 %v569, %v606
  %v609 = vadd.f32 %v570, %v606
  %v610 = vadd.f32 %v571, %v606
  %v611 = vadd.f32 %v572, %v606
  %v612 = vadd.f32 %v573, %v606
  %v613 = vadd.f32 %v574, %v606
  %v614 = vadd.f32 %v575, %v606
  %v615 = vadd.f32 %v576, %v606
  %v616 = vadd.f32 %v577, %v606
  %v617 = vadd.f32 %v578, %v606
  %v618 = vadd.f32 %v579, %v606
  %v619 = vadd.f32 %v580, %v606
  %v620 = vadd.f32 %v581, %v606
  %v621 = vadd.f32 %v582, %v606
  %v622 = vadd.f32 %v583, %v606
  %v623 = vadd.f32 %v584, %v606
  %v624 = vadd.f32 %v585, %v606
  %v625 = vadd.f32 %v586, %v606
  %v626 = vadd.f32 %v587, %v606
  %v627 = vadd.f32 %v588, %v606
  %v628 = vadd.f32 %v589, %v606
  %v629 = vadd.f32 %v590, %v606
  %v630 = vadd.f32 %v591, %v606
  %v631 = vadd.f32 %v592, %v606
  %v632 = vadd.f32 %v593, %v606
  %v633 = vadd.f32 %v594, %v606
  %v634 = vadd.f32 %v595, %v606
  %v635 = vadd.f32 %v596, %v606
  %v636 = vadd.f32 %v597, %v606
  %v637 = vadd.f32 %v598, %v606
  %v638 = vadd.f32 %v599, %v606
  %v639 = vadd.f32 %v600, %v606
  %640 = vst [vmem:[%s4] sm:$0xff] %v608
  %641 = vst [vmem:[%s4 + $0x8] sm:$0xff] %v609
  %642 = vst [vmem:[%s4 + $0x10] sm:$0xff] %v610
  %643 = vst [vmem:[%s4 + $0x18] sm:$0xff] %v611
  %644 = vst [vmem:[%s4 + $0x20] sm:$0xff] %v612
  %645 = vst [vmem:[%s4 + $0x28] sm:$0xff] %v613
  %646 = vst [vmem:[%s4 + $0x30] sm:$0xff] %v614
  %647 = vst [vmem:[%s4 + $0x38] sm:$0xff] %v615
  %648 = vst [vmem:[%s4 + $0x40] sm:$0xff] %v616
  %649 = vst [vmem:[%s4 + $0x48] sm:$0xff] %v617
  %650 = vst [vmem:[%s4 + $0x50] sm:$0xff] %v618
  %651 = vst [vmem:[%s4 + $0x58] sm:$0xff] %v619
  %652 = vst [vmem:[%s4 + $0x60] sm:$0xff] %v620
  %653 = vst [vmem:[%s4 + $0x68] sm:$0xff] %v621
  %654 = vst [vmem:[%s4 + $0x70] sm:$0xff] %v622
  %655 = vst [vmem:[%s4 + $0x78] sm:$0xff] %v623
  %656 = vst [vmem:[%s4 + $0x80] sm:$0xff] %v624
  %657 = vst [vmem:[%s4 + $0x88] sm:$0xff] %v625
  %658 = vst [vmem:[%s4 + $0x90] sm:$0xff] %v626
  %659 = vst [vmem:[%s4 + $0x98] sm:$0xff] %v627
  %660 = vst [vmem:[%s4 + $0xa0] sm:$0xff] %v628
  %661 = vst [vmem:[%s4 + $0xa8] sm:$0xff] %v629
  %662 = vst [vmem:[%s4 + $0xb0] sm:$0xff] %v630
  %663 = vst [vmem:[%s4 + $0xb8] sm:$0xff] %v631
  %664 = vst [vmem:[%s4 + $0xc0] sm:$0xff] %v632
  %665 = vst [vmem:[%s4 + $0xc8] sm:$0xff] %v633
  %666 = vst [vmem:[%s4 + $0xd0] sm:$0xff] %v634
  %667 = vst [vmem:[%s4 + $0xd8] sm:$0xff] %v635
  %668 = vst [vmem:[%s4 + $0xe0] sm:$0xff] %v636
  %669 = vst [vmem:[%s4 + $0xe8] sm:$0xff] %v637
  %670 = vst [vmem:[%s4 + $0xf0] sm:$0xff] %v638
  %671 = vst [vmem:[%s4 + $0xf8] sm:$0xff] %v639
  // Predicated region
  $region18: #{bert_txt_forward.18} parent=0 // pred_check
    _
  $region19: #{bert_txt_forward.18} parent=0 // pred_check_branch
    %673 = sbr.rel (0) target = $region21
  $region20: #{bert_txt_forward.18} parent=0 // pred_region
    _
  $region21: #{bert_txt_forward.18} parent=0 // pred_fallthru
    _
  // Predicated region
  $region22: #{bert_txt_forward.18} parent=0 // pred_check
    _
  $region23: #{bert_txt_forward.18} parent=0 // pred_check_branch
    %675 = sbr.rel (0) target = $region25
  $region24: #{bert_txt_forward.18} parent=0 // pred_region
    _
  $region25: #{bert_txt_forward.18} parent=0 // pred_fallthru
    _

// kernel: bert_txt_forward.27
$region0: #{bert_txt_forward.27}
  #allocation0 [shape = 'u32[]', space=smem, size = 0x4, offset = 0x4, fixed_abs, tag = 'smem constant byte address 0x4 - core index']
  #allocation1 [shape = 'u32[144,128]{1,0:T(1,128)}', space=vmem, size = 0x12000, scoped, tag = 'internal scratch']
  %s0 = inlined_call_operand.vmem [shape: f32[2,128], index: 0, kind: input, shape index: {}]
  %s1 = inlined_call_operand.vmem [shape: bf16[128,128], index: 1, kind: input, shape index: {}]
  %s2 = inlined_call_operand.vmem [shape: f32[1,128], index: 2, kind: input, shape index: {}]
  %s3 = inlined_call_operand.hbm [shape: f32[2,128], index: 3, kind: output, shape index: {}]
  %s4 = sld [smem:[#allocation0]]
  $region30: #{bert_txt_forward.27} parent=0
    _
  %s6 = ssub.s32 1, %s4
  %s7 = scalar_select 0, %s6, %s4
  $region1: #{bert_txt_forward.27} parent=0
    #allocation2 [shape = 'u8[1024]{0}', space=vmem, size = 0x400, scoped, tag = 'output window, operand 0, single buffered']
    #allocation3 [shape = 's32[1]{0}', space=sflag, size = 0x4, scoped, tag = 'scoped memory for bert_txt_forward.27']
    %8 = vsyncpa [#allocation3], 0
    // Predicated region
    $region2: #{bert_txt_forward.27} parent=1 // pred_check
      _
    $region3: #{bert_txt_forward.27} parent=1 // pred_check_branch
      %10 = sbr.rel (0) target = $region5
    $region4: #{bert_txt_forward.27} parent=1 // pred_region
      _
    $region5: #{bert_txt_forward.27} parent=1 // pred_fallthru
      _
    // Predicated region
    $region6: #{bert_txt_forward.27} parent=1 // pred_check
      _
    $region7: #{bert_txt_forward.27} parent=1 // pred_check_branch
      %12 = sbr.rel (0) target = $region9
    $region8: #{bert_txt_forward.27} parent=1 // pred_region
      _
    $region9: #{bert_txt_forward.27} parent=1 // pred_fallthru
      _
    // Predicated region
    $region10: #{bert_txt_forward.27} parent=1 // pred_check
      _
    $region11: #{bert_txt_forward.27} parent=1 // pred_check_branch
      %14 = sbr.rel (0) target = $region13
    $region12: #{bert_txt_forward.27} parent=1 // pred_region
      _
    $region13: #{bert_txt_forward.27} parent=1 // pred_fallthru
      _
    %p16 = scmp.eq.s32.totalorder 0, 0
    // Predicated region
    $region14: #{bert_txt_forward.27} parent=1 // pred_check
      %p17 = pneg %p16
    $region15: #{bert_txt_forward.27} parent=1 // pred_check_branch
      %19 = sbr.rel (%p17) target = $region17
    $region16: #{bert_txt_forward.27} parent=1 // pred_region
      %20 = vst [vmem:[#allocation2] sm:$0x3] 0.0
    $region17: #{bert_txt_forward.27} parent=1 // pred_fallthru
      _
    %v21 = vld [vmem:[#allocation2] sm:$0x3]
    %v22 = vld [vmem:[%s0] sm:$0x3]
    %v23 = vpack.c.bf16 %v22, %v22
    %v24 = vld [vmem:[%s1] sm:$0xf]
    %v25 = vld [vmem:[%s1 + $0x4] sm:$0xf]
    %v26 = vld [vmem:[%s1 + $0x8] sm:$0xf]
    %v27 = vld [vmem:[%s1 + $0xc] sm:$0xf]
    %v28 = vld [vmem:[%s1 + $0x10] sm:$0xf]
    %v29 = vld [vmem:[%s1 + $0x14] sm:$0xf]
    %v30 = vld [vmem:[%s1 + $0x18] sm:$0xf]
    %v31 = vld [vmem:[%s1 + $0x1c] sm:$0xf]
    %v32 = vld [vmem:[%s1 + $0x20] sm:$0xf]
    %v33 = vld [vmem:[%s1 + $0x24] sm:$0xf]
    %v34 = vld [vmem:[%s1 + $0x28] sm:$0xf]
    %v35 = vld [vmem:[%s1 + $0x2c] sm:$0xf]
    %v36 = vld [vmem:[%s1 + $0x30] sm:$0xf]
    %v37 = vld [vmem:[%s1 + $0x34] sm:$0xf]
    %v38 = vld [vmem:[%s1 + $0x38] sm:$0xf]
    %v39 = vld [vmem:[%s1 + $0x3c] sm:$0xf]
    %v56 = vunpack.c.l.b16 %v24
    %v57 = vunpack.c.l.b16 %v25
    %v58 = vunpack.c.l.b16 %v26
    %v59 = vunpack.c.l.b16 %v27
    %v60 = vunpack.c.l.b16 %v28
    %v61 = vunpack.c.l.b16 %v29
    %v62 = vunpack.c.l.b16 %v30
    %v63 = vunpack.c.l.b16 %v31
    %v64 = vunpack.c.l.b16 %v32
    %v65 = vunpack.c.l.b16 %v33
    %v66 = vunpack.c.l.b16 %v34
    %v67 = vunpack.c.l.b16 %v35
    %v68 = vunpack.c.l.b16 %v36
    %v69 = vunpack.c.l.b16 %v37
    %v70 = vunpack.c.l.b16 %v38
    %v71 = vunpack.c.l.b16 %v39
    %v72 = vpack.c.b16 %v57, %v56
    %v73 = vpack.c.b16 %v59, %v58
    %v74 = vpack.c.b16 %v61, %v60
    %v75 = vpack.c.b16 %v63, %v62
    %v76 = vpack.c.b16 %v65, %v64
    %v77 = vpack.c.b16 %v67, %v66
    %v78 = vpack.c.b16 %v69, %v68
    %v79 = vpack.c.b16 %v71, %v70
    %88 = vmatprep.subr.bf16.mxu0 0
    %89 = vmatpush1.bf16.msra.mxu0 %v72
    %90 = vmatprep.subr.bf16.mxu0 0
    %91 = vmatpush1.bf16.msra.mxu0 %v73
    %92 = vmatprep.subr.bf16.mxu0 0
    %93 = vmatpush1.bf16.msra.mxu0 %v74
    %94 = vmatprep.subr.bf16.mxu0 0
    %95 = vmatpush1.bf16.msra.mxu0 %v75
    %96 = vmatprep.subr.bf16.mxu0 0
    %97 = vmatpush1.bf16.msra.mxu0 %v76
    %98 = vmatprep.subr.bf16.mxu0 0
    %99 = vmatpush1.bf16.msra.mxu0 %v77
    %100 = vmatprep.subr.bf16.mxu0 0
    %101 = vmatpush1.bf16.msra.mxu0 %v78
    %102 = vmatprep.subr.bf16.mxu0 0
    %103 = vmatpush1.bf16.msra.mxu0 %v79
    %104 = vmatprep.subr.bf16.mxu0 0
    %105 = vmatpush1.bf16.msra.mxu0 0
    %106 = vmatprep.subr.bf16.mxu0 0
    %107 = vmatpush1.bf16.msra.mxu0 0
    %108 = vmatprep.subr.bf16.mxu0 0
    %109 = vmatpush1.bf16.msra.mxu0 0
    %110 = vmatprep.subr.bf16.mxu0 0
    %111 = vmatpush1.bf16.msra.mxu0 0
    %112 = vmatprep.subr.bf16.mxu0 0
    %113 = vmatpush1.bf16.msra.mxu0 0
    %114 = vmatprep.subr.bf16.mxu0 0
    %115 = vmatpush1.bf16.msra.mxu0 0
    %116 = vmatprep.subr.bf16.mxu0 0
    %117 = vmatpush1.bf16.msra.mxu0 0
    %118 = vmatprep.subr.bf16.mxu0 0
    %119 = vmatpush1.bf16.msra.mxu0 0
    %120 = vmatprep.mubr.bf16.mxu0 0
    %121 = vmatmul.mubr.bf16.gmra.mrb[0].mxu0 %v23
    %v122 = vpop.f32.mrb[0].mxu0
    %v123 = vadd.f32 0.0, %v122
    %v124 = vpop.f32.mrb[0].mxu0
    %v125 = vpop.f32.mrb[0].mxu0
    %v126 = vpop.f32.mrb[0].mxu0
    %127 = vdwg.mxu0
    %v128 = vadd.f32 %v21, %v123
    %129 = vst [vmem:[#allocation2] sm:$0x3] %v128
    // Predicated region
    $region18: #{bert_txt_forward.27} parent=1 // pred_check
      %p130 = pneg %p16
    $region19: #{bert_txt_forward.27} parent=1 // pred_check_branch
      %132 = sbr.rel (%p130) target = $region21
    $region20: #{bert_txt_forward.27} parent=1 // pred_region
      %v133 = vld [vmem:[#allocation2] sm:$0x3]
      %v134 = vld [vmem:[%s2] sm:$0x1]
      %v136 = vlaneseq
      %v137 = vshrl.u32 %v136, 7
      %v138 = vsub.s32 0, %v137
      %v139 = vrot.slane %v134, %v138
      %v141 = vadd.f32 %v133, %v139
      %v142 = vtanh.pop %v141
      %143 = vst [vmem:[#allocation2] sm:$0x3] %v142
    $region21: #{bert_txt_forward.27} parent=1 // pred_fallthru
      _
    // Predicated region
    $region22: #{bert_txt_forward.27} parent=1 // pred_check
      _
    $region23: #{bert_txt_forward.27} parent=1 // pred_check_branch
      %145 = sbr.rel (0) target = $region25
    $region24: #{bert_txt_forward.27} parent=1 // pred_region
      %s147 = ssub.s32 32, 32
      %148 = vsyncadd [#allocation3], %s147
      %s150 = sshll.u32 [#allocation2], 4
      %s151 = int_to_ptr.vmem [resolvable:$true] %s150
      %153 = dma.vmem_to_hbm [thread:$0]  %s151, 32, %s3, [#allocation3]
    $region25: #{bert_txt_forward.27} parent=1 // pred_fallthru
      _
    // Predicated region
    $region26: #{bert_txt_forward.27} parent=1 // pred_check
      _
    $region27: #{bert_txt_forward.27} parent=1 // pred_check_branch
      %155 = sbr.rel (0) target = $region29
    $region28: #{bert_txt_forward.27} parent=1 // pred_region
      %156 = dma.done [#allocation3], 32
    $region29: #{bert_txt_forward.27} parent=1 // pred_fallthru
      _
    %157 = vsyncpa [#allocation3], 1

// kernel: bert_txt_forward.19
$region0: #{bert_txt_forward.19}
  #allocation0 [shape = 'u32[]', space=smem, size = 0x4, offset = 0x4, fixed_abs, tag = 'smem constant byte address 0x4 - core index']
  #allocation1 [shape = 'u32[144,128]{1,0:T(1,128)}', space=vmem, size = 0x12000, scoped, tag = 'internal scratch']
  %s0 = inlined_call_operand.vmem [shape: f32[256,128], index: 0, kind: input, shape index: {}]
  %s1 = inlined_call_operand.vmem [shape: bf16[128,512], index: 1, kind: input, shape index: {}]
  %s2 = inlined_call_operand.vmem [shape: f32[1,512], index: 2, kind: input, shape index: {}]
  %s3 = inlined_call_operand.vmem [shape: bf16[512,128], index: 3, kind: input, shape index: {}]
  %s4 = inlined_call_operand.vmem [shape: f32[1,128], index: 4, kind: input, shape index: {}]
  %s5 = inlined_call_operand.vmem [shape: f32[256,128], index: 5, kind: output, shape index: {}]
  %s6 = sld [smem:[#allocation0]]
  $region38: #{bert_txt_forward.19} parent=0
    _
  %s8 = ssub.s32 1, %s6
  %s9 = scalar_select 0, %s8, %s6
  // Predicated region
  $region2: #{bert_txt_forward.19} parent=0 // pred_check
    _
  $region3: #{bert_txt_forward.19} parent=0 // pred_check_branch
    %11 = sbr.rel (0) target = $region5
  $region4: #{bert_txt_forward.19} parent=0 // pred_region
    _
  $region5: #{bert_txt_forward.19} parent=0 // pred_fallthru
    _
  // Predicated region
  $region6: #{bert_txt_forward.19} parent=0 // pred_check
    _
  $region7: #{bert_txt_forward.19} parent=0 // pred_check_branch
    %13 = sbr.rel (0) target = $region9
  $region8: #{bert_txt_forward.19} parent=0 // pred_region
    _
  $region9: #{bert_txt_forward.19} parent=0 // pred_fallthru
    _
  // Predicated region
  $region10: #{bert_txt_forward.19} parent=0 // pred_check
    _
  $region11: #{bert_txt_forward.19} parent=0 // pred_check_branch
    %15 = sbr.rel (0) target = $region13
  $region12: #{bert_txt_forward.19} parent=0 // pred_region
    _
  $region13: #{bert_txt_forward.19} parent=0 // pred_fallthru
    _
  // Predicated region
  $region14: #{bert_txt_forward.19} parent=0 // pred_check
    _
  $region15: #{bert_txt_forward.19} parent=0 // pred_check_branch
    %17 = sbr.rel (0) target = $region17
  $region16: #{bert_txt_forward.19} parent=0 // pred_region
    _
  $region17: #{bert_txt_forward.19} parent=0 // pred_fallthru
    _
  // Predicated region
  $region18: #{bert_txt_forward.19} parent=0 // pred_check
    _
  $region19: #{bert_txt_forward.19} parent=0 // pred_check_branch
    %19 = sbr.rel (0) target = $region21
  $region20: #{bert_txt_forward.19} parent=0 // pred_region
    _
  $region21: #{bert_txt_forward.19} parent=0 // pred_fallthru
    _
  %p21 = scmp.eq.s32.totalorder 0, 0
  // Predicated region
  $region22: #{bert_txt_forward.19} parent=0 // pred_check
    %p22 = pneg %p21
  $region23: #{bert_txt_forward.19} parent=0 // pred_check_branch
    %24 = sbr.rel (%p22) target = $region25
  $region24: #{bert_txt_forward.19} parent=0 // pred_region
    %25 = vst [vmem:[%s5] sm:$0xff] 0.0
    %26 = vst [vmem:[%s5 + $0x8] sm:$0xff] 0.0
    %27 = vst [vmem:[%s5 + $0x10] sm:$0xff] 0.0
    %28 = vst [vmem:[%s5 + $0x18] sm:$0xff] 0.0
    %29 = vst [vmem:[%s5 + $0x20] sm:$0xff] 0.0
    %30 = vst [vmem:[%s5 + $0x28] sm:$0xff] 0.0
    %31 = vst [vmem:[%s5 + $0x30] sm:$0xff] 0.0
    %32 = vst [vmem:[%s5 + $0x38] sm:$0xff] 0.0
    %33 = vst [vmem:[%s5 + $0x40] sm:$0xff] 0.0
    %34 = vst [vmem:[%s5 + $0x48] sm:$0xff] 0.0
    %35 = vst [vmem:[%s5 + $0x50] sm:$0xff] 0.0
    %36 = vst [vmem:[%s5 + $0x58] sm:$0xff] 0.0
    %37 = vst [vmem:[%s5 + $0x60] sm:$0xff] 0.0
    %38 = vst [vmem:[%s5 + $0x68] sm:$0xff] 0.0
    %39 = vst [vmem:[%s5 + $0x70] sm:$0xff] 0.0
    %40 = vst [vmem:[%s5 + $0x78] sm:$0xff] 0.0
    %41 = vst [vmem:[%s5 + $0x80] sm:$0xff] 0.0
    %42 = vst [vmem:[%s5 + $0x88] sm:$0xff] 0.0
    %43 = vst [vmem:[%s5 + $0x90] sm:$0xff] 0.0
    %44 = vst [vmem:[%s5 + $0x98] sm:$0xff] 0.0
    %45 = vst [vmem:[%s5 + $0xa0] sm:$0xff] 0.0
    %46 = vst [vmem:[%s5 + $0xa8] sm:$0xff] 0.0
    %47 = vst [vmem:[%s5 + $0xb0] sm:$0xff] 0.0
    %48 = vst [vmem:[%s5 + $0xb8] sm:$0xff] 0.0
    %49 = vst [vmem:[%s5 + $0xc0] sm:$0xff] 0.0
    %50 = vst [vmem:[%s5 + $0xc8] sm:$0xff] 0.0
    %51 = vst [vmem:[%s5 + $0xd0] sm:$0xff] 0.0
    %52 = vst [vmem:[%s5 + $0xd8] sm:$0xff] 0.0
    %53 = vst [vmem:[%s5 + $0xe0] sm:$0xff] 0.0
    %54 = vst [vmem:[%s5 + $0xe8] sm:$0xff] 0.0
    %55 = vst [vmem:[%s5 + $0xf0] sm:$0xff] 0.0
    %56 = vst [vmem:[%s5 + $0xf8] sm:$0xff] 0.0
  $region25: #{bert_txt_forward.19} parent=0 // pred_fallthru
    _
  %v57 = vld [vmem:[%s0] sm:$0xff]
  %v58 = vld [vmem:[%s0 + $0x8] sm:$0xff]
  %v59 = vld [vmem:[%s0 + $0x10] sm:$0xff]
  %v60 = vld [vmem:[%s0 + $0x18] sm:$0xff]
  %v61 = vld [vmem:[%s0 + $0x20] sm:$0xff]
  %v62 = vld [vmem:[%s0 + $0x28] sm:$0xff]
  %v63 = vld [vmem:[%s0 + $0x30] sm:$0xff]
  %v64 = vld [vmem:[%s0 + $0x38] sm:$0xff]
  %v65 = vld [vmem:[%s0 + $0x40] sm:$0xff]
  %v66 = vld [vmem:[%s0 + $0x48] sm:$0xff]
  %v67 = vld [vmem:[%s0 + $0x50] sm:$0xff]
  %v68 = vld [vmem:[%s0 + $0x58] sm:$0xff]
  %v69 = vld [vmem:[%s0 + $0x60] sm:$0xff]
  %v70 = vld [vmem:[%s0 + $0x68] sm:$0xff]
  %v71 = vld [vmem:[%s0 + $0x70] sm:$0xff]
  %v72 = vld [vmem:[%s0 + $0x78] sm:$0xff]
  %v73 = vld [vmem:[%s0 + $0x80] sm:$0xff]
  %v74 = vld [vmem:[%s0 + $0x88] sm:$0xff]
  %v75 = vld [vmem:[%s0 + $0x90] sm:$0xff]
  %v76 = vld [vmem:[%s0 + $0x98] sm:$0xff]
  %v77 = vld [vmem:[%s0 + $0xa0] sm:$0xff]
  %v78 = vld [vmem:[%s0 + $0xa8] sm:$0xff]
  %v79 = vld [vmem:[%s0 + $0xb0] sm:$0xff]
  %v80 = vld [vmem:[%s0 + $0xb8] sm:$0xff]
  %v81 = vld [vmem:[%s0 + $0xc0] sm:$0xff]
  %v82 = vld [vmem:[%s0 + $0xc8] sm:$0xff]
  %v83 = vld [vmem:[%s0 + $0xd0] sm:$0xff]
  %v84 = vld [vmem:[%s0 + $0xd8] sm:$0xff]
  %v85 = vld [vmem:[%s0 + $0xe0] sm:$0xff]
  %v86 = vld [vmem:[%s0 + $0xe8] sm:$0xff]
  %v87 = vld [vmem:[%s0 + $0xf0] sm:$0xff]
  %v88 = vld [vmem:[%s0 + $0xf8] sm:$0xff]
  %v89 = vpack.c.bf16 %v58, %v57
  %v90 = vpack.c.bf16 %v60, %v59
  %v91 = vpack.c.bf16 %v62, %v61
  %v92 = vpack.c.bf16 %v64, %v63
  %v93 = vpack.c.bf16 %v66, %v65
  %v94 = vpack.c.bf16 %v68, %v67
  %v95 = vpack.c.bf16 %v70, %v69
  %v96 = vpack.c.bf16 %v72, %v71
  %v97 = vpack.c.bf16 %v74, %v73
  %v98 = vpack.c.bf16 %v76, %v75
  %v99 = vpack.c.bf16 %v78, %v77
  %v100 = vpack.c.bf16 %v80, %v79
  %v101 = vpack.c.bf16 %v82, %v81
  %v102 = vpack.c.bf16 %v84, %v83
  %v103 = vpack.c.bf16 %v86, %v85
  %v104 = vpack.c.bf16 %v88, %v87
  %v105 = vld [vmem:[%s1] sm:$0xff]
  %v106 = vld [vmem:[%s1 + $0x8] sm:$0xff]
  %v107 = vld [vmem:[%s1 + $0x10] sm:$0xff]
  %v108 = vld [vmem:[%s1 + $0x18] sm:$0xff]
  %v109 = vld [vmem:[%s1 + $0x20] sm:$0xff]
  %v110 = vld [vmem:[%s1 + $0x28] sm:$0xff]
  %v111 = vld [vmem:[%s1 + $0x30] sm:$0xff]
  %v112 = vld [vmem:[%s1 + $0x38] sm:$0xff]
  %v113 = vld [vmem:[%s1 + $0x40] sm:$0xff]
  %v114 = vld [vmem:[%s1 + $0x48] sm:$0xff]
  %v115 = vld [vmem:[%s1 + $0x50] sm:$0xff]
  %v116 = vld [vmem:[%s1 + $0x58] sm:$0xff]
  %v117 = vld [vmem:[%s1 + $0x60] sm:$0xff]
  %v118 = vld [vmem:[%s1 + $0x68] sm:$0xff]
  %v119 = vld [vmem:[%s1 + $0x70] sm:$0xff]
  %v120 = vld [vmem:[%s1 + $0x78] sm:$0xff]
  %v121 = vld [vmem:[%s1 + $0x80] sm:$0xff]
  %v122 = vld [vmem:[%s1 + $0x88] sm:$0xff]
  %v123 = vld [vmem:[%s1 + $0x90] sm:$0xff]
  %v124 = vld [vmem:[%s1 + $0x98] sm:$0xff]
  %v125 = vld [vmem:[%s1 + $0xa0] sm:$0xff]
  %v126 = vld [vmem:[%s1 + $0xa8] sm:$0xff]
  %v127 = vld [vmem:[%s1 + $0xb0] sm:$0xff]
  %v128 = vld [vmem:[%s1 + $0xb8] sm:$0xff]
  %v129 = vld [vmem:[%s1 + $0xc0] sm:$0xff]
  %v130 = vld [vmem:[%s1 + $0xc8] sm:$0xff]
  %v131 = vld [vmem:[%s1 + $0xd0] sm:$0xff]
  %v132 = vld [vmem:[%s1 + $0xd8] sm:$0xff]
  %v133 = vld [vmem:[%s1 + $0xe0] sm:$0xff]
  %v134 = vld [vmem:[%s1 + $0xe8] sm:$0xff]
  %v135 = vld [vmem:[%s1 + $0xf0] sm:$0xff]
  %v136 = vld [vmem:[%s1 + $0xf8] sm:$0xff]
  %v137 = vld [vmem:[%s2] sm:$0xf]
  %v139 = vlaneseq
  %v140 = vshrl.u32 %v139, 7
  %v141 = vsub.s32 0, %v140
  %v142 = vrot.slane %v137, %v141
  %v143 = vlaneseq
  %v144 = vshrl.u32 %v143, 7
  %v145 = vsub.s32 1, %v144
  %v146 = vrot.slane %v137, %v145
  %v147 = vlaneseq
  %v148 = vshrl.u32 %v147, 7
  %v149 = vsub.s32 2, %v148
  %v150 = vrot.slane %v137, %v149
  %v151 = vlaneseq
  %v152 = vshrl.u32 %v151, 7
  %v153 = vsub.s32 3, %v152
  %v154 = vrot.slane %v137, %v153
  %v191 = vunpack.c.l.b16 %v105
  %v192 = vunpack.c.h.b16 %v105
  %v193 = vunpack.c.l.b16 %v106
  %v194 = vunpack.c.h.b16 %v106
  %v195 = vunpack.c.l.b16 %v107
  %v196 = vunpack.c.h.b16 %v107
  %v197 = vunpack.c.l.b16 %v108
  %v198 = vunpack.c.h.b16 %v108
  %v199 = vunpack.c.l.b16 %v109
  %v200 = vunpack.c.h.b16 %v109
  %v201 = vunpack.c.l.b16 %v110
  %v202 = vunpack.c.h.b16 %v110
  %v203 = vunpack.c.l.b16 %v111
  %v204 = vunpack.c.h.b16 %v111
  %v205 = vunpack.c.l.b16 %v112
  %v206 = vunpack.c.h.b16 %v112
  %v207 = vunpack.c.l.b16 %v113
  %v208 = vunpack.c.h.b16 %v113
  %v209 = vunpack.c.l.b16 %v114
  %v210 = vunpack.c.h.b16 %v114
  %v211 = vunpack.c.l.b16 %v115
  %v212 = vunpack.c.h.b16 %v115
  %v213 = vunpack.c.l.b16 %v116
  %v214 = vunpack.c.h.b16 %v116
  %v215 = vunpack.c.l.b16 %v117
  %v216 = vunpack.c.h.b16 %v117
  %v217 = vunpack.c.l.b16 %v118
  %v218 = vunpack.c.h.b16 %v118
  %v219 = vunpack.c.l.b16 %v119
  %v220 = vunpack.c.h.b16 %v119
  %v221 = vunpack.c.l.b16 %v120
  %v222 = vunpack.c.h.b16 %v120
  %v223 = vunpack.c.l.b16 %v121
  %v224 = vunpack.c.h.b16 %v121
  %v225 = vunpack.c.l.b16 %v122
  %v226 = vunpack.c.h.b16 %v122
  %v227 = vunpack.c.l.b16 %v123
  %v228 = vunpack.c.h.b16 %v123
  %v229 = vunpack.c.l.b16 %v124
  %v230 = vunpack.c.h.b16 %v124
  %v231 = vunpack.c.l.b16 %v125
  %v232 = vunpack.c.h.b16 %v125
  %v233 = vunpack.c.l.b16 %v126
  %v234 = vunpack.c.h.b16 %v126
  %v235 = vunpack.c.l.b16 %v127
  %v236 = vunpack.c.h.b16 %v127
  %v237 = vunpack.c.l.b16 %v128
  %v238 = vunpack.c.h.b16 %v128
  %v239 = vunpack.c.l.b16 %v129
  %v240 = vunpack.c.h.b16 %v129
  %v241 = vunpack.c.l.b16 %v130
  %v242 = vunpack.c.h.b16 %v130
  %v243 = vunpack.c.l.b16 %v131
  %v244 = vunpack.c.h.b16 %v131
  %v245 = vunpack.c.l.b16 %v132
  %v246 = vunpack.c.h.b16 %v132
  %v247 = vunpack.c.l.b16 %v133
  %v248 = vunpack.c.h.b16 %v133
  %v249 = vunpack.c.l.b16 %v134
  %v250 = vunpack.c.h.b16 %v134
  %v251 = vunpack.c.l.b16 %v135
  %v252 = vunpack.c.h.b16 %v135
  %v253 = vunpack.c.l.b16 %v136
  %v254 = vunpack.c.h.b16 %v136
  %v255 = vpack.c.b16 %v195, %v191
  %v256 = vpack.c.b16 %v196, %v192
  %v257 = vpack.c.b16 %v197, %v193
  %v258 = vpack.c.b16 %v198, %v194
  %v259 = vpack.c.b16 %v203, %v199
  %v260 = vpack.c.b16 %v204, %v200
  %v261 = vpack.c.b16 %v205, %v201
  %v262 = vpack.c.b16 %v206, %v202
  %v263 = vpack.c.b16 %v211, %v207
  %v264 = vpack.c.b16 %v212, %v208
  %v265 = vpack.c.b16 %v213, %v209
  %v266 = vpack.c.b16 %v214, %v210
  %v267 = vpack.c.b16 %v219, %v215
  %v268 = vpack.c.b16 %v220, %v216
  %v269 = vpack.c.b16 %v221, %v217
  %v270 = vpack.c.b16 %v222, %v218
  %v271 = vpack.c.b16 %v227, %v223
  %v272 = vpack.c.b16 %v228, %v224
  %v273 = vpack.c.b16 %v229, %v225
  %v274 = vpack.c.b16 %v230, %v226
  %v275 = vpack.c.b16 %v235, %v231
  %v276 = vpack.c.b16 %v236, %v232
  %v277 = vpack.c.b16 %v237, %v233
  %v278 = vpack.c.b16 %v238, %v234
  %v279 = vpack.c.b16 %v243, %v239
  %v280 = vpack.c.b16 %v244, %v240
  %v281 = vpack.c.b16 %v245, %v241
  %v282 = vpack.c.b16 %v246, %v242
  %v283 = vpack.c.b16 %v251, %v247
  %v284 = vpack.c.b16 %v252, %v248
  %v285 = vpack.c.b16 %v253, %v249
  %v286 = vpack.c.b16 %v254, %v250
  %319 = vmatprep.subr.bf16.mxu0 %v256
  %320 = vmatpush1.bf16.msra.mxu0 %v255
  %321 = vmatprep.subr.bf16.mxu0 %v260
  %322 = vmatpush1.bf16.msra.mxu0 %v259
  %323 = vmatprep.subr.bf16.mxu0 %v264
  %324 = vmatpush1.bf16.msra.mxu0 %v263
  %325 = vmatprep.subr.bf16.mxu0 %v268
  %326 = vmatpush1.bf16.msra.mxu0 %v267
  %327 = vmatprep.subr.bf16.mxu0 %v272
  %328 = vmatpush1.bf16.msra.mxu0 %v271
  %329 = vmatprep.subr.bf16.mxu0 %v276
  %330 = vmatpush1.bf16.msra.mxu0 %v275
  %331 = vmatprep.subr.bf16.mxu0 %v280
  %332 = vmatpush1.bf16.msra.mxu0 %v279
  %333 = vmatprep.subr.bf16.mxu0 %v284
  %334 = vmatpush1.bf16.msra.mxu0 %v283
  %335 = vmatprep.subr.bf16.mxu0 0
  %336 = vmatpush1.bf16.msra.mxu0 0
  %337 = vmatprep.subr.bf16.mxu0 0
  %338 = vmatpush1.bf16.msra.mxu0 0
  %339 = vmatprep.subr.bf16.mxu0 0
  %340 = vmatpush1.bf16.msra.mxu0 0
  %341 = vmatprep.subr.bf16.mxu0 0
  %342 = vmatpush1.bf16.msra.mxu0 0
  %343 = vmatprep.subr.bf16.mxu0 0
  %344 = vmatpush1.bf16.msra.mxu0 0
  %345 = vmatprep.subr.bf16.mxu0 0
  %346 = vmatpush1.bf16.msra.mxu0 0
  %347 = vmatprep.subr.bf16.mxu0 0
  %348 = vmatpush1.bf16.msra.mxu0 0
  %349 = vmatprep.subr.bf16.mxu0 0
  %350 = vmatpush1.bf16.msra.mxu0 0
  %351 = vmatprep.mubr.bf16.mxu0 0
  %352 = vmatmul.mubr.bf16.gmra.mrb[0].mxu0 %v89
  %v353 = vpop.f32.mrb[0].mxu0
  %v354 = vadd.f32 %v142, %v353
  %v355 = vpop.f32.mrb[0].mxu0
  %v356 = vadd.f32 %v146, %v355
  %v357 = vpop.f32.mrb[0].mxu0
  %v358 = vadd.f32 %v142, %v357
  %v359 = vpop.f32.mrb[0].mxu0
  %v360 = vadd.f32 %v146, %v359
  %361 = vmatprep.mubr.bf16.mxu0 0
  %362 = vmatmul.mubr.bf16.gmra.mrb[0].mxu0 %v90
  %v363 = vpop.f32.mrb[0].mxu0
  %v364 = vadd.f32 %v142, %v363
  %v365 = vpop.f32.mrb[0].mxu0
  %v366 = vadd.f32 %v146, %v365
  %v367 = vpop.f32.mrb[0].mxu0
  %v368 = vadd.f32 %v142, %v367
  %v369 = vpop.f32.mrb[0].mxu0
  %v370 = vadd.f32 %v146, %v369
  %371 = vmatprep.mubr.bf16.mxu0 0
  %372 = vmatmul.mubr.bf16.gmra.mrb[0].mxu0 %v91
  %v373 = vpop.f32.mrb[0].mxu0
  %v374 = vadd.f32 %v142, %v373
  %v375 = vpop.f32.mrb[0].mxu0
  %v376 = vadd.f32 %v146, %v375
  %v377 = vpop.f32.mrb[0].mxu0
  %v378 = vadd.f32 %v142, %v377
  %v379 = vpop.f32.mrb[0].mxu0
  %v380 = vadd.f32 %v146, %v379
  %381 = vmatprep.mubr.bf16.mxu0 0
  %382 = vmatmul.mubr.bf16.gmra.mrb[0].mxu0 %v92
  %v383 = vpop.f32.mrb[0].mxu0
  %v384 = vadd.f32 %v142, %v383
  %v385 = vpop.f32.mrb[0].mxu0
  %v386 = vadd.f32 %v146, %v385
  %v387 = vpop.f32.mrb[0].mxu0
  %v388 = vadd.f32 %v142, %v387
  %v389 = vpop.f32.mrb[0].mxu0
  %v390 = vadd.f32 %v146, %v389
  %391 = vmatprep.mubr.bf16.mxu0 0
  %392 = vmatmul.mubr.bf16.gmra.mrb[0].mxu0 %v93
  %v393 = vpop.f32.mrb[0].mxu0
  %v394 = vadd.f32 %v142, %v393
  %v395 = vpop.f32.mrb[0].mxu0
  %v396 = vadd.f32 %v146, %v395
  %v397 = vpop.f32.mrb[0].mxu0
  %v398 = vadd.f32 %v142, %v397
  %v399 = vpop.f32.mrb[0].mxu0
  %v400 = vadd.f32 %v146, %v399
  %401 = vmatprep.mubr.bf16.mxu0 0
  %402 = vmatmul.mubr.bf16.gmra.mrb[0].mxu0 %v94
  %v403 = vpop.f32.mrb[0].mxu0
  %v404 = vadd.f32 %v142, %v403
  %v405 = vpop.f32.mrb[0].mxu0
  %v406 = vadd.f32 %v146, %v405
  %v407 = vpop.f32.mrb[0].mxu0
  %v408 = vadd.f32 %v142, %v407
  %v409 = vpop.f32.mrb[0].mxu0
  %v410 = vadd.f32 %v146, %v409
  %411 = vmatprep.mubr.bf16.mxu0 0
  %412 = vmatmul.mubr.bf16.gmra.mrb[0].mxu0 %v95
  %v413 = vpop.f32.mrb[0].mxu0
  %v414 = vadd.f32 %v142, %v413
  %v415 = vpop.f32.mrb[0].mxu0
  %v416 = vadd.f32 %v146, %v415
  %v417 = vpop.f32.mrb[0].mxu0
  %v418 = vadd.f32 %v142, %v417
  %v419 = vpop.f32.mrb[0].mxu0
  %v420 = vadd.f32 %v146, %v419
  %421 = vmatprep.mubr.bf16.mxu0 0
  %422 = vmatmul.mubr.bf16.gmra.mrb[0].mxu0 %v96
  %v423 = vpop.f32.mrb[0].mxu0
  %v424 = vadd.f32 %v142, %v423
  %v425 = vpop.f32.mrb[0].mxu0
  %v426 = vadd.f32 %v146, %v425
  %v427 = vpop.f32.mrb[0].mxu0
  %v428 = vadd.f32 %v142, %v427
  %v429 = vpop.f32.mrb[0].mxu0
  %v430 = vadd.f32 %v146, %v429
  %431 = vmatprep.mubr.bf16.mxu0 0
  %432 = vmatmul.mubr.bf16.gmra.mrb[0].mxu0 %v97
  %v433 = vpop.f32.mrb[0].mxu0
  %v434 = vadd.f32 %v142, %v433
  %v435 = vpop.f32.mrb[0].mxu0
  %v436 = vadd.f32 %v146, %v435
  %v437 = vpop.f32.mrb[0].mxu0
  %v438 = vadd.f32 %v142, %v437
  %v439 = vpop.f32.mrb[0].mxu0
  %v440 = vadd.f32 %v146, %v439
  %441 = vmatprep.mubr.bf16.mxu0 0
  %442 = vmatmul.mubr.bf16.gmra.mrb[0].mxu0 %v98
  %v443 = vpop.f32.mrb[0].mxu0
  %v444 = vadd.f32 %v142, %v443
  %v445 = vpop.f32.mrb[0].mxu0
  %v446 = vadd.f32 %v146, %v445
  %v447 = vpop.f32.mrb[0].mxu0
  %v448 = vadd.f32 %v142, %v447
  %v449 = vpop.f32.mrb[0].mxu0
  %v450 = vadd.f32 %v146, %v449
  %451 = vmatprep.mubr.bf16.mxu0 0
  %452 = vmatmul.mubr.bf16.gmra.mrb[0].mxu0 %v99
  %v453 = vpop.f32.mrb[0].mxu0
  %v454 = vadd.f32 %v142, %v453
  %v455 = vpop.f32.mrb[0].mxu0
  %v456 = vadd.f32 %v146, %v455
  %v457 = vpop.f32.mrb[0].mxu0
  %v458 = vadd.f32 %v142, %v457
  %v459 = vpop.f32.mrb[0].mxu0
  %v460 = vadd.f32 %v146, %v459
  %461 = vmatprep.mubr.bf16.mxu0 0
  %462 = vmatmul.mubr.bf16.gmra.mrb[0].mxu0 %v100
  %v463 = vpop.f32.mrb[0].mxu0
  %v464 = vadd.f32 %v142, %v463
  %v465 = vpop.f32.mrb[0].mxu0
  %v466 = vadd.f32 %v146, %v465
  %v467 = vpop.f32.mrb[0].mxu0
  %v468 = vadd.f32 %v142, %v467
  %v469 = vpop.f32.mrb[0].mxu0
  %v470 = vadd.f32 %v146, %v469
  %471 = vmatprep.mubr.bf16.mxu0 0
  %472 = vmatmul.mubr.bf16.gmra.mrb[0].mxu0 %v101
  %v473 = vpop.f32.mrb[0].mxu0
  %v474 = vadd.f32 %v142, %v473
  %v475 = vpop.f32.mrb[0].mxu0
  %v476 = vadd.f32 %v146, %v475
  %v477 = vpop.f32.mrb[0].mxu0
  %v478 = vadd.f32 %v142, %v477
  %v479 = vpop.f32.mrb[0].mxu0
  %v480 = vadd.f32 %v146, %v479
  %481 = vmatprep.mubr.bf16.mxu0 0
  %482 = vmatmul.mubr.bf16.gmra.mrb[0].mxu0 %v102
  %v483 = vpop.f32.mrb[0].mxu0
  %v484 = vadd.f32 %v142, %v483
  %v485 = vpop.f32.mrb[0].mxu0
  %v486 = vadd.f32 %v146, %v485
  %v487 = vpop.f32.mrb[0].mxu0
  %v488 = vadd.f32 %v142, %v487
  %v489 = vpop.f32.mrb[0].mxu0
  %v490 = vadd.f32 %v146, %v489
  %491 = vmatprep.mubr.bf16.mxu0 0
  %492 = vmatmul.mubr.bf16.gmra.mrb[0].mxu0 %v103
  %v493 = vpop.f32.mrb[0].mxu0
  %v494 = vadd.f32 %v142, %v493
  %v495 = vpop.f32.mrb[0].mxu0
  %v496 = vadd.f32 %v146, %v495
  %v497 = vpop.f32.mrb[0].mxu0
  %v498 = vadd.f32 %v142, %v497
  %v499 = vpop.f32.mrb[0].mxu0
  %v500 = vadd.f32 %v146, %v499
  %501 = vmatprep.mubr.bf16.mxu0 0
  %502 = vmatmul.mubr.bf16.gmra.mrb[0].mxu0 %v104
  %v503 = vpop.f32.mrb[0].mxu0
  %v504 = vadd.f32 %v142, %v503
  %v505 = vpop.f32.mrb[0].mxu0
  %v506 = vadd.f32 %v146, %v505
  %v507 = vpop.f32.mrb[0].mxu0
  %v508 = vadd.f32 %v142, %v507
  %v509 = vpop.f32.mrb[0].mxu0
  %v510 = vadd.f32 %v146, %v509
  %511 = vdwg.mxu0
  %512 = vmatprep.subr.bf16.mxu0 %v258
  %513 = vmatpush1.bf16.msra.mxu0 %v257
  %514 = vmatprep.subr.bf16.mxu0 %v262
  %515 = vmatpush1.bf16.msra.mxu0 %v261
  %516 = vmatprep.subr.bf16.mxu0 %v266
  %517 = vmatpush1.bf16.msra.mxu0 %v265
  %518 = vmatprep.subr.bf16.mxu0 %v270
  %519 = vmatpush1.bf16.msra.mxu0 %v269
  %520 = vmatprep.subr.bf16.mxu0 %v274
  %521 = vmatpush1.bf16.msra.mxu0 %v273
  %522 = vmatprep.subr.bf16.mxu0 %v278
  %523 = vmatpush1.bf16.msra.mxu0 %v277
  %524 = vmatprep.subr.bf16.mxu0 %v282
  %525 = vmatpush1.bf16.msra.mxu0 %v281
  %526 = vmatprep.subr.bf16.mxu0 %v286
  %527 = vmatpush1.bf16.msra.mxu0 %v285
  %528 = vmatprep.subr.bf16.mxu0 0
  %529 = vmatpush1.bf16.msra.mxu0 0
  %530 = vmatprep.subr.bf16.mxu0 0
  %531 = vmatpush1.bf16.msra.mxu0 0
  %532 = vmatprep.subr.bf16.mxu0 0
  %533 = vmatpush1.bf16.msra.mxu0 0
  %534 = vmatprep.subr.bf16.mxu0 0
  %535 = vmatpush1.bf16.msra.mxu0 0
  %536 = vmatprep.subr.bf16.mxu0 0
  %537 = vmatpush1.bf16.msra.mxu0 0
  %538 = vmatprep.subr.bf16.mxu0 0
  %539 = vmatpush1.bf16.msra.mxu0 0
  %540 = vmatprep.subr.bf16.mxu0 0
  %541 = vmatpush1.bf16.msra.mxu0 0
  %542 = vmatprep.subr.bf16.mxu0 0
  %543 = vmatpush1.bf16.msra.mxu0 0
  %544 = vmatprep.mubr.bf16.mxu0 0
  %545 = vmatmul.mubr.bf16.gmra.mrb[0].mxu0 %v89
  %v546 = vpop.f32.mrb[0].mxu0
  %v547 = vadd.f32 %v150, %v546
  %v548 = vpop.f32.mrb[0].mxu0
  %v549 = vadd.f32 %v154, %v548
  %v550 = vpop.f32.mrb[0].mxu0
  %v551 = vadd.f32 %v150, %v550
  %v552 = vpop.f32.mrb[0].mxu0
  %v553 = vadd.f32 %v154, %v552
  %554 = vmatprep.mubr.bf16.mxu0 0
  %555 = vmatmul.mubr.bf16.gmra.mrb[0].mxu0 %v90
  %v556 = vpop.f32.mrb[0].mxu0
  %v557 = vadd.f32 %v150, %v556
  %v558 = vpop.f32.mrb[0].mxu0
  %v559 = vadd.f32 %v154, %v558
  %v560 = vpop.f32.mrb[0].mxu0
  %v561 = vadd.f32 %v150, %v560
  %v562 = vpop.f32.mrb[0].mxu0
  %v563 = vadd.f32 %v154, %v562
  %564 = vmatprep.mubr.bf16.mxu0 0
  %565 = vmatmul.mubr.bf16.gmra.mrb[0].mxu0 %v91
  %v566 = vpop.f32.mrb[0].mxu0
  %v567 = vadd.f32 %v150, %v566
  %v568 = vpop.f32.mrb[0].mxu0
  %v569 = vadd.f32 %v154, %v568
  %v570 = vpop.f32.mrb[0].mxu0
  %v571 = vadd.f32 %v150, %v570
  %v572 = vpop.f32.mrb[0].mxu0
  %v573 = vadd.f32 %v154, %v572
  %574 = vmatprep.mubr.bf16.mxu0 0
  %575 = vmatmul.mubr.bf16.gmra.mrb[0].mxu0 %v92
  %v576 = vpop.f32.mrb[0].mxu0
  %v577 = vadd.f32 %v150, %v576
  %v578 = vpop.f32.mrb[0].mxu0
  %v579 = vadd.f32 %v154, %v578
  %v580 = vpop.f32.mrb[0].mxu0
  %v581 = vadd.f32 %v150, %v580
  %v582 = vpop.f32.mrb[0].mxu0
  %v583 = vadd.f32 %v154, %v582
  %584 = vmatprep.mubr.bf16.mxu0 0
  %585 = vmatmul.mubr.bf16.gmra.mrb[0].mxu0 %v93
  %v586 = vpop.f32.mrb[0].mxu0
  %v587 = vadd.f32 %v150, %v586
  %v588 = vpop.f32.mrb[0].mxu0
  %v589 = vadd.f32 %v154, %v588
  %v590 = vpop.f32.mrb[0].mxu0
  %v591 = vadd.f32 %v150, %v590
  %v592 = vpop.f32.mrb[0].mxu0
  %v593 = vadd.f32 %v154, %v592
  %594 = vmatprep.mubr.bf16.mxu0 0
  %595 = vmatmul.mubr.bf16.gmra.mrb[0].mxu0 %v94
  %v596 = vpop.f32.mrb[0].mxu0
  %v597 = vadd.f32 %v150, %v596
  %v598 = vpop.f32.mrb[0].mxu0
  %v599 = vadd.f32 %v154, %v598
  %v600 = vpop.f32.mrb[0].mxu0
  %v601 = vadd.f32 %v150, %v600
  %v602 = vpop.f32.mrb[0].mxu0
  %v603 = vadd.f32 %v154, %v602
  %604 = vmatprep.mubr.bf16.mxu0 0
  %605 = vmatmul.mubr.bf16.gmra.mrb[0].mxu0 %v95
  %v606 = vpop.f32.mrb[0].mxu0
  %v607 = vadd.f32 %v150, %v606
  %v608 = vpop.f32.mrb[0].mxu0
  %v609 = vadd.f32 %v154, %v608
  %v610 = vpop.f32.mrb[0].mxu0
  %v611 = vadd.f32 %v150, %v610
  %v612 = vpop.f32.mrb[0].mxu0
  %v613 = vadd.f32 %v154, %v612
  %614 = vmatprep.mubr.bf16.mxu0 0
  %615 = vmatmul.mubr.bf16.gmra.mrb[0].mxu0 %v96
  %v616 = vpop.f32.mrb[0].mxu0
  %v617 = vadd.f32 %v150, %v616
  %v618 = vpop.f32.mrb[0].mxu0
  %v619 = vadd.f32 %v154, %v618
  %v620 = vpop.f32.mrb[0].mxu0
  %v621 = vadd.f32 %v150, %v620
  %v622 = vpop.f32.mrb[0].mxu0
  %v623 = vadd.f32 %v154, %v622
  %624 = vmatprep.mubr.bf16.mxu0 0
  %625 = vmatmul.mubr.bf16.gmra.mrb[0].mxu0 %v97
  %v626 = vpop.f32.mrb[0].mxu0
  %v627 = vadd.f32 %v150, %v626
  %v628 = vpop.f32.mrb[0].mxu0
  %v629 = vadd.f32 %v154, %v628
  %v630 = vpop.f32.mrb[0].mxu0
  %v631 = vadd.f32 %v150, %v630
  %v632 = vpop.f32.mrb[0].mxu0
  %v633 = vadd.f32 %v154, %v632
  %634 = vmatprep.mubr.bf16.mxu0 0
  %635 = vmatmul.mubr.bf16.gmra.mrb[0].mxu0 %v98
  %v636 = vpop.f32.mrb[0].mxu0
  %v637 = vadd.f32 %v150, %v636
  %v638 = vpop.f32.mrb[0].mxu0
  %v639 = vadd.f32 %v154, %v638
  %v640 = vpop.f32.mrb[0].mxu0
  %v641 = vadd.f32 %v150, %v640
  %v642 = vpop.f32.mrb[0].mxu0
  %v643 = vadd.f32 %v154, %v642
  %644 = vmatprep.mubr.bf16.mxu0 0
  %645 = vmatmul.mubr.bf16.gmra.mrb[0].mxu0 %v99
  %v646 = vpop.f32.mrb[0].mxu0
  %v647 = vadd.f32 %v150, %v646
  %v648 = vpop.f32.mrb[0].mxu0
  %v649 = vadd.f32 %v154, %v648
  %v650 = vpop.f32.mrb[0].mxu0
  %v651 = vadd.f32 %v150, %v650
  %v652 = vpop.f32.mrb[0].mxu0
  %v653 = vadd.f32 %v154, %v652
  %654 = vmatprep.mubr.bf16.mxu0 0
  %655 = vmatmul.mubr.bf16.gmra.mrb[0].mxu0 %v100
  %v656 = vpop.f32.mrb[0].mxu0
  %v657 = vadd.f32 %v150, %v656
  %v658 = vpop.f32.mrb[0].mxu0
  %v659 = vadd.f32 %v154, %v658
  %v660 = vpop.f32.mrb[0].mxu0
  %v661 = vadd.f32 %v150, %v660
  %v662 = vpop.f32.mrb[0].mxu0
  %v663 = vadd.f32 %v154, %v662
  %664 = vmatprep.mubr.bf16.mxu0 0
  %665 = vmatmul.mubr.bf16.gmra.mrb[0].mxu0 %v101
  %v666 = vpop.f32.mrb[0].mxu0
  %v667 = vadd.f32 %v150, %v666
  %v668 = vpop.f32.mrb[0].mxu0
  %v669 = vadd.f32 %v154, %v668
  %v670 = vpop.f32.mrb[0].mxu0
  %v671 = vadd.f32 %v150, %v670
  %v672 = vpop.f32.mrb[0].mxu0
  %v673 = vadd.f32 %v154, %v672
  %674 = vmatprep.mubr.bf16.mxu0 0
  %675 = vmatmul.mubr.bf16.gmra.mrb[0].mxu0 %v102
  %v676 = vpop.f32.mrb[0].mxu0
  %v677 = vadd.f32 %v150, %v676
  %v678 = vpop.f32.mrb[0].mxu0
  %v679 = vadd.f32 %v154, %v678
  %v680 = vpop.f32.mrb[0].mxu0
  %v681 = vadd.f32 %v150, %v680
  %v682 = vpop.f32.mrb[0].mxu0
  %v683 = vadd.f32 %v154, %v682
  %684 = vmatprep.mubr.bf16.mxu0 0
  %685 = vmatmul.mubr.bf16.gmra.mrb[0].mxu0 %v103
  %v686 = vpop.f32.mrb[0].mxu0
  %v687 = vadd.f32 %v150, %v686
  %v688 = vpop.f32.mrb[0].mxu0
  %v689 = vadd.f32 %v154, %v688
  %v690 = vpop.f32.mrb[0].mxu0
  %v691 = vadd.f32 %v150, %v690
  %v692 = vpop.f32.mrb[0].mxu0
  %v693 = vadd.f32 %v154, %v692
  %694 = vmatprep.mubr.bf16.mxu0 0
  %695 = vmatmul.mubr.bf16.gmra.mrb[0].mxu0 %v104
  %v696 = vpop.f32.mrb[0].mxu0
  %v697 = vadd.f32 %v150, %v696
  %v698 = vpop.f32.mrb[0].mxu0
  %v699 = vadd.f32 %v154, %v698
  %v700 = vpop.f32.mrb[0].mxu0
  %v701 = vadd.f32 %v150, %v700
  %v702 = vpop.f32.mrb[0].mxu0
  %v703 = vadd.f32 %v154, %v702
  %704 = vdwg.mxu0
  %v705 = vmul.f32 %v354, %v354
  %v706 = vmul.f32 %v356, %v356
  %v707 = vmul.f32 %v547, %v547
  %v708 = vmul.f32 %v549, %v549
  %v709 = vmul.f32 %v358, %v358
  %v710 = vmul.f32 %v360, %v360
  %v711 = vmul.f32 %v551, %v551
  %v712 = vmul.f32 %v553, %v553
  %v713 = vmul.f32 %v364, %v364
  %v714 = vmul.f32 %v366, %v366
  %v715 = vmul.f32 %v557, %v557
  %v716 = vmul.f32 %v559, %v559
  %v717 = vmul.f32 %v368, %v368
  %v718 = vmul.f32 %v370, %v370
  %v719 = vmul.f32 %v561, %v561
  %v720 = vmul.f32 %v563, %v563
  %v721 = vmul.f32 %v374, %v374
  %v722 = vmul.f32 %v376, %v376
  %v723 = vmul.f32 %v567, %v567
  %v724 = vmul.f32 %v569, %v569
  %v725 = vmul.f32 %v378, %v378
  %v726 = vmul.f32 %v380, %v380
  %v727 = vmul.f32 %v571, %v571
  %v728 = vmul.f32 %v573, %v573
  %v729 = vmul.f32 %v384, %v384
  %v730 = vmul.f32 %v386, %v386
  %v731 = vmul.f32 %v577, %v577
  %v732 = vmul.f32 %v579, %v579
  %v733 = vmul.f32 %v388, %v388
  %v734 = vmul.f32 %v390, %v390
  %v735 = vmul.f32 %v581, %v581
  %v736 = vmul.f32 %v583, %v583
  %v737 = vmul.f32 %v394, %v394
  %v738 = vmul.f32 %v396, %v396
  %v739 = vmul.f32 %v587, %v587
  %v740 = vmul.f32 %v589, %v589
  %v741 = vmul.f32 %v398, %v398
  %v742 = vmul.f32 %v400, %v400
  %v743 = vmul.f32 %v591, %v591
  %v744 = vmul.f32 %v593, %v593
  %v745 = vmul.f32 %v404, %v404
  %v746 = vmul.f32 %v406, %v406
  %v747 = vmul.f32 %v597, %v597
  %v748 = vmul.f32 %v599, %v599
  %v749 = vmul.f32 %v408, %v408
  %v750 = vmul.f32 %v410, %v410
  %v751 = vmul.f32 %v601, %v601
  %v752 = vmul.f32 %v603, %v603
  %v753 = vmul.f32 %v414, %v414
  %v754 = vmul.f32 %v416, %v416
  %v755 = vmul.f32 %v607, %v607
  %v756 = vmul.f32 %v609, %v609
  %v757 = vmul.f32 %v418, %v418
  %v758 = vmul.f32 %v420, %v420
  %v759 = vmul.f32 %v611, %v611
  %v760 = vmul.f32 %v613, %v613
  %v761 = vmul.f32 %v424, %v424
  %v762 = vmul.f32 %v426, %v426
  %v763 = vmul.f32 %v617, %v617
  %v764 = vmul.f32 %v619, %v619
  %v765 = vmul.f32 %v428, %v428
  %v766 = vmul.f32 %v430, %v430
  %v767 = vmul.f32 %v621, %v621
  %v768 = vmul.f32 %v623, %v623
  %v769 = vmul.f32 %v434, %v434
  %v770 = vmul.f32 %v436, %v436
  %v771 = vmul.f32 %v627, %v627
  %v772 = vmul.f32 %v629, %v629
  %v773 = vmul.f32 %v438, %v438
  %v774 = vmul.f32 %v440, %v440
  %v775 = vmul.f32 %v631, %v631
  %v776 = vmul.f32 %v633, %v633
  %v777 = vmul.f32 %v444, %v444
  %v778 = vmul.f32 %v446, %v446
  %v779 = vmul.f32 %v637, %v637
  %v780 = vmul.f32 %v639, %v639
  %v781 = vmul.f32 %v448, %v448
  %v782 = vmul.f32 %v450, %v450
  %v783 = vmul.f32 %v641, %v641
  %v784 = vmul.f32 %v643, %v643
  %v785 = vmul.f32 %v454, %v454
  %v786 = vmul.f32 %v456, %v456
  %v787 = vmul.f32 %v647, %v647
  %v788 = vmul.f32 %v649, %v649
  %v789 = vmul.f32 %v458, %v458
  %v790 = vmul.f32 %v460, %v460
  %v791 = vmul.f32 %v651, %v651
  %v792 = vmul.f32 %v653, %v653
  %v793 = vmul.f32 %v464, %v464
  %v794 = vmul.f32 %v466, %v466
  %v795 = vmul.f32 %v657, %v657
  %v796 = vmul.f32 %v659, %v659
  %v797 = vmul.f32 %v468, %v468
  %v798 = vmul.f32 %v470, %v470
  %v799 = vmul.f32 %v661, %v661
  %v800 = vmul.f32 %v663, %v663
  %v801 = vmul.f32 %v474, %v474
  %v802 = vmul.f32 %v476, %v476
  %v803 = vmul.f32 %v667, %v667
  %v804 = vmul.f32 %v669, %v669
  %v805 = vmul.f32 %v478, %v478
  %v806 = vmul.f32 %v480, %v480
  %v807 = vmul.f32 %v671, %v671
  %v808 = vmul.f32 %v673, %v673
  %v809 = vmul.f32 %v484, %v484
  %v810 = vmul.f32 %v486, %v486
  %v811 = vmul.f32 %v677, %v677
  %v812 = vmul.f32 %v679, %v679
  %v813 = vmul.f32 %v488, %v488
  %v814 = vmul.f32 %v490, %v490
  %v815 = vmul.f32 %v681, %v681
  %v816 = vmul.f32 %v683, %v683
  %v817 = vmul.f32 %v494, %v494
  %v818 = vmul.f32 %v496, %v496
  %v819 = vmul.f32 %v687, %v687
  %v820 = vmul.f32 %v689, %v689
  %v821 = vmul.f32 %v498, %v498
  %v822 = vmul.f32 %v500, %v500
  %v823 = vmul.f32 %v691, %v691
  %v824 = vmul.f32 %v693, %v693
  %v825 = vmul.f32 %v504, %v504
  %v826 = vmul.f32 %v506, %v506
  %v827 = vmul.f32 %v697, %v697
  %v828 = vmul.f32 %v699, %v699
  %v829 = vmul.f32 %v508, %v508
  %v830 = vmul.f32 %v510, %v510
  %v831 = vmul.f32 %v701, %v701
  %v832 = vmul.f32 %v703, %v703
  %v833 = vmul.f32 %v354, %v705
  %v834 = vmul.f32 %v356, %v706
  %v835 = vmul.f32 %v547, %v707
  %v836 = vmul.f32 %v549, %v708
  %v837 = vmul.f32 %v358, %v709
  %v838 = vmul.f32 %v360, %v710
  %v839 = vmul.f32 %v551, %v711
  %v840 = vmul.f32 %v553, %v712
  %v841 = vmul.f32 %v364, %v713
  %v842 = vmul.f32 %v366, %v714
  %v843 = vmul.f32 %v557, %v715
  %v844 = vmul.f32 %v559, %v716
  %v845 = vmul.f32 %v368, %v717
  %v846 = vmul.f32 %v370, %v718
  %v847 = vmul.f32 %v561, %v719
  %v848 = vmul.f32 %v563, %v720
  %v849 = vmul.f32 %v374, %v721
  %v850 = vmul.f32 %v376, %v722
  %v851 = vmul.f32 %v567, %v723
  %v852 = vmul.f32 %v569, %v724
  %v853 = vmul.f32 %v378, %v725
  %v854 = vmul.f32 %v380, %v726
  %v855 = vmul.f32 %v571, %v727
  %v856 = vmul.f32 %v573, %v728
  %v857 = vmul.f32 %v384, %v729
  %v858 = vmul.f32 %v386, %v730
  %v859 = vmul.f32 %v577, %v731
  %v860 = vmul.f32 %v579, %v732
  %v861 = vmul.f32 %v388, %v733
  %v862 = vmul.f32 %v390, %v734
  %v863 = vmul.f32 %v581, %v735
  %v864 = vmul.f32 %v583, %v736
  %v865 = vmul.f32 %v394, %v737
  %v866 = vmul.f32 %v396, %v738
  %v867 = vmul.f32 %v587, %v739
  %v868 = vmul.f32 %v589, %v740
  %v869 = vmul.f32 %v398, %v741
  %v870 = vmul.f32 %v400, %v742
  %v871 = vmul.f32 %v591, %v743
  %v872 = vmul.f32 %v593, %v744
  %v873 = vmul.f32 %v404, %v745
  %v874 = vmul.f32 %v406, %v746
  %v875 = vmul.f32 %v597, %v747
  %v876 = vmul.f32 %v599, %v748
  %v877 = vmul.f32 %v408, %v749
  %v878 = vmul.f32 %v410, %v750
  %v879 = vmul.f32 %v601, %v751
  %v880 = vmul.f32 %v603, %v752
  %v881 = vmul.f32 %v414, %v753
  %v882 = vmul.f32 %v416, %v754
  %v883 = vmul.f32 %v607, %v755
  %v884 = vmul.f32 %v609, %v756
  %v885 = vmul.f32 %v418, %v757
  %v886 = vmul.f32 %v420, %v758
  %v887 = vmul.f32 %v611, %v759
  %v888 = vmul.f32 %v613, %v760
  %v889 = vmul.f32 %v424, %v761
  %v890 = vmul.f32 %v426, %v762
  %v891 = vmul.f32 %v617, %v763
  %v892 = vmul.f32 %v619, %v764
  %v893 = vmul.f32 %v428, %v765
  %v894 = vmul.f32 %v430, %v766
  %v895 = vmul.f32 %v621, %v767
  %v896 = vmul.f32 %v623, %v768
  %v897 = vmul.f32 %v434, %v769
  %v898 = vmul.f32 %v436, %v770
  %v899 = vmul.f32 %v627, %v771
  %v900 = vmul.f32 %v629, %v772
  %v901 = vmul.f32 %v438, %v773
  %v902 = vmul.f32 %v440, %v774
  %v903 = vmul.f32 %v631, %v775
  %v904 = vmul.f32 %v633, %v776
  %v905 = vmul.f32 %v444, %v777
  %v906 = vmul.f32 %v446, %v778
  %v907 = vmul.f32 %v637, %v779
  %v908 = vmul.f32 %v639, %v780
  %v909 = vmul.f32 %v448, %v781
  %v910 = vmul.f32 %v450, %v782
  %v911 = vmul.f32 %v641, %v783
  %v912 = vmul.f32 %v643, %v784
  %v913 = vmul.f32 %v454, %v785
  %v914 = vmul.f32 %v456, %v786
  %v915 = vmul.f32 %v647, %v787
  %v916 = vmul.f32 %v649, %v788
  %v917 = vmul.f32 %v458, %v789
  %v918 = vmul.f32 %v460, %v790
  %v919 = vmul.f32 %v651, %v791
  %v920 = vmul.f32 %v653, %v792
  %v921 = vmul.f32 %v464, %v793
  %v922 = vmul.f32 %v466, %v794
  %v923 = vmul.f32 %v657, %v795
  %v924 = vmul.f32 %v659, %v796
  %v925 = vmul.f32 %v468, %v797
  %v926 = vmul.f32 %v470, %v798
  %v927 = vmul.f32 %v661, %v799
  %v928 = vmul.f32 %v663, %v800
  %v929 = vmul.f32 %v474, %v801
  %v930 = vmul.f32 %v476, %v802
  %v931 = vmul.f32 %v667, %v803
  %v932 = vmul.f32 %v669, %v804
  %v933 = vmul.f32 %v478, %v805
  %v934 = vmul.f32 %v480, %v806
  %v935 = vmul.f32 %v671, %v807
  %v936 = vmul.f32 %v673, %v808
  %v937 = vmul.f32 %v484, %v809
  %v938 = vmul.f32 %v486, %v810
  %v939 = vmul.f32 %v677, %v811
  %v940 = vmul.f32 %v679, %v812
  %v941 = vmul.f32 %v488, %v813
  %v942 = vmul.f32 %v490, %v814
  %v943 = vmul.f32 %v681, %v815
  %v944 = vmul.f32 %v683, %v816
  %v945 = vmul.f32 %v494, %v817
  %v946 = vmul.f32 %v496, %v818
  %v947 = vmul.f32 %v687, %v819
  %v948 = vmul.f32 %v689, %v820
  %v949 = vmul.f32 %v498, %v821
  %v950 = vmul.f32 %v500, %v822
  %v951 = vmul.f32 %v691, %v823
  %v952 = vmul.f32 %v693, %v824
  %v953 = vmul.f32 %v504, %v825
  %v954 = vmul.f32 %v506, %v826
  %v955 = vmul.f32 %v697, %v827
  %v956 = vmul.f32 %v699, %v828
  %v957 = vmul.f32 %v508, %v829
  %v958 = vmul.f32 %v510, %v830
  %v959 = vmul.f32 %v701, %v831
  %v960 = vmul.f32 %v703, %v832
  %v961 = vmul.f32 %v833, 0.044715
  %v962 = vmul.f32 %v834, 0.044715
  %v963 = vmul.f32 %v835, 0.044715
  %v964 = vmul.f32 %v836, 0.044715
  %v965 = vmul.f32 %v837, 0.044715
  %v966 = vmul.f32 %v838, 0.044715
  %v967 = vmul.f32 %v839, 0.044715
  %v968 = vmul.f32 %v840, 0.044715
  %v969 = vmul.f32 %v841, 0.044715
  %v970 = vmul.f32 %v842, 0.044715
  %v971 = vmul.f32 %v843, 0.044715
  %v972 = vmul.f32 %v844, 0.044715
  %v973 = vmul.f32 %v845, 0.044715
  %v974 = vmul.f32 %v846, 0.044715
  %v975 = vmul.f32 %v847, 0.044715
  %v976 = vmul.f32 %v848, 0.044715
  %v977 = vmul.f32 %v849, 0.044715
  %v978 = vmul.f32 %v850, 0.044715
  %v979 = vmul.f32 %v851, 0.044715
  %v980 = vmul.f32 %v852, 0.044715
  %v981 = vmul.f32 %v853, 0.044715
  %v982 = vmul.f32 %v854, 0.044715
  %v983 = vmul.f32 %v855, 0.044715
  %v984 = vmul.f32 %v856, 0.044715
  %v985 = vmul.f32 %v857, 0.044715
  %v986 = vmul.f32 %v858, 0.044715
  %v987 = vmul.f32 %v859, 0.044715
  %v988 = vmul.f32 %v860, 0.044715
  %v989 = vmul.f32 %v861, 0.044715
  %v990 = vmul.f32 %v862, 0.044715
  %v991 = vmul.f32 %v863, 0.044715
  %v992 = vmul.f32 %v864, 0.044715
  %v993 = vmul.f32 %v865, 0.044715
  %v994 = vmul.f32 %v866, 0.044715
  %v995 = vmul.f32 %v867, 0.044715
  %v996 = vmul.f32 %v868, 0.044715
  %v997 = vmul.f32 %v869, 0.044715
  %v998 = vmul.f32 %v870, 0.044715
  %v999 = vmul.f32 %v871, 0.044715
  %v1000 = vmul.f32 %v872, 0.044715
  %v1001 = vmul.f32 %v873, 0.044715
  %v1002 = vmul.f32 %v874, 0.044715
  %v1003 = vmul.f32 %v875, 0.044715
  %v1004 = vmul.f32 %v876, 0.044715
  %v1005 = vmul.f32 %v877, 0.044715
  %v1006 = vmul.f32 %v878, 0.044715
  %v1007 = vmul.f32 %v879, 0.044715
  %v1008 = vmul.f32 %v880, 0.044715
  %v1009 = vmul.f32 %v881, 0.044715
  %v1010 = vmul.f32 %v882, 0.044715
  %v1011 = vmul.f32 %v883, 0.044715
  %v1012 = vmul.f32 %v884, 0.044715
  %v1013 = vmul.f32 %v885, 0.044715
  %v1014 = vmul.f32 %v886, 0.044715
  %v1015 = vmul.f32 %v887, 0.044715
  %v1016 = vmul.f32 %v888, 0.044715
  %v1017 = vmul.f32 %v889, 0.044715
  %v1018 = vmul.f32 %v890, 0.044715
  %v1019 = vmul.f32 %v891, 0.044715
  %v1020 = vmul.f32 %v892, 0.044715
  %v1021 = vmul.f32 %v893, 0.044715
  %v1022 = vmul.f32 %v894, 0.044715
  %v1023 = vmul.f32 %v895, 0.044715
  %v1024 = vmul.f32 %v896, 0.044715
  %v1025 = vmul.f32 %v897, 0.044715
  %v1026 = vmul.f32 %v898, 0.044715
  %v1027 = vmul.f32 %v899, 0.044715
  %v1028 = vmul.f32 %v900, 0.044715
  %v1029 = vmul.f32 %v901, 0.044715
  %v1030 = vmul.f32 %v902, 0.044715
  %v1031 = vmul.f32 %v903, 0.044715
  %v1032 = vmul.f32 %v904, 0.044715
  %v1033 = vmul.f32 %v905, 0.044715
  %v1034 = vmul.f32 %v906, 0.044715
  %v1035 = vmul.f32 %v907, 0.044715
  %v1036 = vmul.f32 %v908, 0.044715
  %v1037 = vmul.f32 %v909, 0.044715
  %v1038 = vmul.f32 %v910, 0.044715
  %v1039 = vmul.f32 %v911, 0.044715
  %v1040 = vmul.f32 %v912, 0.044715
  %v1041 = vmul.f32 %v913, 0.044715
  %v1042 = vmul.f32 %v914, 0.044715
  %v1043 = vmul.f32 %v915, 0.044715
  %v1044 = vmul.f32 %v916, 0.044715
  %v1045 = vmul.f32 %v917, 0.044715
  %v1046 = vmul.f32 %v918, 0.044715
  %v1047 = vmul.f32 %v919, 0.044715
  %v1048 = vmul.f32 %v920, 0.044715
  %v1049 = vmul.f32 %v921, 0.044715
  %v1050 = vmul.f32 %v922, 0.044715
  %v1051 = vmul.f32 %v923, 0.044715
  %v1052 = vmul.f32 %v924, 0.044715
  %v1053 = vmul.f32 %v925, 0.044715
  %v1054 = vmul.f32 %v926, 0.044715
  %v1055 = vmul.f32 %v927, 0.044715
  %v1056 = vmul.f32 %v928, 0.044715
  %v1057 = vmul.f32 %v929, 0.044715
  %v1058 = vmul.f32 %v930, 0.044715
  %v1059 = vmul.f32 %v931, 0.044715
  %v1060 = vmul.f32 %v932, 0.044715
  %v1061 = vmul.f32 %v933, 0.044715
  %v1062 = vmul.f32 %v934, 0.044715
  %v1063 = vmul.f32 %v935, 0.044715
  %v1064 = vmul.f32 %v936, 0.044715
  %v1065 = vmul.f32 %v937, 0.044715
  %v1066 = vmul.f32 %v938, 0.044715
  %v1067 = vmul.f32 %v939, 0.044715
  %v1068 = vmul.f32 %v940, 0.044715
  %v1069 = vmul.f32 %v941, 0.044715
  %v1070 = vmul.f32 %v942, 0.044715
  %v1071 = vmul.f32 %v943, 0.044715
  %v1072 = vmul.f32 %v944, 0.044715
  %v1073 = vmul.f32 %v945, 0.044715
  %v1074 = vmul.f32 %v946, 0.044715
  %v1075 = vmul.f32 %v947, 0.044715
  %v1076 = vmul.f32 %v948, 0.044715
  %v1077 = vmul.f32 %v949, 0.044715
  %v1078 = vmul.f32 %v950, 0.044715
  %v1079 = vmul.f32 %v951, 0.044715
  %v1080 = vmul.f32 %v952, 0.044715
  %v1081 = vmul.f32 %v953, 0.044715
  %v1082 = vmul.f32 %v954, 0.044715
  %v1083 = vmul.f32 %v955, 0.044715
  %v1084 = vmul.f32 %v956, 0.044715
  %v1085 = vmul.f32 %v957, 0.044715
  %v1086 = vmul.f32 %v958, 0.044715
  %v1087 = vmul.f32 %v959, 0.044715
  %v1088 = vmul.f32 %v960, 0.044715
  %v1089 = vadd.f32 %v354, %v961
  %v1090 = vadd.f32 %v356, %v962
  %v1091 = vadd.f32 %v547, %v963
  %v1092 = vadd.f32 %v549, %v964
  %v1093 = vadd.f32 %v358, %v965
  %v1094 = vadd.f32 %v360, %v966
  %v1095 = vadd.f32 %v551, %v967
  %v1096 = vadd.f32 %v553, %v968
  %v1097 = vadd.f32 %v364, %v969
  %v1098 = vadd.f32 %v366, %v970
  %v1099 = vadd.f32 %v557, %v971
  %v1100 = vadd.f32 %v559, %v972
  %v1101 = vadd.f32 %v368, %v973
  %v1102 = vadd.f32 %v370, %v974
  %v1103 = vadd.f32 %v561, %v975
  %v1104 = vadd.f32 %v563, %v976
  %v1105 = vadd.f32 %v374, %v977
  %v1106 = vadd.f32 %v376, %v978
  %v1107 = vadd.f32 %v567, %v979
  %v1108 = vadd.f32 %v569, %v980
  %v1109 = vadd.f32 %v378, %v981
  %v1110 = vadd.f32 %v380, %v982
  %v1111 = vadd.f32 %v571, %v983
  %v1112 = vadd.f32 %v573, %v984
  %v1113 = vadd.f32 %v384, %v985
  %v1114 = vadd.f32 %v386, %v986
  %v1115 = vadd.f32 %v577, %v987
  %v1116 = vadd.f32 %v579, %v988
  %v1117 = vadd.f32 %v388, %v989
  %v1118 = vadd.f32 %v390, %v990
  %v1119 = vadd.f32 %v581, %v991
  %v1120 = vadd.f32 %v583, %v992
  %v1121 = vadd.f32 %v394, %v993
  %v1122 = vadd.f32 %v396, %v994
  %v1123 = vadd.f32 %v587, %v995
  %v1124 = vadd.f32 %v589, %v996
  %v1125 = vadd.f32 %v398, %v997
  %v1126 = vadd.f32 %v400, %v998
  %v1127 = vadd.f32 %v591, %v999
  %v1128 = vadd.f32 %v593, %v1000
  %v1129 = vadd.f32 %v404, %v1001
  %v1130 = vadd.f32 %v406, %v1002
  %v1131 = vadd.f32 %v597, %v1003
  %v1132 = vadd.f32 %v599, %v1004
  %v1133 = vadd.f32 %v408, %v1005
  %v1134 = vadd.f32 %v410, %v1006
  %v1135 = vadd.f32 %v601, %v1007
  %v1136 = vadd.f32 %v603, %v1008
  %v1137 = vadd.f32 %v414, %v1009
  %v1138 = vadd.f32 %v416, %v1010
  %v1139 = vadd.f32 %v607, %v1011
  %v1140 = vadd.f32 %v609, %v1012
  %v1141 = vadd.f32 %v418, %v1013
  %v1142 = vadd.f32 %v420, %v1014
  %v1143 = vadd.f32 %v611, %v1015
  %v1144 = vadd.f32 %v613, %v1016
  %v1145 = vadd.f32 %v424, %v1017
  %v1146 = vadd.f32 %v426, %v1018
  %v1147 = vadd.f32 %v617, %v1019
  %v1148 = vadd.f32 %v619, %v1020
  %v1149 = vadd.f32 %v428, %v1021
  %v1150 = vadd.f32 %v430, %v1022
  %v1151 = vadd.f32 %v621, %v1023
  %v1152 = vadd.f32 %v623, %v1024
  %v1153 = vadd.f32 %v434, %v1025
  %v1154 = vadd.f32 %v436, %v1026
  %v1155 = vadd.f32 %v627, %v1027
  %v1156 = vadd.f32 %v629, %v1028
  %v1157 = vadd.f32 %v438, %v1029
  %v1158 = vadd.f32 %v440, %v1030
  %v1159 = vadd.f32 %v631, %v1031
  %v1160 = vadd.f32 %v633, %v1032
  %v1161 = vadd.f32 %v444, %v1033
  %v1162 = vadd.f32 %v446, %v1034
  %v1163 = vadd.f32 %v637, %v1035
  %v1164 = vadd.f32 %v639, %v1036
  %v1165 = vadd.f32 %v448, %v1037
  %v1166 = vadd.f32 %v450, %v1038
  %v1167 = vadd.f32 %v641, %v1039
  %v1168 = vadd.f32 %v643, %v1040
  %v1169 = vadd.f32 %v454, %v1041
  %v1170 = vadd.f32 %v456, %v1042
  %v1171 = vadd.f32 %v647, %v1043
  %v1172 = vadd.f32 %v649, %v1044
  %v1173 = vadd.f32 %v458, %v1045
  %v1174 = vadd.f32 %v460, %v1046
  %v1175 = vadd.f32 %v651, %v1047
  %v1176 = vadd.f32 %v653, %v1048
  %v1177 = vadd.f32 %v464, %v1049
  %v1178 = vadd.f32 %v466, %v1050
  %v1179 = vadd.f32 %v657, %v1051
  %v1180 = vadd.f32 %v659, %v1052
  %v1181 = vadd.f32 %v468, %v1053
  %v1182 = vadd.f32 %v470, %v1054
  %v1183 = vadd.f32 %v661, %v1055
  %v1184 = vadd.f32 %v663, %v1056
  %v1185 = vadd.f32 %v474, %v1057
  %v1186 = vadd.f32 %v476, %v1058
  %v1187 = vadd.f32 %v667, %v1059
  %v1188 = vadd.f32 %v669, %v1060
  %v1189 = vadd.f32 %v478, %v1061
  %v1190 = vadd.f32 %v480, %v1062
  %v1191 = vadd.f32 %v671, %v1063
  %v1192 = vadd.f32 %v673, %v1064
  %v1193 = vadd.f32 %v484, %v1065
  %v1194 = vadd.f32 %v486, %v1066
  %v1195 = vadd.f32 %v677, %v1067
  %v1196 = vadd.f32 %v679, %v1068
  %v1197 = vadd.f32 %v488, %v1069
  %v1198 = vadd.f32 %v490, %v1070
  %v1199 = vadd.f32 %v681, %v1071
  %v1200 = vadd.f32 %v683, %v1072
  %v1201 = vadd.f32 %v494, %v1073
  %v1202 = vadd.f32 %v496, %v1074
  %v1203 = vadd.f32 %v687, %v1075
  %v1204 = vadd.f32 %v689, %v1076
  %v1205 = vadd.f32 %v498, %v1077
  %v1206 = vadd.f32 %v500, %v1078
  %v1207 = vadd.f32 %v691, %v1079
  %v1208 = vadd.f32 %v693, %v1080
  %v1209 = vadd.f32 %v504, %v1081
  %v1210 = vadd.f32 %v506, %v1082
  %v1211 = vadd.f32 %v697, %v1083
  %v1212 = vadd.f32 %v699, %v1084
  %v1213 = vadd.f32 %v508, %v1085
  %v1214 = vadd.f32 %v510, %v1086
  %v1215 = vadd.f32 %v701, %v1087
  %v1216 = vadd.f32 %v703, %v1088
  %v1217 = vmul.f32 %v1089, 0.7978846
  %v1218 = vmul.f32 %v1090, 0.7978846
  %v1219 = vmul.f32 %v1091, 0.7978846
  %v1220 = vmul.f32 %v1092, 0.7978846
  %v1221 = vmul.f32 %v1093, 0.7978846
  %v1222 = vmul.f32 %v1094, 0.7978846
  %v1223 = vmul.f32 %v1095, 0.7978846
  %v1224 = vmul.f32 %v1096, 0.7978846
  %v1225 = vmul.f32 %v1097, 0.7978846
  %v1226 = vmul.f32 %v1098, 0.7978846
  %v1227 = vmul.f32 %v1099, 0.7978846
  %v1228 = vmul.f32 %v1100, 0.7978846
  %v1229 = vmul.f32 %v1101, 0.7978846
  %v1230 = vmul.f32 %v1102, 0.7978846
  %v1231 = vmul.f32 %v1103, 0.7978846
  %v1232 = vmul.f32 %v1104, 0.7978846
  %v1233 = vmul.f32 %v1105, 0.7978846
  %v1234 = vmul.f32 %v1106, 0.7978846
  %v1235 = vmul.f32 %v1107, 0.7978846
  %v1236 = vmul.f32 %v1108, 0.7978846
  %v1237 = vmul.f32 %v1109, 0.7978846
  %v1238 = vmul.f32 %v1110, 0.7978846
  %v1239 = vmul.f32 %v1111, 0.7978846
  %v1240 = vmul.f32 %v1112, 0.7978846
  %v1241 = vmul.f32 %v1113, 0.7978846
  %v1242 = vmul.f32 %v1114, 0.7978846
  %v1243 = vmul.f32 %v1115, 0.7978846
  %v1244 = vmul.f32 %v1116, 0.7978846
  %v1245 = vmul.f32 %v1117, 0.7978846
  %v1246 = vmul.f32 %v1118, 0.7978846
  %v1247 = vmul.f32 %v1119, 0.7978846
  %v1248 = vmul.f32 %v1120, 0.7978846
  %v1249 = vmul.f32 %v1121, 0.7978846
  %v1250 = vmul.f32 %v1122, 0.7978846
  %v1251 = vmul.f32 %v1123, 0.7978846
  %v1252 = vmul.f32 %v1124, 0.7978846
  %v1253 = vmul.f32 %v1125, 0.7978846
  %v1254 = vmul.f32 %v1126, 0.7978846
  %v1255 = vmul.f32 %v1127, 0.7978846
  %v1256 = vmul.f32 %v1128, 0.7978846
  %v1257 = vmul.f32 %v1129, 0.7978846
  %v1258 = vmul.f32 %v1130, 0.7978846
  %v1259 = vmul.f32 %v1131, 0.7978846
  %v1260 = vmul.f32 %v1132, 0.7978846
  %v1261 = vmul.f32 %v1133, 0.7978846
  %v1262 = vmul.f32 %v1134, 0.7978846
  %v1263 = vmul.f32 %v1135, 0.7978846
  %v1264 = vmul.f32 %v1136, 0.7978846
  %v1265 = vmul.f32 %v1137, 0.7978846
  %v1266 = vmul.f32 %v1138, 0.7978846
  %v1267 = vmul.f32 %v1139, 0.7978846
  %v1268 = vmul.f32 %v1140, 0.7978846
  %v1269 = vmul.f32 %v1141, 0.7978846
  %v1270 = vmul.f32 %v1142, 0.7978846
  %v1271 = vmul.f32 %v1143, 0.7978846
  %v1272 = vmul.f32 %v1144, 0.7978846
  %v1273 = vmul.f32 %v1145, 0.7978846
  %v1274 = vmul.f32 %v1146, 0.7978846
  %v1275 = vmul.f32 %v1147, 0.7978846
  %v1276 = vmul.f32 %v1148, 0.7978846
  %v1277 = vmul.f32 %v1149, 0.7978846
  %v1278 = vmul.f32 %v1150, 0.7978846
  %v1279 = vmul.f32 %v1151, 0.7978846
  %v1280 = vmul.f32 %v1152, 0.7978846
  %v1281 = vmul.f32 %v1153, 0.7978846
  %v1282 = vmul.f32 %v1154, 0.7978846
  %v1283 = vmul.f32 %v1155, 0.7978846
  %v1284 = vmul.f32 %v1156, 0.7978846
  %v1285 = vmul.f32 %v1157, 0.7978846
  %v1286 = vmul.f32 %v1158, 0.7978846
  %v1287 = vmul.f32 %v1159, 0.7978846
  %v1288 = vmul.f32 %v1160, 0.7978846
  %v1289 = vmul.f32 %v1161, 0.7978846
  %v1290 = vmul.f32 %v1162, 0.7978846
  %v1291 = vmul.f32 %v1163, 0.7978846
  %v1292 = vmul.f32 %v1164, 0.7978846
  %v1293 = vmul.f32 %v1165, 0.7978846
  %v1294 = vmul.f32 %v1166, 0.7978846
  %v1295 = vmul.f32 %v1167, 0.7978846
  %v1296 = vmul.f32 %v1168, 0.7978846
  %v1297 = vmul.f32 %v1169, 0.7978846
  %v1298 = vmul.f32 %v1170, 0.7978846
  %v1299 = vmul.f32 %v1171, 0.7978846
  %v1300 = vmul.f32 %v1172, 0.7978846
  %v1301 = vmul.f32 %v1173, 0.7978846
  %v1302 = vmul.f32 %v1174, 0.7978846
  %v1303 = vmul.f32 %v1175, 0.7978846
  %v1304 = vmul.f32 %v1176, 0.7978846
  %v1305 = vmul.f32 %v1177, 0.7978846
  %v1306 = vmul.f32 %v1178, 0.7978846
  %v1307 = vmul.f32 %v1179, 0.7978846
  %v1308 = vmul.f32 %v1180, 0.7978846
  %v1309 = vmul.f32 %v1181, 0.7978846
  %v1310 = vmul.f32 %v1182, 0.7978846
  %v1311 = vmul.f32 %v1183, 0.7978846
  %v1312 = vmul.f32 %v1184, 0.7978846
  %v1313 = vmul.f32 %v1185, 0.7978846
  %v1314 = vmul.f32 %v1186, 0.7978846
  %v1315 = vmul.f32 %v1187, 0.7978846
  %v1316 = vmul.f32 %v1188, 0.7978846
  %v1317 = vmul.f32 %v1189, 0.7978846
  %v1318 = vmul.f32 %v1190, 0.7978846
  %v1319 = vmul.f32 %v1191, 0.7978846
  %v1320 = vmul.f32 %v1192, 0.7978846
  %v1321 = vmul.f32 %v1193, 0.7978846
  %v1322 = vmul.f32 %v1194, 0.7978846
  %v1323 = vmul.f32 %v1195, 0.7978846
  %v1324 = vmul.f32 %v1196, 0.7978846
  %v1325 = vmul.f32 %v1197, 0.7978846
  %v1326 = vmul.f32 %v1198, 0.7978846
  %v1327 = vmul.f32 %v1199, 0.7978846
  %v1328 = vmul.f32 %v1200, 0.7978846
  %v1329 = vmul.f32 %v1201, 0.7978846
  %v1330 = vmul.f32 %v1202, 0.7978846
  %v1331 = vmul.f32 %v1203, 0.7978846
  %v1332 = vmul.f32 %v1204, 0.7978846
  %v1333 = vmul.f32 %v1205, 0.7978846
  %v1334 = vmul.f32 %v1206, 0.7978846
  %v1335 = vmul.f32 %v1207, 0.7978846
  %v1336 = vmul.f32 %v1208, 0.7978846
  %v1337 = vmul.f32 %v1209, 0.7978846
  %v1338 = vmul.f32 %v1210, 0.7978846
  %v1339 = vmul.f32 %v1211, 0.7978846
  %v1340 = vmul.f32 %v1212, 0.7978846
  %v1341 = vmul.f32 %v1213, 0.7978846
  %v1342 = vmul.f32 %v1214, 0.7978846
  %v1343 = vmul.f32 %v1215, 0.7978846
  %v1344 = vmul.f32 %v1216, 0.7978846
  %v1345 = vtanh.pop %v1217
  %v1346 = vtanh.pop %v1218
  %v1347 = vtanh.pop %v1219
  %v1348 = vtanh.pop %v1220
  %v1349 = vtanh.pop %v1221
  %v1350 = vtanh.pop %v1222
  %v1351 = vtanh.pop %v1223
  %v1352 = vtanh.pop %v1224
  %v1353 = vtanh.pop %v1225
  %v1354 = vtanh.pop %v1226
  %v1355 = vtanh.pop %v1227
  %v1356 = vtanh.pop %v1228
  %v1357 = vtanh.pop %v1229
  %v1358 = vtanh.pop %v1230
  %v1359 = vtanh.pop %v1231
  %v1360 = vtanh.pop %v1232
  %v1361 = vtanh.pop %v1233
  %v1362 = vtanh.pop %v1234
  %v1363 = vtanh.pop %v1235
  %v1364 = vtanh.pop %v1236
  %v1365 = vtanh.pop %v1237
  %v1366 = vtanh.pop %v1238
  %v1367 = vtanh.pop %v1239
  %v1368 = vtanh.pop %v1240
  %v1369 = vtanh.pop %v1241
  %v1370 = vtanh.pop %v1242
  %v1371 = vtanh.pop %v1243
  %v1372 = vtanh.pop %v1244
  %v1373 = vtanh.pop %v1245
  %v1374 = vtanh.pop %v1246
  %v1375 = vtanh.pop %v1247
  %v1376 = vtanh.pop %v1248
  %v1377 = vtanh.pop %v1249
  %v1378 = vtanh.pop %v1250
  %v1379 = vtanh.pop %v1251
  %v1380 = vtanh.pop %v1252
  %v1381 = vtanh.pop %v1253
  %v1382 = vtanh.pop %v1254
  %v1383 = vtanh.pop %v1255
  %v1384 = vtanh.pop %v1256
  %v1385 = vtanh.pop %v1257
  %v1386 = vtanh.pop %v1258
  %v1387 = vtanh.pop %v1259
  %v1388 = vtanh.pop %v1260
  %v1389 = vtanh.pop %v1261
  %v1390 = vtanh.pop %v1262
  %v1391 = vtanh.pop %v1263
  %v1392 = vtanh.pop %v1264
  %v1393 = vtanh.pop %v1265
  %v1394 = vtanh.pop %v1266
  %v1395 = vtanh.pop %v1267
  %v1396 = vtanh.pop %v1268
  %v1397 = vtanh.pop %v1269
  %v1398 = vtanh.pop %v1270
  %v1399 = vtanh.pop %v1271
  %v1400 = vtanh.pop %v1272
  %v1401 = vtanh.pop %v1273
  %v1402 = vtanh.pop %v1274
  %v1403 = vtanh.pop %v1275
  %v1404 = vtanh.pop %v1276
  %v1405 = vtanh.pop %v1277
  %v1406 = vtanh.pop %v1278
  %v1407 = vtanh.pop %v1279
  %v1408 = vtanh.pop %v1280
  %v1409 = vtanh.pop %v1281
  %v1410 = vtanh.pop %v1282
  %v1411 = vtanh.pop %v1283
  %v1412 = vtanh.pop %v1284
  %v1413 = vtanh.pop %v1285
  %v1414 = vtanh.pop %v1286
  %v1415 = vtanh.pop %v1287
  %v1416 = vtanh.pop %v1288
  %v1417 = vtanh.pop %v1289
  %v1418 = vtanh.pop %v1290
  %v1419 = vtanh.pop %v1291
  %v1420 = vtanh.pop %v1292
  %v1421 = vtanh.pop %v1293
  %v1422 = vtanh.pop %v1294
  %v1423 = vtanh.pop %v1295
  %v1424 = vtanh.pop %v1296
  %v1425 = vtanh.pop %v1297
  %v1426 = vtanh.pop %v1298
  %v1427 = vtanh.pop %v1299
  %v1428 = vtanh.pop %v1300
  %v1429 = vtanh.pop %v1301
  %v1430 = vtanh.pop %v1302
  %v1431 = vtanh.pop %v1303
  %v1432 = vtanh.pop %v1304
  %v1433 = vtanh.pop %v1305
  %v1434 = vtanh.pop %v1306
  %v1435 = vtanh.pop %v1307
  %v1436 = vtanh.pop %v1308
  %v1437 = vtanh.pop %v1309
  %v1438 = vtanh.pop %v1310
  %v1439 = vtanh.pop %v1311
  %v1440 = vtanh.pop %v1312
  %v1441 = vtanh.pop %v1313
  %v1442 = vtanh.pop %v1314
  %v1443 = vtanh.pop %v1315
  %v1444 = vtanh.pop %v1316
  %v1445 = vtanh.pop %v1317
  %v1446 = vtanh.pop %v1318
  %v1447 = vtanh.pop %v1319
  %v1448 = vtanh.pop %v1320
  %v1449 = vtanh.pop %v1321
  %v1450 = vtanh.pop %v1322
  %v1451 = vtanh.pop %v1323
  %v1452 = vtanh.pop %v1324
  %v1453 = vtanh.pop %v1325
  %v1454 = vtanh.pop %v1326
  %v1455 = vtanh.pop %v1327
  %v1456 = vtanh.pop %v1328
  %v1457 = vtanh.pop %v1329
  %v1458 = vtanh.pop %v1330
  %v1459 = vtanh.pop %v1331
  %v1460 = vtanh.pop %v1332
  %v1461 = vtanh.pop %v1333
  %v1462 = vtanh.pop %v1334
  %v1463 = vtanh.pop %v1335
  %v1464 = vtanh.pop %v1336
  %v1465 = vtanh.pop %v1337
  %v1466 = vtanh.pop %v1338
  %v1467 = vtanh.pop %v1339
  %v1468 = vtanh.pop %v1340
  %v1469 = vtanh.pop %v1341
  %v1470 = vtanh.pop %v1342
  %v1471 = vtanh.pop %v1343
  %v1472 = vtanh.pop %v1344
  %v1473 = vadd.f32 %v1345, 1.0
  %v1474 = vadd.f32 %v1346, 1.0
  %v1475 = vadd.f32 %v1347, 1.0
  %v1476 = vadd.f32 %v1348, 1.0
  %v1477 = vadd.f32 %v1349, 1.0
  %v1478 = vadd.f32 %v1350, 1.0
  %v1479 = vadd.f32 %v1351, 1.0
  %v1480 = vadd.f32 %v1352, 1.0
  %v1481 = vadd.f32 %v1353, 1.0
  %v1482 = vadd.f32 %v1354, 1.0
  %v1483 = vadd.f32 %v1355, 1.0
  %v1484 = vadd.f32 %v1356, 1.0
  %v1485 = vadd.f32 %v1357, 1.0
  %v1486 = vadd.f32 %v1358, 1.0
  %v1487 = vadd.f32 %v1359, 1.0
  %v1488 = vadd.f32 %v1360, 1.0
  %v1489 = vadd.f32 %v1361, 1.0
  %v1490 = vadd.f32 %v1362, 1.0
  %v1491 = vadd.f32 %v1363, 1.0
  %v1492 = vadd.f32 %v1364, 1.0
  %v1493 = vadd.f32 %v1365, 1.0
  %v1494 = vadd.f32 %v1366, 1.0
  %v1495 = vadd.f32 %v1367, 1.0
  %v1496 = vadd.f32 %v1368, 1.0
  %v1497 = vadd.f32 %v1369, 1.0
  %v1498 = vadd.f32 %v1370, 1.0
  %v1499 = vadd.f32 %v1371, 1.0
  %v1500 = vadd.f32 %v1372, 1.0
  %v1501 = vadd.f32 %v1373, 1.0
  %v1502 = vadd.f32 %v1374, 1.0
  %v1503 = vadd.f32 %v1375, 1.0
  %v1504 = vadd.f32 %v1376, 1.0
  %v1505 = vadd.f32 %v1377, 1.0
  %v1506 = vadd.f32 %v1378, 1.0
  %v1507 = vadd.f32 %v1379, 1.0
  %v1508 = vadd.f32 %v1380, 1.0
  %v1509 = vadd.f32 %v1381, 1.0
  %v1510 = vadd.f32 %v1382, 1.0
  %v1511 = vadd.f32 %v1383, 1.0
  %v1512 = vadd.f32 %v1384, 1.0
  %v1513 = vadd.f32 %v1385, 1.0
  %v1514 = vadd.f32 %v1386, 1.0
  %v1515 = vadd.f32 %v1387, 1.0
  %v1516 = vadd.f32 %v1388, 1.0
  %v1517 = vadd.f32 %v1389, 1.0
  %v1518 = vadd.f32 %v1390, 1.0
  %v1519 = vadd.f32 %v1391, 1.0
  %v1520 = vadd.f32 %v1392, 1.0
  %v1521 = vadd.f32 %v1393, 1.0
  %v1522 = vadd.f32 %v1394, 1.0
  %v1523 = vadd.f32 %v1395, 1.0
  %v1524 = vadd.f32 %v1396, 1.0
  %v1525 = vadd.f32 %v1397, 1.0
  %v1526 = vadd.f32 %v1398, 1.0
  %v1527 = vadd.f32 %v1399, 1.0
  %v1528 = vadd.f32 %v1400, 1.0
  %v1529 = vadd.f32 %v1401, 1.0
  %v1530 = vadd.f32 %v1402, 1.0
  %v1531 = vadd.f32 %v1403, 1.0
  %v1532 = vadd.f32 %v1404, 1.0
  %v1533 = vadd.f32 %v1405, 1.0
  %v1534 = vadd.f32 %v1406, 1.0
  %v1535 = vadd.f32 %v1407, 1.0
  %v1536 = vadd.f32 %v1408, 1.0
  %v1537 = vadd.f32 %v1409, 1.0
  %v1538 = vadd.f32 %v1410, 1.0
  %v1539 = vadd.f32 %v1411, 1.0
  %v1540 = vadd.f32 %v1412, 1.0
  %v1541 = vadd.f32 %v1413, 1.0
  %v1542 = vadd.f32 %v1414, 1.0
  %v1543 = vadd.f32 %v1415, 1.0
  %v1544 = vadd.f32 %v1416, 1.0
  %v1545 = vadd.f32 %v1417, 1.0
  %v1546 = vadd.f32 %v1418, 1.0
  %v1547 = vadd.f32 %v1419, 1.0
  %v1548 = vadd.f32 %v1420, 1.0
  %v1549 = vadd.f32 %v1421, 1.0
  %v1550 = vadd.f32 %v1422, 1.0
  %v1551 = vadd.f32 %v1423, 1.0
  %v1552 = vadd.f32 %v1424, 1.0
  %v1553 = vadd.f32 %v1425, 1.0
  %v1554 = vadd.f32 %v1426, 1.0
  %v1555 = vadd.f32 %v1427, 1.0
  %v1556 = vadd.f32 %v1428, 1.0
  %v1557 = vadd.f32 %v1429, 1.0
  %v1558 = vadd.f32 %v1430, 1.0
  %v1559 = vadd.f32 %v1431, 1.0
  %v1560 = vadd.f32 %v1432, 1.0
  %v1561 = vadd.f32 %v1433, 1.0
  %v1562 = vadd.f32 %v1434, 1.0
  %v1563 = vadd.f32 %v1435, 1.0
  %v1564 = vadd.f32 %v1436, 1.0
  %v1565 = vadd.f32 %v1437, 1.0
  %v1566 = vadd.f32 %v1438, 1.0
  %v1567 = vadd.f32 %v1439, 1.0
  %v1568 = vadd.f32 %v1440, 1.0
  %v1569 = vadd.f32 %v1441, 1.0
  %v1570 = vadd.f32 %v1442, 1.0
  %v1571 = vadd.f32 %v1443, 1.0
  %v1572 = vadd.f32 %v1444, 1.0
  %v1573 = vadd.f32 %v1445, 1.0
  %v1574 = vadd.f32 %v1446, 1.0
  %v1575 = vadd.f32 %v1447, 1.0
  %v1576 = vadd.f32 %v1448, 1.0
  %v1577 = vadd.f32 %v1449, 1.0
  %v1578 = vadd.f32 %v1450, 1.0
  %v1579 = vadd.f32 %v1451, 1.0
  %v1580 = vadd.f32 %v1452, 1.0
  %v1581 = vadd.f32 %v1453, 1.0
  %v1582 = vadd.f32 %v1454, 1.0
  %v1583 = vadd.f32 %v1455, 1.0
  %v1584 = vadd.f32 %v1456, 1.0
  %v1585 = vadd.f32 %v1457, 1.0
  %v1586 = vadd.f32 %v1458, 1.0
  %v1587 = vadd.f32 %v1459, 1.0
  %v1588 = vadd.f32 %v1460, 1.0
  %v1589 = vadd.f32 %v1461, 1.0
  %v1590 = vadd.f32 %v1462, 1.0
  %v1591 = vadd.f32 %v1463, 1.0
  %v1592 = vadd.f32 %v1464, 1.0
  %v1593 = vadd.f32 %v1465, 1.0
  %v1594 = vadd.f32 %v1466, 1.0
  %v1595 = vadd.f32 %v1467, 1.0
  %v1596 = vadd.f32 %v1468, 1.0
  %v1597 = vadd.f32 %v1469, 1.0
  %v1598 = vadd.f32 %v1470, 1.0
  %v1599 = vadd.f32 %v1471, 1.0
  %v1600 = vadd.f32 %v1472, 1.0
  %v1601 = vmul.f32 %v1473, 0.5
  %v1602 = vmul.f32 %v1474, 0.5
  %v1603 = vmul.f32 %v1475, 0.5
  %v1604 = vmul.f32 %v1476, 0.5
  %v1605 = vmul.f32 %v1477, 0.5
  %v1606 = vmul.f32 %v1478, 0.5
  %v1607 = vmul.f32 %v1479, 0.5
  %v1608 = vmul.f32 %v1480, 0.5
  %v1609 = vmul.f32 %v1481, 0.5
  %v1610 = vmul.f32 %v1482, 0.5
  %v1611 = vmul.f32 %v1483, 0.5
  %v1612 = vmul.f32 %v1484, 0.5
  %v1613 = vmul.f32 %v1485, 0.5
  %v1614 = vmul.f32 %v1486, 0.5
  %v1615 = vmul.f32 %v1487, 0.5
  %v1616 = vmul.f32 %v1488, 0.5
  %v1617 = vmul.f32 %v1489, 0.5
  %v1618 = vmul.f32 %v1490, 0.5
  %v1619 = vmul.f32 %v1491, 0.5
  %v1620 = vmul.f32 %v1492, 0.5
  %v1621 = vmul.f32 %v1493, 0.5
  %v1622 = vmul.f32 %v1494, 0.5
  %v1623 = vmul.f32 %v1495, 0.5
  %v1624 = vmul.f32 %v1496, 0.5
  %v1625 = vmul.f32 %v1497, 0.5
  %v1626 = vmul.f32 %v1498, 0.5
  %v1627 = vmul.f32 %v1499, 0.5
  %v1628 = vmul.f32 %v1500, 0.5
  %v1629 = vmul.f32 %v1501, 0.5
  %v1630 = vmul.f32 %v1502, 0.5
  %v1631 = vmul.f32 %v1503, 0.5
  %v1632 = vmul.f32 %v1504, 0.5
  %v1633 = vmul.f32 %v1505, 0.5
  %v1634 = vmul.f32 %v1506, 0.5
  %v1635 = vmul.f32 %v1507, 0.5
  %v1636 = vmul.f32 %v1508, 0.5
  %v1637 = vmul.f32 %v1509, 0.5
  %v1638 = vmul.f32 %v1510, 0.5
  %v1639 = vmul.f32 %v1511, 0.5
  %v1640 = vmul.f32 %v1512, 0.5
  %v1641 = vmul.f32 %v1513, 0.5
  %v1642 = vmul.f32 %v1514, 0.5
  %v1643 = vmul.f32 %v1515, 0.5
  %v1644 = vmul.f32 %v1516, 0.5
  %v1645 = vmul.f32 %v1517, 0.5
  %v1646 = vmul.f32 %v1518, 0.5
  %v1647 = vmul.f32 %v1519, 0.5
  %v1648 = vmul.f32 %v1520, 0.5
  %v1649 = vmul.f32 %v1521, 0.5
  %v1650 = vmul.f32 %v1522, 0.5
  %v1651 = vmul.f32 %v1523, 0.5
  %v1652 = vmul.f32 %v1524, 0.5
  %v1653 = vmul.f32 %v1525, 0.5
  %v1654 = vmul.f32 %v1526, 0.5
  %v1655 = vmul.f32 %v1527, 0.5
  %v1656 = vmul.f32 %v1528, 0.5
  %v1657 = vmul.f32 %v1529, 0.5
  %v1658 = vmul.f32 %v1530, 0.5
  %v1659 = vmul.f32 %v1531, 0.5
  %v1660 = vmul.f32 %v1532, 0.5
  %v1661 = vmul.f32 %v1533, 0.5
  %v1662 = vmul.f32 %v1534, 0.5
  %v1663 = vmul.f32 %v1535, 0.5
  %v1664 = vmul.f32 %v1536, 0.5
  %v1665 = vmul.f32 %v1537, 0.5
  %v1666 = vmul.f32 %v1538, 0.5
  %v1667 = vmul.f32 %v1539, 0.5
  %v1668 = vmul.f32 %v1540, 0.5
  %v1669 = vmul.f32 %v1541, 0.5
  %v1670 = vmul.f32 %v1542, 0.5
  %v1671 = vmul.f32 %v1543, 0.5
  %v1672 = vmul.f32 %v1544, 0.5
  %v1673 = vmul.f32 %v1545, 0.5
  %v1674 = vmul.f32 %v1546, 0.5
  %v1675 = vmul.f32 %v1547, 0.5
  %v1676 = vmul.f32 %v1548, 0.5
  %v1677 = vmul.f32 %v1549, 0.5
  %v1678 = vmul.f32 %v1550, 0.5
  %v1679 = vmul.f32 %v1551, 0.5
  %v1680 = vmul.f32 %v1552, 0.5
  %v1681 = vmul.f32 %v1553, 0.5
  %v1682 = vmul.f32 %v1554, 0.5
  %v1683 = vmul.f32 %v1555, 0.5
  %v1684 = vmul.f32 %v1556, 0.5
  %v1685 = vmul.f32 %v1557, 0.5
  %v1686 = vmul.f32 %v1558, 0.5
  %v1687 = vmul.f32 %v1559, 0.5
  %v1688 = vmul.f32 %v1560, 0.5
  %v1689 = vmul.f32 %v1561, 0.5
  %v1690 = vmul.f32 %v1562, 0.5
  %v1691 = vmul.f32 %v1563, 0.5
  %v1692 = vmul.f32 %v1564, 0.5
  %v1693 = vmul.f32 %v1565, 0.5
  %v1694 = vmul.f32 %v1566, 0.5
  %v1695 = vmul.f32 %v1567, 0.5
  %v1696 = vmul.f32 %v1568, 0.5
  %v1697 = vmul.f32 %v1569, 0.5
  %v1698 = vmul.f32 %v1570, 0.5
  %v1699 = vmul.f32 %v1571, 0.5
  %v1700 = vmul.f32 %v1572, 0.5
  %v1701 = vmul.f32 %v1573, 0.5
  %v1702 = vmul.f32 %v1574, 0.5
  %v1703 = vmul.f32 %v1575, 0.5
  %v1704 = vmul.f32 %v1576, 0.5
  %v1705 = vmul.f32 %v1577, 0.5
  %v1706 = vmul.f32 %v1578, 0.5
  %v1707 = vmul.f32 %v1579, 0.5
  %v1708 = vmul.f32 %v1580, 0.5
  %v1709 = vmul.f32 %v1581, 0.5
  %v1710 = vmul.f32 %v1582, 0.5
  %v1711 = vmul.f32 %v1583, 0.5
  %v1712 = vmul.f32 %v1584, 0.5
  %v1713 = vmul.f32 %v1585, 0.5
  %v1714 = vmul.f32 %v1586, 0.5
  %v1715 = vmul.f32 %v1587, 0.5
  %v1716 = vmul.f32 %v1588, 0.5
  %v1717 = vmul.f32 %v1589, 0.5
  %v1718 = vmul.f32 %v1590, 0.5
  %v1719 = vmul.f32 %v1591, 0.5
  %v1720 = vmul.f32 %v1592, 0.5
  %v1721 = vmul.f32 %v1593, 0.5
  %v1722 = vmul.f32 %v1594, 0.5
  %v1723 = vmul.f32 %v1595, 0.5
  %v1724 = vmul.f32 %v1596, 0.5
  %v1725 = vmul.f32 %v1597, 0.5
  %v1726 = vmul.f32 %v1598, 0.5
  %v1727 = vmul.f32 %v1599, 0.5
  %v1728 = vmul.f32 %v1600, 0.5
  %v1729 = vmul.f32 %v354, %v1601
  %v1730 = vmul.f32 %v356, %v1602
  %v1731 = vmul.f32 %v547, %v1603
  %v1732 = vmul.f32 %v549, %v1604
  %v1733 = vmul.f32 %v358, %v1605
  %v1734 = vmul.f32 %v360, %v1606
  %v1735 = vmul.f32 %v551, %v1607
  %v1736 = vmul.f32 %v553, %v1608
  %v1737 = vmul.f32 %v364, %v1609
  %v1738 = vmul.f32 %v366, %v1610
  %v1739 = vmul.f32 %v557, %v1611
  %v1740 = vmul.f32 %v559, %v1612
  %v1741 = vmul.f32 %v368, %v1613
  %v1742 = vmul.f32 %v370, %v1614
  %v1743 = vmul.f32 %v561, %v1615
  %v1744 = vmul.f32 %v563, %v1616
  %v1745 = vmul.f32 %v374, %v1617
  %v1746 = vmul.f32 %v376, %v1618
  %v1747 = vmul.f32 %v567, %v1619
  %v1748 = vmul.f32 %v569, %v1620
  %v1749 = vmul.f32 %v378, %v1621
  %v1750 = vmul.f32 %v380, %v1622
  %v1751 = vmul.f32 %v571, %v1623
  %v1752 = vmul.f32 %v573, %v1624
  %v1753 = vmul.f32 %v384, %v1625
  %v1754 = vmul.f32 %v386, %v1626
  %v1755 = vmul.f32 %v577, %v1627
  %v1756 = vmul.f32 %v579, %v1628
  %v1757 = vmul.f32 %v388, %v1629
  %v1758 = vmul.f32 %v390, %v1630
  %v1759 = vmul.f32 %v581, %v1631
  %v1760 = vmul.f32 %v583, %v1632
  %v1761 = vmul.f32 %v394, %v1633
  %v1762 = vmul.f32 %v396, %v1634
  %v1763 = vmul.f32 %v587, %v1635
  %v1764 = vmul.f32 %v589, %v1636
  %v1765 = vmul.f32 %v398, %v1637
  %v1766 = vmul.f32 %v400, %v1638
  %v1767 = vmul.f32 %v591, %v1639
  %v1768 = vmul.f32 %v593, %v1640
  %v1769 = vmul.f32 %v404, %v1641
  %v1770 = vmul.f32 %v406, %v1642
  %v1771 = vmul.f32 %v597, %v1643
  %v1772 = vmul.f32 %v599, %v1644
  %v1773 = vmul.f32 %v408, %v1645
  %v1774 = vmul.f32 %v410, %v1646
  %v1775 = vmul.f32 %v601, %v1647
  %v1776 = vmul.f32 %v603, %v1648
  %v1777 = vmul.f32 %v414, %v1649
  %v1778 = vmul.f32 %v416, %v1650
  %v1779 = vmul.f32 %v607, %v1651
  %v1780 = vmul.f32 %v609, %v1652
  %v1781 = vmul.f32 %v418, %v1653
  %v1782 = vmul.f32 %v420, %v1654
  %v1783 = vmul.f32 %v611, %v1655
  %v1784 = vmul.f32 %v613, %v1656
  %v1785 = vmul.f32 %v424, %v1657
  %v1786 = vmul.f32 %v426, %v1658
  %v1787 = vmul.f32 %v617, %v1659
  %v1788 = vmul.f32 %v619, %v1660
  %v1789 = vmul.f32 %v428, %v1661
  %v1790 = vmul.f32 %v430, %v1662
  %v1791 = vmul.f32 %v621, %v1663
  %v1792 = vmul.f32 %v623, %v1664
  %v1793 = vmul.f32 %v434, %v1665
  %v1794 = vmul.f32 %v436, %v1666
  %v1795 = vmul.f32 %v627, %v1667
  %v1796 = vmul.f32 %v629, %v1668
  %v1797 = vmul.f32 %v438, %v1669
  %v1798 = vmul.f32 %v440, %v1670
  %v1799 = vmul.f32 %v631, %v1671
  %v1800 = vmul.f32 %v633, %v1672
  %v1801 = vmul.f32 %v444, %v1673
  %v1802 = vmul.f32 %v446, %v1674
  %v1803 = vmul.f32 %v637, %v1675
  %v1804 = vmul.f32 %v639, %v1676
  %v1805 = vmul.f32 %v448, %v1677
  %v1806 = vmul.f32 %v450, %v1678
  %v1807 = vmul.f32 %v641, %v1679
  %v1808 = vmul.f32 %v643, %v1680
  %v1809 = vmul.f32 %v454, %v1681
  %v1810 = vmul.f32 %v456, %v1682
  %v1811 = vmul.f32 %v647, %v1683
  %v1812 = vmul.f32 %v649, %v1684
  %v1813 = vmul.f32 %v458, %v1685
  %v1814 = vmul.f32 %v460, %v1686
  %v1815 = vmul.f32 %v651, %v1687
  %v1816 = vmul.f32 %v653, %v1688
  %v1817 = vmul.f32 %v464, %v1689
  %v1818 = vmul.f32 %v466, %v1690
  %v1819 = vmul.f32 %v657, %v1691
  %v1820 = vmul.f32 %v659, %v1692
  %v1821 = vmul.f32 %v468, %v1693
  %v1822 = vmul.f32 %v470, %v1694
  %v1823 = vmul.f32 %v661, %v1695
  %v1824 = vmul.f32 %v663, %v1696
  %v1825 = vmul.f32 %v474, %v1697
  %v1826 = vmul.f32 %v476, %v1698
  %v1827 = vmul.f32 %v667, %v1699
  %v1828 = vmul.f32 %v669, %v1700
  %v1829 = vmul.f32 %v478, %v1701
  %v1830 = vmul.f32 %v480, %v1702
  %v1831 = vmul.f32 %v671, %v1703
  %v1832 = vmul.f32 %v673, %v1704
  %v1833 = vmul.f32 %v484, %v1705
  %v1834 = vmul.f32 %v486, %v1706
  %v1835 = vmul.f32 %v677, %v1707
  %v1836 = vmul.f32 %v679, %v1708
  %v1837 = vmul.f32 %v488, %v1709
  %v1838 = vmul.f32 %v490, %v1710
  %v1839 = vmul.f32 %v681, %v1711
  %v1840 = vmul.f32 %v683, %v1712
  %v1841 = vmul.f32 %v494, %v1713
  %v1842 = vmul.f32 %v496, %v1714
  %v1843 = vmul.f32 %v687, %v1715
  %v1844 = vmul.f32 %v689, %v1716
  %v1845 = vmul.f32 %v498, %v1717
  %v1846 = vmul.f32 %v500, %v1718
  %v1847 = vmul.f32 %v691, %v1719
  %v1848 = vmul.f32 %v693, %v1720
  %v1849 = vmul.f32 %v504, %v1721
  %v1850 = vmul.f32 %v506, %v1722
  %v1851 = vmul.f32 %v697, %v1723
  %v1852 = vmul.f32 %v699, %v1724
  %v1853 = vmul.f32 %v508, %v1725
  %v1854 = vmul.f32 %v510, %v1726
  %v1855 = vmul.f32 %v701, %v1727
  %v1856 = vmul.f32 %v703, %v1728
  %v1857 = vld [vmem:[%s5] sm:$0xff]
  %v1858 = vld [vmem:[%s5 + $0x8] sm:$0xff]
  %v1859 = vld [vmem:[%s5 + $0x10] sm:$0xff]
  %v1860 = vld [vmem:[%s5 + $0x18] sm:$0xff]
  %v1861 = vld [vmem:[%s5 + $0x20] sm:$0xff]
  %v1862 = vld [vmem:[%s5 + $0x28] sm:$0xff]
  %v1863 = vld [vmem:[%s5 + $0x30] sm:$0xff]
  %v1864 = vld [vmem:[%s5 + $0x38] sm:$0xff]
  %v1865 = vld [vmem:[%s5 + $0x40] sm:$0xff]
  %v1866 = vld [vmem:[%s5 + $0x48] sm:$0xff]
  %v1867 = vld [vmem:[%s5 + $0x50] sm:$0xff]
  %v1868 = vld [vmem:[%s5 + $0x58] sm:$0xff]
  %v1869 = vld [vmem:[%s5 + $0x60] sm:$0xff]
  %v1870 = vld [vmem:[%s5 + $0x68] sm:$0xff]
  %v1871 = vld [vmem:[%s5 + $0x70] sm:$0xff]
  %v1872 = vld [vmem:[%s5 + $0x78] sm:$0xff]
  %v1873 = vld [vmem:[%s5 + $0x80] sm:$0xff]
  %v1874 = vld [vmem:[%s5 + $0x88] sm:$0xff]
  %v1875 = vld [vmem:[%s5 + $0x90] sm:$0xff]
  %v1876 = vld [vmem:[%s5 + $0x98] sm:$0xff]
  %v1877 = vld [vmem:[%s5 + $0xa0] sm:$0xff]
  %v1878 = vld [vmem:[%s5 + $0xa8] sm:$0xff]
  %v1879 = vld [vmem:[%s5 + $0xb0] sm:$0xff]
  %v1880 = vld [vmem:[%s5 + $0xb8] sm:$0xff]
  %v1881 = vld [vmem:[%s5 + $0xc0] sm:$0xff]
  %v1882 = vld [vmem:[%s5 + $0xc8] sm:$0xff]
  %v1883 = vld [vmem:[%s5 + $0xd0] sm:$0xff]
  %v1884 = vld [vmem:[%s5 + $0xd8] sm:$0xff]
  %v1885 = vld [vmem:[%s5 + $0xe0] sm:$0xff]
  %v1886 = vld [vmem:[%s5 + $0xe8] sm:$0xff]
  %v1887 = vld [vmem:[%s5 + $0xf0] sm:$0xff]
  %v1888 = vld [vmem:[%s5 + $0xf8] sm:$0xff]
  %v1889 = vpack.c.bf16 %v1733, %v1729
  %v1890 = vpack.c.bf16 %v1734, %v1730
  %v1891 = vpack.c.bf16 %v1735, %v1731
  %v1892 = vpack.c.bf16 %v1736, %v1732
  %v1893 = vpack.c.bf16 %v1741, %v1737
  %v1894 = vpack.c.bf16 %v1742, %v1738
  %v1895 = vpack.c.bf16 %v1743, %v1739
  %v1896 = vpack.c.bf16 %v1744, %v1740
  %v1897 = vpack.c.bf16 %v1749, %v1745
  %v1898 = vpack.c.bf16 %v1750, %v1746
  %v1899 = vpack.c.bf16 %v1751, %v1747
  %v1900 = vpack.c.bf16 %v1752, %v1748
  %v1901 = vpack.c.bf16 %v1757, %v1753
  %v1902 = vpack.c.bf16 %v1758, %v1754
  %v1903 = vpack.c.bf16 %v1759, %v1755
  %v1904 = vpack.c.bf16 %v1760, %v1756
  %v1905 = vpack.c.bf16 %v1765, %v1761
  %v1906 = vpack.c.bf16 %v1766, %v1762
  %v1907 = vpack.c.bf16 %v1767, %v1763
  %v1908 = vpack.c.bf16 %v1768, %v1764
  %v1909 = vpack.c.bf16 %v1773, %v1769
  %v1910 = vpack.c.bf16 %v1774, %v1770
  %v1911 = vpack.c.bf16 %v1775, %v1771
  %v1912 = vpack.c.bf16 %v1776, %v1772
  %v1913 = vpack.c.bf16 %v1781, %v1777
  %v1914 = vpack.c.bf16 %v1782, %v1778
  %v1915 = vpack.c.bf16 %v1783, %v1779
  %v1916 = vpack.c.bf16 %v1784, %v1780
  %v1917 = vpack.c.bf16 %v1789, %v1785
  %v1918 = vpack.c.bf16 %v1790, %v1786
  %v1919 = vpack.c.bf16 %v1791, %v1787
  %v1920 = vpack.c.bf16 %v1792, %v1788
  %v1921 = vpack.c.bf16 %v1797, %v1793
  %v1922 = vpack.c.bf16 %v1798, %v1794
  %v1923 = vpack.c.bf16 %v1799, %v1795
  %v1924 = vpack.c.bf16 %v1800, %v1796
  %v1925 = vpack.c.bf16 %v1805, %v1801
  %v1926 = vpack.c.bf16 %v1806, %v1802
  %v1927 = vpack.c.bf16 %v1807, %v1803
  %v1928 = vpack.c.bf16 %v1808, %v1804
  %v1929 = vpack.c.bf16 %v1813, %v1809
  %v1930 = vpack.c.bf16 %v1814, %v1810
  %v1931 = vpack.c.bf16 %v1815, %v1811
  %v1932 = vpack.c.bf16 %v1816, %v1812
  %v1933 = vpack.c.bf16 %v1821, %v1817
  %v1934 = vpack.c.bf16 %v1822, %v1818
  %v1935 = vpack.c.bf16 %v1823, %v1819
  %v1936 = vpack.c.bf16 %v1824, %v1820
  %v1937 = vpack.c.bf16 %v1829, %v1825
  %v1938 = vpack.c.bf16 %v1830, %v1826
  %v1939 = vpack.c.bf16 %v1831, %v1827
  %v1940 = vpack.c.bf16 %v1832, %v1828
  %v1941 = vpack.c.bf16 %v1837, %v1833
  %v1942 = vpack.c.bf16 %v1838, %v1834
  %v1943 = vpack.c.bf16 %v1839, %v1835
  %v1944 = vpack.c.bf16 %v1840, %v1836
  %v1945 = vpack.c.bf16 %v1845, %v1841
  %v1946 = vpack.c.bf16 %v1846, %v1842
  %v1947 = vpack.c.bf16 %v1847, %v1843
  %v1948 = vpack.c.bf16 %v1848, %v1844
  %v1949 = vpack.c.bf16 %v1853, %v1849
  %v1950 = vpack.c.bf16 %v1854, %v1850
  %v1951 = vpack.c.bf16 %v1855, %v1851
  %v1952 = vpack.c.bf16 %v1856, %v1852
  %v1953 = vld [vmem:[%s3] sm:$0xf]
  %v1954 = vld [vmem:[%s3 + $0x4] sm:$0xf]
  %v1955 = vld [vmem:[%s3 + $0x8] sm:$0xf]
  %v1956 = vld [vmem:[%s3 + $0xc] sm:$0xf]
  %v1957 = vld [vmem:[%s3 + $0x10] sm:$0xf]
  %v1958 = vld [vmem:[%s3 + $0x14] sm:$0xf]
  %v1959 = vld [vmem:[%s3 + $0x18] sm:$0xf]
  %v1960 = vld [vmem:[%s3 + $0x1c] sm:$0xf]
  %v1961 = vld [vmem:[%s3 + $0x20] sm:$0xf]
  %v1962 = vld [vmem:[%s3 + $0x24] sm:$0xf]
  %v1963 = vld [vmem:[%s3 + $0x28] sm:$0xf]
  %v1964 = vld [vmem:[%s3 + $0x2c] sm:$0xf]
  %v1965 = vld [vmem:[%s3 + $0x30] sm:$0xf]
  %v1966 = vld [vmem:[%s3 + $0x34] sm:$0xf]
  %v1967 = vld [vmem:[%s3 + $0x38] sm:$0xf]
  %v1968 = vld [vmem:[%s3 + $0x3c] sm:$0xf]
  %v1969 = vld [vmem:[%s3 + $0x40] sm:$0xf]
  %v1970 = vld [vmem:[%s3 + $0x44] sm:$0xf]
  %v1971 = vld [vmem:[%s3 + $0x48] sm:$0xf]
  %v1972 = vld [vmem:[%s3 + $0x4c] sm:$0xf]
  %v1973 = vld [vmem:[%s3 + $0x50] sm:$0xf]
  %v1974 = vld [vmem:[%s3 + $0x54] sm:$0xf]
  %v1975 = vld [vmem:[%s3 + $0x58] sm:$0xf]
  %v1976 = vld [vmem:[%s3 + $0x5c] sm:$0xf]
  %v1977 = vld [vmem:[%s3 + $0x60] sm:$0xf]
  %v1978 = vld [vmem:[%s3 + $0x64] sm:$0xf]
  %v1979 = vld [vmem:[%s3 + $0x68] sm:$0xf]
  %v1980 = vld [vmem:[%s3 + $0x6c] sm:$0xf]
  %v1981 = vld [vmem:[%s3 + $0x70] sm:$0xf]
  %v1982 = vld [vmem:[%s3 + $0x74] sm:$0xf]
  %v1983 = vld [vmem:[%s3 + $0x78] sm:$0xf]
  %v1984 = vld [vmem:[%s3 + $0x7c] sm:$0xf]
  %v1985 = vld [vmem:[%s3 + $0x80] sm:$0xf]
  %v1986 = vld [vmem:[%s3 + $0x84] sm:$0xf]
  %v1987 = vld [vmem:[%s3 + $0x88] sm:$0xf]
  %v1988 = vld [vmem:[%s3 + $0x8c] sm:$0xf]
  %v1989 = vld [vmem:[%s3 + $0x90] sm:$0xf]
  %v1990 = vld [vmem:[%s3 + $0x94] sm:$0xf]
  %v1991 = vld [vmem:[%s3 + $0x98] sm:$0xf]
  %v1992 = vld [vmem:[%s3 + $0x9c] sm:$0xf]
  %v1993 = vld [vmem:[%s3 + $0xa0] sm:$0xf]
  %v1994 = vld [vmem:[%s3 + $0xa4] sm:$0xf]
  %v1995 = vld [vmem:[%s3 + $0xa8] sm:$0xf]
  %v1996 = vld [vmem:[%s3 + $0xac] sm:$0xf]
  %v1997 = vld [vmem:[%s3 + $0xb0] sm:$0xf]
  %v1998 = vld [vmem:[%s3 + $0xb4] sm:$0xf]
  %v1999 = vld [vmem:[%s3 + $0xb8] sm:$0xf]
  %v2000 = vld [vmem:[%s3 + $0xbc] sm:$0xf]
  %v2001 = vld [vmem:[%s3 + $0xc0] sm:$0xf]
  %v2002 = vld [vmem:[%s3 + $0xc4] sm:$0xf]
  %v2003 = vld [vmem:[%s3 + $0xc8] sm:$0xf]
  %v2004 = vld [vmem:[%s3 + $0xcc] sm:$0xf]
  %v2005 = vld [vmem:[%s3 + $0xd0] sm:$0xf]
  %v2006 = vld [vmem:[%s3 + $0xd4] sm:$0xf]
  %v2007 = vld [vmem:[%s3 + $0xd8] sm:$0xf]
  %v2008 = vld [vmem:[%s3 + $0xdc] sm:$0xf]
  %v2009 = vld [vmem:[%s3 + $0xe0] sm:$0xf]
  %v2010 = vld [vmem:[%s3 + $0xe4] sm:$0xf]
  %v2011 = vld [vmem:[%s3 + $0xe8] sm:$0xf]
  %v2012 = vld [vmem:[%s3 + $0xec] sm:$0xf]
  %v2013 = vld [vmem:[%s3 + $0xf0] sm:$0xf]
  %v2014 = vld [vmem:[%s3 + $0xf4] sm:$0xf]
  %v2015 = vld [vmem:[%s3 + $0xf8] sm:$0xf]
  %v2016 = vld [vmem:[%s3 + $0xfc] sm:$0xf]
  %v2081 = vunpack.c.l.b16 %v1953
  %v2082 = vunpack.c.l.b16 %v1954
  %v2083 = vunpack.c.l.b16 %v1955
  %v2084 = vunpack.c.l.b16 %v1956
  %v2085 = vunpack.c.l.b16 %v1957
  %v2086 = vunpack.c.l.b16 %v1958
  %v2087 = vunpack.c.l.b16 %v1959
  %v2088 = vunpack.c.l.b16 %v1960
  %v2089 = vunpack.c.l.b16 %v1961
  %v2090 = vunpack.c.l.b16 %v1962
  %v2091 = vunpack.c.l.b16 %v1963
  %v2092 = vunpack.c.l.b16 %v1964
  %v2093 = vunpack.c.l.b16 %v1965
  %v2094 = vunpack.c.l.b16 %v1966
  %v2095 = vunpack.c.l.b16 %v1967
  %v2096 = vunpack.c.l.b16 %v1968
  %v2097 = vunpack.c.l.b16 %v1969
  %v2098 = vunpack.c.l.b16 %v1970
  %v2099 = vunpack.c.l.b16 %v1971
  %v2100 = vunpack.c.l.b16 %v1972
  %v2101 = vunpack.c.l.b16 %v1973
  %v2102 = vunpack.c.l.b16 %v1974
  %v2103 = vunpack.c.l.b16 %v1975
  %v2104 = vunpack.c.l.b16 %v1976
  %v2105 = vunpack.c.l.b16 %v1977
  %v2106 = vunpack.c.l.b16 %v1978
  %v2107 = vunpack.c.l.b16 %v1979
  %v2108 = vunpack.c.l.b16 %v1980
  %v2109 = vunpack.c.l.b16 %v1981
  %v2110 = vunpack.c.l.b16 %v1982
  %v2111 = vunpack.c.l.b16 %v1983
  %v2112 = vunpack.c.l.b16 %v1984
  %v2113 = vunpack.c.l.b16 %v1985
  %v2114 = vunpack.c.l.b16 %v1986
  %v2115 = vunpack.c.l.b16 %v1987
  %v2116 = vunpack.c.l.b16 %v1988
  %v2117 = vunpack.c.l.b16 %v1989
  %v2118 = vunpack.c.l.b16 %v1990
  %v2119 = vunpack.c.l.b16 %v1991
  %v2120 = vunpack.c.l.b16 %v1992
  %v2121 = vunpack.c.l.b16 %v1993
  %v2122 = vunpack.c.l.b16 %v1994
  %v2123 = vunpack.c.l.b16 %v1995
  %v2124 = vunpack.c.l.b16 %v1996
  %v2125 = vunpack.c.l.b16 %v1997
  %v2126 = vunpack.c.l.b16 %v1998
  %v2127 = vunpack.c.l.b16 %v1999
  %v2128 = vunpack.c.l.b16 %v2000
  %v2129 = vunpack.c.l.b16 %v2001
  %v2130 = vunpack.c.l.b16 %v2002
  %v2131 = vunpack.c.l.b16 %v2003
  %v2132 = vunpack.c.l.b16 %v2004
  %v2133 = vunpack.c.l.b16 %v2005
  %v2134 = vunpack.c.l.b16 %v2006
  %v2135 = vunpack.c.l.b16 %v2007
  %v2136 = vunpack.c.l.b16 %v2008
  %v2137 = vunpack.c.l.b16 %v2009
  %v2138 = vunpack.c.l.b16 %v2010
  %v2139 = vunpack.c.l.b16 %v2011
  %v2140 = vunpack.c.l.b16 %v2012
  %v2141 = vunpack.c.l.b16 %v2013
  %v2142 = vunpack.c.l.b16 %v2014
  %v2143 = vunpack.c.l.b16 %v2015
  %v2144 = vunpack.c.l.b16 %v2016
  %v2145 = vpack.c.b16 %v2082, %v2081
  %v2146 = vpack.c.b16 %v2084, %v2083
  %v2147 = vpack.c.b16 %v2086, %v2085
  %v2148 = vpack.c.b16 %v2088, %v2087
  %v2149 = vpack.c.b16 %v2090, %v2089
  %v2150 = vpack.c.b16 %v2092, %v2091
  %v2151 = vpack.c.b16 %v2094, %v2093
  %v2152 = vpack.c.b16 %v2096, %v2095
  %v2153 = vpack.c.b16 %v2098, %v2097
  %v2154 = vpack.c.b16 %v2100, %v2099
  %v2155 = vpack.c.b16 %v2102, %v2101
  %v2156 = vpack.c.b16 %v2104, %v2103
  %v2157 = vpack.c.b16 %v2106, %v2105
  %v2158 = vpack.c.b16 %v2108, %v2107
  %v2159 = vpack.c.b16 %v2110, %v2109
  %v2160 = vpack.c.b16 %v2112, %v2111
  %v2161 = vpack.c.b16 %v2114, %v2113
  %v2162 = vpack.c.b16 %v2116, %v2115
  %v2163 = vpack.c.b16 %v2118, %v2117
  %v2164 = vpack.c.b16 %v2120, %v2119
  %v2165 = vpack.c.b16 %v2122, %v2121
  %v2166 = vpack.c.b16 %v2124, %v2123
  %v2167 = vpack.c.b16 %v2126, %v2125
  %v2168 = vpack.c.b16 %v2128, %v2127
  %v2169 = vpack.c.b16 %v2130, %v2129
  %v2170 = vpack.c.b16 %v2132, %v2131
  %v2171 = vpack.c.b16 %v2134, %v2133
  %v2172 = vpack.c.b16 %v2136, %v2135
  %v2173 = vpack.c.b16 %v2138, %v2137
  %v2174 = vpack.c.b16 %v2140, %v2139
  %v2175 = vpack.c.b16 %v2142, %v2141
  %v2176 = vpack.c.b16 %v2144, %v2143
  %2209 = vmatprep.subr.bf16.mxu0 0
  %2210 = vmatpush1.bf16.msra.mxu0 %v2145
  %2211 = vmatprep.subr.bf16.mxu0 0
  %2212 = vmatpush1.bf16.msra.mxu0 %v2146
  %2213 = vmatprep.subr.bf16.mxu0 0
  %2214 = vmatpush1.bf16.msra.mxu0 %v2147
  %2215 = vmatprep.subr.bf16.mxu0 0
  %2216 = vmatpush1.bf16.msra.mxu0 %v2148
  %2217 = vmatprep.subr.bf16.mxu0 0
  %2218 = vmatpush1.bf16.msra.mxu0 %v2149
  %2219 = vmatprep.subr.bf16.mxu0 0
  %2220 = vmatpush1.bf16.msra.mxu0 %v2150
  %2221 = vmatprep.subr.bf16.mxu0 0
  %2222 = vmatpush1.bf16.msra.mxu0 %v2151
  %2223 = vmatprep.subr.bf16.mxu0 0
  %2224 = vmatpush1.bf16.msra.mxu0 %v2152
  %2225 = vmatprep.subr.bf16.mxu0 0
  %2226 = vmatpush1.bf16.msra.mxu0 %v2153
  %2227 = vmatprep.subr.bf16.mxu0 0
  %2228 = vmatpush1.bf16.msra.mxu0 %v2154
  %2229 = vmatprep.subr.bf16.mxu0 0
  %2230 = vmatpush1.bf16.msra.mxu0 %v2155
  %2231 = vmatprep.subr.bf16.mxu0 0
  %2232 = vmatpush1.bf16.msra.mxu0 %v2156
  %2233 = vmatprep.subr.bf16.mxu0 0
  %2234 = vmatpush1.bf16.msra.mxu0 %v2157
  %2235 = vmatprep.subr.bf16.mxu0 0
  %2236 = vmatpush1.bf16.msra.mxu0 %v2158
  %2237 = vmatprep.subr.bf16.mxu0 0
  %2238 = vmatpush1.bf16.msra.mxu0 %v2159
  %2239 = vmatprep.subr.bf16.mxu0 0
  %2240 = vmatpush1.bf16.msra.mxu0 %v2160
  %2241 = vmatprep.mubr.bf16.mxu0 %v1890
  %2242 = vmatmul.mubr.bf16.gmra.mrb[0].mxu0 %v1889
  %v2243 = vpop.f32.mrb[0].mxu0
  %v2244 = vadd.f32 0.0, %v2243
  %v2245 = vpop.f32.mrb[0].mxu0
  %v2246 = vpop.f32.mrb[0].mxu0
  %v2247 = vadd.f32 0.0, %v2246
  %v2248 = vpop.f32.mrb[0].mxu0
  %2249 = vmatprep.mubr.bf16.mxu0 %v1894
  %2250 = vmatmul.mubr.bf16.gmra.mrb[0].mxu0 %v1893
  %v2251 = vpop.f32.mrb[0].mxu0
  %v2252 = vadd.f32 0.0, %v2251
  %v2253 = vpop.f32.mrb[0].mxu0
  %v2254 = vpop.f32.mrb[0].mxu0
  %v2255 = vadd.f32 0.0, %v2254
  %v2256 = vpop.f32.mrb[0].mxu0
  %2257 = vmatprep.mubr.bf16.mxu0 %v1898
  %2258 = vmatmul.mubr.bf16.gmra.mrb[0].mxu0 %v1897
  %v2259 = vpop.f32.mrb[0].mxu0
  %v2260 = vadd.f32 0.0, %v2259
  %v2261 = vpop.f32.mrb[0].mxu0
  %v2262 = vpop.f32.mrb[0].mxu0
  %v2263 = vadd.f32 0.0, %v2262
  %v2264 = vpop.f32.mrb[0].mxu0
  %2265 = vmatprep.mubr.bf16.mxu0 %v1902
  %2266 = vmatmul.mubr.bf16.gmra.mrb[0].mxu0 %v1901
  %v2267 = vpop.f32.mrb[0].mxu0
  %v2268 = vadd.f32 0.0, %v2267
  %v2269 = vpop.f32.mrb[0].mxu0
  %v2270 = vpop.f32.mrb[0].mxu0
  %v2271 = vadd.f32 0.0, %v2270
  %v2272 = vpop.f32.mrb[0].mxu0
  %2273 = vmatprep.mubr.bf16.mxu0 %v1906
  %2274 = vmatmul.mubr.bf16.gmra.mrb[0].mxu0 %v1905
  %v2275 = vpop.f32.mrb[0].mxu0
  %v2276 = vadd.f32 0.0, %v2275
  %v2277 = vpop.f32.mrb[0].mxu0
  %v2278 = vpop.f32.mrb[0].mxu0
  %v2279 = vadd.f32 0.0, %v2278
  %v2280 = vpop.f32.mrb[0].mxu0
  %2281 = vmatprep.mubr.bf16.mxu0 %v1910
  %2282 = vmatmul.mubr.bf16.gmra.mrb[0].mxu0 %v1909
  %v2283 = vpop.f32.mrb[0].mxu0
  %v2284 = vadd.f32 0.0, %v2283
  %v2285 = vpop.f32.mrb[0].mxu0
  %v2286 = vpop.f32.mrb[0].mxu0
  %v2287 = vadd.f32 0.0, %v2286
  %v2288 = vpop.f32.mrb[0].mxu0
  %2289 = vmatprep.mubr.bf16.mxu0 %v1914
  %2290 = vmatmul.mubr.bf16.gmra.mrb[0].mxu0 %v1913
  %v2291 = vpop.f32.mrb[0].mxu0
  %v2292 = vadd.f32 0.0, %v2291
  %v2293 = vpop.f32.mrb[0].mxu0
  %v2294 = vpop.f32.mrb[0].mxu0
  %v2295 = vadd.f32 0.0, %v2294
  %v2296 = vpop.f32.mrb[0].mxu0
  %2297 = vmatprep.mubr.bf16.mxu0 %v1918
  %2298 = vmatmul.mubr.bf16.gmra.mrb[0].mxu0 %v1917
  %v2299 = vpop.f32.mrb[0].mxu0
  %v2300 = vadd.f32 0.0, %v2299
  %v2301 = vpop.f32.mrb[0].mxu0
  %v2302 = vpop.f32.mrb[0].mxu0
  %v2303 = vadd.f32 0.0, %v2302
  %v2304 = vpop.f32.mrb[0].mxu0
  %2305 = vmatprep.mubr.bf16.mxu0 %v1922
  %2306 = vmatmul.mubr.bf16.gmra.mrb[0].mxu0 %v1921
  %v2307 = vpop.f32.mrb[0].mxu0
  %v2308 = vadd.f32 0.0, %v2307
  %v2309 = vpop.f32.mrb[0].mxu0
  %v2310 = vpop.f32.mrb[0].mxu0
  %v2311 = vadd.f32 0.0, %v2310
  %v2312 = vpop.f32.mrb[0].mxu0
  %2313 = vmatprep.mubr.bf16.mxu0 %v1926
  %2314 = vmatmul.mubr.bf16.gmra.mrb[0].mxu0 %v1925
  %v2315 = vpop.f32.mrb[0].mxu0
  %v2316 = vadd.f32 0.0, %v2315
  %v2317 = vpop.f32.mrb[0].mxu0
  %v2318 = vpop.f32.mrb[0].mxu0
  %v2319 = vadd.f32 0.0, %v2318
  %v2320 = vpop.f32.mrb[0].mxu0
  %2321 = vmatprep.mubr.bf16.mxu0 %v1930
  %2322 = vmatmul.mubr.bf16.gmra.mrb[0].mxu0 %v1929
  %v2323 = vpop.f32.mrb[0].mxu0
  %v2324 = vadd.f32 0.0, %v2323
  %v2325 = vpop.f32.mrb[0].mxu0
  %v2326 = vpop.f32.mrb[0].mxu0
  %v2327 = vadd.f32 0.0, %v2326
  %v2328 = vpop.f32.mrb[0].mxu0
  %2329 = vmatprep.mubr.bf16.mxu0 %v1934
  %2330 = vmatmul.mubr.bf16.gmra.mrb[0].mxu0 %v1933
  %v2331 = vpop.f32.mrb[0].mxu0
  %v2332 = vadd.f32 0.0, %v2331
  %v2333 = vpop.f32.mrb[0].mxu0
  %v2334 = vpop.f32.mrb[0].mxu0
  %v2335 = vadd.f32 0.0, %v2334
  %v2336 = vpop.f32.mrb[0].mxu0
  %2337 = vmatprep.mubr.bf16.mxu0 %v1938
  %2338 = vmatmul.mubr.bf16.gmra.mrb[0].mxu0 %v1937
  %v2339 = vpop.f32.mrb[0].mxu0
  %v2340 = vadd.f32 0.0, %v2339
  %v2341 = vpop.f32.mrb[0].mxu0
  %v2342 = vpop.f32.mrb[0].mxu0
  %v2343 = vadd.f32 0.0, %v2342
  %v2344 = vpop.f32.mrb[0].mxu0
  %2345 = vmatprep.mubr.bf16.mxu0 %v1942
  %2346 = vmatmul.mubr.bf16.gmra.mrb[0].mxu0 %v1941
  %v2347 = vpop.f32.mrb[0].mxu0
  %v2348 = vadd.f32 0.0, %v2347
  %v2349 = vpop.f32.mrb[0].mxu0
  %v2350 = vpop.f32.mrb[0].mxu0
  %v2351 = vadd.f32 0.0, %v2350
  %v2352 = vpop.f32.mrb[0].mxu0
  %2353 = vmatprep.mubr.bf16.mxu0 %v1946
  %2354 = vmatmul.mubr.bf16.gmra.mrb[0].mxu0 %v1945
  %v2355 = vpop.f32.mrb[0].mxu0
  %v2356 = vadd.f32 0.0, %v2355
  %v2357 = vpop.f32.mrb[0].mxu0
  %v2358 = vpop.f32.mrb[0].mxu0
  %v2359 = vadd.f32 0.0, %v2358
  %v2360 = vpop.f32.mrb[0].mxu0
  %2361 = vmatprep.mubr.bf16.mxu0 %v1950
  %2362 = vmatmul.mubr.bf16.gmra.mrb[0].mxu0 %v1949
  %v2363 = vpop.f32.mrb[0].mxu0
  %v2364 = vadd.f32 0.0, %v2363
  %v2365 = vpop.f32.mrb[0].mxu0
  %v2366 = vpop.f32.mrb[0].mxu0
  %v2367 = vadd.f32 0.0, %v2366
  %v2368 = vpop.f32.mrb[0].mxu0
  %2369 = vdwg.mxu0
  %2370 = vmatprep.subr.bf16.mxu0 0
  %2371 = vmatpush1.bf16.msra.mxu0 %v2161
  %2372 = vmatprep.subr.bf16.mxu0 0
  %2373 = vmatpush1.bf16.msra.mxu0 %v2162
  %2374 = vmatprep.subr.bf16.mxu0 0
  %2375 = vmatpush1.bf16.msra.mxu0 %v2163
  %2376 = vmatprep.subr.bf16.mxu0 0
  %2377 = vmatpush1.bf16.msra.mxu0 %v2164
  %2378 = vmatprep.subr.bf16.mxu0 0
  %2379 = vmatpush1.bf16.msra.mxu0 %v2165
  %2380 = vmatprep.subr.bf16.mxu0 0
  %2381 = vmatpush1.bf16.msra.mxu0 %v2166
  %2382 = vmatprep.subr.bf16.mxu0 0
  %2383 = vmatpush1.bf16.msra.mxu0 %v2167
  %2384 = vmatprep.subr.bf16.mxu0 0
  %2385 = vmatpush1.bf16.msra.mxu0 %v2168
  %2386 = vmatprep.subr.bf16.mxu0 0
  %2387 = vmatpush1.bf16.msra.mxu0 %v2169
  %2388 = vmatprep.subr.bf16.mxu0 0
  %2389 = vmatpush1.bf16.msra.mxu0 %v2170
  %2390 = vmatprep.subr.bf16.mxu0 0
  %2391 = vmatpush1.bf16.msra.mxu0 %v2171
  %2392 = vmatprep.subr.bf16.mxu0 0
  %2393 = vmatpush1.bf16.msra.mxu0 %v2172
  %2394 = vmatprep.subr.bf16.mxu0 0
  %2395 = vmatpush1.bf16.msra.mxu0 %v2173
  %2396 = vmatprep.subr.bf16.mxu0 0
  %2397 = vmatpush1.bf16.msra.mxu0 %v2174
  %2398 = vmatprep.subr.bf16.mxu0 0
  %2399 = vmatpush1.bf16.msra.mxu0 %v2175
  %2400 = vmatprep.subr.bf16.mxu0 0
  %2401 = vmatpush1.bf16.msra.mxu0 %v2176
  %2402 = vmatprep.mubr.bf16.mxu0 %v1892
  %2403 = vmatmul.mubr.bf16.gmra.mrb[0].mxu0 %v1891
  %v2404 = vpop.f32.mrb[0].mxu0
  %v2405 = vadd.f32 %v2244, %v2404
  %v2406 = vpop.f32.mrb[0].mxu0
  %v2407 = vpop.f32.mrb[0].mxu0
  %v2408 = vadd.f32 %v2247, %v2407
  %v2409 = vpop.f32.mrb[0].mxu0
  %2410 = vmatprep.mubr.bf16.mxu0 %v1896
  %2411 = vmatmul.mubr.bf16.gmra.mrb[0].mxu0 %v1895
  %v2412 = vpop.f32.mrb[0].mxu0
  %v2413 = vadd.f32 %v2252, %v2412
  %v2414 = vpop.f32.mrb[0].mxu0
  %v2415 = vpop.f32.mrb[0].mxu0
  %v2416 = vadd.f32 %v2255, %v2415
  %v2417 = vpop.f32.mrb[0].mxu0
  %2418 = vmatprep.mubr.bf16.mxu0 %v1900
  %2419 = vmatmul.mubr.bf16.gmra.mrb[0].mxu0 %v1899
  %v2420 = vpop.f32.mrb[0].mxu0
  %v2421 = vadd.f32 %v2260, %v2420
  %v2422 = vpop.f32.mrb[0].mxu0
  %v2423 = vpop.f32.mrb[0].mxu0
  %v2424 = vadd.f32 %v2263, %v2423
  %v2425 = vpop.f32.mrb[0].mxu0
  %2426 = vmatprep.mubr.bf16.mxu0 %v1904
  %2427 = vmatmul.mubr.bf16.gmra.mrb[0].mxu0 %v1903
  %v2428 = vpop.f32.mrb[0].mxu0
  %v2429 = vadd.f32 %v2268, %v2428
  %v2430 = vpop.f32.mrb[0].mxu0
  %v2431 = vpop.f32.mrb[0].mxu0
  %v2432 = vadd.f32 %v2271, %v2431
  %v2433 = vpop.f32.mrb[0].mxu0
  %2434 = vmatprep.mubr.bf16.mxu0 %v1908
  %2435 = vmatmul.mubr.bf16.gmra.mrb[0].mxu0 %v1907
  %v2436 = vpop.f32.mrb[0].mxu0
  %v2437 = vadd.f32 %v2276, %v2436
  %v2438 = vpop.f32.mrb[0].mxu0
  %v2439 = vpop.f32.mrb[0].mxu0
  %v2440 = vadd.f32 %v2279, %v2439
  %v2441 = vpop.f32.mrb[0].mxu0
  %2442 = vmatprep.mubr.bf16.mxu0 %v1912
  %2443 = vmatmul.mubr.bf16.gmra.mrb[0].mxu0 %v1911
  %v2444 = vpop.f32.mrb[0].mxu0
  %v2445 = vadd.f32 %v2284, %v2444
  %v2446 = vpop.f32.mrb[0].mxu0
  %v2447 = vpop.f32.mrb[0].mxu0
  %v2448 = vadd.f32 %v2287, %v2447
  %v2449 = vpop.f32.mrb[0].mxu0
  %2450 = vmatprep.mubr.bf16.mxu0 %v1916
  %2451 = vmatmul.mubr.bf16.gmra.mrb[0].mxu0 %v1915
  %v2452 = vpop.f32.mrb[0].mxu0
  %v2453 = vadd.f32 %v2292, %v2452
  %v2454 = vpop.f32.mrb[0].mxu0
  %v2455 = vpop.f32.mrb[0].mxu0
  %v2456 = vadd.f32 %v2295, %v2455
  %v2457 = vpop.f32.mrb[0].mxu0
  %2458 = vmatprep.mubr.bf16.mxu0 %v1920
  %2459 = vmatmul.mubr.bf16.gmra.mrb[0].mxu0 %v1919
  %v2460 = vpop.f32.mrb[0].mxu0
  %v2461 = vadd.f32 %v2300, %v2460
  %v2462 = vpop.f32.mrb[0].mxu0
  %v2463 = vpop.f32.mrb[0].mxu0
  %v2464 = vadd.f32 %v2303, %v2463
  %v2465 = vpop.f32.mrb[0].mxu0
  %2466 = vmatprep.mubr.bf16.mxu0 %v1924
  %2467 = vmatmul.mubr.bf16.gmra.mrb[0].mxu0 %v1923
  %v2468 = vpop.f32.mrb[0].mxu0
  %v2469 = vadd.f32 %v2308, %v2468
  %v2470 = vpop.f32.mrb[0].mxu0
  %v2471 = vpop.f32.mrb[0].mxu0
  %v2472 = vadd.f32 %v2311, %v2471
  %v2473 = vpop.f32.mrb[0].mxu0
  %2474 = vmatprep.mubr.bf16.mxu0 %v1928
  %2475 = vmatmul.mubr.bf16.gmra.mrb[0].mxu0 %v1927
  %v2476 = vpop.f32.mrb[0].mxu0
  %v2477 = vadd.f32 %v2316, %v2476
  %v2478 = vpop.f32.mrb[0].mxu0
  %v2479 = vpop.f32.mrb[0].mxu0
  %v2480 = vadd.f32 %v2319, %v2479
  %v2481 = vpop.f32.mrb[0].mxu0
  %2482 = vmatprep.mubr.bf16.mxu0 %v1932
  %2483 = vmatmul.mubr.bf16.gmra.mrb[0].mxu0 %v1931
  %v2484 = vpop.f32.mrb[0].mxu0
  %v2485 = vadd.f32 %v2324, %v2484
  %v2486 = vpop.f32.mrb[0].mxu0
  %v2487 = vpop.f32.mrb[0].mxu0
  %v2488 = vadd.f32 %v2327, %v2487
  %v2489 = vpop.f32.mrb[0].mxu0
  %2490 = vmatprep.mubr.bf16.mxu0 %v1936
  %2491 = vmatmul.mubr.bf16.gmra.mrb[0].mxu0 %v1935
  %v2492 = vpop.f32.mrb[0].mxu0
  %v2493 = vadd.f32 %v2332, %v2492
  %v2494 = vpop.f32.mrb[0].mxu0
  %v2495 = vpop.f32.mrb[0].mxu0
  %v2496 = vadd.f32 %v2335, %v2495
  %v2497 = vpop.f32.mrb[0].mxu0
  %2498 = vmatprep.mubr.bf16.mxu0 %v1940
  %2499 = vmatmul.mubr.bf16.gmra.mrb[0].mxu0 %v1939
  %v2500 = vpop.f32.mrb[0].mxu0
  %v2501 = vadd.f32 %v2340, %v2500
  %v2502 = vpop.f32.mrb[0].mxu0
  %v2503 = vpop.f32.mrb[0].mxu0
  %v2504 = vadd.f32 %v2343, %v2503
  %v2505 = vpop.f32.mrb[0].mxu0
  %2506 = vmatprep.mubr.bf16.mxu0 %v1944
  %2507 = vmatmul.mubr.bf16.gmra.mrb[0].mxu0 %v1943
  %v2508 = vpop.f32.mrb[0].mxu0
  %v2509 = vadd.f32 %v2348, %v2508
  %v2510 = vpop.f32.mrb[0].mxu0
  %v2511 = vpop.f32.mrb[0].mxu0
  %v2512 = vadd.f32 %v2351, %v2511
  %v2513 = vpop.f32.mrb[0].mxu0
  %2514 = vmatprep.mubr.bf16.mxu0 %v1948
  %2515 = vmatmul.mubr.bf16.gmra.mrb[0].mxu0 %v1947
  %v2516 = vpop.f32.mrb[0].mxu0
  %v2517 = vadd.f32 %v2356, %v2516
  %v2518 = vpop.f32.mrb[0].mxu0
  %v2519 = vpop.f32.mrb[0].mxu0
  %v2520 = vadd.f32 %v2359, %v2519
  %v2521 = vpop.f32.mrb[0].mxu0
  %2522 = vmatprep.mubr.bf16.mxu0 %v1952
  %2523 = vmatmul.mubr.bf16.gmra.mrb[0].mxu0 %v1951
  %v2524 = vpop.f32.mrb[0].mxu0
  %v2525 = vadd.f32 %v2364, %v2524
  %v2526 = vpop.f32.mrb[0].mxu0
  %v2527 = vpop.f32.mrb[0].mxu0
  %v2528 = vadd.f32 %v2367, %v2527
  %v2529 = vpop.f32.mrb[0].mxu0
  %2530 = vdwg.mxu0
  %v2531 = vadd.f32 %v1857, %v2405
  %v2532 = vadd.f32 %v1858, %v2408
  %v2533 = vadd.f32 %v1859, %v2413
  %v2534 = vadd.f32 %v1860, %v2416
  %v2535 = vadd.f32 %v1861, %v2421
  %v2536 = vadd.f32 %v1862, %v2424
  %v2537 = vadd.f32 %v1863, %v2429
  %v2538 = vadd.f32 %v1864, %v2432
  %v2539 = vadd.f32 %v1865, %v2437
  %v2540 = vadd.f32 %v1866, %v2440
  %v2541 = vadd.f32 %v1867, %v2445
  %v2542 = vadd.f32 %v1868, %v2448
  %v2543 = vadd.f32 %v1869, %v2453
  %v2544 = vadd.f32 %v1870, %v2456
  %v2545 = vadd.f32 %v1871, %v2461
  %v2546 = vadd.f32 %v1872, %v2464
  %v2547 = vadd.f32 %v1873, %v2469
  %v2548 = vadd.f32 %v1874, %v2472
  %v2549 = vadd.f32 %v1875, %v2477
  %v2550 = vadd.f32 %v1876, %v2480
  %v2551 = vadd.f32 %v1877, %v2485
  %v2552 = vadd.f32 %v1878, %v2488
  %v2553 = vadd.f32 %v1879, %v2493
  %v2554 = vadd.f32 %v1880, %v2496
  %v2555 = vadd.f32 %v1881, %v2501
  %v2556 = vadd.f32 %v1882, %v2504
  %v2557 = vadd.f32 %v1883, %v2509
  %v2558 = vadd.f32 %v1884, %v2512
  %v2559 = vadd.f32 %v1885, %v2517
  %v2560 = vadd.f32 %v1886, %v2520
  %v2561 = vadd.f32 %v1887, %v2525
  %v2562 = vadd.f32 %v1888, %v2528
  %2563 = vst [vmem:[%s5] sm:$0xff] %v2531
  %2564 = vst [vmem:[%s5 + $0x8] sm:$0xff] %v2532
  %2565 = vst [vmem:[%s5 + $0x10] sm:$0xff] %v2533
  %2566 = vst [vmem:[%s5 + $0x18] sm:$0xff] %v2534
  %2567 = vst [vmem:[%s5 + $0x20] sm:$0xff] %v2535
  %2568 = vst [vmem:[%s5 + $0x28] sm:$0xff] %v2536
  %2569 = vst [vmem:[%s5 + $0x30] sm:$0xff] %v2537
  %2570 = vst [vmem:[%s5 + $0x38] sm:$0xff] %v2538
  %2571 = vst [vmem:[%s5 + $0x40] sm:$0xff] %v2539
  %2572 = vst [vmem:[%s5 + $0x48] sm:$0xff] %v2540
  %2573 = vst [vmem:[%s5 + $0x50] sm:$0xff] %v2541
  %2574 = vst [vmem:[%s5 + $0x58] sm:$0xff] %v2542
  %2575 = vst [vmem:[%s5 + $0x60] sm:$0xff] %v2543
  %2576 = vst [vmem:[%s5 + $0x68] sm:$0xff] %v2544
  %2577 = vst [vmem:[%s5 + $0x70] sm:$0xff] %v2545
  %2578 = vst [vmem:[%s5 + $0x78] sm:$0xff] %v2546
  %2579 = vst [vmem:[%s5 + $0x80] sm:$0xff] %v2547
  %2580 = vst [vmem:[%s5 + $0x88] sm:$0xff] %v2548
  %2581 = vst [vmem:[%s5 + $0x90] sm:$0xff] %v2549
  %2582 = vst [vmem:[%s5 + $0x98] sm:$0xff] %v2550
  %2583 = vst [vmem:[%s5 + $0xa0] sm:$0xff] %v2551
  %2584 = vst [vmem:[%s5 + $0xa8] sm:$0xff] %v2552
  %2585 = vst [vmem:[%s5 + $0xb0] sm:$0xff] %v2553
  %2586 = vst [vmem:[%s5 + $0xb8] sm:$0xff] %v2554
  %2587 = vst [vmem:[%s5 + $0xc0] sm:$0xff] %v2555
  %2588 = vst [vmem:[%s5 + $0xc8] sm:$0xff] %v2556
  %2589 = vst [vmem:[%s5 + $0xd0] sm:$0xff] %v2557
  %2590 = vst [vmem:[%s5 + $0xd8] sm:$0xff] %v2558
  %2591 = vst [vmem:[%s5 + $0xe0] sm:$0xff] %v2559
  %2592 = vst [vmem:[%s5 + $0xe8] sm:$0xff] %v2560
  %2593 = vst [vmem:[%s5 + $0xf0] sm:$0xff] %v2561
  %2594 = vst [vmem:[%s5 + $0xf8] sm:$0xff] %v2562
  // Predicated region
  $region26: #{bert_txt_forward.19} parent=0 // pred_check
    %p2595 = pneg %p21
  $region27: #{bert_txt_forward.19} parent=0 // pred_check_branch
    %2597 = sbr.rel (%p2595) target = $region29
  $region28: #{bert_txt_forward.19} parent=0 // pred_region
    %v2598 = vld [vmem:[%s5] sm:$0xff]
    %v2599 = vld [vmem:[%s5 + $0x8] sm:$0xff]
    %v2600 = vld [vmem:[%s5 + $0x10] sm:$0xff]
    %v2601 = vld [vmem:[%s5 + $0x18] sm:$0xff]
    %v2602 = vld [vmem:[%s5 + $0x20] sm:$0xff]
    %v2603 = vld [vmem:[%s5 + $0x28] sm:$0xff]
    %v2604 = vld [vmem:[%s5 + $0x30] sm:$0xff]
    %v2605 = vld [vmem:[%s5 + $0x38] sm:$0xff]
    %v2606 = vld [vmem:[%s5 + $0x40] sm:$0xff]
    %v2607 = vld [vmem:[%s5 + $0x48] sm:$0xff]
    %v2608 = vld [vmem:[%s5 + $0x50] sm:$0xff]
    %v2609 = vld [vmem:[%s5 + $0x58] sm:$0xff]
    %v2610 = vld [vmem:[%s5 + $0x60] sm:$0xff]
    %v2611 = vld [vmem:[%s5 + $0x68] sm:$0xff]
    %v2612 = vld [vmem:[%s5 + $0x70] sm:$0xff]
    %v2613 = vld [vmem:[%s5 + $0x78] sm:$0xff]
    %v2614 = vld [vmem:[%s5 + $0x80] sm:$0xff]
    %v2615 = vld [vmem:[%s5 + $0x88] sm:$0xff]
    %v2616 = vld [vmem:[%s5 + $0x90] sm:$0xff]
    %v2617 = vld [vmem:[%s5 + $0x98] sm:$0xff]
    %v2618 = vld [vmem:[%s5 + $0xa0] sm:$0xff]
    %v2619 = vld [vmem:[%s5 + $0xa8] sm:$0xff]
    %v2620 = vld [vmem:[%s5 + $0xb0] sm:$0xff]
    %v2621 = vld [vmem:[%s5 + $0xb8] sm:$0xff]
    %v2622 = vld [vmem:[%s5 + $0xc0] sm:$0xff]
    %v2623 = vld [vmem:[%s5 + $0xc8] sm:$0xff]
    %v2624 = vld [vmem:[%s5 + $0xd0] sm:$0xff]
    %v2625 = vld [vmem:[%s5 + $0xd8] sm:$0xff]
    %v2626 = vld [vmem:[%s5 + $0xe0] sm:$0xff]
    %v2627 = vld [vmem:[%s5 + $0xe8] sm:$0xff]
    %v2628 = vld [vmem:[%s5 + $0xf0] sm:$0xff]
    %v2629 = vld [vmem:[%s5 + $0xf8] sm:$0xff]
    %v2630 = vld [vmem:[%s4] sm:$0x1]
    %v2632 = vlaneseq
    %v2633 = vshrl.u32 %v2632, 7
    %v2634 = vsub.s32 0, %v2633
    %v2635 = vrot.slane %v2630, %v2634
    %v2637 = vadd.f32 %v2598, %v2635
    %v2638 = vadd.f32 %v2599, %v2635
    %v2639 = vadd.f32 %v2600, %v2635
    %v2640 = vadd.f32 %v2601, %v2635
    %v2641 = vadd.f32 %v2602, %v2635
    %v2642 = vadd.f32 %v2603, %v2635
    %v2643 = vadd.f32 %v2604, %v2635
    %v2644 = vadd.f32 %v2605, %v2635
    %v2645 = vadd.f32 %v2606, %v2635
    %v2646 = vadd.f32 %v2607, %v2635
    %v2647 = vadd.f32 %v2608, %v2635
    %v2648 = vadd.f32 %v2609, %v2635
    %v2649 = vadd.f32 %v2610, %v2635
    %v2650 = vadd.f32 %v2611, %v2635
    %v2651 = vadd.f32 %v2612, %v2635
    %v2652 = vadd.f32 %v2613, %v2635
    %v2653 = vadd.f32 %v2614, %v2635
    %v2654 = vadd.f32 %v2615, %v2635
    %v2655 = vadd.f32 %v2616, %v2635
    %v2656 = vadd.f32 %v2617, %v2635
    %v2657 = vadd.f32 %v2618, %v2635
    %v2658 = vadd.f32 %v2619, %v2635
    %v2659 = vadd.f32 %v2620, %v2635
    %v2660 = vadd.f32 %v2621, %v2635
    %v2661 = vadd.f32 %v2622, %v2635
    %v2662 = vadd.f32 %v2623, %v2635
    %v2663 = vadd.f32 %v2624, %v2635
    %v2664 = vadd.f32 %v2625, %v2635
    %v2665 = vadd.f32 %v2626, %v2635
    %v2666 = vadd.f32 %v2627, %v2635
    %v2667 = vadd.f32 %v2628, %v2635
    %v2668 = vadd.f32 %v2629, %v2635
    %2669 = vst [vmem:[%s5] sm:$0xff] %v2637
    %2670 = vst [vmem:[%s5 + $0x8] sm:$0xff] %v2638
    %2671 = vst [vmem:[%s5 + $0x10] sm:$0xff] %v2639
    %2672 = vst [vmem:[%s5 + $0x18] sm:$0xff] %v2640
    %2673 = vst [vmem:[%s5 + $0x20] sm:$0xff] %v2641
    %2674 = vst [vmem:[%s5 + $0x28] sm:$0xff] %v2642
    %2675 = vst [vmem:[%s5 + $0x30] sm:$0xff] %v2643
    %2676 = vst [vmem:[%s5 + $0x38] sm:$0xff] %v2644
    %2677 = vst [vmem:[%s5 + $0x40] sm:$0xff] %v2645
    %2678 = vst [vmem:[%s5 + $0x48] sm:$0xff] %v2646
    %2679 = vst [vmem:[%s5 + $0x50] sm:$0xff] %v2647
    %2680 = vst [vmem:[%s5 + $0x58] sm:$0xff] %v2648
    %2681 = vst [vmem:[%s5 + $0x60] sm:$0xff] %v2649
    %2682 = vst [vmem:[%s5 + $0x68] sm:$0xff] %v2650
    %2683 = vst [vmem:[%s5 + $0x70] sm:$0xff] %v2651
    %2684 = vst [vmem:[%s5 + $0x78] sm:$0xff] %v2652
    %2685 = vst [vmem:[%s5 + $0x80] sm:$0xff] %v2653
    %2686 = vst [vmem:[%s5 + $0x88] sm:$0xff] %v2654
    %2687 = vst [vmem:[%s5 + $0x90] sm:$0xff] %v2655
    %2688 = vst [vmem:[%s5 + $0x98] sm:$0xff] %v2656
    %2689 = vst [vmem:[%s5 + $0xa0] sm:$0xff] %v2657
    %2690 = vst [vmem:[%s5 + $0xa8] sm:$0xff] %v2658
    %2691 = vst [vmem:[%s5 + $0xb0] sm:$0xff] %v2659
    %2692 = vst [vmem:[%s5 + $0xb8] sm:$0xff] %v2660
    %2693 = vst [vmem:[%s5 + $0xc0] sm:$0xff] %v2661
    %2694 = vst [vmem:[%s5 + $0xc8] sm:$0xff] %v2662
    %2695 = vst [vmem:[%s5 + $0xd0] sm:$0xff] %v2663
    %2696 = vst [vmem:[%s5 + $0xd8] sm:$0xff] %v2664
    %2697 = vst [vmem:[%s5 + $0xe0] sm:$0xff] %v2665
    %2698 = vst [vmem:[%s5 + $0xe8] sm:$0xff] %v2666
    %2699 = vst [vmem:[%s5 + $0xf0] sm:$0xff] %v2667
    %2700 = vst [vmem:[%s5 + $0xf8] sm:$0xff] %v2668
  $region29: #{bert_txt_forward.19} parent=0 // pred_fallthru
    _
  // Predicated region
  $region30: #{bert_txt_forward.19} parent=0 // pred_check
    _
  $region31: #{bert_txt_forward.19} parent=0 // pred_check_branch
    %2702 = sbr.rel (0) target = $region33
  $region32: #{bert_txt_forward.19} parent=0 // pred_region
    _
  $region33: #{bert_txt_forward.19} parent=0 // pred_fallthru
    _
  // Predicated region
  $region34: #{bert_txt_forward.19} parent=0 // pred_check
    _
  $region35: #{bert_txt_forward.19} parent=0 // pred_check_branch
    %2704 = sbr.rel (0) target = $region37
  $region36: #{bert_txt_forward.19} parent=0 // pred_region
    _
  $region37: #{bert_txt_forward.19} parent=0 // pred_fallthru
    _

</llo_original>
